<compile_context>
chip_gen: v7x
topology: tpu7x:2x2x1
jax: 0.10.0
libtpu: 0.0.40
codegen_flags: <defaults>
</compile_context>

<pallas_src>
import jax
import jax.numpy as jnp
from jax.experimental import pallas as pl
from jax.experimental.pallas import tpu as pltpu


def _round_up(x, m):
    return (x + m - 1) // m * m


def _cdiv(a, b):
    return (a + b - 1) // b


def yolov5_classifier_head(feat_nchw, w1, b1, w2, b2,
                           *, b_tile_max=32, hw_tile_max=512,
                           feat_tile_budget=4 << 20):
    """feat_nchw: (B, 512, H, W) backbone features -> (B, num_classes) logits."""
    B, C, H, W = feat_nchw.shape
    hidden = w1.shape[0]              # 256
    num_classes = w2.shape[0]
    hw = H * W
    inv_hw = 1.0 / float(hw)
    assert hw_tile_max % 128 == 0 and b_tile_max % 8 == 0

    # Free, layout-preserving flatten of the spatial dims (no HBM pass):
    # C=512 sits in sublanes, HW in lanes; the reduce runs over the lane axis.
    feat = feat_nchw.reshape(B, C, hw)
    itemsize = jnp.dtype(feat.dtype).itemsize

    # ---- spatial (reduction) tiling: whole hw if small, else 512-lane blocks;
    # the ragged tail block is masked in-kernel, never zero-padded in HBM.
    hw_block = hw if hw <= hw_tile_max else hw_tile_max
    nk = _cdiv(hw, hw_block)
    tail = hw - (nk - 1) * hw_block          # static size of the final hw block
    needs_tail_mask = tail != hw_block

    # ---- batch tiling: target a multi-MiB feature block per grid step; keep
    # b_tile a multiple of 8 (legal ragged tail blocks) and give v7x's second
    # TensorCore work (>=2 batch blocks) once B is large enough.
    row_bytes = C * hw_block * itemsize       # bytes per batch row per k step
    b_cap = min(b_tile_max, max(8, (feat_tile_budget // max(row_bytes, 1)) // 8 * 8))
    if B <= b_cap:
        b_tile = _round_up(_cdiv(B, 2), 8) if B >= 16 else B
    else:
        b_tile = b_cap
    nb = _cdiv(B, b_tile)

    # ---- params (tiny): PyTorch Linear stores (out, in); pre-transpose, stream
    # the weights as bf16, pad classes to a lane-dense multiple of 128.
    nc_pad = _round_up(max(num_classes, 128), 128)
    w1_t = jnp.transpose(w1).astype(jnp.bfloat16)                         # (512, 256)
    b1_2d = b1.reshape(1, hidden).astype(jnp.float32)                     # (1, 256)
    w2_t = jnp.pad(jnp.transpose(w2).astype(jnp.float32),
                   ((0, 0), (0, nc_pad - num_classes))).astype(jnp.bfloat16)  # (256, nc_pad)
    b2_2d = jnp.pad(b2.reshape(1, num_classes).astype(jnp.float32),
                    ((0, 0), (0, nc_pad - num_classes)))                  # (1, nc_pad)

    def kernel(feat_ref, w1_ref, b1_ref, w2_ref, b2_ref, out_ref, acc_ref):
        k = pl.program_id(1)

        @pl.when(k == 0)
        def _():
            acc_ref[...] = jnp.zeros_like(acc_ref)

        def accumulate(mask_tail):
            x = feat_ref[...]                          # (b_tile, C, hw_block)
            if mask_tail:
                lane = jax.lax.broadcasted_iota(jnp.int32, x.shape, 2)
                x = jnp.where(lane < tail, x, jnp.zeros_like(x))
            # hw is the lane axis; accumulate the spatial sum in f32.
            acc_ref[...] += jnp.sum(x, axis=-1, dtype=jnp.float32)

        if needs_tail_mask:
            @pl.when(k == nk - 1)
            def _():
                accumulate(True)

            @pl.when(k != nk - 1)
            def _():
                accumulate(False)
        else:
            accumulate(False)

        @pl.when(k == nk - 1)
        def _():
            # AdaptiveAvgPool2d((1,1)) + Flatten = mean over hw.
            pooled = acc_ref[...] * inv_hw
            h = jnp.dot(pooled.astype(jnp.bfloat16), w1_ref[...],
                        preferred_element_type=jnp.float32) + b1_ref[...]
            h = jnp.maximum(h, 0.0)                    # ReLU; Dropout(0.5) = identity
            out_ref[...] = jnp.dot(h.astype(jnp.bfloat16), w2_ref[...],
                                   preferred_element_type=jnp.float32) + b2_ref[...]

    # ---- VMEM budget (account for lane padding of the hw block in VMEM).
    hw_block_vmem = _round_up(hw_block, 128)
    feat_tile_vmem = b_tile * C * hw_block_vmem * itemsize
    param_vmem = (w1_t.size + w2_t.size) * 2 + (b1_2d.size + b2_2d.size) * 4
    out_tile_vmem = _round_up(b_tile, 8) * nc_pad * 4
    acc_vmem = _round_up(b_tile, 8) * C * 4
    vmem_need = (2 * feat_tile_vmem + 2 * param_vmem
                 + 2 * out_tile_vmem + acc_vmem + (4 << 20))
    try:
        vmem_cap = int(pltpu.get_tpu_info().vmem_capacity_bytes)
    except Exception:
        vmem_cap = 64 << 20                            # conservative (v7x-sized) fallback
    vmem_limit = int(min(min(100 << 20, (vmem_cap * 3) // 4),
                         max(vmem_need, 32 << 20)))

    cost = pl.CostEstimate(
        flops=int(B * C * hw + 2 * B * C * hidden + 2 * B * hidden * nc_pad),
        transcendentals=0,
        bytes_accessed=int(feat.size * itemsize
                           + (w1_t.size + w2_t.size) * 2
                           + (b1_2d.size + b2_2d.size) * 4
                           + B * nc_pad * 4),
    )

    out_padded = pl.pallas_call(
        kernel,
        out_shape=jax.ShapeDtypeStruct((B, nc_pad), jnp.float32),
        grid_spec=pltpu.PrefetchScalarGridSpec(
            num_scalar_prefetch=0,
            grid=(nb, nk),
            in_specs=[
                pl.BlockSpec((b_tile, C, hw_block), lambda b, k: (b, 0, k)),
                pl.BlockSpec((C, hidden), lambda b, k: (0, 0)),
                pl.BlockSpec((1, hidden), lambda b, k: (0, 0)),
                pl.BlockSpec((hidden, nc_pad), lambda b, k: (0, 0)),
                pl.BlockSpec((1, nc_pad), lambda b, k: (0, 0)),
            ],
            out_specs=pl.BlockSpec((b_tile, nc_pad), lambda b, k: (b, 0)),
            scratch_shapes=[pltpu.VMEM((b_tile, C), jnp.float32)],
        ),
        compiler_params=pltpu.CompilerParams(
            dimension_semantics=("parallel", "arbitrary"),
            vmem_limit_bytes=vmem_limit,
        ),
        cost_estimate=cost,
    )(feat, w1_t, b1_2d, w2_t, b2_2d)

    return out_padded[:, :num_classes]


def _reference(feat_nchw, w1, b1, w2, b2):
    f = feat_nchw.astype(jnp.float32)
    pooled = jnp.mean(f, axis=(2, 3))                  # (B, 512)
    h = jnp.maximum(pooled @ w1.T.astype(jnp.float32) + b1.astype(jnp.float32), 0.0)
    return h @ w2.T.astype(jnp.float32) + b2.astype(jnp.float32)


if __name__ == "__main__":
    key = jax.random.PRNGKey(0)
    k_feat, k_w1, k_b1, k_w2, k_b2 = jax.random.split(key, 5)

    B, C, H, W = 2, 512, 4, 4             # stand-in backbone feature map
    num_classes = 10

    feat = jax.random.normal(k_feat, (B, C, H, W), dtype=jnp.float32)
    w1 = jax.random.normal(k_w1, (256, C), dtype=jnp.float32) * 0.02   # (out, in)
    b1 = jax.random.normal(k_b1, (256,), dtype=jnp.float32) * 0.02
    w2 = jax.random.normal(k_w2, (num_classes, 256), dtype=jnp.float32) * 0.02
    b2 = jax.random.normal(k_b2, (num_classes,), dtype=jnp.float32) * 0.02

    out = yolov5_classifier_head(feat, w1, b1, w2, b2)
    out = jax.block_until_ready(out)

    ref = _reference(feat, w1, b1, w2, b2)
    assert out.shape == (B, num_classes), out.shape
    max_err = float(jnp.max(jnp.abs(out - ref)))
    assert jnp.allclose(out, ref, atol=5e-3, rtol=5e-3), ("mismatch vs reference", max_err)

    print("KERNEL_OK")
</pallas_src>

<mosaic_0001>
module attributes {stable_mosaic.version = 11 : i64} {
  func.func @kernel(%arg0: i32, %arg1: i32, %arg2: memref<2x512x16xf32, #tpu.memory_space<vmem>>, %arg3: memref<512x256xbf16, #tpu.memory_space<vmem>>, %arg4: memref<1x256xf32, #tpu.memory_space<vmem>>, %arg5: memref<256x128xbf16, #tpu.memory_space<vmem>>, %arg6: memref<1x128xf32, #tpu.memory_space<vmem>>, %arg7: memref<2x128xf32, #tpu.memory_space<vmem>>, %arg8: memref<2x512xf32, #tpu.memory_space<vmem>>) attributes {dimension_semantics = [#tpu.dimension_semantics<parallel>, #tpu.dimension_semantics<arbitrary>], iteration_bounds = array<i64: 1, 1>, scalar_prefetch = 0 : i64, scratch_operands = 1 : i64, tpu.core_type = #tpu.core_type<tc>, window_params = [{transform_indices = @transform_0, window_bounds = array<i64: 2, 512, 16>}, {pipeline_mode = #tpu.pipeline_mode<synchronous>, transform_indices = @transform_1, window_bounds = array<i64: 512, 256>}, {pipeline_mode = #tpu.pipeline_mode<synchronous>, transform_indices = @transform_2, window_bounds = array<i64: 1, 256>}, {pipeline_mode = #tpu.pipeline_mode<synchronous>, transform_indices = @transform_3, window_bounds = array<i64: 256, 128>}, {pipeline_mode = #tpu.pipeline_mode<synchronous>, transform_indices = @transform_4, window_bounds = array<i64: 1, 128>}, {transform_indices = @transform_5, window_bounds = array<i64: 2, 128>}]} {
    %c0_i32 = arith.constant 0 : i32
    %0 = arith.cmpi eq, %arg1, %c0_i32 : i32
    %1 = arith.extui %0 : i1 to i32
    %c0_i32_0 = arith.constant 0 : i32
    %2 = arith.cmpi ne, %1, %c0_i32_0 : i32
    scf.if %2 {
      %cst_9 = arith.constant 0.000000e+00 : f32
      %11 = vector.broadcast %cst_9 : f32 to vector<2x512xf32>
      %c0_10 = arith.constant 0 : index
      %c0_11 = arith.constant 0 : index
      %12 = vector.load %arg8[%c0_10, %c0_11] : memref<2x512xf32, #tpu.memory_space<vmem>>, vector<2x512xf32>
      tpu.vector_store %arg8[%c0_10, %c0_11], %11 {strides = array<i32>} : memref<2x512xf32, #tpu.memory_space<vmem>>, vector<2x512xf32>,
    } else {
    }
    %c0 = arith.constant 0 : index
    %c0_1 = arith.constant 0 : index
    %c0_2 = arith.constant 0 : index
    %3 = vector.load %arg2[%c0, %c0_1, %c0_2] : memref<2x512x16xf32, #tpu.memory_space<vmem>>, vector<2x512x16xf32>
    %c0_3 = arith.constant 0 : index
    %c0_4 = arith.constant 0 : index
    %4 = vector.load %arg8[%c0_3, %c0_4] : memref<2x512xf32, #tpu.memory_space<vmem>>, vector<2x512xf32>
    %cst = arith.constant dense<0.000000e+00> : vector<2x512xf32>
    %5 = vector.multi_reduction <add>, %3, %cst [2] : vector<2x512x16xf32> to vector<2x512xf32>
    %6 = arith.addf %4, %5 : vector<2x512xf32>
    %c0_5 = arith.constant 0 : index
    %c0_6 = arith.constant 0 : index
    %7 = vector.load %arg8[%c0_5, %c0_6] : memref<2x512xf32, #tpu.memory_space<vmem>>, vector<2x512xf32>
    tpu.vector_store %arg8[%c0_5, %c0_6], %6 {strides = array<i32>} : memref<2x512xf32, #tpu.memory_space<vmem>>, vector<2x512xf32>,
    %c0_i32_7 = arith.constant 0 : i32
    %8 = arith.cmpi eq, %arg1, %c0_i32_7 : i32
    %9 = arith.extui %8 : i1 to i32
    %c0_i32_8 = arith.constant 0 : i32
    %10 = arith.cmpi ne, %9, %c0_i32_8 : i32
    scf.if %10 {
      %c0_9 = arith.constant 0 : index
      %c0_10 = arith.constant 0 : index
      %11 = vector.load %arg8[%c0_9, %c0_10] : memref<2x512xf32, #tpu.memory_space<vmem>>, vector<2x512xf32>
      %cst_11 = arith.constant 6.250000e-02 : f32
      %12 = vector.broadcast %cst_11 : f32 to vector<2x512xf32>
      %13 = arith.mulf %11, %12 : vector<2x512xf32>
      %14 = arith.truncf %13 : vector<2x512xf32> to vector<2x512xbf16>
      %c0_12 = arith.constant 0 : index
      %c0_13 = arith.constant 0 : index
      %15 = vector.load %arg3[%c0_12, %c0_13] : memref<512x256xbf16, #tpu.memory_space<vmem>>, vector<512x256xbf16>
      %cst_14 = arith.constant dense<0.000000e+00> : vector<2x256xf32>
      %16 = tpu.matmul %14, %15, %cst_14 {dimension_numbers = #tpu.dot_dimension_numbers<[1], [0], [0], [1], [0, 0, 1, 1], [], []>} : vector<2x512xbf16>, vector<512x256xbf16>, vector<2x256xf32> -> vector<2x256xf32>
      %c0_15 = arith.constant 0 : index
      %c0_16 = arith.constant 0 : index
      %17 = vector.load %arg4[%c0_15, %c0_16] : memref<1x256xf32, #tpu.memory_space<vmem>>, vector<1x256xf32>
      %18 = vector.broadcast %17 : vector<1x256xf32> to vector<2x256xf32>
      %19 = arith.addf %16, %18 : vector<2x256xf32>
      %cst_17 = arith.constant 0.000000e+00 : f32
      %20 = vector.broadcast %cst_17 : f32 to vector<2x256xf32>
      %21 = arith.maximumf %19, %20 : vector<2x256xf32>
      %22 = arith.truncf %21 : vector<2x256xf32> to vector<2x256xbf16>
      %c0_18 = arith.constant 0 : index
      %c0_19 = arith.constant 0 : index
      %23 = vector.load %arg5[%c0_18, %c0_19] : memref<256x128xbf16, #tpu.memory_space<vmem>>, vector<256x128xbf16>
      %cst_20 = arith.constant dense<0.000000e+00> : vector<2x128xf32>
      %24 = tpu.matmul %22, %23, %cst_20 {dimension_numbers = #tpu.dot_dimension_numbers<[1], [0], [0], [1], [0, 0, 1, 1], [], []>} : vector<2x256xbf16>, vector<256x128xbf16>, vector<2x128xf32> -> vector<2x128xf32>
      %c0_21 = arith.constant 0 : index
      %c0_22 = arith.constant 0 : index
      %25 = vector.load %arg6[%c0_21, %c0_22] : memref<1x128xf32, #tpu.memory_space<vmem>>, vector<1x128xf32>
      %26 = vector.broadcast %25 : vector<1x128xf32> to vector<2x128xf32>
      %27 = arith.addf %24, %26 : vector<2x128xf32>
      %c0_23 = arith.constant 0 : index
      %c0_24 = arith.constant 0 : index
      %28 = vector.load %arg7[%c0_23, %c0_24] : memref<2x128xf32, #tpu.memory_space<vmem>>, vector<2x128xf32>
      tpu.vector_store %arg7[%c0_23, %c0_24], %27 {strides = array<i32>} : memref<2x128xf32, #tpu.memory_space<vmem>>, vector<2x128xf32>,
    } else {
    }
    return
  }
  func.func @transform_0(%arg0: i32, %arg1: i32) -> (i32, i32, i32) {
    %c0_i32 = arith.constant 0 : i32
    %c0_i32_0 = arith.constant 0 : i32
    return %arg0, %c0_i32, %arg1 : i32, i32, i32
  }
  func.func @transform_1(%arg0: i32, %arg1: i32) -> (i32, i32) {
    %c0_i32 = arith.constant 0 : i32
    %c0_i32_0 = arith.constant 0 : i32
    %c0_i32_1 = arith.constant 0 : i32
    return %c0_i32, %c0_i32_0 : i32, i32
  }
  func.func @transform_2(%arg0: i32, %arg1: i32) -> (i32, i32) {
    %c0_i32 = arith.constant 0 : i32
    %c0_i32_0 = arith.constant 0 : i32
    %c0_i32_1 = arith.constant 0 : i32
    return %c0_i32, %c0_i32_0 : i32, i32
  }
  func.func @transform_3(%arg0: i32, %arg1: i32) -> (i32, i32) {
    %c0_i32 = arith.constant 0 : i32
    %c0_i32_0 = arith.constant 0 : i32
    %c0_i32_1 = arith.constant 0 : i32
    return %c0_i32, %c0_i32_0 : i32, i32
  }
  func.func @transform_4(%arg0: i32, %arg1: i32) -> (i32, i32) {
    %c0_i32 = arith.constant 0 : i32
    %c0_i32_0 = arith.constant 0 : i32
    %c0_i32_1 = arith.constant 0 : i32
    return %c0_i32, %c0_i32_0 : i32, i32
  }
  func.func @transform_5(%arg0: i32, %arg1: i32) -> (i32, i32) {
    %c0_i32 = arith.constant 0 : i32
    %c0_i32_0 = arith.constant 0 : i32
    return %arg0, %c0_i32 : i32, i32
  }
}

</mosaic_0001>

<llo_original>
// kernel: tpu_custom_call.1
$region0: #{tpu_custom_call.1}
  #allocation0 [shape = 'u32[]', space=smem, size = 0x4, offset = 0x4, fixed_abs, tag = 'smem constant byte address 0x4 - core index']
  #allocation1 [shape = 'u32[144,128]{1,0:T(1,128)}', space=vmem, size = 0x12000, scoped, tag = 'internal scratch']
  #allocation2 [shape = 'f32[2,512]{1,0:T(2,128)}', space=vmem, size = 0x1000, scoped, tag = 'scratch operand']
  %s0 = inlined_call_operand.vmem [shape: f32[2,512,16], index: 0, kind: input, shape index: {}]
  %s1 = inlined_call_operand.vmem [shape: bf16[512,256], index: 1, kind: input, shape index: {}]
  %s2 = inlined_call_operand.vmem [shape: f32[1,256], index: 2, kind: input, shape index: {}]
  %s3 = inlined_call_operand.vmem [shape: bf16[256,128], index: 3, kind: input, shape index: {}]
  %s4 = inlined_call_operand.vmem [shape: f32[1,128], index: 4, kind: input, shape index: {}]
  %s5 = inlined_call_operand.hbm [shape: f32[2,128], index: 5, kind: output, shape index: {}]
  %s6 = sld [smem:[#allocation0]]
  $region38: #{tpu_custom_call.1} parent=0
    _
  %s8 = ssub.s32 1, %s6
  %s9 = scalar_select 0, %s8, %s6
  $region1: #{tpu_custom_call.1} parent=0
    #allocation3 [shape = 'u8[1024]{0}', space=vmem, size = 0x400, scoped, tag = 'output window, operand 0, single buffered']
    #allocation4 [shape = 's32[1]{0}', space=sflag, size = 0x4, scoped, tag = 'scoped memory for tpu_custom_call.1']
    %10 = vsyncpa [#allocation4], 0
    // Predicated region
    $region2: #{tpu_custom_call.1} parent=1 // pred_check
      _
    $region3: #{tpu_custom_call.1} parent=1 // pred_check_branch
      %12 = sbr.rel (0) target = $region5
    $region4: #{tpu_custom_call.1} parent=1 // pred_region
      _
    $region5: #{tpu_custom_call.1} parent=1 // pred_fallthru
      _
    // Predicated region
    $region6: #{tpu_custom_call.1} parent=1 // pred_check
      _
    $region7: #{tpu_custom_call.1} parent=1 // pred_check_branch
      %14 = sbr.rel (0) target = $region9
    $region8: #{tpu_custom_call.1} parent=1 // pred_region
      _
    $region9: #{tpu_custom_call.1} parent=1 // pred_fallthru
      _
    // Predicated region
    $region10: #{tpu_custom_call.1} parent=1 // pred_check
      _
    $region11: #{tpu_custom_call.1} parent=1 // pred_check_branch
      %16 = sbr.rel (0) target = $region13
    $region12: #{tpu_custom_call.1} parent=1 // pred_region
      _
    $region13: #{tpu_custom_call.1} parent=1 // pred_fallthru
      _
    // Predicated region
    $region14: #{tpu_custom_call.1} parent=1 // pred_check
      _
    $region15: #{tpu_custom_call.1} parent=1 // pred_check_branch
      %18 = sbr.rel (0) target = $region17
    $region16: #{tpu_custom_call.1} parent=1 // pred_region
      _
    $region17: #{tpu_custom_call.1} parent=1 // pred_fallthru
      _
    // Predicated region
    $region18: #{tpu_custom_call.1} parent=1 // pred_check
      _
    $region19: #{tpu_custom_call.1} parent=1 // pred_check_branch
      %20 = sbr.rel (0) target = $region21
    $region20: #{tpu_custom_call.1} parent=1 // pred_region
      _
    $region21: #{tpu_custom_call.1} parent=1 // pred_fallthru
      _
    %p22 = scmp.eq.s32.totalorder 0, 0
    // Predicated region
    $region22: #{tpu_custom_call.1} parent=1 // pred_check
      %p23 = pneg %p22
    $region23: #{tpu_custom_call.1} parent=1 // pred_check_branch
      %25 = sbr.rel (%p23) target = $region25
    $region24: #{tpu_custom_call.1} parent=1 // pred_region
      %26 = vst [vmem:[#allocation2] sm:$0xff] 0.0
    $region25: #{tpu_custom_call.1} parent=1 // pred_fallthru
      _
    %v27 = vld [vmem:[%s0] sm:$0xff]
    %v28 = vld [vmem:[%s0 + $0x8] sm:$0xff]
    %v29 = vld [vmem:[%s0 + $0x10] sm:$0xff]
    %v30 = vld [vmem:[%s0 + $0x18] sm:$0xff]
    %v31 = vld [vmem:[%s0 + $0x20] sm:$0xff]
    %v32 = vld [vmem:[%s0 + $0x28] sm:$0xff]
    %v33 = vld [vmem:[%s0 + $0x30] sm:$0xff]
    %v34 = vld [vmem:[%s0 + $0x38] sm:$0xff]
    %v35 = vld [vmem:[%s0 + $0x40] sm:$0xff]
    %v36 = vld [vmem:[%s0 + $0x48] sm:$0xff]
    %v37 = vld [vmem:[%s0 + $0x50] sm:$0xff]
    %v38 = vld [vmem:[%s0 + $0x58] sm:$0xff]
    %v39 = vld [vmem:[%s0 + $0x60] sm:$0xff]
    %v40 = vld [vmem:[%s0 + $0x68] sm:$0xff]
    %v41 = vld [vmem:[%s0 + $0x70] sm:$0xff]
    %v42 = vld [vmem:[%s0 + $0x78] sm:$0xff]
    %v43 = vld [vmem:[%s0 + $0x80] sm:$0xff]
    %v44 = vld [vmem:[%s0 + $0x88] sm:$0xff]
    %v45 = vld [vmem:[%s0 + $0x90] sm:$0xff]
    %v46 = vld [vmem:[%s0 + $0x98] sm:$0xff]
    %v47 = vld [vmem:[%s0 + $0xa0] sm:$0xff]
    %v48 = vld [vmem:[%s0 + $0xa8] sm:$0xff]
    %v49 = vld [vmem:[%s0 + $0xb0] sm:$0xff]
    %v50 = vld [vmem:[%s0 + $0xb8] sm:$0xff]
    %v51 = vld [vmem:[%s0 + $0xc0] sm:$0xff]
    %v52 = vld [vmem:[%s0 + $0xc8] sm:$0xff]
    %v53 = vld [vmem:[%s0 + $0xd0] sm:$0xff]
    %v54 = vld [vmem:[%s0 + $0xd8] sm:$0xff]
    %v55 = vld [vmem:[%s0 + $0xe0] sm:$0xff]
    %v56 = vld [vmem:[%s0 + $0xe8] sm:$0xff]
    %v57 = vld [vmem:[%s0 + $0xf0] sm:$0xff]
    %v58 = vld [vmem:[%s0 + $0xf8] sm:$0xff]
    %v59 = vld [vmem:[%s0 + $0x100] sm:$0xff]
    %v60 = vld [vmem:[%s0 + $0x108] sm:$0xff]
    %v61 = vld [vmem:[%s0 + $0x110] sm:$0xff]
    %v62 = vld [vmem:[%s0 + $0x118] sm:$0xff]
    %v63 = vld [vmem:[%s0 + $0x120] sm:$0xff]
    %v64 = vld [vmem:[%s0 + $0x128] sm:$0xff]
    %v65 = vld [vmem:[%s0 + $0x130] sm:$0xff]
    %v66 = vld [vmem:[%s0 + $0x138] sm:$0xff]
    %v67 = vld [vmem:[%s0 + $0x140] sm:$0xff]
    %v68 = vld [vmem:[%s0 + $0x148] sm:$0xff]
    %v69 = vld [vmem:[%s0 + $0x150] sm:$0xff]
    %v70 = vld [vmem:[%s0 + $0x158] sm:$0xff]
    %v71 = vld [vmem:[%s0 + $0x160] sm:$0xff]
    %v72 = vld [vmem:[%s0 + $0x168] sm:$0xff]
    %v73 = vld [vmem:[%s0 + $0x170] sm:$0xff]
    %v74 = vld [vmem:[%s0 + $0x178] sm:$0xff]
    %v75 = vld [vmem:[%s0 + $0x180] sm:$0xff]
    %v76 = vld [vmem:[%s0 + $0x188] sm:$0xff]
    %v77 = vld [vmem:[%s0 + $0x190] sm:$0xff]
    %v78 = vld [vmem:[%s0 + $0x198] sm:$0xff]
    %v79 = vld [vmem:[%s0 + $0x1a0] sm:$0xff]
    %v80 = vld [vmem:[%s0 + $0x1a8] sm:$0xff]
    %v81 = vld [vmem:[%s0 + $0x1b0] sm:$0xff]
    %v82 = vld [vmem:[%s0 + $0x1b8] sm:$0xff]
    %v83 = vld [vmem:[%s0 + $0x1c0] sm:$0xff]
    %v84 = vld [vmem:[%s0 + $0x1c8] sm:$0xff]
    %v85 = vld [vmem:[%s0 + $0x1d0] sm:$0xff]
    %v86 = vld [vmem:[%s0 + $0x1d8] sm:$0xff]
    %v87 = vld [vmem:[%s0 + $0x1e0] sm:$0xff]
    %v88 = vld [vmem:[%s0 + $0x1e8] sm:$0xff]
    %v89 = vld [vmem:[%s0 + $0x1f0] sm:$0xff]
    %v90 = vld [vmem:[%s0 + $0x1f8] sm:$0xff]
    %v91 = vld [vmem:[%s0 + $0x200] sm:$0xff]
    %v92 = vld [vmem:[%s0 + $0x208] sm:$0xff]
    %v93 = vld [vmem:[%s0 + $0x210] sm:$0xff]
    %v94 = vld [vmem:[%s0 + $0x218] sm:$0xff]
    %v95 = vld [vmem:[%s0 + $0x220] sm:$0xff]
    %v96 = vld [vmem:[%s0 + $0x228] sm:$0xff]
    %v97 = vld [vmem:[%s0 + $0x230] sm:$0xff]
    %v98 = vld [vmem:[%s0 + $0x238] sm:$0xff]
    %v99 = vld [vmem:[%s0 + $0x240] sm:$0xff]
    %v100 = vld [vmem:[%s0 + $0x248] sm:$0xff]
    %v101 = vld [vmem:[%s0 + $0x250] sm:$0xff]
    %v102 = vld [vmem:[%s0 + $0x258] sm:$0xff]
    %v103 = vld [vmem:[%s0 + $0x260] sm:$0xff]
    %v104 = vld [vmem:[%s0 + $0x268] sm:$0xff]
    %v105 = vld [vmem:[%s0 + $0x270] sm:$0xff]
    %v106 = vld [vmem:[%s0 + $0x278] sm:$0xff]
    %v107 = vld [vmem:[%s0 + $0x280] sm:$0xff]
    %v108 = vld [vmem:[%s0 + $0x288] sm:$0xff]
    %v109 = vld [vmem:[%s0 + $0x290] sm:$0xff]
    %v110 = vld [vmem:[%s0 + $0x298] sm:$0xff]
    %v111 = vld [vmem:[%s0 + $0x2a0] sm:$0xff]
    %v112 = vld [vmem:[%s0 + $0x2a8] sm:$0xff]
    %v113 = vld [vmem:[%s0 + $0x2b0] sm:$0xff]
    %v114 = vld [vmem:[%s0 + $0x2b8] sm:$0xff]
    %v115 = vld [vmem:[%s0 + $0x2c0] sm:$0xff]
    %v116 = vld [vmem:[%s0 + $0x2c8] sm:$0xff]
    %v117 = vld [vmem:[%s0 + $0x2d0] sm:$0xff]
    %v118 = vld [vmem:[%s0 + $0x2d8] sm:$0xff]
    %v119 = vld [vmem:[%s0 + $0x2e0] sm:$0xff]
    %v120 = vld [vmem:[%s0 + $0x2e8] sm:$0xff]
    %v121 = vld [vmem:[%s0 + $0x2f0] sm:$0xff]
    %v122 = vld [vmem:[%s0 + $0x2f8] sm:$0xff]
    %v123 = vld [vmem:[%s0 + $0x300] sm:$0xff]
    %v124 = vld [vmem:[%s0 + $0x308] sm:$0xff]
    %v125 = vld [vmem:[%s0 + $0x310] sm:$0xff]
    %v126 = vld [vmem:[%s0 + $0x318] sm:$0xff]
    %v127 = vld [vmem:[%s0 + $0x320] sm:$0xff]
    %v128 = vld [vmem:[%s0 + $0x328] sm:$0xff]
    %v129 = vld [vmem:[%s0 + $0x330] sm:$0xff]
    %v130 = vld [vmem:[%s0 + $0x338] sm:$0xff]
    %v131 = vld [vmem:[%s0 + $0x340] sm:$0xff]
    %v132 = vld [vmem:[%s0 + $0x348] sm:$0xff]
    %v133 = vld [vmem:[%s0 + $0x350] sm:$0xff]
    %v134 = vld [vmem:[%s0 + $0x358] sm:$0xff]
    %v135 = vld [vmem:[%s0 + $0x360] sm:$0xff]
    %v136 = vld [vmem:[%s0 + $0x368] sm:$0xff]
    %v137 = vld [vmem:[%s0 + $0x370] sm:$0xff]
    %v138 = vld [vmem:[%s0 + $0x378] sm:$0xff]
    %v139 = vld [vmem:[%s0 + $0x380] sm:$0xff]
    %v140 = vld [vmem:[%s0 + $0x388] sm:$0xff]
    %v141 = vld [vmem:[%s0 + $0x390] sm:$0xff]
    %v142 = vld [vmem:[%s0 + $0x398] sm:$0xff]
    %v143 = vld [vmem:[%s0 + $0x3a0] sm:$0xff]
    %v144 = vld [vmem:[%s0 + $0x3a8] sm:$0xff]
    %v145 = vld [vmem:[%s0 + $0x3b0] sm:$0xff]
    %v146 = vld [vmem:[%s0 + $0x3b8] sm:$0xff]
    %v147 = vld [vmem:[%s0 + $0x3c0] sm:$0xff]
    %v148 = vld [vmem:[%s0 + $0x3c8] sm:$0xff]
    %v149 = vld [vmem:[%s0 + $0x3d0] sm:$0xff]
    %v150 = vld [vmem:[%s0 + $0x3d8] sm:$0xff]
    %v151 = vld [vmem:[%s0 + $0x3e0] sm:$0xff]
    %v152 = vld [vmem:[%s0 + $0x3e8] sm:$0xff]
    %v153 = vld [vmem:[%s0 + $0x3f0] sm:$0xff]
    %v154 = vld [vmem:[%s0 + $0x3f8] sm:$0xff]
    %v155 = vld [vmem:[#allocation2] sm:$0xff]
    %vm156 = vcmask 130048
    %v157 = vsel %vm156, %v27, 0.0
    %158 = vadd.xlane.f32.xlu0 %v157
    %v159 = vpop.xlane.xlu0 %158
    %v160 = vsel %vm156, %v28, 0.0
    %161 = vadd.xlane.f32.xlu0 %v160
    %v162 = vpop.xlane.xlu0 %161
    %v163 = vsel %vm156, %v29, 0.0
    %164 = vadd.xlane.f32.xlu0 %v163
    %v165 = vpop.xlane.xlu0 %164
    %v166 = vsel %vm156, %v30, 0.0
    %167 = vadd.xlane.f32.xlu0 %v166
    %v168 = vpop.xlane.xlu0 %167
    %v169 = vsel %vm156, %v31, 0.0
    %170 = vadd.xlane.f32.xlu0 %v169
    %v171 = vpop.xlane.xlu0 %170
    %v172 = vsel %vm156, %v32, 0.0
    %173 = vadd.xlane.f32.xlu0 %v172
    %v174 = vpop.xlane.xlu0 %173
    %v175 = vsel %vm156, %v33, 0.0
    %176 = vadd.xlane.f32.xlu0 %v175
    %v177 = vpop.xlane.xlu0 %176
    %v178 = vsel %vm156, %v34, 0.0
    %179 = vadd.xlane.f32.xlu0 %v178
    %v180 = vpop.xlane.xlu0 %179
    %v181 = vsel %vm156, %v35, 0.0
    %182 = vadd.xlane.f32.xlu0 %v181
    %v183 = vpop.xlane.xlu0 %182
    %v184 = vsel %vm156, %v36, 0.0
    %185 = vadd.xlane.f32.xlu0 %v184
    %v186 = vpop.xlane.xlu0 %185
    %v187 = vsel %vm156, %v37, 0.0
    %188 = vadd.xlane.f32.xlu0 %v187
    %v189 = vpop.xlane.xlu0 %188
    %v190 = vsel %vm156, %v38, 0.0
    %191 = vadd.xlane.f32.xlu0 %v190
    %v192 = vpop.xlane.xlu0 %191
    %v193 = vsel %vm156, %v39, 0.0
    %194 = vadd.xlane.f32.xlu0 %v193
    %v195 = vpop.xlane.xlu0 %194
    %v196 = vsel %vm156, %v40, 0.0
    %197 = vadd.xlane.f32.xlu0 %v196
    %v198 = vpop.xlane.xlu0 %197
    %v199 = vsel %vm156, %v41, 0.0
    %200 = vadd.xlane.f32.xlu0 %v199
    %v201 = vpop.xlane.xlu0 %200
    %v202 = vsel %vm156, %v42, 0.0
    %203 = vadd.xlane.f32.xlu0 %v202
    %v204 = vpop.xlane.xlu0 %203
    %v205 = vsel %vm156, %v43, 0.0
    %206 = vadd.xlane.f32.xlu0 %v205
    %v207 = vpop.xlane.xlu0 %206
    %v208 = vsel %vm156, %v44, 0.0
    %209 = vadd.xlane.f32.xlu0 %v208
    %v210 = vpop.xlane.xlu0 %209
    %v211 = vsel %vm156, %v45, 0.0
    %212 = vadd.xlane.f32.xlu0 %v211
    %v213 = vpop.xlane.xlu0 %212
    %v214 = vsel %vm156, %v46, 0.0
    %215 = vadd.xlane.f32.xlu0 %v214
    %v216 = vpop.xlane.xlu0 %215
    %v217 = vsel %vm156, %v47, 0.0
    %218 = vadd.xlane.f32.xlu0 %v217
    %v219 = vpop.xlane.xlu0 %218
    %v220 = vsel %vm156, %v48, 0.0
    %221 = vadd.xlane.f32.xlu0 %v220
    %v222 = vpop.xlane.xlu0 %221
    %v223 = vsel %vm156, %v49, 0.0
    %224 = vadd.xlane.f32.xlu0 %v223
    %v225 = vpop.xlane.xlu0 %224
    %v226 = vsel %vm156, %v50, 0.0
    %227 = vadd.xlane.f32.xlu0 %v226
    %v228 = vpop.xlane.xlu0 %227
    %v229 = vsel %vm156, %v51, 0.0
    %230 = vadd.xlane.f32.xlu0 %v229
    %v231 = vpop.xlane.xlu0 %230
    %v232 = vsel %vm156, %v52, 0.0
    %233 = vadd.xlane.f32.xlu0 %v232
    %v234 = vpop.xlane.xlu0 %233
    %v235 = vsel %vm156, %v53, 0.0
    %236 = vadd.xlane.f32.xlu0 %v235
    %v237 = vpop.xlane.xlu0 %236
    %v238 = vsel %vm156, %v54, 0.0
    %239 = vadd.xlane.f32.xlu0 %v238
    %v240 = vpop.xlane.xlu0 %239
    %v241 = vsel %vm156, %v55, 0.0
    %242 = vadd.xlane.f32.xlu0 %v241
    %v243 = vpop.xlane.xlu0 %242
    %v244 = vsel %vm156, %v56, 0.0
    %245 = vadd.xlane.f32.xlu0 %v244
    %v246 = vpop.xlane.xlu0 %245
    %v247 = vsel %vm156, %v57, 0.0
    %248 = vadd.xlane.f32.xlu0 %v247
    %v249 = vpop.xlane.xlu0 %248
    %v250 = vsel %vm156, %v58, 0.0
    %251 = vadd.xlane.f32.xlu0 %v250
    %v252 = vpop.xlane.xlu0 %251
    %v253 = vsel %vm156, %v59, 0.0
    %254 = vadd.xlane.f32.xlu0 %v253
    %v255 = vpop.xlane.xlu0 %254
    %v256 = vsel %vm156, %v60, 0.0
    %257 = vadd.xlane.f32.xlu0 %v256
    %v258 = vpop.xlane.xlu0 %257
    %v259 = vsel %vm156, %v61, 0.0
    %260 = vadd.xlane.f32.xlu0 %v259
    %v261 = vpop.xlane.xlu0 %260
    %v262 = vsel %vm156, %v62, 0.0
    %263 = vadd.xlane.f32.xlu0 %v262
    %v264 = vpop.xlane.xlu0 %263
    %v265 = vsel %vm156, %v63, 0.0
    %266 = vadd.xlane.f32.xlu0 %v265
    %v267 = vpop.xlane.xlu0 %266
    %v268 = vsel %vm156, %v64, 0.0
    %269 = vadd.xlane.f32.xlu0 %v268
    %v270 = vpop.xlane.xlu0 %269
    %v271 = vsel %vm156, %v65, 0.0
    %272 = vadd.xlane.f32.xlu0 %v271
    %v273 = vpop.xlane.xlu0 %272
    %v274 = vsel %vm156, %v66, 0.0
    %275 = vadd.xlane.f32.xlu0 %v274
    %v276 = vpop.xlane.xlu0 %275
    %v277 = vsel %vm156, %v67, 0.0
    %278 = vadd.xlane.f32.xlu0 %v277
    %v279 = vpop.xlane.xlu0 %278
    %v280 = vsel %vm156, %v68, 0.0
    %281 = vadd.xlane.f32.xlu0 %v280
    %v282 = vpop.xlane.xlu0 %281
    %v283 = vsel %vm156, %v69, 0.0
    %284 = vadd.xlane.f32.xlu0 %v283
    %v285 = vpop.xlane.xlu0 %284
    %v286 = vsel %vm156, %v70, 0.0
    %287 = vadd.xlane.f32.xlu0 %v286
    %v288 = vpop.xlane.xlu0 %287
    %v289 = vsel %vm156, %v71, 0.0
    %290 = vadd.xlane.f32.xlu0 %v289
    %v291 = vpop.xlane.xlu0 %290
    %v292 = vsel %vm156, %v72, 0.0
    %293 = vadd.xlane.f32.xlu0 %v292
    %v294 = vpop.xlane.xlu0 %293
    %v295 = vsel %vm156, %v73, 0.0
    %296 = vadd.xlane.f32.xlu0 %v295
    %v297 = vpop.xlane.xlu0 %296
    %v298 = vsel %vm156, %v74, 0.0
    %299 = vadd.xlane.f32.xlu0 %v298
    %v300 = vpop.xlane.xlu0 %299
    %v301 = vsel %vm156, %v75, 0.0
    %302 = vadd.xlane.f32.xlu0 %v301
    %v303 = vpop.xlane.xlu0 %302
    %v304 = vsel %vm156, %v76, 0.0
    %305 = vadd.xlane.f32.xlu0 %v304
    %v306 = vpop.xlane.xlu0 %305
    %v307 = vsel %vm156, %v77, 0.0
    %308 = vadd.xlane.f32.xlu0 %v307
    %v309 = vpop.xlane.xlu0 %308
    %v310 = vsel %vm156, %v78, 0.0
    %311 = vadd.xlane.f32.xlu0 %v310
    %v312 = vpop.xlane.xlu0 %311
    %v313 = vsel %vm156, %v79, 0.0
    %314 = vadd.xlane.f32.xlu0 %v313
    %v315 = vpop.xlane.xlu0 %314
    %v316 = vsel %vm156, %v80, 0.0
    %317 = vadd.xlane.f32.xlu0 %v316
    %v318 = vpop.xlane.xlu0 %317
    %v319 = vsel %vm156, %v81, 0.0
    %320 = vadd.xlane.f32.xlu0 %v319
    %v321 = vpop.xlane.xlu0 %320
    %v322 = vsel %vm156, %v82, 0.0
    %323 = vadd.xlane.f32.xlu0 %v322
    %v324 = vpop.xlane.xlu0 %323
    %v325 = vsel %vm156, %v83, 0.0
    %326 = vadd.xlane.f32.xlu0 %v325
    %v327 = vpop.xlane.xlu0 %326
    %v328 = vsel %vm156, %v84, 0.0
    %329 = vadd.xlane.f32.xlu0 %v328
    %v330 = vpop.xlane.xlu0 %329
    %v331 = vsel %vm156, %v85, 0.0
    %332 = vadd.xlane.f32.xlu0 %v331
    %v333 = vpop.xlane.xlu0 %332
    %v334 = vsel %vm156, %v86, 0.0
    %335 = vadd.xlane.f32.xlu0 %v334
    %v336 = vpop.xlane.xlu0 %335
    %v337 = vsel %vm156, %v87, 0.0
    %338 = vadd.xlane.f32.xlu0 %v337
    %v339 = vpop.xlane.xlu0 %338
    %v340 = vsel %vm156, %v88, 0.0
    %341 = vadd.xlane.f32.xlu0 %v340
    %v342 = vpop.xlane.xlu0 %341
    %v343 = vsel %vm156, %v89, 0.0
    %344 = vadd.xlane.f32.xlu0 %v343
    %v345 = vpop.xlane.xlu0 %344
    %v346 = vsel %vm156, %v90, 0.0
    %347 = vadd.xlane.f32.xlu0 %v346
    %v348 = vpop.xlane.xlu0 %347
    %v349 = vsel %vm156, %v91, 0.0
    %350 = vadd.xlane.f32.xlu0 %v349
    %v351 = vpop.xlane.xlu0 %350
    %v352 = vsel %vm156, %v92, 0.0
    %353 = vadd.xlane.f32.xlu0 %v352
    %v354 = vpop.xlane.xlu0 %353
    %v355 = vsel %vm156, %v93, 0.0
    %356 = vadd.xlane.f32.xlu0 %v355
    %v357 = vpop.xlane.xlu0 %356
    %v358 = vsel %vm156, %v94, 0.0
    %359 = vadd.xlane.f32.xlu0 %v358
    %v360 = vpop.xlane.xlu0 %359
    %v361 = vsel %vm156, %v95, 0.0
    %362 = vadd.xlane.f32.xlu0 %v361
    %v363 = vpop.xlane.xlu0 %362
    %v364 = vsel %vm156, %v96, 0.0
    %365 = vadd.xlane.f32.xlu0 %v364
    %v366 = vpop.xlane.xlu0 %365
    %v367 = vsel %vm156, %v97, 0.0
    %368 = vadd.xlane.f32.xlu0 %v367
    %v369 = vpop.xlane.xlu0 %368
    %v370 = vsel %vm156, %v98, 0.0
    %371 = vadd.xlane.f32.xlu0 %v370
    %v372 = vpop.xlane.xlu0 %371
    %v373 = vsel %vm156, %v99, 0.0
    %374 = vadd.xlane.f32.xlu0 %v373
    %v375 = vpop.xlane.xlu0 %374
    %v376 = vsel %vm156, %v100, 0.0
    %377 = vadd.xlane.f32.xlu0 %v376
    %v378 = vpop.xlane.xlu0 %377
    %v379 = vsel %vm156, %v101, 0.0
    %380 = vadd.xlane.f32.xlu0 %v379
    %v381 = vpop.xlane.xlu0 %380
    %v382 = vsel %vm156, %v102, 0.0
    %383 = vadd.xlane.f32.xlu0 %v382
    %v384 = vpop.xlane.xlu0 %383
    %v385 = vsel %vm156, %v103, 0.0
    %386 = vadd.xlane.f32.xlu0 %v385
    %v387 = vpop.xlane.xlu0 %386
    %v388 = vsel %vm156, %v104, 0.0
    %389 = vadd.xlane.f32.xlu0 %v388
    %v390 = vpop.xlane.xlu0 %389
    %v391 = vsel %vm156, %v105, 0.0
    %392 = vadd.xlane.f32.xlu0 %v391
    %v393 = vpop.xlane.xlu0 %392
    %v394 = vsel %vm156, %v106, 0.0
    %395 = vadd.xlane.f32.xlu0 %v394
    %v396 = vpop.xlane.xlu0 %395
    %v397 = vsel %vm156, %v107, 0.0
    %398 = vadd.xlane.f32.xlu0 %v397
    %v399 = vpop.xlane.xlu0 %398
    %v400 = vsel %vm156, %v108, 0.0
    %401 = vadd.xlane.f32.xlu0 %v400
    %v402 = vpop.xlane.xlu0 %401
    %v403 = vsel %vm156, %v109, 0.0
    %404 = vadd.xlane.f32.xlu0 %v403
    %v405 = vpop.xlane.xlu0 %404
    %v406 = vsel %vm156, %v110, 0.0
    %407 = vadd.xlane.f32.xlu0 %v406
    %v408 = vpop.xlane.xlu0 %407
    %v409 = vsel %vm156, %v111, 0.0
    %410 = vadd.xlane.f32.xlu0 %v409
    %v411 = vpop.xlane.xlu0 %410
    %v412 = vsel %vm156, %v112, 0.0
    %413 = vadd.xlane.f32.xlu0 %v412
    %v414 = vpop.xlane.xlu0 %413
    %v415 = vsel %vm156, %v113, 0.0
    %416 = vadd.xlane.f32.xlu0 %v415
    %v417 = vpop.xlane.xlu0 %416
    %v418 = vsel %vm156, %v114, 0.0
    %419 = vadd.xlane.f32.xlu0 %v418
    %v420 = vpop.xlane.xlu0 %419
    %v421 = vsel %vm156, %v115, 0.0
    %422 = vadd.xlane.f32.xlu0 %v421
    %v423 = vpop.xlane.xlu0 %422
    %v424 = vsel %vm156, %v116, 0.0
    %425 = vadd.xlane.f32.xlu0 %v424
    %v426 = vpop.xlane.xlu0 %425
    %v427 = vsel %vm156, %v117, 0.0
    %428 = vadd.xlane.f32.xlu0 %v427
    %v429 = vpop.xlane.xlu0 %428
    %v430 = vsel %vm156, %v118, 0.0
    %431 = vadd.xlane.f32.xlu0 %v430
    %v432 = vpop.xlane.xlu0 %431
    %v433 = vsel %vm156, %v119, 0.0
    %434 = vadd.xlane.f32.xlu0 %v433
    %v435 = vpop.xlane.xlu0 %434
    %v436 = vsel %vm156, %v120, 0.0
    %437 = vadd.xlane.f32.xlu0 %v436
    %v438 = vpop.xlane.xlu0 %437
    %v439 = vsel %vm156, %v121, 0.0
    %440 = vadd.xlane.f32.xlu0 %v439
    %v441 = vpop.xlane.xlu0 %440
    %v442 = vsel %vm156, %v122, 0.0
    %443 = vadd.xlane.f32.xlu0 %v442
    %v444 = vpop.xlane.xlu0 %443
    %v445 = vsel %vm156, %v123, 0.0
    %446 = vadd.xlane.f32.xlu0 %v445
    %v447 = vpop.xlane.xlu0 %446
    %v448 = vsel %vm156, %v124, 0.0
    %449 = vadd.xlane.f32.xlu0 %v448
    %v450 = vpop.xlane.xlu0 %449
    %v451 = vsel %vm156, %v125, 0.0
    %452 = vadd.xlane.f32.xlu0 %v451
    %v453 = vpop.xlane.xlu0 %452
    %v454 = vsel %vm156, %v126, 0.0
    %455 = vadd.xlane.f32.xlu0 %v454
    %v456 = vpop.xlane.xlu0 %455
    %v457 = vsel %vm156, %v127, 0.0
    %458 = vadd.xlane.f32.xlu0 %v457
    %v459 = vpop.xlane.xlu0 %458
    %v460 = vsel %vm156, %v128, 0.0
    %461 = vadd.xlane.f32.xlu0 %v460
    %v462 = vpop.xlane.xlu0 %461
    %v463 = vsel %vm156, %v129, 0.0
    %464 = vadd.xlane.f32.xlu0 %v463
    %v465 = vpop.xlane.xlu0 %464
    %v466 = vsel %vm156, %v130, 0.0
    %467 = vadd.xlane.f32.xlu0 %v466
    %v468 = vpop.xlane.xlu0 %467
    %v469 = vsel %vm156, %v131, 0.0
    %470 = vadd.xlane.f32.xlu0 %v469
    %v471 = vpop.xlane.xlu0 %470
    %v472 = vsel %vm156, %v132, 0.0
    %473 = vadd.xlane.f32.xlu0 %v472
    %v474 = vpop.xlane.xlu0 %473
    %v475 = vsel %vm156, %v133, 0.0
    %476 = vadd.xlane.f32.xlu0 %v475
    %v477 = vpop.xlane.xlu0 %476
    %v478 = vsel %vm156, %v134, 0.0
    %479 = vadd.xlane.f32.xlu0 %v478
    %v480 = vpop.xlane.xlu0 %479
    %v481 = vsel %vm156, %v135, 0.0
    %482 = vadd.xlane.f32.xlu0 %v481
    %v483 = vpop.xlane.xlu0 %482
    %v484 = vsel %vm156, %v136, 0.0
    %485 = vadd.xlane.f32.xlu0 %v484
    %v486 = vpop.xlane.xlu0 %485
    %v487 = vsel %vm156, %v137, 0.0
    %488 = vadd.xlane.f32.xlu0 %v487
    %v489 = vpop.xlane.xlu0 %488
    %v490 = vsel %vm156, %v138, 0.0
    %491 = vadd.xlane.f32.xlu0 %v490
    %v492 = vpop.xlane.xlu0 %491
    %v493 = vsel %vm156, %v139, 0.0
    %494 = vadd.xlane.f32.xlu0 %v493
    %v495 = vpop.xlane.xlu0 %494
    %v496 = vsel %vm156, %v140, 0.0
    %497 = vadd.xlane.f32.xlu0 %v496
    %v498 = vpop.xlane.xlu0 %497
    %v499 = vsel %vm156, %v141, 0.0
    %500 = vadd.xlane.f32.xlu0 %v499
    %v501 = vpop.xlane.xlu0 %500
    %v502 = vsel %vm156, %v142, 0.0
    %503 = vadd.xlane.f32.xlu0 %v502
    %v504 = vpop.xlane.xlu0 %503
    %v505 = vsel %vm156, %v143, 0.0
    %506 = vadd.xlane.f32.xlu0 %v505
    %v507 = vpop.xlane.xlu0 %506
    %v508 = vsel %vm156, %v144, 0.0
    %509 = vadd.xlane.f32.xlu0 %v508
    %v510 = vpop.xlane.xlu0 %509
    %v511 = vsel %vm156, %v145, 0.0
    %512 = vadd.xlane.f32.xlu0 %v511
    %v513 = vpop.xlane.xlu0 %512
    %v514 = vsel %vm156, %v146, 0.0
    %515 = vadd.xlane.f32.xlu0 %v514
    %v516 = vpop.xlane.xlu0 %515
    %v517 = vsel %vm156, %v147, 0.0
    %518 = vadd.xlane.f32.xlu0 %v517
    %v519 = vpop.xlane.xlu0 %518
    %v520 = vsel %vm156, %v148, 0.0
    %521 = vadd.xlane.f32.xlu0 %v520
    %v522 = vpop.xlane.xlu0 %521
    %v523 = vsel %vm156, %v149, 0.0
    %524 = vadd.xlane.f32.xlu0 %v523
    %v525 = vpop.xlane.xlu0 %524
    %v526 = vsel %vm156, %v150, 0.0
    %527 = vadd.xlane.f32.xlu0 %v526
    %v528 = vpop.xlane.xlu0 %527
    %v529 = vsel %vm156, %v151, 0.0
    %530 = vadd.xlane.f32.xlu0 %v529
    %v531 = vpop.xlane.xlu0 %530
    %v532 = vsel %vm156, %v152, 0.0
    %533 = vadd.xlane.f32.xlu0 %v532
    %v534 = vpop.xlane.xlu0 %533
    %v535 = vsel %vm156, %v153, 0.0
    %536 = vadd.xlane.f32.xlu0 %v535
    %v537 = vpop.xlane.xlu0 %536
    %v538 = vsel %vm156, %v154, 0.0
    %539 = vadd.xlane.f32.xlu0 %v538
    %v540 = vpop.xlane.xlu0 %539
    %v670 = vunpack.c.l.s4 269488144
    %v671 = vunpack.c.0.s8 %v670
    %v672 = vlaneseq
    %v673 = vshrl.u32 %v672, 7
    %v674 = vsub.s32 %v671, %v673
    %v675 = vrot.slane %v159, %v674
    %v677 = vunpack.c.l.s4 842150450
    %v678 = vunpack.c.0.s8 %v677
    %v679 = vlaneseq
    %v680 = vshrl.u32 %v679, 7
    %v681 = vsub.s32 %v678, %v680
    %v682 = vrot.slane %v159, %v681
    %v684 = vunpack.c.l.s4 1414812756
    %v685 = vunpack.c.0.s8 %v684
    %v686 = vlaneseq
    %v687 = vshrl.u32 %v686, 7
    %v688 = vsub.s32 %v685, %v687
    %v689 = vrot.slane %v159, %v688
    %v691 = vunpack.c.l.s4 1987475062
    %v692 = vunpack.c.0.s8 %v691
    %v693 = vlaneseq
    %v694 = vshrl.u32 %v693, 7
    %v695 = vsub.s32 %v692, %v694
    %v696 = vrot.slane %v159, %v695
    %v698 = vunpack.c.l.s4 269488144
    %v699 = vunpack.c.0.s8 %v698
    %v700 = vlaneseq
    %v701 = vshrl.u32 %v700, 7
    %v702 = vsub.s32 %v699, %v701
    %v703 = vrot.slane %v162, %v702
    %v705 = vunpack.c.l.s4 842150450
    %v706 = vunpack.c.0.s8 %v705
    %v707 = vlaneseq
    %v708 = vshrl.u32 %v707, 7
    %v709 = vsub.s32 %v706, %v708
    %v710 = vrot.slane %v162, %v709
    %v712 = vunpack.c.l.s4 1414812756
    %v713 = vunpack.c.0.s8 %v712
    %v714 = vlaneseq
    %v715 = vshrl.u32 %v714, 7
    %v716 = vsub.s32 %v713, %v715
    %v717 = vrot.slane %v162, %v716
    %v719 = vunpack.c.l.s4 1987475062
    %v720 = vunpack.c.0.s8 %v719
    %v721 = vlaneseq
    %v722 = vshrl.u32 %v721, 7
    %v723 = vsub.s32 %v720, %v722
    %v724 = vrot.slane %v162, %v723
    %v726 = vunpack.c.l.s4 269488144
    %v727 = vunpack.c.0.s8 %v726
    %v728 = vlaneseq
    %v729 = vshrl.u32 %v728, 7
    %v730 = vsub.s32 %v727, %v729
    %v731 = vrot.slane %v165, %v730
    %v733 = vunpack.c.l.s4 842150450
    %v734 = vunpack.c.0.s8 %v733
    %v735 = vlaneseq
    %v736 = vshrl.u32 %v735, 7
    %v737 = vsub.s32 %v734, %v736
    %v738 = vrot.slane %v165, %v737
    %v740 = vunpack.c.l.s4 1414812756
    %v741 = vunpack.c.0.s8 %v740
    %v742 = vlaneseq
    %v743 = vshrl.u32 %v742, 7
    %v744 = vsub.s32 %v741, %v743
    %v745 = vrot.slane %v165, %v744
    %v747 = vunpack.c.l.s4 1987475062
    %v748 = vunpack.c.0.s8 %v747
    %v749 = vlaneseq
    %v750 = vshrl.u32 %v749, 7
    %v751 = vsub.s32 %v748, %v750
    %v752 = vrot.slane %v165, %v751
    %v754 = vunpack.c.l.s4 269488144
    %v755 = vunpack.c.0.s8 %v754
    %v756 = vlaneseq
    %v757 = vshrl.u32 %v756, 7
    %v758 = vsub.s32 %v755, %v757
    %v759 = vrot.slane %v168, %v758
    %v761 = vunpack.c.l.s4 842150450
    %v762 = vunpack.c.0.s8 %v761
    %v763 = vlaneseq
    %v764 = vshrl.u32 %v763, 7
    %v765 = vsub.s32 %v762, %v764
    %v766 = vrot.slane %v168, %v765
    %v768 = vunpack.c.l.s4 1414812756
    %v769 = vunpack.c.0.s8 %v768
    %v770 = vlaneseq
    %v771 = vshrl.u32 %v770, 7
    %v772 = vsub.s32 %v769, %v771
    %v773 = vrot.slane %v168, %v772
    %v775 = vunpack.c.l.s4 1987475062
    %v776 = vunpack.c.0.s8 %v775
    %v777 = vlaneseq
    %v778 = vshrl.u32 %v777, 7
    %v779 = vsub.s32 %v776, %v778
    %v780 = vrot.slane %v168, %v779
    %v782 = vunpack.c.l.s4 269488144
    %v783 = vunpack.c.0.s8 %v782
    %v784 = vlaneseq
    %v785 = vshrl.u32 %v784, 7
    %v786 = vsub.s32 %v783, %v785
    %v787 = vrot.slane %v171, %v786
    %v789 = vunpack.c.l.s4 842150450
    %v790 = vunpack.c.0.s8 %v789
    %v791 = vlaneseq
    %v792 = vshrl.u32 %v791, 7
    %v793 = vsub.s32 %v790, %v792
    %v794 = vrot.slane %v171, %v793
    %v796 = vunpack.c.l.s4 1414812756
    %v797 = vunpack.c.0.s8 %v796
    %v798 = vlaneseq
    %v799 = vshrl.u32 %v798, 7
    %v800 = vsub.s32 %v797, %v799
    %v801 = vrot.slane %v171, %v800
    %v803 = vunpack.c.l.s4 1987475062
    %v804 = vunpack.c.0.s8 %v803
    %v805 = vlaneseq
    %v806 = vshrl.u32 %v805, 7
    %v807 = vsub.s32 %v804, %v806
    %v808 = vrot.slane %v171, %v807
    %v810 = vunpack.c.l.s4 269488144
    %v811 = vunpack.c.0.s8 %v810
    %v812 = vlaneseq
    %v813 = vshrl.u32 %v812, 7
    %v814 = vsub.s32 %v811, %v813
    %v815 = vrot.slane %v174, %v814
    %v817 = vunpack.c.l.s4 842150450
    %v818 = vunpack.c.0.s8 %v817
    %v819 = vlaneseq
    %v820 = vshrl.u32 %v819, 7
    %v821 = vsub.s32 %v818, %v820
    %v822 = vrot.slane %v174, %v821
    %v824 = vunpack.c.l.s4 1414812756
    %v825 = vunpack.c.0.s8 %v824
    %v826 = vlaneseq
    %v827 = vshrl.u32 %v826, 7
    %v828 = vsub.s32 %v825, %v827
    %v829 = vrot.slane %v174, %v828
    %v831 = vunpack.c.l.s4 1987475062
    %v832 = vunpack.c.0.s8 %v831
    %v833 = vlaneseq
    %v834 = vshrl.u32 %v833, 7
    %v835 = vsub.s32 %v832, %v834
    %v836 = vrot.slane %v174, %v835
    %v838 = vunpack.c.l.s4 269488144
    %v839 = vunpack.c.0.s8 %v838
    %v840 = vlaneseq
    %v841 = vshrl.u32 %v840, 7
    %v842 = vsub.s32 %v839, %v841
    %v843 = vrot.slane %v177, %v842
    %v845 = vunpack.c.l.s4 842150450
    %v846 = vunpack.c.0.s8 %v845
    %v847 = vlaneseq
    %v848 = vshrl.u32 %v847, 7
    %v849 = vsub.s32 %v846, %v848
    %v850 = vrot.slane %v177, %v849
    %v852 = vunpack.c.l.s4 1414812756
    %v853 = vunpack.c.0.s8 %v852
    %v854 = vlaneseq
    %v855 = vshrl.u32 %v854, 7
    %v856 = vsub.s32 %v853, %v855
    %v857 = vrot.slane %v177, %v856
    %v859 = vunpack.c.l.s4 1987475062
    %v860 = vunpack.c.0.s8 %v859
    %v861 = vlaneseq
    %v862 = vshrl.u32 %v861, 7
    %v863 = vsub.s32 %v860, %v862
    %v864 = vrot.slane %v177, %v863
    %v866 = vunpack.c.l.s4 269488144
    %v867 = vunpack.c.0.s8 %v866
    %v868 = vlaneseq
    %v869 = vshrl.u32 %v868, 7
    %v870 = vsub.s32 %v867, %v869
    %v871 = vrot.slane %v180, %v870
    %v873 = vunpack.c.l.s4 842150450
    %v874 = vunpack.c.0.s8 %v873
    %v875 = vlaneseq
    %v876 = vshrl.u32 %v875, 7
    %v877 = vsub.s32 %v874, %v876
    %v878 = vrot.slane %v180, %v877
    %v880 = vunpack.c.l.s4 1414812756
    %v881 = vunpack.c.0.s8 %v880
    %v882 = vlaneseq
    %v883 = vshrl.u32 %v882, 7
    %v884 = vsub.s32 %v881, %v883
    %v885 = vrot.slane %v180, %v884
    %v887 = vunpack.c.l.s4 1987475062
    %v888 = vunpack.c.0.s8 %v887
    %v889 = vlaneseq
    %v890 = vshrl.u32 %v889, 7
    %v891 = vsub.s32 %v888, %v890
    %v892 = vrot.slane %v180, %v891
    %v894 = vunpack.c.l.s4 269488144
    %v895 = vunpack.c.0.s8 %v894
    %v896 = vlaneseq
    %v897 = vshrl.u32 %v896, 7
    %v898 = vsub.s32 %v895, %v897
    %v899 = vrot.slane %v183, %v898
    %v901 = vunpack.c.l.s4 842150450
    %v902 = vunpack.c.0.s8 %v901
    %v903 = vlaneseq
    %v904 = vshrl.u32 %v903, 7
    %v905 = vsub.s32 %v902, %v904
    %v906 = vrot.slane %v183, %v905
    %v908 = vunpack.c.l.s4 1414812756
    %v909 = vunpack.c.0.s8 %v908
    %v910 = vlaneseq
    %v911 = vshrl.u32 %v910, 7
    %v912 = vsub.s32 %v909, %v911
    %v913 = vrot.slane %v183, %v912
    %v915 = vunpack.c.l.s4 1987475062
    %v916 = vunpack.c.0.s8 %v915
    %v917 = vlaneseq
    %v918 = vshrl.u32 %v917, 7
    %v919 = vsub.s32 %v916, %v918
    %v920 = vrot.slane %v183, %v919
    %v922 = vunpack.c.l.s4 269488144
    %v923 = vunpack.c.0.s8 %v922
    %v924 = vlaneseq
    %v925 = vshrl.u32 %v924, 7
    %v926 = vsub.s32 %v923, %v925
    %v927 = vrot.slane %v186, %v926
    %v929 = vunpack.c.l.s4 842150450
    %v930 = vunpack.c.0.s8 %v929
    %v931 = vlaneseq
    %v932 = vshrl.u32 %v931, 7
    %v933 = vsub.s32 %v930, %v932
    %v934 = vrot.slane %v186, %v933
    %v936 = vunpack.c.l.s4 1414812756
    %v937 = vunpack.c.0.s8 %v936
    %v938 = vlaneseq
    %v939 = vshrl.u32 %v938, 7
    %v940 = vsub.s32 %v937, %v939
    %v941 = vrot.slane %v186, %v940
    %v943 = vunpack.c.l.s4 1987475062
    %v944 = vunpack.c.0.s8 %v943
    %v945 = vlaneseq
    %v946 = vshrl.u32 %v945, 7
    %v947 = vsub.s32 %v944, %v946
    %v948 = vrot.slane %v186, %v947
    %v950 = vunpack.c.l.s4 269488144
    %v951 = vunpack.c.0.s8 %v950
    %v952 = vlaneseq
    %v953 = vshrl.u32 %v952, 7
    %v954 = vsub.s32 %v951, %v953
    %v955 = vrot.slane %v189, %v954
    %v957 = vunpack.c.l.s4 842150450
    %v958 = vunpack.c.0.s8 %v957
    %v959 = vlaneseq
    %v960 = vshrl.u32 %v959, 7
    %v961 = vsub.s32 %v958, %v960
    %v962 = vrot.slane %v189, %v961
    %v964 = vunpack.c.l.s4 1414812756
    %v965 = vunpack.c.0.s8 %v964
    %v966 = vlaneseq
    %v967 = vshrl.u32 %v966, 7
    %v968 = vsub.s32 %v965, %v967
    %v969 = vrot.slane %v189, %v968
    %v971 = vunpack.c.l.s4 1987475062
    %v972 = vunpack.c.0.s8 %v971
    %v973 = vlaneseq
    %v974 = vshrl.u32 %v973, 7
    %v975 = vsub.s32 %v972, %v974
    %v976 = vrot.slane %v189, %v975
    %v978 = vunpack.c.l.s4 269488144
    %v979 = vunpack.c.0.s8 %v978
    %v980 = vlaneseq
    %v981 = vshrl.u32 %v980, 7
    %v982 = vsub.s32 %v979, %v981
    %v983 = vrot.slane %v192, %v982
    %v985 = vunpack.c.l.s4 842150450
    %v986 = vunpack.c.0.s8 %v985
    %v987 = vlaneseq
    %v988 = vshrl.u32 %v987, 7
    %v989 = vsub.s32 %v986, %v988
    %v990 = vrot.slane %v192, %v989
    %v992 = vunpack.c.l.s4 1414812756
    %v993 = vunpack.c.0.s8 %v992
    %v994 = vlaneseq
    %v995 = vshrl.u32 %v994, 7
    %v996 = vsub.s32 %v993, %v995
    %v997 = vrot.slane %v192, %v996
    %v999 = vunpack.c.l.s4 1987475062
    %v1000 = vunpack.c.0.s8 %v999
    %v1001 = vlaneseq
    %v1002 = vshrl.u32 %v1001, 7
    %v1003 = vsub.s32 %v1000, %v1002
    %v1004 = vrot.slane %v192, %v1003
    %v1006 = vunpack.c.l.s4 269488144
    %v1007 = vunpack.c.0.s8 %v1006
    %v1008 = vlaneseq
    %v1009 = vshrl.u32 %v1008, 7
    %v1010 = vsub.s32 %v1007, %v1009
    %v1011 = vrot.slane %v195, %v1010
    %v1013 = vunpack.c.l.s4 842150450
    %v1014 = vunpack.c.0.s8 %v1013
    %v1015 = vlaneseq
    %v1016 = vshrl.u32 %v1015, 7
    %v1017 = vsub.s32 %v1014, %v1016
    %v1018 = vrot.slane %v195, %v1017
    %v1020 = vunpack.c.l.s4 1414812756
    %v1021 = vunpack.c.0.s8 %v1020
    %v1022 = vlaneseq
    %v1023 = vshrl.u32 %v1022, 7
    %v1024 = vsub.s32 %v1021, %v1023
    %v1025 = vrot.slane %v195, %v1024
    %v1027 = vunpack.c.l.s4 1987475062
    %v1028 = vunpack.c.0.s8 %v1027
    %v1029 = vlaneseq
    %v1030 = vshrl.u32 %v1029, 7
    %v1031 = vsub.s32 %v1028, %v1030
    %v1032 = vrot.slane %v195, %v1031
    %v1034 = vunpack.c.l.s4 269488144
    %v1035 = vunpack.c.0.s8 %v1034
    %v1036 = vlaneseq
    %v1037 = vshrl.u32 %v1036, 7
    %v1038 = vsub.s32 %v1035, %v1037
    %v1039 = vrot.slane %v198, %v1038
    %v1041 = vunpack.c.l.s4 842150450
    %v1042 = vunpack.c.0.s8 %v1041
    %v1043 = vlaneseq
    %v1044 = vshrl.u32 %v1043, 7
    %v1045 = vsub.s32 %v1042, %v1044
    %v1046 = vrot.slane %v198, %v1045
    %v1048 = vunpack.c.l.s4 1414812756
    %v1049 = vunpack.c.0.s8 %v1048
    %v1050 = vlaneseq
    %v1051 = vshrl.u32 %v1050, 7
    %v1052 = vsub.s32 %v1049, %v1051
    %v1053 = vrot.slane %v198, %v1052
    %v1055 = vunpack.c.l.s4 1987475062
    %v1056 = vunpack.c.0.s8 %v1055
    %v1057 = vlaneseq
    %v1058 = vshrl.u32 %v1057, 7
    %v1059 = vsub.s32 %v1056, %v1058
    %v1060 = vrot.slane %v198, %v1059
    %v1062 = vunpack.c.l.s4 269488144
    %v1063 = vunpack.c.0.s8 %v1062
    %v1064 = vlaneseq
    %v1065 = vshrl.u32 %v1064, 7
    %v1066 = vsub.s32 %v1063, %v1065
    %v1067 = vrot.slane %v201, %v1066
    %v1069 = vunpack.c.l.s4 842150450
    %v1070 = vunpack.c.0.s8 %v1069
    %v1071 = vlaneseq
    %v1072 = vshrl.u32 %v1071, 7
    %v1073 = vsub.s32 %v1070, %v1072
    %v1074 = vrot.slane %v201, %v1073
    %v1076 = vunpack.c.l.s4 1414812756
    %v1077 = vunpack.c.0.s8 %v1076
    %v1078 = vlaneseq
    %v1079 = vshrl.u32 %v1078, 7
    %v1080 = vsub.s32 %v1077, %v1079
    %v1081 = vrot.slane %v201, %v1080
    %v1083 = vunpack.c.l.s4 1987475062
    %v1084 = vunpack.c.0.s8 %v1083
    %v1085 = vlaneseq
    %v1086 = vshrl.u32 %v1085, 7
    %v1087 = vsub.s32 %v1084, %v1086
    %v1088 = vrot.slane %v201, %v1087
    %v1090 = vunpack.c.l.s4 269488144
    %v1091 = vunpack.c.0.s8 %v1090
    %v1092 = vlaneseq
    %v1093 = vshrl.u32 %v1092, 7
    %v1094 = vsub.s32 %v1091, %v1093
    %v1095 = vrot.slane %v204, %v1094
    %v1097 = vunpack.c.l.s4 842150450
    %v1098 = vunpack.c.0.s8 %v1097
    %v1099 = vlaneseq
    %v1100 = vshrl.u32 %v1099, 7
    %v1101 = vsub.s32 %v1098, %v1100
    %v1102 = vrot.slane %v204, %v1101
    %v1104 = vunpack.c.l.s4 1414812756
    %v1105 = vunpack.c.0.s8 %v1104
    %v1106 = vlaneseq
    %v1107 = vshrl.u32 %v1106, 7
    %v1108 = vsub.s32 %v1105, %v1107
    %v1109 = vrot.slane %v204, %v1108
    %v1111 = vunpack.c.l.s4 1987475062
    %v1112 = vunpack.c.0.s8 %v1111
    %v1113 = vlaneseq
    %v1114 = vshrl.u32 %v1113, 7
    %v1115 = vsub.s32 %v1112, %v1114
    %v1116 = vrot.slane %v204, %v1115
    %v1118 = vunpack.c.l.s4 269488144
    %v1119 = vunpack.c.0.s8 %v1118
    %v1120 = vlaneseq
    %v1121 = vshrl.u32 %v1120, 7
    %v1122 = vsub.s32 %v1119, %v1121
    %v1123 = vrot.slane %v207, %v1122
    %v1125 = vunpack.c.l.s4 842150450
    %v1126 = vunpack.c.0.s8 %v1125
    %v1127 = vlaneseq
    %v1128 = vshrl.u32 %v1127, 7
    %v1129 = vsub.s32 %v1126, %v1128
    %v1130 = vrot.slane %v207, %v1129
    %v1132 = vunpack.c.l.s4 1414812756
    %v1133 = vunpack.c.0.s8 %v1132
    %v1134 = vlaneseq
    %v1135 = vshrl.u32 %v1134, 7
    %v1136 = vsub.s32 %v1133, %v1135
    %v1137 = vrot.slane %v207, %v1136
    %v1139 = vunpack.c.l.s4 1987475062
    %v1140 = vunpack.c.0.s8 %v1139
    %v1141 = vlaneseq
    %v1142 = vshrl.u32 %v1141, 7
    %v1143 = vsub.s32 %v1140, %v1142
    %v1144 = vrot.slane %v207, %v1143
    %v1146 = vunpack.c.l.s4 269488144
    %v1147 = vunpack.c.0.s8 %v1146
    %v1148 = vlaneseq
    %v1149 = vshrl.u32 %v1148, 7
    %v1150 = vsub.s32 %v1147, %v1149
    %v1151 = vrot.slane %v210, %v1150
    %v1153 = vunpack.c.l.s4 842150450
    %v1154 = vunpack.c.0.s8 %v1153
    %v1155 = vlaneseq
    %v1156 = vshrl.u32 %v1155, 7
    %v1157 = vsub.s32 %v1154, %v1156
    %v1158 = vrot.slane %v210, %v1157
    %v1160 = vunpack.c.l.s4 1414812756
    %v1161 = vunpack.c.0.s8 %v1160
    %v1162 = vlaneseq
    %v1163 = vshrl.u32 %v1162, 7
    %v1164 = vsub.s32 %v1161, %v1163
    %v1165 = vrot.slane %v210, %v1164
    %v1167 = vunpack.c.l.s4 1987475062
    %v1168 = vunpack.c.0.s8 %v1167
    %v1169 = vlaneseq
    %v1170 = vshrl.u32 %v1169, 7
    %v1171 = vsub.s32 %v1168, %v1170
    %v1172 = vrot.slane %v210, %v1171
    %v1174 = vunpack.c.l.s4 269488144
    %v1175 = vunpack.c.0.s8 %v1174
    %v1176 = vlaneseq
    %v1177 = vshrl.u32 %v1176, 7
    %v1178 = vsub.s32 %v1175, %v1177
    %v1179 = vrot.slane %v213, %v1178
    %v1181 = vunpack.c.l.s4 842150450
    %v1182 = vunpack.c.0.s8 %v1181
    %v1183 = vlaneseq
    %v1184 = vshrl.u32 %v1183, 7
    %v1185 = vsub.s32 %v1182, %v1184
    %v1186 = vrot.slane %v213, %v1185
    %v1188 = vunpack.c.l.s4 1414812756
    %v1189 = vunpack.c.0.s8 %v1188
    %v1190 = vlaneseq
    %v1191 = vshrl.u32 %v1190, 7
    %v1192 = vsub.s32 %v1189, %v1191
    %v1193 = vrot.slane %v213, %v1192
    %v1195 = vunpack.c.l.s4 1987475062
    %v1196 = vunpack.c.0.s8 %v1195
    %v1197 = vlaneseq
    %v1198 = vshrl.u32 %v1197, 7
    %v1199 = vsub.s32 %v1196, %v1198
    %v1200 = vrot.slane %v213, %v1199
    %v1202 = vunpack.c.l.s4 269488144
    %v1203 = vunpack.c.0.s8 %v1202
    %v1204 = vlaneseq
    %v1205 = vshrl.u32 %v1204, 7
    %v1206 = vsub.s32 %v1203, %v1205
    %v1207 = vrot.slane %v216, %v1206
    %v1209 = vunpack.c.l.s4 842150450
    %v1210 = vunpack.c.0.s8 %v1209
    %v1211 = vlaneseq
    %v1212 = vshrl.u32 %v1211, 7
    %v1213 = vsub.s32 %v1210, %v1212
    %v1214 = vrot.slane %v216, %v1213
    %v1216 = vunpack.c.l.s4 1414812756
    %v1217 = vunpack.c.0.s8 %v1216
    %v1218 = vlaneseq
    %v1219 = vshrl.u32 %v1218, 7
    %v1220 = vsub.s32 %v1217, %v1219
    %v1221 = vrot.slane %v216, %v1220
    %v1223 = vunpack.c.l.s4 1987475062
    %v1224 = vunpack.c.0.s8 %v1223
    %v1225 = vlaneseq
    %v1226 = vshrl.u32 %v1225, 7
    %v1227 = vsub.s32 %v1224, %v1226
    %v1228 = vrot.slane %v216, %v1227
    %v1230 = vunpack.c.l.s4 269488144
    %v1231 = vunpack.c.0.s8 %v1230
    %v1232 = vlaneseq
    %v1233 = vshrl.u32 %v1232, 7
    %v1234 = vsub.s32 %v1231, %v1233
    %v1235 = vrot.slane %v219, %v1234
    %v1237 = vunpack.c.l.s4 842150450
    %v1238 = vunpack.c.0.s8 %v1237
    %v1239 = vlaneseq
    %v1240 = vshrl.u32 %v1239, 7
    %v1241 = vsub.s32 %v1238, %v1240
    %v1242 = vrot.slane %v219, %v1241
    %v1244 = vunpack.c.l.s4 1414812756
    %v1245 = vunpack.c.0.s8 %v1244
    %v1246 = vlaneseq
    %v1247 = vshrl.u32 %v1246, 7
    %v1248 = vsub.s32 %v1245, %v1247
    %v1249 = vrot.slane %v219, %v1248
    %v1251 = vunpack.c.l.s4 1987475062
    %v1252 = vunpack.c.0.s8 %v1251
    %v1253 = vlaneseq
    %v1254 = vshrl.u32 %v1253, 7
    %v1255 = vsub.s32 %v1252, %v1254
    %v1256 = vrot.slane %v219, %v1255
    %v1258 = vunpack.c.l.s4 269488144
    %v1259 = vunpack.c.0.s8 %v1258
    %v1260 = vlaneseq
    %v1261 = vshrl.u32 %v1260, 7
    %v1262 = vsub.s32 %v1259, %v1261
    %v1263 = vrot.slane %v222, %v1262
    %v1265 = vunpack.c.l.s4 842150450
    %v1266 = vunpack.c.0.s8 %v1265
    %v1267 = vlaneseq
    %v1268 = vshrl.u32 %v1267, 7
    %v1269 = vsub.s32 %v1266, %v1268
    %v1270 = vrot.slane %v222, %v1269
    %v1272 = vunpack.c.l.s4 1414812756
    %v1273 = vunpack.c.0.s8 %v1272
    %v1274 = vlaneseq
    %v1275 = vshrl.u32 %v1274, 7
    %v1276 = vsub.s32 %v1273, %v1275
    %v1277 = vrot.slane %v222, %v1276
    %v1279 = vunpack.c.l.s4 1987475062
    %v1280 = vunpack.c.0.s8 %v1279
    %v1281 = vlaneseq
    %v1282 = vshrl.u32 %v1281, 7
    %v1283 = vsub.s32 %v1280, %v1282
    %v1284 = vrot.slane %v222, %v1283
    %v1286 = vunpack.c.l.s4 269488144
    %v1287 = vunpack.c.0.s8 %v1286
    %v1288 = vlaneseq
    %v1289 = vshrl.u32 %v1288, 7
    %v1290 = vsub.s32 %v1287, %v1289
    %v1291 = vrot.slane %v225, %v1290
    %v1293 = vunpack.c.l.s4 842150450
    %v1294 = vunpack.c.0.s8 %v1293
    %v1295 = vlaneseq
    %v1296 = vshrl.u32 %v1295, 7
    %v1297 = vsub.s32 %v1294, %v1296
    %v1298 = vrot.slane %v225, %v1297
    %v1300 = vunpack.c.l.s4 1414812756
    %v1301 = vunpack.c.0.s8 %v1300
    %v1302 = vlaneseq
    %v1303 = vshrl.u32 %v1302, 7
    %v1304 = vsub.s32 %v1301, %v1303
    %v1305 = vrot.slane %v225, %v1304
    %v1307 = vunpack.c.l.s4 1987475062
    %v1308 = vunpack.c.0.s8 %v1307
    %v1309 = vlaneseq
    %v1310 = vshrl.u32 %v1309, 7
    %v1311 = vsub.s32 %v1308, %v1310
    %v1312 = vrot.slane %v225, %v1311
    %v1314 = vunpack.c.l.s4 269488144
    %v1315 = vunpack.c.0.s8 %v1314
    %v1316 = vlaneseq
    %v1317 = vshrl.u32 %v1316, 7
    %v1318 = vsub.s32 %v1315, %v1317
    %v1319 = vrot.slane %v228, %v1318
    %v1321 = vunpack.c.l.s4 842150450
    %v1322 = vunpack.c.0.s8 %v1321
    %v1323 = vlaneseq
    %v1324 = vshrl.u32 %v1323, 7
    %v1325 = vsub.s32 %v1322, %v1324
    %v1326 = vrot.slane %v228, %v1325
    %v1328 = vunpack.c.l.s4 1414812756
    %v1329 = vunpack.c.0.s8 %v1328
    %v1330 = vlaneseq
    %v1331 = vshrl.u32 %v1330, 7
    %v1332 = vsub.s32 %v1329, %v1331
    %v1333 = vrot.slane %v228, %v1332
    %v1335 = vunpack.c.l.s4 1987475062
    %v1336 = vunpack.c.0.s8 %v1335
    %v1337 = vlaneseq
    %v1338 = vshrl.u32 %v1337, 7
    %v1339 = vsub.s32 %v1336, %v1338
    %v1340 = vrot.slane %v228, %v1339
    %v1342 = vunpack.c.l.s4 269488144
    %v1343 = vunpack.c.0.s8 %v1342
    %v1344 = vlaneseq
    %v1345 = vshrl.u32 %v1344, 7
    %v1346 = vsub.s32 %v1343, %v1345
    %v1347 = vrot.slane %v231, %v1346
    %v1349 = vunpack.c.l.s4 842150450
    %v1350 = vunpack.c.0.s8 %v1349
    %v1351 = vlaneseq
    %v1352 = vshrl.u32 %v1351, 7
    %v1353 = vsub.s32 %v1350, %v1352
    %v1354 = vrot.slane %v231, %v1353
    %v1356 = vunpack.c.l.s4 1414812756
    %v1357 = vunpack.c.0.s8 %v1356
    %v1358 = vlaneseq
    %v1359 = vshrl.u32 %v1358, 7
    %v1360 = vsub.s32 %v1357, %v1359
    %v1361 = vrot.slane %v231, %v1360
    %v1363 = vunpack.c.l.s4 1987475062
    %v1364 = vunpack.c.0.s8 %v1363
    %v1365 = vlaneseq
    %v1366 = vshrl.u32 %v1365, 7
    %v1367 = vsub.s32 %v1364, %v1366
    %v1368 = vrot.slane %v231, %v1367
    %v1370 = vunpack.c.l.s4 269488144
    %v1371 = vunpack.c.0.s8 %v1370
    %v1372 = vlaneseq
    %v1373 = vshrl.u32 %v1372, 7
    %v1374 = vsub.s32 %v1371, %v1373
    %v1375 = vrot.slane %v234, %v1374
    %v1377 = vunpack.c.l.s4 842150450
    %v1378 = vunpack.c.0.s8 %v1377
    %v1379 = vlaneseq
    %v1380 = vshrl.u32 %v1379, 7
    %v1381 = vsub.s32 %v1378, %v1380
    %v1382 = vrot.slane %v234, %v1381
    %v1384 = vunpack.c.l.s4 1414812756
    %v1385 = vunpack.c.0.s8 %v1384
    %v1386 = vlaneseq
    %v1387 = vshrl.u32 %v1386, 7
    %v1388 = vsub.s32 %v1385, %v1387
    %v1389 = vrot.slane %v234, %v1388
    %v1391 = vunpack.c.l.s4 1987475062
    %v1392 = vunpack.c.0.s8 %v1391
    %v1393 = vlaneseq
    %v1394 = vshrl.u32 %v1393, 7
    %v1395 = vsub.s32 %v1392, %v1394
    %v1396 = vrot.slane %v234, %v1395
    %v1398 = vunpack.c.l.s4 269488144
    %v1399 = vunpack.c.0.s8 %v1398
    %v1400 = vlaneseq
    %v1401 = vshrl.u32 %v1400, 7
    %v1402 = vsub.s32 %v1399, %v1401
    %v1403 = vrot.slane %v237, %v1402
    %v1405 = vunpack.c.l.s4 842150450
    %v1406 = vunpack.c.0.s8 %v1405
    %v1407 = vlaneseq
    %v1408 = vshrl.u32 %v1407, 7
    %v1409 = vsub.s32 %v1406, %v1408
    %v1410 = vrot.slane %v237, %v1409
    %v1412 = vunpack.c.l.s4 1414812756
    %v1413 = vunpack.c.0.s8 %v1412
    %v1414 = vlaneseq
    %v1415 = vshrl.u32 %v1414, 7
    %v1416 = vsub.s32 %v1413, %v1415
    %v1417 = vrot.slane %v237, %v1416
    %v1419 = vunpack.c.l.s4 1987475062
    %v1420 = vunpack.c.0.s8 %v1419
    %v1421 = vlaneseq
    %v1422 = vshrl.u32 %v1421, 7
    %v1423 = vsub.s32 %v1420, %v1422
    %v1424 = vrot.slane %v237, %v1423
    %v1426 = vunpack.c.l.s4 269488144
    %v1427 = vunpack.c.0.s8 %v1426
    %v1428 = vlaneseq
    %v1429 = vshrl.u32 %v1428, 7
    %v1430 = vsub.s32 %v1427, %v1429
    %v1431 = vrot.slane %v240, %v1430
    %v1433 = vunpack.c.l.s4 842150450
    %v1434 = vunpack.c.0.s8 %v1433
    %v1435 = vlaneseq
    %v1436 = vshrl.u32 %v1435, 7
    %v1437 = vsub.s32 %v1434, %v1436
    %v1438 = vrot.slane %v240, %v1437
    %v1440 = vunpack.c.l.s4 1414812756
    %v1441 = vunpack.c.0.s8 %v1440
    %v1442 = vlaneseq
    %v1443 = vshrl.u32 %v1442, 7
    %v1444 = vsub.s32 %v1441, %v1443
    %v1445 = vrot.slane %v240, %v1444
    %v1447 = vunpack.c.l.s4 1987475062
    %v1448 = vunpack.c.0.s8 %v1447
    %v1449 = vlaneseq
    %v1450 = vshrl.u32 %v1449, 7
    %v1451 = vsub.s32 %v1448, %v1450
    %v1452 = vrot.slane %v240, %v1451
    %v1454 = vunpack.c.l.s4 269488144
    %v1455 = vunpack.c.0.s8 %v1454
    %v1456 = vlaneseq
    %v1457 = vshrl.u32 %v1456, 7
    %v1458 = vsub.s32 %v1455, %v1457
    %v1459 = vrot.slane %v243, %v1458
    %v1461 = vunpack.c.l.s4 842150450
    %v1462 = vunpack.c.0.s8 %v1461
    %v1463 = vlaneseq
    %v1464 = vshrl.u32 %v1463, 7
    %v1465 = vsub.s32 %v1462, %v1464
    %v1466 = vrot.slane %v243, %v1465
    %v1468 = vunpack.c.l.s4 1414812756
    %v1469 = vunpack.c.0.s8 %v1468
    %v1470 = vlaneseq
    %v1471 = vshrl.u32 %v1470, 7
    %v1472 = vsub.s32 %v1469, %v1471
    %v1473 = vrot.slane %v243, %v1472
    %v1475 = vunpack.c.l.s4 1987475062
    %v1476 = vunpack.c.0.s8 %v1475
    %v1477 = vlaneseq
    %v1478 = vshrl.u32 %v1477, 7
    %v1479 = vsub.s32 %v1476, %v1478
    %v1480 = vrot.slane %v243, %v1479
    %v1482 = vunpack.c.l.s4 269488144
    %v1483 = vunpack.c.0.s8 %v1482
    %v1484 = vlaneseq
    %v1485 = vshrl.u32 %v1484, 7
    %v1486 = vsub.s32 %v1483, %v1485
    %v1487 = vrot.slane %v246, %v1486
    %v1489 = vunpack.c.l.s4 842150450
    %v1490 = vunpack.c.0.s8 %v1489
    %v1491 = vlaneseq
    %v1492 = vshrl.u32 %v1491, 7
    %v1493 = vsub.s32 %v1490, %v1492
    %v1494 = vrot.slane %v246, %v1493
    %v1496 = vunpack.c.l.s4 1414812756
    %v1497 = vunpack.c.0.s8 %v1496
    %v1498 = vlaneseq
    %v1499 = vshrl.u32 %v1498, 7
    %v1500 = vsub.s32 %v1497, %v1499
    %v1501 = vrot.slane %v246, %v1500
    %v1503 = vunpack.c.l.s4 1987475062
    %v1504 = vunpack.c.0.s8 %v1503
    %v1505 = vlaneseq
    %v1506 = vshrl.u32 %v1505, 7
    %v1507 = vsub.s32 %v1504, %v1506
    %v1508 = vrot.slane %v246, %v1507
    %v1510 = vunpack.c.l.s4 269488144
    %v1511 = vunpack.c.0.s8 %v1510
    %v1512 = vlaneseq
    %v1513 = vshrl.u32 %v1512, 7
    %v1514 = vsub.s32 %v1511, %v1513
    %v1515 = vrot.slane %v249, %v1514
    %v1517 = vunpack.c.l.s4 842150450
    %v1518 = vunpack.c.0.s8 %v1517
    %v1519 = vlaneseq
    %v1520 = vshrl.u32 %v1519, 7
    %v1521 = vsub.s32 %v1518, %v1520
    %v1522 = vrot.slane %v249, %v1521
    %v1524 = vunpack.c.l.s4 1414812756
    %v1525 = vunpack.c.0.s8 %v1524
    %v1526 = vlaneseq
    %v1527 = vshrl.u32 %v1526, 7
    %v1528 = vsub.s32 %v1525, %v1527
    %v1529 = vrot.slane %v249, %v1528
    %v1531 = vunpack.c.l.s4 1987475062
    %v1532 = vunpack.c.0.s8 %v1531
    %v1533 = vlaneseq
    %v1534 = vshrl.u32 %v1533, 7
    %v1535 = vsub.s32 %v1532, %v1534
    %v1536 = vrot.slane %v249, %v1535
    %v1538 = vunpack.c.l.s4 269488144
    %v1539 = vunpack.c.0.s8 %v1538
    %v1540 = vlaneseq
    %v1541 = vshrl.u32 %v1540, 7
    %v1542 = vsub.s32 %v1539, %v1541
    %v1543 = vrot.slane %v252, %v1542
    %v1545 = vunpack.c.l.s4 842150450
    %v1546 = vunpack.c.0.s8 %v1545
    %v1547 = vlaneseq
    %v1548 = vshrl.u32 %v1547, 7
    %v1549 = vsub.s32 %v1546, %v1548
    %v1550 = vrot.slane %v252, %v1549
    %v1552 = vunpack.c.l.s4 1414812756
    %v1553 = vunpack.c.0.s8 %v1552
    %v1554 = vlaneseq
    %v1555 = vshrl.u32 %v1554, 7
    %v1556 = vsub.s32 %v1553, %v1555
    %v1557 = vrot.slane %v252, %v1556
    %v1559 = vunpack.c.l.s4 1987475062
    %v1560 = vunpack.c.0.s8 %v1559
    %v1561 = vlaneseq
    %v1562 = vshrl.u32 %v1561, 7
    %v1563 = vsub.s32 %v1560, %v1562
    %v1564 = vrot.slane %v252, %v1563
    %v1566 = vunpack.c.l.s4 269488144
    %v1567 = vunpack.c.0.s8 %v1566
    %v1568 = vlaneseq
    %v1569 = vshrl.u32 %v1568, 7
    %v1570 = vsub.s32 %v1567, %v1569
    %v1571 = vrot.slane %v255, %v1570
    %v1573 = vunpack.c.l.s4 842150450
    %v1574 = vunpack.c.0.s8 %v1573
    %v1575 = vlaneseq
    %v1576 = vshrl.u32 %v1575, 7
    %v1577 = vsub.s32 %v1574, %v1576
    %v1578 = vrot.slane %v255, %v1577
    %v1580 = vunpack.c.l.s4 1414812756
    %v1581 = vunpack.c.0.s8 %v1580
    %v1582 = vlaneseq
    %v1583 = vshrl.u32 %v1582, 7
    %v1584 = vsub.s32 %v1581, %v1583
    %v1585 = vrot.slane %v255, %v1584
    %v1587 = vunpack.c.l.s4 1987475062
    %v1588 = vunpack.c.0.s8 %v1587
    %v1589 = vlaneseq
    %v1590 = vshrl.u32 %v1589, 7
    %v1591 = vsub.s32 %v1588, %v1590
    %v1592 = vrot.slane %v255, %v1591
    %v1594 = vunpack.c.l.s4 269488144
    %v1595 = vunpack.c.0.s8 %v1594
    %v1596 = vlaneseq
    %v1597 = vshrl.u32 %v1596, 7
    %v1598 = vsub.s32 %v1595, %v1597
    %v1599 = vrot.slane %v258, %v1598
    %v1601 = vunpack.c.l.s4 842150450
    %v1602 = vunpack.c.0.s8 %v1601
    %v1603 = vlaneseq
    %v1604 = vshrl.u32 %v1603, 7
    %v1605 = vsub.s32 %v1602, %v1604
    %v1606 = vrot.slane %v258, %v1605
    %v1608 = vunpack.c.l.s4 1414812756
    %v1609 = vunpack.c.0.s8 %v1608
    %v1610 = vlaneseq
    %v1611 = vshrl.u32 %v1610, 7
    %v1612 = vsub.s32 %v1609, %v1611
    %v1613 = vrot.slane %v258, %v1612
    %v1615 = vunpack.c.l.s4 1987475062
    %v1616 = vunpack.c.0.s8 %v1615
    %v1617 = vlaneseq
    %v1618 = vshrl.u32 %v1617, 7
    %v1619 = vsub.s32 %v1616, %v1618
    %v1620 = vrot.slane %v258, %v1619
    %v1622 = vunpack.c.l.s4 269488144
    %v1623 = vunpack.c.0.s8 %v1622
    %v1624 = vlaneseq
    %v1625 = vshrl.u32 %v1624, 7
    %v1626 = vsub.s32 %v1623, %v1625
    %v1627 = vrot.slane %v261, %v1626
    %v1629 = vunpack.c.l.s4 842150450
    %v1630 = vunpack.c.0.s8 %v1629
    %v1631 = vlaneseq
    %v1632 = vshrl.u32 %v1631, 7
    %v1633 = vsub.s32 %v1630, %v1632
    %v1634 = vrot.slane %v261, %v1633
    %v1636 = vunpack.c.l.s4 1414812756
    %v1637 = vunpack.c.0.s8 %v1636
    %v1638 = vlaneseq
    %v1639 = vshrl.u32 %v1638, 7
    %v1640 = vsub.s32 %v1637, %v1639
    %v1641 = vrot.slane %v261, %v1640
    %v1643 = vunpack.c.l.s4 1987475062
    %v1644 = vunpack.c.0.s8 %v1643
    %v1645 = vlaneseq
    %v1646 = vshrl.u32 %v1645, 7
    %v1647 = vsub.s32 %v1644, %v1646
    %v1648 = vrot.slane %v261, %v1647
    %v1650 = vunpack.c.l.s4 269488144
    %v1651 = vunpack.c.0.s8 %v1650
    %v1652 = vlaneseq
    %v1653 = vshrl.u32 %v1652, 7
    %v1654 = vsub.s32 %v1651, %v1653
    %v1655 = vrot.slane %v264, %v1654
    %v1657 = vunpack.c.l.s4 842150450
    %v1658 = vunpack.c.0.s8 %v1657
    %v1659 = vlaneseq
    %v1660 = vshrl.u32 %v1659, 7
    %v1661 = vsub.s32 %v1658, %v1660
    %v1662 = vrot.slane %v264, %v1661
    %v1664 = vunpack.c.l.s4 1414812756
    %v1665 = vunpack.c.0.s8 %v1664
    %v1666 = vlaneseq
    %v1667 = vshrl.u32 %v1666, 7
    %v1668 = vsub.s32 %v1665, %v1667
    %v1669 = vrot.slane %v264, %v1668
    %v1671 = vunpack.c.l.s4 1987475062
    %v1672 = vunpack.c.0.s8 %v1671
    %v1673 = vlaneseq
    %v1674 = vshrl.u32 %v1673, 7
    %v1675 = vsub.s32 %v1672, %v1674
    %v1676 = vrot.slane %v264, %v1675
    %v1678 = vunpack.c.l.s4 269488144
    %v1679 = vunpack.c.0.s8 %v1678
    %v1680 = vlaneseq
    %v1681 = vshrl.u32 %v1680, 7
    %v1682 = vsub.s32 %v1679, %v1681
    %v1683 = vrot.slane %v267, %v1682
    %v1685 = vunpack.c.l.s4 842150450
    %v1686 = vunpack.c.0.s8 %v1685
    %v1687 = vlaneseq
    %v1688 = vshrl.u32 %v1687, 7
    %v1689 = vsub.s32 %v1686, %v1688
    %v1690 = vrot.slane %v267, %v1689
    %v1692 = vunpack.c.l.s4 1414812756
    %v1693 = vunpack.c.0.s8 %v1692
    %v1694 = vlaneseq
    %v1695 = vshrl.u32 %v1694, 7
    %v1696 = vsub.s32 %v1693, %v1695
    %v1697 = vrot.slane %v267, %v1696
    %v1699 = vunpack.c.l.s4 1987475062
    %v1700 = vunpack.c.0.s8 %v1699
    %v1701 = vlaneseq
    %v1702 = vshrl.u32 %v1701, 7
    %v1703 = vsub.s32 %v1700, %v1702
    %v1704 = vrot.slane %v267, %v1703
    %v1706 = vunpack.c.l.s4 269488144
    %v1707 = vunpack.c.0.s8 %v1706
    %v1708 = vlaneseq
    %v1709 = vshrl.u32 %v1708, 7
    %v1710 = vsub.s32 %v1707, %v1709
    %v1711 = vrot.slane %v270, %v1710
    %v1713 = vunpack.c.l.s4 842150450
    %v1714 = vunpack.c.0.s8 %v1713
    %v1715 = vlaneseq
    %v1716 = vshrl.u32 %v1715, 7
    %v1717 = vsub.s32 %v1714, %v1716
    %v1718 = vrot.slane %v270, %v1717
    %v1720 = vunpack.c.l.s4 1414812756
    %v1721 = vunpack.c.0.s8 %v1720
    %v1722 = vlaneseq
    %v1723 = vshrl.u32 %v1722, 7
    %v1724 = vsub.s32 %v1721, %v1723
    %v1725 = vrot.slane %v270, %v1724
    %v1727 = vunpack.c.l.s4 1987475062
    %v1728 = vunpack.c.0.s8 %v1727
    %v1729 = vlaneseq
    %v1730 = vshrl.u32 %v1729, 7
    %v1731 = vsub.s32 %v1728, %v1730
    %v1732 = vrot.slane %v270, %v1731
    %v1734 = vunpack.c.l.s4 269488144
    %v1735 = vunpack.c.0.s8 %v1734
    %v1736 = vlaneseq
    %v1737 = vshrl.u32 %v1736, 7
    %v1738 = vsub.s32 %v1735, %v1737
    %v1739 = vrot.slane %v273, %v1738
    %v1741 = vunpack.c.l.s4 842150450
    %v1742 = vunpack.c.0.s8 %v1741
    %v1743 = vlaneseq
    %v1744 = vshrl.u32 %v1743, 7
    %v1745 = vsub.s32 %v1742, %v1744
    %v1746 = vrot.slane %v273, %v1745
    %v1748 = vunpack.c.l.s4 1414812756
    %v1749 = vunpack.c.0.s8 %v1748
    %v1750 = vlaneseq
    %v1751 = vshrl.u32 %v1750, 7
    %v1752 = vsub.s32 %v1749, %v1751
    %v1753 = vrot.slane %v273, %v1752
    %v1755 = vunpack.c.l.s4 1987475062
    %v1756 = vunpack.c.0.s8 %v1755
    %v1757 = vlaneseq
    %v1758 = vshrl.u32 %v1757, 7
    %v1759 = vsub.s32 %v1756, %v1758
    %v1760 = vrot.slane %v273, %v1759
    %v1762 = vunpack.c.l.s4 269488144
    %v1763 = vunpack.c.0.s8 %v1762
    %v1764 = vlaneseq
    %v1765 = vshrl.u32 %v1764, 7
    %v1766 = vsub.s32 %v1763, %v1765
    %v1767 = vrot.slane %v276, %v1766
    %v1769 = vunpack.c.l.s4 842150450
    %v1770 = vunpack.c.0.s8 %v1769
    %v1771 = vlaneseq
    %v1772 = vshrl.u32 %v1771, 7
    %v1773 = vsub.s32 %v1770, %v1772
    %v1774 = vrot.slane %v276, %v1773
    %v1776 = vunpack.c.l.s4 1414812756
    %v1777 = vunpack.c.0.s8 %v1776
    %v1778 = vlaneseq
    %v1779 = vshrl.u32 %v1778, 7
    %v1780 = vsub.s32 %v1777, %v1779
    %v1781 = vrot.slane %v276, %v1780
    %v1783 = vunpack.c.l.s4 1987475062
    %v1784 = vunpack.c.0.s8 %v1783
    %v1785 = vlaneseq
    %v1786 = vshrl.u32 %v1785, 7
    %v1787 = vsub.s32 %v1784, %v1786
    %v1788 = vrot.slane %v276, %v1787
    %v1790 = vunpack.c.l.s4 269488144
    %v1791 = vunpack.c.0.s8 %v1790
    %v1792 = vlaneseq
    %v1793 = vshrl.u32 %v1792, 7
    %v1794 = vsub.s32 %v1791, %v1793
    %v1795 = vrot.slane %v279, %v1794
    %v1797 = vunpack.c.l.s4 842150450
    %v1798 = vunpack.c.0.s8 %v1797
    %v1799 = vlaneseq
    %v1800 = vshrl.u32 %v1799, 7
    %v1801 = vsub.s32 %v1798, %v1800
    %v1802 = vrot.slane %v279, %v1801
    %v1804 = vunpack.c.l.s4 1414812756
    %v1805 = vunpack.c.0.s8 %v1804
    %v1806 = vlaneseq
    %v1807 = vshrl.u32 %v1806, 7
    %v1808 = vsub.s32 %v1805, %v1807
    %v1809 = vrot.slane %v279, %v1808
    %v1811 = vunpack.c.l.s4 1987475062
    %v1812 = vunpack.c.0.s8 %v1811
    %v1813 = vlaneseq
    %v1814 = vshrl.u32 %v1813, 7
    %v1815 = vsub.s32 %v1812, %v1814
    %v1816 = vrot.slane %v279, %v1815
    %v1818 = vunpack.c.l.s4 269488144
    %v1819 = vunpack.c.0.s8 %v1818
    %v1820 = vlaneseq
    %v1821 = vshrl.u32 %v1820, 7
    %v1822 = vsub.s32 %v1819, %v1821
    %v1823 = vrot.slane %v282, %v1822
    %v1825 = vunpack.c.l.s4 842150450
    %v1826 = vunpack.c.0.s8 %v1825
    %v1827 = vlaneseq
    %v1828 = vshrl.u32 %v1827, 7
    %v1829 = vsub.s32 %v1826, %v1828
    %v1830 = vrot.slane %v282, %v1829
    %v1832 = vunpack.c.l.s4 1414812756
    %v1833 = vunpack.c.0.s8 %v1832
    %v1834 = vlaneseq
    %v1835 = vshrl.u32 %v1834, 7
    %v1836 = vsub.s32 %v1833, %v1835
    %v1837 = vrot.slane %v282, %v1836
    %v1839 = vunpack.c.l.s4 1987475062
    %v1840 = vunpack.c.0.s8 %v1839
    %v1841 = vlaneseq
    %v1842 = vshrl.u32 %v1841, 7
    %v1843 = vsub.s32 %v1840, %v1842
    %v1844 = vrot.slane %v282, %v1843
    %v1846 = vunpack.c.l.s4 269488144
    %v1847 = vunpack.c.0.s8 %v1846
    %v1848 = vlaneseq
    %v1849 = vshrl.u32 %v1848, 7
    %v1850 = vsub.s32 %v1847, %v1849
    %v1851 = vrot.slane %v285, %v1850
    %v1853 = vunpack.c.l.s4 842150450
    %v1854 = vunpack.c.0.s8 %v1853
    %v1855 = vlaneseq
    %v1856 = vshrl.u32 %v1855, 7
    %v1857 = vsub.s32 %v1854, %v1856
    %v1858 = vrot.slane %v285, %v1857
    %v1860 = vunpack.c.l.s4 1414812756
    %v1861 = vunpack.c.0.s8 %v1860
    %v1862 = vlaneseq
    %v1863 = vshrl.u32 %v1862, 7
    %v1864 = vsub.s32 %v1861, %v1863
    %v1865 = vrot.slane %v285, %v1864
    %v1867 = vunpack.c.l.s4 1987475062
    %v1868 = vunpack.c.0.s8 %v1867
    %v1869 = vlaneseq
    %v1870 = vshrl.u32 %v1869, 7
    %v1871 = vsub.s32 %v1868, %v1870
    %v1872 = vrot.slane %v285, %v1871
    %v1874 = vunpack.c.l.s4 269488144
    %v1875 = vunpack.c.0.s8 %v1874
    %v1876 = vlaneseq
    %v1877 = vshrl.u32 %v1876, 7
    %v1878 = vsub.s32 %v1875, %v1877
    %v1879 = vrot.slane %v288, %v1878
    %v1881 = vunpack.c.l.s4 842150450
    %v1882 = vunpack.c.0.s8 %v1881
    %v1883 = vlaneseq
    %v1884 = vshrl.u32 %v1883, 7
    %v1885 = vsub.s32 %v1882, %v1884
    %v1886 = vrot.slane %v288, %v1885
    %v1888 = vunpack.c.l.s4 1414812756
    %v1889 = vunpack.c.0.s8 %v1888
    %v1890 = vlaneseq
    %v1891 = vshrl.u32 %v1890, 7
    %v1892 = vsub.s32 %v1889, %v1891
    %v1893 = vrot.slane %v288, %v1892
    %v1895 = vunpack.c.l.s4 1987475062
    %v1896 = vunpack.c.0.s8 %v1895
    %v1897 = vlaneseq
    %v1898 = vshrl.u32 %v1897, 7
    %v1899 = vsub.s32 %v1896, %v1898
    %v1900 = vrot.slane %v288, %v1899
    %v1902 = vunpack.c.l.s4 269488144
    %v1903 = vunpack.c.0.s8 %v1902
    %v1904 = vlaneseq
    %v1905 = vshrl.u32 %v1904, 7
    %v1906 = vsub.s32 %v1903, %v1905
    %v1907 = vrot.slane %v291, %v1906
    %v1909 = vunpack.c.l.s4 842150450
    %v1910 = vunpack.c.0.s8 %v1909
    %v1911 = vlaneseq
    %v1912 = vshrl.u32 %v1911, 7
    %v1913 = vsub.s32 %v1910, %v1912
    %v1914 = vrot.slane %v291, %v1913
    %v1916 = vunpack.c.l.s4 1414812756
    %v1917 = vunpack.c.0.s8 %v1916
    %v1918 = vlaneseq
    %v1919 = vshrl.u32 %v1918, 7
    %v1920 = vsub.s32 %v1917, %v1919
    %v1921 = vrot.slane %v291, %v1920
    %v1923 = vunpack.c.l.s4 1987475062
    %v1924 = vunpack.c.0.s8 %v1923
    %v1925 = vlaneseq
    %v1926 = vshrl.u32 %v1925, 7
    %v1927 = vsub.s32 %v1924, %v1926
    %v1928 = vrot.slane %v291, %v1927
    %v1930 = vunpack.c.l.s4 269488144
    %v1931 = vunpack.c.0.s8 %v1930
    %v1932 = vlaneseq
    %v1933 = vshrl.u32 %v1932, 7
    %v1934 = vsub.s32 %v1931, %v1933
    %v1935 = vrot.slane %v294, %v1934
    %v1937 = vunpack.c.l.s4 842150450
    %v1938 = vunpack.c.0.s8 %v1937
    %v1939 = vlaneseq
    %v1940 = vshrl.u32 %v1939, 7
    %v1941 = vsub.s32 %v1938, %v1940
    %v1942 = vrot.slane %v294, %v1941
    %v1944 = vunpack.c.l.s4 1414812756
    %v1945 = vunpack.c.0.s8 %v1944
    %v1946 = vlaneseq
    %v1947 = vshrl.u32 %v1946, 7
    %v1948 = vsub.s32 %v1945, %v1947
    %v1949 = vrot.slane %v294, %v1948
    %v1951 = vunpack.c.l.s4 1987475062
    %v1952 = vunpack.c.0.s8 %v1951
    %v1953 = vlaneseq
    %v1954 = vshrl.u32 %v1953, 7
    %v1955 = vsub.s32 %v1952, %v1954
    %v1956 = vrot.slane %v294, %v1955
    %v1958 = vunpack.c.l.s4 269488144
    %v1959 = vunpack.c.0.s8 %v1958
    %v1960 = vlaneseq
    %v1961 = vshrl.u32 %v1960, 7
    %v1962 = vsub.s32 %v1959, %v1961
    %v1963 = vrot.slane %v297, %v1962
    %v1965 = vunpack.c.l.s4 842150450
    %v1966 = vunpack.c.0.s8 %v1965
    %v1967 = vlaneseq
    %v1968 = vshrl.u32 %v1967, 7
    %v1969 = vsub.s32 %v1966, %v1968
    %v1970 = vrot.slane %v297, %v1969
    %v1972 = vunpack.c.l.s4 1414812756
    %v1973 = vunpack.c.0.s8 %v1972
    %v1974 = vlaneseq
    %v1975 = vshrl.u32 %v1974, 7
    %v1976 = vsub.s32 %v1973, %v1975
    %v1977 = vrot.slane %v297, %v1976
    %v1979 = vunpack.c.l.s4 1987475062
    %v1980 = vunpack.c.0.s8 %v1979
    %v1981 = vlaneseq
    %v1982 = vshrl.u32 %v1981, 7
    %v1983 = vsub.s32 %v1980, %v1982
    %v1984 = vrot.slane %v297, %v1983
    %v1986 = vunpack.c.l.s4 269488144
    %v1987 = vunpack.c.0.s8 %v1986
    %v1988 = vlaneseq
    %v1989 = vshrl.u32 %v1988, 7
    %v1990 = vsub.s32 %v1987, %v1989
    %v1991 = vrot.slane %v300, %v1990
    %v1993 = vunpack.c.l.s4 842150450
    %v1994 = vunpack.c.0.s8 %v1993
    %v1995 = vlaneseq
    %v1996 = vshrl.u32 %v1995, 7
    %v1997 = vsub.s32 %v1994, %v1996
    %v1998 = vrot.slane %v300, %v1997
    %v2000 = vunpack.c.l.s4 1414812756
    %v2001 = vunpack.c.0.s8 %v2000
    %v2002 = vlaneseq
    %v2003 = vshrl.u32 %v2002, 7
    %v2004 = vsub.s32 %v2001, %v2003
    %v2005 = vrot.slane %v300, %v2004
    %v2007 = vunpack.c.l.s4 1987475062
    %v2008 = vunpack.c.0.s8 %v2007
    %v2009 = vlaneseq
    %v2010 = vshrl.u32 %v2009, 7
    %v2011 = vsub.s32 %v2008, %v2010
    %v2012 = vrot.slane %v300, %v2011
    %v2014 = vunpack.c.l.s4 269488144
    %v2015 = vunpack.c.0.s8 %v2014
    %v2016 = vlaneseq
    %v2017 = vshrl.u32 %v2016, 7
    %v2018 = vsub.s32 %v2015, %v2017
    %v2019 = vrot.slane %v303, %v2018
    %v2021 = vunpack.c.l.s4 842150450
    %v2022 = vunpack.c.0.s8 %v2021
    %v2023 = vlaneseq
    %v2024 = vshrl.u32 %v2023, 7
    %v2025 = vsub.s32 %v2022, %v2024
    %v2026 = vrot.slane %v303, %v2025
    %v2028 = vunpack.c.l.s4 1414812756
    %v2029 = vunpack.c.0.s8 %v2028
    %v2030 = vlaneseq
    %v2031 = vshrl.u32 %v2030, 7
    %v2032 = vsub.s32 %v2029, %v2031
    %v2033 = vrot.slane %v303, %v2032
    %v2035 = vunpack.c.l.s4 1987475062
    %v2036 = vunpack.c.0.s8 %v2035
    %v2037 = vlaneseq
    %v2038 = vshrl.u32 %v2037, 7
    %v2039 = vsub.s32 %v2036, %v2038
    %v2040 = vrot.slane %v303, %v2039
    %v2042 = vunpack.c.l.s4 269488144
    %v2043 = vunpack.c.0.s8 %v2042
    %v2044 = vlaneseq
    %v2045 = vshrl.u32 %v2044, 7
    %v2046 = vsub.s32 %v2043, %v2045
    %v2047 = vrot.slane %v306, %v2046
    %v2049 = vunpack.c.l.s4 842150450
    %v2050 = vunpack.c.0.s8 %v2049
    %v2051 = vlaneseq
    %v2052 = vshrl.u32 %v2051, 7
    %v2053 = vsub.s32 %v2050, %v2052
    %v2054 = vrot.slane %v306, %v2053
    %v2056 = vunpack.c.l.s4 1414812756
    %v2057 = vunpack.c.0.s8 %v2056
    %v2058 = vlaneseq
    %v2059 = vshrl.u32 %v2058, 7
    %v2060 = vsub.s32 %v2057, %v2059
    %v2061 = vrot.slane %v306, %v2060
    %v2063 = vunpack.c.l.s4 1987475062
    %v2064 = vunpack.c.0.s8 %v2063
    %v2065 = vlaneseq
    %v2066 = vshrl.u32 %v2065, 7
    %v2067 = vsub.s32 %v2064, %v2066
    %v2068 = vrot.slane %v306, %v2067
    %v2070 = vunpack.c.l.s4 269488144
    %v2071 = vunpack.c.0.s8 %v2070
    %v2072 = vlaneseq
    %v2073 = vshrl.u32 %v2072, 7
    %v2074 = vsub.s32 %v2071, %v2073
    %v2075 = vrot.slane %v309, %v2074
    %v2077 = vunpack.c.l.s4 842150450
    %v2078 = vunpack.c.0.s8 %v2077
    %v2079 = vlaneseq
    %v2080 = vshrl.u32 %v2079, 7
    %v2081 = vsub.s32 %v2078, %v2080
    %v2082 = vrot.slane %v309, %v2081
    %v2084 = vunpack.c.l.s4 1414812756
    %v2085 = vunpack.c.0.s8 %v2084
    %v2086 = vlaneseq
    %v2087 = vshrl.u32 %v2086, 7
    %v2088 = vsub.s32 %v2085, %v2087
    %v2089 = vrot.slane %v309, %v2088
    %v2091 = vunpack.c.l.s4 1987475062
    %v2092 = vunpack.c.0.s8 %v2091
    %v2093 = vlaneseq
    %v2094 = vshrl.u32 %v2093, 7
    %v2095 = vsub.s32 %v2092, %v2094
    %v2096 = vrot.slane %v309, %v2095
    %v2098 = vunpack.c.l.s4 269488144
    %v2099 = vunpack.c.0.s8 %v2098
    %v2100 = vlaneseq
    %v2101 = vshrl.u32 %v2100, 7
    %v2102 = vsub.s32 %v2099, %v2101
    %v2103 = vrot.slane %v312, %v2102
    %v2105 = vunpack.c.l.s4 842150450
    %v2106 = vunpack.c.0.s8 %v2105
    %v2107 = vlaneseq
    %v2108 = vshrl.u32 %v2107, 7
    %v2109 = vsub.s32 %v2106, %v2108
    %v2110 = vrot.slane %v312, %v2109
    %v2112 = vunpack.c.l.s4 1414812756
    %v2113 = vunpack.c.0.s8 %v2112
    %v2114 = vlaneseq
    %v2115 = vshrl.u32 %v2114, 7
    %v2116 = vsub.s32 %v2113, %v2115
    %v2117 = vrot.slane %v312, %v2116
    %v2119 = vunpack.c.l.s4 1987475062
    %v2120 = vunpack.c.0.s8 %v2119
    %v2121 = vlaneseq
    %v2122 = vshrl.u32 %v2121, 7
    %v2123 = vsub.s32 %v2120, %v2122
    %v2124 = vrot.slane %v312, %v2123
    %v2126 = vunpack.c.l.s4 269488144
    %v2127 = vunpack.c.0.s8 %v2126
    %v2128 = vlaneseq
    %v2129 = vshrl.u32 %v2128, 7
    %v2130 = vsub.s32 %v2127, %v2129
    %v2131 = vrot.slane %v315, %v2130
    %v2133 = vunpack.c.l.s4 842150450
    %v2134 = vunpack.c.0.s8 %v2133
    %v2135 = vlaneseq
    %v2136 = vshrl.u32 %v2135, 7
    %v2137 = vsub.s32 %v2134, %v2136
    %v2138 = vrot.slane %v315, %v2137
    %v2140 = vunpack.c.l.s4 1414812756
    %v2141 = vunpack.c.0.s8 %v2140
    %v2142 = vlaneseq
    %v2143 = vshrl.u32 %v2142, 7
    %v2144 = vsub.s32 %v2141, %v2143
    %v2145 = vrot.slane %v315, %v2144
    %v2147 = vunpack.c.l.s4 1987475062
    %v2148 = vunpack.c.0.s8 %v2147
    %v2149 = vlaneseq
    %v2150 = vshrl.u32 %v2149, 7
    %v2151 = vsub.s32 %v2148, %v2150
    %v2152 = vrot.slane %v315, %v2151
    %v2154 = vunpack.c.l.s4 269488144
    %v2155 = vunpack.c.0.s8 %v2154
    %v2156 = vlaneseq
    %v2157 = vshrl.u32 %v2156, 7
    %v2158 = vsub.s32 %v2155, %v2157
    %v2159 = vrot.slane %v318, %v2158
    %v2161 = vunpack.c.l.s4 842150450
    %v2162 = vunpack.c.0.s8 %v2161
    %v2163 = vlaneseq
    %v2164 = vshrl.u32 %v2163, 7
    %v2165 = vsub.s32 %v2162, %v2164
    %v2166 = vrot.slane %v318, %v2165
    %v2168 = vunpack.c.l.s4 1414812756
    %v2169 = vunpack.c.0.s8 %v2168
    %v2170 = vlaneseq
    %v2171 = vshrl.u32 %v2170, 7
    %v2172 = vsub.s32 %v2169, %v2171
    %v2173 = vrot.slane %v318, %v2172
    %v2175 = vunpack.c.l.s4 1987475062
    %v2176 = vunpack.c.0.s8 %v2175
    %v2177 = vlaneseq
    %v2178 = vshrl.u32 %v2177, 7
    %v2179 = vsub.s32 %v2176, %v2178
    %v2180 = vrot.slane %v318, %v2179
    %v2182 = vunpack.c.l.s4 269488144
    %v2183 = vunpack.c.0.s8 %v2182
    %v2184 = vlaneseq
    %v2185 = vshrl.u32 %v2184, 7
    %v2186 = vsub.s32 %v2183, %v2185
    %v2187 = vrot.slane %v321, %v2186
    %v2189 = vunpack.c.l.s4 842150450
    %v2190 = vunpack.c.0.s8 %v2189
    %v2191 = vlaneseq
    %v2192 = vshrl.u32 %v2191, 7
    %v2193 = vsub.s32 %v2190, %v2192
    %v2194 = vrot.slane %v321, %v2193
    %v2196 = vunpack.c.l.s4 1414812756
    %v2197 = vunpack.c.0.s8 %v2196
    %v2198 = vlaneseq
    %v2199 = vshrl.u32 %v2198, 7
    %v2200 = vsub.s32 %v2197, %v2199
    %v2201 = vrot.slane %v321, %v2200
    %v2203 = vunpack.c.l.s4 1987475062
    %v2204 = vunpack.c.0.s8 %v2203
    %v2205 = vlaneseq
    %v2206 = vshrl.u32 %v2205, 7
    %v2207 = vsub.s32 %v2204, %v2206
    %v2208 = vrot.slane %v321, %v2207
    %v2210 = vunpack.c.l.s4 269488144
    %v2211 = vunpack.c.0.s8 %v2210
    %v2212 = vlaneseq
    %v2213 = vshrl.u32 %v2212, 7
    %v2214 = vsub.s32 %v2211, %v2213
    %v2215 = vrot.slane %v324, %v2214
    %v2217 = vunpack.c.l.s4 842150450
    %v2218 = vunpack.c.0.s8 %v2217
    %v2219 = vlaneseq
    %v2220 = vshrl.u32 %v2219, 7
    %v2221 = vsub.s32 %v2218, %v2220
    %v2222 = vrot.slane %v324, %v2221
    %v2224 = vunpack.c.l.s4 1414812756
    %v2225 = vunpack.c.0.s8 %v2224
    %v2226 = vlaneseq
    %v2227 = vshrl.u32 %v2226, 7
    %v2228 = vsub.s32 %v2225, %v2227
    %v2229 = vrot.slane %v324, %v2228
    %v2231 = vunpack.c.l.s4 1987475062
    %v2232 = vunpack.c.0.s8 %v2231
    %v2233 = vlaneseq
    %v2234 = vshrl.u32 %v2233, 7
    %v2235 = vsub.s32 %v2232, %v2234
    %v2236 = vrot.slane %v324, %v2235
    %v2238 = vunpack.c.l.s4 269488144
    %v2239 = vunpack.c.0.s8 %v2238
    %v2240 = vlaneseq
    %v2241 = vshrl.u32 %v2240, 7
    %v2242 = vsub.s32 %v2239, %v2241
    %v2243 = vrot.slane %v327, %v2242
    %v2245 = vunpack.c.l.s4 842150450
    %v2246 = vunpack.c.0.s8 %v2245
    %v2247 = vlaneseq
    %v2248 = vshrl.u32 %v2247, 7
    %v2249 = vsub.s32 %v2246, %v2248
    %v2250 = vrot.slane %v327, %v2249
    %v2252 = vunpack.c.l.s4 1414812756
    %v2253 = vunpack.c.0.s8 %v2252
    %v2254 = vlaneseq
    %v2255 = vshrl.u32 %v2254, 7
    %v2256 = vsub.s32 %v2253, %v2255
    %v2257 = vrot.slane %v327, %v2256
    %v2259 = vunpack.c.l.s4 1987475062
    %v2260 = vunpack.c.0.s8 %v2259
    %v2261 = vlaneseq
    %v2262 = vshrl.u32 %v2261, 7
    %v2263 = vsub.s32 %v2260, %v2262
    %v2264 = vrot.slane %v327, %v2263
    %v2266 = vunpack.c.l.s4 269488144
    %v2267 = vunpack.c.0.s8 %v2266
    %v2268 = vlaneseq
    %v2269 = vshrl.u32 %v2268, 7
    %v2270 = vsub.s32 %v2267, %v2269
    %v2271 = vrot.slane %v330, %v2270
    %v2273 = vunpack.c.l.s4 842150450
    %v2274 = vunpack.c.0.s8 %v2273
    %v2275 = vlaneseq
    %v2276 = vshrl.u32 %v2275, 7
    %v2277 = vsub.s32 %v2274, %v2276
    %v2278 = vrot.slane %v330, %v2277
    %v2280 = vunpack.c.l.s4 1414812756
    %v2281 = vunpack.c.0.s8 %v2280
    %v2282 = vlaneseq
    %v2283 = vshrl.u32 %v2282, 7
    %v2284 = vsub.s32 %v2281, %v2283
    %v2285 = vrot.slane %v330, %v2284
    %v2287 = vunpack.c.l.s4 1987475062
    %v2288 = vunpack.c.0.s8 %v2287
    %v2289 = vlaneseq
    %v2290 = vshrl.u32 %v2289, 7
    %v2291 = vsub.s32 %v2288, %v2290
    %v2292 = vrot.slane %v330, %v2291
    %v2294 = vunpack.c.l.s4 269488144
    %v2295 = vunpack.c.0.s8 %v2294
    %v2296 = vlaneseq
    %v2297 = vshrl.u32 %v2296, 7
    %v2298 = vsub.s32 %v2295, %v2297
    %v2299 = vrot.slane %v333, %v2298
    %v2301 = vunpack.c.l.s4 842150450
    %v2302 = vunpack.c.0.s8 %v2301
    %v2303 = vlaneseq
    %v2304 = vshrl.u32 %v2303, 7
    %v2305 = vsub.s32 %v2302, %v2304
    %v2306 = vrot.slane %v333, %v2305
    %v2308 = vunpack.c.l.s4 1414812756
    %v2309 = vunpack.c.0.s8 %v2308
    %v2310 = vlaneseq
    %v2311 = vshrl.u32 %v2310, 7
    %v2312 = vsub.s32 %v2309, %v2311
    %v2313 = vrot.slane %v333, %v2312
    %v2315 = vunpack.c.l.s4 1987475062
    %v2316 = vunpack.c.0.s8 %v2315
    %v2317 = vlaneseq
    %v2318 = vshrl.u32 %v2317, 7
    %v2319 = vsub.s32 %v2316, %v2318
    %v2320 = vrot.slane %v333, %v2319
    %v2322 = vunpack.c.l.s4 269488144
    %v2323 = vunpack.c.0.s8 %v2322
    %v2324 = vlaneseq
    %v2325 = vshrl.u32 %v2324, 7
    %v2326 = vsub.s32 %v2323, %v2325
    %v2327 = vrot.slane %v336, %v2326
    %v2329 = vunpack.c.l.s4 842150450
    %v2330 = vunpack.c.0.s8 %v2329
    %v2331 = vlaneseq
    %v2332 = vshrl.u32 %v2331, 7
    %v2333 = vsub.s32 %v2330, %v2332
    %v2334 = vrot.slane %v336, %v2333
    %v2336 = vunpack.c.l.s4 1414812756
    %v2337 = vunpack.c.0.s8 %v2336
    %v2338 = vlaneseq
    %v2339 = vshrl.u32 %v2338, 7
    %v2340 = vsub.s32 %v2337, %v2339
    %v2341 = vrot.slane %v336, %v2340
    %v2343 = vunpack.c.l.s4 1987475062
    %v2344 = vunpack.c.0.s8 %v2343
    %v2345 = vlaneseq
    %v2346 = vshrl.u32 %v2345, 7
    %v2347 = vsub.s32 %v2344, %v2346
    %v2348 = vrot.slane %v336, %v2347
    %v2350 = vunpack.c.l.s4 269488144
    %v2351 = vunpack.c.0.s8 %v2350
    %v2352 = vlaneseq
    %v2353 = vshrl.u32 %v2352, 7
    %v2354 = vsub.s32 %v2351, %v2353
    %v2355 = vrot.slane %v339, %v2354
    %v2357 = vunpack.c.l.s4 842150450
    %v2358 = vunpack.c.0.s8 %v2357
    %v2359 = vlaneseq
    %v2360 = vshrl.u32 %v2359, 7
    %v2361 = vsub.s32 %v2358, %v2360
    %v2362 = vrot.slane %v339, %v2361
    %v2364 = vunpack.c.l.s4 1414812756
    %v2365 = vunpack.c.0.s8 %v2364
    %v2366 = vlaneseq
    %v2367 = vshrl.u32 %v2366, 7
    %v2368 = vsub.s32 %v2365, %v2367
    %v2369 = vrot.slane %v339, %v2368
    %v2371 = vunpack.c.l.s4 1987475062
    %v2372 = vunpack.c.0.s8 %v2371
    %v2373 = vlaneseq
    %v2374 = vshrl.u32 %v2373, 7
    %v2375 = vsub.s32 %v2372, %v2374
    %v2376 = vrot.slane %v339, %v2375
    %v2378 = vunpack.c.l.s4 269488144
    %v2379 = vunpack.c.0.s8 %v2378
    %v2380 = vlaneseq
    %v2381 = vshrl.u32 %v2380, 7
    %v2382 = vsub.s32 %v2379, %v2381
    %v2383 = vrot.slane %v342, %v2382
    %v2385 = vunpack.c.l.s4 842150450
    %v2386 = vunpack.c.0.s8 %v2385
    %v2387 = vlaneseq
    %v2388 = vshrl.u32 %v2387, 7
    %v2389 = vsub.s32 %v2386, %v2388
    %v2390 = vrot.slane %v342, %v2389
    %v2392 = vunpack.c.l.s4 1414812756
    %v2393 = vunpack.c.0.s8 %v2392
    %v2394 = vlaneseq
    %v2395 = vshrl.u32 %v2394, 7
    %v2396 = vsub.s32 %v2393, %v2395
    %v2397 = vrot.slane %v342, %v2396
    %v2399 = vunpack.c.l.s4 1987475062
    %v2400 = vunpack.c.0.s8 %v2399
    %v2401 = vlaneseq
    %v2402 = vshrl.u32 %v2401, 7
    %v2403 = vsub.s32 %v2400, %v2402
    %v2404 = vrot.slane %v342, %v2403
    %v2406 = vunpack.c.l.s4 269488144
    %v2407 = vunpack.c.0.s8 %v2406
    %v2408 = vlaneseq
    %v2409 = vshrl.u32 %v2408, 7
    %v2410 = vsub.s32 %v2407, %v2409
    %v2411 = vrot.slane %v345, %v2410
    %v2413 = vunpack.c.l.s4 842150450
    %v2414 = vunpack.c.0.s8 %v2413
    %v2415 = vlaneseq
    %v2416 = vshrl.u32 %v2415, 7
    %v2417 = vsub.s32 %v2414, %v2416
    %v2418 = vrot.slane %v345, %v2417
    %v2420 = vunpack.c.l.s4 1414812756
    %v2421 = vunpack.c.0.s8 %v2420
    %v2422 = vlaneseq
    %v2423 = vshrl.u32 %v2422, 7
    %v2424 = vsub.s32 %v2421, %v2423
    %v2425 = vrot.slane %v345, %v2424
    %v2427 = vunpack.c.l.s4 1987475062
    %v2428 = vunpack.c.0.s8 %v2427
    %v2429 = vlaneseq
    %v2430 = vshrl.u32 %v2429, 7
    %v2431 = vsub.s32 %v2428, %v2430
    %v2432 = vrot.slane %v345, %v2431
    %v2434 = vunpack.c.l.s4 269488144
    %v2435 = vunpack.c.0.s8 %v2434
    %v2436 = vlaneseq
    %v2437 = vshrl.u32 %v2436, 7
    %v2438 = vsub.s32 %v2435, %v2437
    %v2439 = vrot.slane %v348, %v2438
    %v2441 = vunpack.c.l.s4 842150450
    %v2442 = vunpack.c.0.s8 %v2441
    %v2443 = vlaneseq
    %v2444 = vshrl.u32 %v2443, 7
    %v2445 = vsub.s32 %v2442, %v2444
    %v2446 = vrot.slane %v348, %v2445
    %v2448 = vunpack.c.l.s4 1414812756
    %v2449 = vunpack.c.0.s8 %v2448
    %v2450 = vlaneseq
    %v2451 = vshrl.u32 %v2450, 7
    %v2452 = vsub.s32 %v2449, %v2451
    %v2453 = vrot.slane %v348, %v2452
    %v2455 = vunpack.c.l.s4 1987475062
    %v2456 = vunpack.c.0.s8 %v2455
    %v2457 = vlaneseq
    %v2458 = vshrl.u32 %v2457, 7
    %v2459 = vsub.s32 %v2456, %v2458
    %v2460 = vrot.slane %v348, %v2459
    %v2462 = vunpack.c.l.s4 269488144
    %v2463 = vunpack.c.0.s8 %v2462
    %v2464 = vlaneseq
    %v2465 = vshrl.u32 %v2464, 7
    %v2466 = vsub.s32 %v2463, %v2465
    %v2467 = vrot.slane %v351, %v2466
    %v2469 = vunpack.c.l.s4 842150450
    %v2470 = vunpack.c.0.s8 %v2469
    %v2471 = vlaneseq
    %v2472 = vshrl.u32 %v2471, 7
    %v2473 = vsub.s32 %v2470, %v2472
    %v2474 = vrot.slane %v351, %v2473
    %v2476 = vunpack.c.l.s4 1414812756
    %v2477 = vunpack.c.0.s8 %v2476
    %v2478 = vlaneseq
    %v2479 = vshrl.u32 %v2478, 7
    %v2480 = vsub.s32 %v2477, %v2479
    %v2481 = vrot.slane %v351, %v2480
    %v2483 = vunpack.c.l.s4 1987475062
    %v2484 = vunpack.c.0.s8 %v2483
    %v2485 = vlaneseq
    %v2486 = vshrl.u32 %v2485, 7
    %v2487 = vsub.s32 %v2484, %v2486
    %v2488 = vrot.slane %v351, %v2487
    %v2490 = vunpack.c.l.s4 269488144
    %v2491 = vunpack.c.0.s8 %v2490
    %v2492 = vlaneseq
    %v2493 = vshrl.u32 %v2492, 7
    %v2494 = vsub.s32 %v2491, %v2493
    %v2495 = vrot.slane %v354, %v2494
    %v2497 = vunpack.c.l.s4 842150450
    %v2498 = vunpack.c.0.s8 %v2497
    %v2499 = vlaneseq
    %v2500 = vshrl.u32 %v2499, 7
    %v2501 = vsub.s32 %v2498, %v2500
    %v2502 = vrot.slane %v354, %v2501
    %v2504 = vunpack.c.l.s4 1414812756
    %v2505 = vunpack.c.0.s8 %v2504
    %v2506 = vlaneseq
    %v2507 = vshrl.u32 %v2506, 7
    %v2508 = vsub.s32 %v2505, %v2507
    %v2509 = vrot.slane %v354, %v2508
    %v2511 = vunpack.c.l.s4 1987475062
    %v2512 = vunpack.c.0.s8 %v2511
    %v2513 = vlaneseq
    %v2514 = vshrl.u32 %v2513, 7
    %v2515 = vsub.s32 %v2512, %v2514
    %v2516 = vrot.slane %v354, %v2515
    %v2518 = vunpack.c.l.s4 269488144
    %v2519 = vunpack.c.0.s8 %v2518
    %v2520 = vlaneseq
    %v2521 = vshrl.u32 %v2520, 7
    %v2522 = vsub.s32 %v2519, %v2521
    %v2523 = vrot.slane %v357, %v2522
    %v2525 = vunpack.c.l.s4 842150450
    %v2526 = vunpack.c.0.s8 %v2525
    %v2527 = vlaneseq
    %v2528 = vshrl.u32 %v2527, 7
    %v2529 = vsub.s32 %v2526, %v2528
    %v2530 = vrot.slane %v357, %v2529
    %v2532 = vunpack.c.l.s4 1414812756
    %v2533 = vunpack.c.0.s8 %v2532
    %v2534 = vlaneseq
    %v2535 = vshrl.u32 %v2534, 7
    %v2536 = vsub.s32 %v2533, %v2535
    %v2537 = vrot.slane %v357, %v2536
    %v2539 = vunpack.c.l.s4 1987475062
    %v2540 = vunpack.c.0.s8 %v2539
    %v2541 = vlaneseq
    %v2542 = vshrl.u32 %v2541, 7
    %v2543 = vsub.s32 %v2540, %v2542
    %v2544 = vrot.slane %v357, %v2543
    %v2546 = vunpack.c.l.s4 269488144
    %v2547 = vunpack.c.0.s8 %v2546
    %v2548 = vlaneseq
    %v2549 = vshrl.u32 %v2548, 7
    %v2550 = vsub.s32 %v2547, %v2549
    %v2551 = vrot.slane %v360, %v2550
    %v2553 = vunpack.c.l.s4 842150450
    %v2554 = vunpack.c.0.s8 %v2553
    %v2555 = vlaneseq
    %v2556 = vshrl.u32 %v2555, 7
    %v2557 = vsub.s32 %v2554, %v2556
    %v2558 = vrot.slane %v360, %v2557
    %v2560 = vunpack.c.l.s4 1414812756
    %v2561 = vunpack.c.0.s8 %v2560
    %v2562 = vlaneseq
    %v2563 = vshrl.u32 %v2562, 7
    %v2564 = vsub.s32 %v2561, %v2563
    %v2565 = vrot.slane %v360, %v2564
    %v2567 = vunpack.c.l.s4 1987475062
    %v2568 = vunpack.c.0.s8 %v2567
    %v2569 = vlaneseq
    %v2570 = vshrl.u32 %v2569, 7
    %v2571 = vsub.s32 %v2568, %v2570
    %v2572 = vrot.slane %v360, %v2571
    %v2574 = vunpack.c.l.s4 269488144
    %v2575 = vunpack.c.0.s8 %v2574
    %v2576 = vlaneseq
    %v2577 = vshrl.u32 %v2576, 7
    %v2578 = vsub.s32 %v2575, %v2577
    %v2579 = vrot.slane %v363, %v2578
    %v2581 = vunpack.c.l.s4 842150450
    %v2582 = vunpack.c.0.s8 %v2581
    %v2583 = vlaneseq
    %v2584 = vshrl.u32 %v2583, 7
    %v2585 = vsub.s32 %v2582, %v2584
    %v2586 = vrot.slane %v363, %v2585
    %v2588 = vunpack.c.l.s4 1414812756
    %v2589 = vunpack.c.0.s8 %v2588
    %v2590 = vlaneseq
    %v2591 = vshrl.u32 %v2590, 7
    %v2592 = vsub.s32 %v2589, %v2591
    %v2593 = vrot.slane %v363, %v2592
    %v2595 = vunpack.c.l.s4 1987475062
    %v2596 = vunpack.c.0.s8 %v2595
    %v2597 = vlaneseq
    %v2598 = vshrl.u32 %v2597, 7
    %v2599 = vsub.s32 %v2596, %v2598
    %v2600 = vrot.slane %v363, %v2599
    %v2602 = vunpack.c.l.s4 269488144
    %v2603 = vunpack.c.0.s8 %v2602
    %v2604 = vlaneseq
    %v2605 = vshrl.u32 %v2604, 7
    %v2606 = vsub.s32 %v2603, %v2605
    %v2607 = vrot.slane %v366, %v2606
    %v2609 = vunpack.c.l.s4 842150450
    %v2610 = vunpack.c.0.s8 %v2609
    %v2611 = vlaneseq
    %v2612 = vshrl.u32 %v2611, 7
    %v2613 = vsub.s32 %v2610, %v2612
    %v2614 = vrot.slane %v366, %v2613
    %v2616 = vunpack.c.l.s4 1414812756
    %v2617 = vunpack.c.0.s8 %v2616
    %v2618 = vlaneseq
    %v2619 = vshrl.u32 %v2618, 7
    %v2620 = vsub.s32 %v2617, %v2619
    %v2621 = vrot.slane %v366, %v2620
    %v2623 = vunpack.c.l.s4 1987475062
    %v2624 = vunpack.c.0.s8 %v2623
    %v2625 = vlaneseq
    %v2626 = vshrl.u32 %v2625, 7
    %v2627 = vsub.s32 %v2624, %v2626
    %v2628 = vrot.slane %v366, %v2627
    %v2630 = vunpack.c.l.s4 269488144
    %v2631 = vunpack.c.0.s8 %v2630
    %v2632 = vlaneseq
    %v2633 = vshrl.u32 %v2632, 7
    %v2634 = vsub.s32 %v2631, %v2633
    %v2635 = vrot.slane %v369, %v2634
    %v2637 = vunpack.c.l.s4 842150450
    %v2638 = vunpack.c.0.s8 %v2637
    %v2639 = vlaneseq
    %v2640 = vshrl.u32 %v2639, 7
    %v2641 = vsub.s32 %v2638, %v2640
    %v2642 = vrot.slane %v369, %v2641
    %v2644 = vunpack.c.l.s4 1414812756
    %v2645 = vunpack.c.0.s8 %v2644
    %v2646 = vlaneseq
    %v2647 = vshrl.u32 %v2646, 7
    %v2648 = vsub.s32 %v2645, %v2647
    %v2649 = vrot.slane %v369, %v2648
    %v2651 = vunpack.c.l.s4 1987475062
    %v2652 = vunpack.c.0.s8 %v2651
    %v2653 = vlaneseq
    %v2654 = vshrl.u32 %v2653, 7
    %v2655 = vsub.s32 %v2652, %v2654
    %v2656 = vrot.slane %v369, %v2655
    %v2658 = vunpack.c.l.s4 269488144
    %v2659 = vunpack.c.0.s8 %v2658
    %v2660 = vlaneseq
    %v2661 = vshrl.u32 %v2660, 7
    %v2662 = vsub.s32 %v2659, %v2661
    %v2663 = vrot.slane %v372, %v2662
    %v2665 = vunpack.c.l.s4 842150450
    %v2666 = vunpack.c.0.s8 %v2665
    %v2667 = vlaneseq
    %v2668 = vshrl.u32 %v2667, 7
    %v2669 = vsub.s32 %v2666, %v2668
    %v2670 = vrot.slane %v372, %v2669
    %v2672 = vunpack.c.l.s4 1414812756
    %v2673 = vunpack.c.0.s8 %v2672
    %v2674 = vlaneseq
    %v2675 = vshrl.u32 %v2674, 7
    %v2676 = vsub.s32 %v2673, %v2675
    %v2677 = vrot.slane %v372, %v2676
    %v2679 = vunpack.c.l.s4 1987475062
    %v2680 = vunpack.c.0.s8 %v2679
    %v2681 = vlaneseq
    %v2682 = vshrl.u32 %v2681, 7
    %v2683 = vsub.s32 %v2680, %v2682
    %v2684 = vrot.slane %v372, %v2683
    %v2686 = vunpack.c.l.s4 269488144
    %v2687 = vunpack.c.0.s8 %v2686
    %v2688 = vlaneseq
    %v2689 = vshrl.u32 %v2688, 7
    %v2690 = vsub.s32 %v2687, %v2689
    %v2691 = vrot.slane %v375, %v2690
    %v2693 = vunpack.c.l.s4 842150450
    %v2694 = vunpack.c.0.s8 %v2693
    %v2695 = vlaneseq
    %v2696 = vshrl.u32 %v2695, 7
    %v2697 = vsub.s32 %v2694, %v2696
    %v2698 = vrot.slane %v375, %v2697
    %v2700 = vunpack.c.l.s4 1414812756
    %v2701 = vunpack.c.0.s8 %v2700
    %v2702 = vlaneseq
    %v2703 = vshrl.u32 %v2702, 7
    %v2704 = vsub.s32 %v2701, %v2703
    %v2705 = vrot.slane %v375, %v2704
    %v2707 = vunpack.c.l.s4 1987475062
    %v2708 = vunpack.c.0.s8 %v2707
    %v2709 = vlaneseq
    %v2710 = vshrl.u32 %v2709, 7
    %v2711 = vsub.s32 %v2708, %v2710
    %v2712 = vrot.slane %v375, %v2711
    %v2714 = vunpack.c.l.s4 269488144
    %v2715 = vunpack.c.0.s8 %v2714
    %v2716 = vlaneseq
    %v2717 = vshrl.u32 %v2716, 7
    %v2718 = vsub.s32 %v2715, %v2717
    %v2719 = vrot.slane %v378, %v2718
    %v2721 = vunpack.c.l.s4 842150450
    %v2722 = vunpack.c.0.s8 %v2721
    %v2723 = vlaneseq
    %v2724 = vshrl.u32 %v2723, 7
    %v2725 = vsub.s32 %v2722, %v2724
    %v2726 = vrot.slane %v378, %v2725
    %v2728 = vunpack.c.l.s4 1414812756
    %v2729 = vunpack.c.0.s8 %v2728
    %v2730 = vlaneseq
    %v2731 = vshrl.u32 %v2730, 7
    %v2732 = vsub.s32 %v2729, %v2731
    %v2733 = vrot.slane %v378, %v2732
    %v2735 = vunpack.c.l.s4 1987475062
    %v2736 = vunpack.c.0.s8 %v2735
    %v2737 = vlaneseq
    %v2738 = vshrl.u32 %v2737, 7
    %v2739 = vsub.s32 %v2736, %v2738
    %v2740 = vrot.slane %v378, %v2739
    %v2742 = vunpack.c.l.s4 269488144
    %v2743 = vunpack.c.0.s8 %v2742
    %v2744 = vlaneseq
    %v2745 = vshrl.u32 %v2744, 7
    %v2746 = vsub.s32 %v2743, %v2745
    %v2747 = vrot.slane %v381, %v2746
    %v2749 = vunpack.c.l.s4 842150450
    %v2750 = vunpack.c.0.s8 %v2749
    %v2751 = vlaneseq
    %v2752 = vshrl.u32 %v2751, 7
    %v2753 = vsub.s32 %v2750, %v2752
    %v2754 = vrot.slane %v381, %v2753
    %v2756 = vunpack.c.l.s4 1414812756
    %v2757 = vunpack.c.0.s8 %v2756
    %v2758 = vlaneseq
    %v2759 = vshrl.u32 %v2758, 7
    %v2760 = vsub.s32 %v2757, %v2759
    %v2761 = vrot.slane %v381, %v2760
    %v2763 = vunpack.c.l.s4 1987475062
    %v2764 = vunpack.c.0.s8 %v2763
    %v2765 = vlaneseq
    %v2766 = vshrl.u32 %v2765, 7
    %v2767 = vsub.s32 %v2764, %v2766
    %v2768 = vrot.slane %v381, %v2767
    %v2770 = vunpack.c.l.s4 269488144
    %v2771 = vunpack.c.0.s8 %v2770
    %v2772 = vlaneseq
    %v2773 = vshrl.u32 %v2772, 7
    %v2774 = vsub.s32 %v2771, %v2773
    %v2775 = vrot.slane %v384, %v2774
    %v2777 = vunpack.c.l.s4 842150450
    %v2778 = vunpack.c.0.s8 %v2777
    %v2779 = vlaneseq
    %v2780 = vshrl.u32 %v2779, 7
    %v2781 = vsub.s32 %v2778, %v2780
    %v2782 = vrot.slane %v384, %v2781
    %v2784 = vunpack.c.l.s4 1414812756
    %v2785 = vunpack.c.0.s8 %v2784
    %v2786 = vlaneseq
    %v2787 = vshrl.u32 %v2786, 7
    %v2788 = vsub.s32 %v2785, %v2787
    %v2789 = vrot.slane %v384, %v2788
    %v2791 = vunpack.c.l.s4 1987475062
    %v2792 = vunpack.c.0.s8 %v2791
    %v2793 = vlaneseq
    %v2794 = vshrl.u32 %v2793, 7
    %v2795 = vsub.s32 %v2792, %v2794
    %v2796 = vrot.slane %v384, %v2795
    %v2798 = vunpack.c.l.s4 269488144
    %v2799 = vunpack.c.0.s8 %v2798
    %v2800 = vlaneseq
    %v2801 = vshrl.u32 %v2800, 7
    %v2802 = vsub.s32 %v2799, %v2801
    %v2803 = vrot.slane %v387, %v2802
    %v2805 = vunpack.c.l.s4 842150450
    %v2806 = vunpack.c.0.s8 %v2805
    %v2807 = vlaneseq
    %v2808 = vshrl.u32 %v2807, 7
    %v2809 = vsub.s32 %v2806, %v2808
    %v2810 = vrot.slane %v387, %v2809
    %v2812 = vunpack.c.l.s4 1414812756
    %v2813 = vunpack.c.0.s8 %v2812
    %v2814 = vlaneseq
    %v2815 = vshrl.u32 %v2814, 7
    %v2816 = vsub.s32 %v2813, %v2815
    %v2817 = vrot.slane %v387, %v2816
    %v2819 = vunpack.c.l.s4 1987475062
    %v2820 = vunpack.c.0.s8 %v2819
    %v2821 = vlaneseq
    %v2822 = vshrl.u32 %v2821, 7
    %v2823 = vsub.s32 %v2820, %v2822
    %v2824 = vrot.slane %v387, %v2823
    %v2826 = vunpack.c.l.s4 269488144
    %v2827 = vunpack.c.0.s8 %v2826
    %v2828 = vlaneseq
    %v2829 = vshrl.u32 %v2828, 7
    %v2830 = vsub.s32 %v2827, %v2829
    %v2831 = vrot.slane %v390, %v2830
    %v2833 = vunpack.c.l.s4 842150450
    %v2834 = vunpack.c.0.s8 %v2833
    %v2835 = vlaneseq
    %v2836 = vshrl.u32 %v2835, 7
    %v2837 = vsub.s32 %v2834, %v2836
    %v2838 = vrot.slane %v390, %v2837
    %v2840 = vunpack.c.l.s4 1414812756
    %v2841 = vunpack.c.0.s8 %v2840
    %v2842 = vlaneseq
    %v2843 = vshrl.u32 %v2842, 7
    %v2844 = vsub.s32 %v2841, %v2843
    %v2845 = vrot.slane %v390, %v2844
    %v2847 = vunpack.c.l.s4 1987475062
    %v2848 = vunpack.c.0.s8 %v2847
    %v2849 = vlaneseq
    %v2850 = vshrl.u32 %v2849, 7
    %v2851 = vsub.s32 %v2848, %v2850
    %v2852 = vrot.slane %v390, %v2851
    %v2854 = vunpack.c.l.s4 269488144
    %v2855 = vunpack.c.0.s8 %v2854
    %v2856 = vlaneseq
    %v2857 = vshrl.u32 %v2856, 7
    %v2858 = vsub.s32 %v2855, %v2857
    %v2859 = vrot.slane %v393, %v2858
    %v2861 = vunpack.c.l.s4 842150450
    %v2862 = vunpack.c.0.s8 %v2861
    %v2863 = vlaneseq
    %v2864 = vshrl.u32 %v2863, 7
    %v2865 = vsub.s32 %v2862, %v2864
    %v2866 = vrot.slane %v393, %v2865
    %v2868 = vunpack.c.l.s4 1414812756
    %v2869 = vunpack.c.0.s8 %v2868
    %v2870 = vlaneseq
    %v2871 = vshrl.u32 %v2870, 7
    %v2872 = vsub.s32 %v2869, %v2871
    %v2873 = vrot.slane %v393, %v2872
    %v2875 = vunpack.c.l.s4 1987475062
    %v2876 = vunpack.c.0.s8 %v2875
    %v2877 = vlaneseq
    %v2878 = vshrl.u32 %v2877, 7
    %v2879 = vsub.s32 %v2876, %v2878
    %v2880 = vrot.slane %v393, %v2879
    %v2882 = vunpack.c.l.s4 269488144
    %v2883 = vunpack.c.0.s8 %v2882
    %v2884 = vlaneseq
    %v2885 = vshrl.u32 %v2884, 7
    %v2886 = vsub.s32 %v2883, %v2885
    %v2887 = vrot.slane %v396, %v2886
    %v2889 = vunpack.c.l.s4 842150450
    %v2890 = vunpack.c.0.s8 %v2889
    %v2891 = vlaneseq
    %v2892 = vshrl.u32 %v2891, 7
    %v2893 = vsub.s32 %v2890, %v2892
    %v2894 = vrot.slane %v396, %v2893
    %v2896 = vunpack.c.l.s4 1414812756
    %v2897 = vunpack.c.0.s8 %v2896
    %v2898 = vlaneseq
    %v2899 = vshrl.u32 %v2898, 7
    %v2900 = vsub.s32 %v2897, %v2899
    %v2901 = vrot.slane %v396, %v2900
    %v2903 = vunpack.c.l.s4 1987475062
    %v2904 = vunpack.c.0.s8 %v2903
    %v2905 = vlaneseq
    %v2906 = vshrl.u32 %v2905, 7
    %v2907 = vsub.s32 %v2904, %v2906
    %v2908 = vrot.slane %v396, %v2907
    %v2910 = vunpack.c.l.s4 269488144
    %v2911 = vunpack.c.0.s8 %v2910
    %v2912 = vlaneseq
    %v2913 = vshrl.u32 %v2912, 7
    %v2914 = vsub.s32 %v2911, %v2913
    %v2915 = vrot.slane %v399, %v2914
    %v2917 = vunpack.c.l.s4 842150450
    %v2918 = vunpack.c.0.s8 %v2917
    %v2919 = vlaneseq
    %v2920 = vshrl.u32 %v2919, 7
    %v2921 = vsub.s32 %v2918, %v2920
    %v2922 = vrot.slane %v399, %v2921
    %v2924 = vunpack.c.l.s4 1414812756
    %v2925 = vunpack.c.0.s8 %v2924
    %v2926 = vlaneseq
    %v2927 = vshrl.u32 %v2926, 7
    %v2928 = vsub.s32 %v2925, %v2927
    %v2929 = vrot.slane %v399, %v2928
    %v2931 = vunpack.c.l.s4 1987475062
    %v2932 = vunpack.c.0.s8 %v2931
    %v2933 = vlaneseq
    %v2934 = vshrl.u32 %v2933, 7
    %v2935 = vsub.s32 %v2932, %v2934
    %v2936 = vrot.slane %v399, %v2935
    %v2938 = vunpack.c.l.s4 269488144
    %v2939 = vunpack.c.0.s8 %v2938
    %v2940 = vlaneseq
    %v2941 = vshrl.u32 %v2940, 7
    %v2942 = vsub.s32 %v2939, %v2941
    %v2943 = vrot.slane %v402, %v2942
    %v2945 = vunpack.c.l.s4 842150450
    %v2946 = vunpack.c.0.s8 %v2945
    %v2947 = vlaneseq
    %v2948 = vshrl.u32 %v2947, 7
    %v2949 = vsub.s32 %v2946, %v2948
    %v2950 = vrot.slane %v402, %v2949
    %v2952 = vunpack.c.l.s4 1414812756
    %v2953 = vunpack.c.0.s8 %v2952
    %v2954 = vlaneseq
    %v2955 = vshrl.u32 %v2954, 7
    %v2956 = vsub.s32 %v2953, %v2955
    %v2957 = vrot.slane %v402, %v2956
    %v2959 = vunpack.c.l.s4 1987475062
    %v2960 = vunpack.c.0.s8 %v2959
    %v2961 = vlaneseq
    %v2962 = vshrl.u32 %v2961, 7
    %v2963 = vsub.s32 %v2960, %v2962
    %v2964 = vrot.slane %v402, %v2963
    %v2966 = vunpack.c.l.s4 269488144
    %v2967 = vunpack.c.0.s8 %v2966
    %v2968 = vlaneseq
    %v2969 = vshrl.u32 %v2968, 7
    %v2970 = vsub.s32 %v2967, %v2969
    %v2971 = vrot.slane %v405, %v2970
    %v2973 = vunpack.c.l.s4 842150450
    %v2974 = vunpack.c.0.s8 %v2973
    %v2975 = vlaneseq
    %v2976 = vshrl.u32 %v2975, 7
    %v2977 = vsub.s32 %v2974, %v2976
    %v2978 = vrot.slane %v405, %v2977
    %v2980 = vunpack.c.l.s4 1414812756
    %v2981 = vunpack.c.0.s8 %v2980
    %v2982 = vlaneseq
    %v2983 = vshrl.u32 %v2982, 7
    %v2984 = vsub.s32 %v2981, %v2983
    %v2985 = vrot.slane %v405, %v2984
    %v2987 = vunpack.c.l.s4 1987475062
    %v2988 = vunpack.c.0.s8 %v2987
    %v2989 = vlaneseq
    %v2990 = vshrl.u32 %v2989, 7
    %v2991 = vsub.s32 %v2988, %v2990
    %v2992 = vrot.slane %v405, %v2991
    %v2994 = vunpack.c.l.s4 269488144
    %v2995 = vunpack.c.0.s8 %v2994
    %v2996 = vlaneseq
    %v2997 = vshrl.u32 %v2996, 7
    %v2998 = vsub.s32 %v2995, %v2997
    %v2999 = vrot.slane %v408, %v2998
    %v3001 = vunpack.c.l.s4 842150450
    %v3002 = vunpack.c.0.s8 %v3001
    %v3003 = vlaneseq
    %v3004 = vshrl.u32 %v3003, 7
    %v3005 = vsub.s32 %v3002, %v3004
    %v3006 = vrot.slane %v408, %v3005
    %v3008 = vunpack.c.l.s4 1414812756
    %v3009 = vunpack.c.0.s8 %v3008
    %v3010 = vlaneseq
    %v3011 = vshrl.u32 %v3010, 7
    %v3012 = vsub.s32 %v3009, %v3011
    %v3013 = vrot.slane %v408, %v3012
    %v3015 = vunpack.c.l.s4 1987475062
    %v3016 = vunpack.c.0.s8 %v3015
    %v3017 = vlaneseq
    %v3018 = vshrl.u32 %v3017, 7
    %v3019 = vsub.s32 %v3016, %v3018
    %v3020 = vrot.slane %v408, %v3019
    %v3022 = vunpack.c.l.s4 269488144
    %v3023 = vunpack.c.0.s8 %v3022
    %v3024 = vlaneseq
    %v3025 = vshrl.u32 %v3024, 7
    %v3026 = vsub.s32 %v3023, %v3025
    %v3027 = vrot.slane %v411, %v3026
    %v3029 = vunpack.c.l.s4 842150450
    %v3030 = vunpack.c.0.s8 %v3029
    %v3031 = vlaneseq
    %v3032 = vshrl.u32 %v3031, 7
    %v3033 = vsub.s32 %v3030, %v3032
    %v3034 = vrot.slane %v411, %v3033
    %v3036 = vunpack.c.l.s4 1414812756
    %v3037 = vunpack.c.0.s8 %v3036
    %v3038 = vlaneseq
    %v3039 = vshrl.u32 %v3038, 7
    %v3040 = vsub.s32 %v3037, %v3039
    %v3041 = vrot.slane %v411, %v3040
    %v3043 = vunpack.c.l.s4 1987475062
    %v3044 = vunpack.c.0.s8 %v3043
    %v3045 = vlaneseq
    %v3046 = vshrl.u32 %v3045, 7
    %v3047 = vsub.s32 %v3044, %v3046
    %v3048 = vrot.slane %v411, %v3047
    %v3050 = vunpack.c.l.s4 269488144
    %v3051 = vunpack.c.0.s8 %v3050
    %v3052 = vlaneseq
    %v3053 = vshrl.u32 %v3052, 7
    %v3054 = vsub.s32 %v3051, %v3053
    %v3055 = vrot.slane %v414, %v3054
    %v3057 = vunpack.c.l.s4 842150450
    %v3058 = vunpack.c.0.s8 %v3057
    %v3059 = vlaneseq
    %v3060 = vshrl.u32 %v3059, 7
    %v3061 = vsub.s32 %v3058, %v3060
    %v3062 = vrot.slane %v414, %v3061
    %v3064 = vunpack.c.l.s4 1414812756
    %v3065 = vunpack.c.0.s8 %v3064
    %v3066 = vlaneseq
    %v3067 = vshrl.u32 %v3066, 7
    %v3068 = vsub.s32 %v3065, %v3067
    %v3069 = vrot.slane %v414, %v3068
    %v3071 = vunpack.c.l.s4 1987475062
    %v3072 = vunpack.c.0.s8 %v3071
    %v3073 = vlaneseq
    %v3074 = vshrl.u32 %v3073, 7
    %v3075 = vsub.s32 %v3072, %v3074
    %v3076 = vrot.slane %v414, %v3075
    %v3078 = vunpack.c.l.s4 269488144
    %v3079 = vunpack.c.0.s8 %v3078
    %v3080 = vlaneseq
    %v3081 = vshrl.u32 %v3080, 7
    %v3082 = vsub.s32 %v3079, %v3081
    %v3083 = vrot.slane %v417, %v3082
    %v3085 = vunpack.c.l.s4 842150450
    %v3086 = vunpack.c.0.s8 %v3085
    %v3087 = vlaneseq
    %v3088 = vshrl.u32 %v3087, 7
    %v3089 = vsub.s32 %v3086, %v3088
    %v3090 = vrot.slane %v417, %v3089
    %v3092 = vunpack.c.l.s4 1414812756
    %v3093 = vunpack.c.0.s8 %v3092
    %v3094 = vlaneseq
    %v3095 = vshrl.u32 %v3094, 7
    %v3096 = vsub.s32 %v3093, %v3095
    %v3097 = vrot.slane %v417, %v3096
    %v3099 = vunpack.c.l.s4 1987475062
    %v3100 = vunpack.c.0.s8 %v3099
    %v3101 = vlaneseq
    %v3102 = vshrl.u32 %v3101, 7
    %v3103 = vsub.s32 %v3100, %v3102
    %v3104 = vrot.slane %v417, %v3103
    %v3106 = vunpack.c.l.s4 269488144
    %v3107 = vunpack.c.0.s8 %v3106
    %v3108 = vlaneseq
    %v3109 = vshrl.u32 %v3108, 7
    %v3110 = vsub.s32 %v3107, %v3109
    %v3111 = vrot.slane %v420, %v3110
    %v3113 = vunpack.c.l.s4 842150450
    %v3114 = vunpack.c.0.s8 %v3113
    %v3115 = vlaneseq
    %v3116 = vshrl.u32 %v3115, 7
    %v3117 = vsub.s32 %v3114, %v3116
    %v3118 = vrot.slane %v420, %v3117
    %v3120 = vunpack.c.l.s4 1414812756
    %v3121 = vunpack.c.0.s8 %v3120
    %v3122 = vlaneseq
    %v3123 = vshrl.u32 %v3122, 7
    %v3124 = vsub.s32 %v3121, %v3123
    %v3125 = vrot.slane %v420, %v3124
    %v3127 = vunpack.c.l.s4 1987475062
    %v3128 = vunpack.c.0.s8 %v3127
    %v3129 = vlaneseq
    %v3130 = vshrl.u32 %v3129, 7
    %v3131 = vsub.s32 %v3128, %v3130
    %v3132 = vrot.slane %v420, %v3131
    %v3134 = vunpack.c.l.s4 269488144
    %v3135 = vunpack.c.0.s8 %v3134
    %v3136 = vlaneseq
    %v3137 = vshrl.u32 %v3136, 7
    %v3138 = vsub.s32 %v3135, %v3137
    %v3139 = vrot.slane %v423, %v3138
    %v3141 = vunpack.c.l.s4 842150450
    %v3142 = vunpack.c.0.s8 %v3141
    %v3143 = vlaneseq
    %v3144 = vshrl.u32 %v3143, 7
    %v3145 = vsub.s32 %v3142, %v3144
    %v3146 = vrot.slane %v423, %v3145
    %v3148 = vunpack.c.l.s4 1414812756
    %v3149 = vunpack.c.0.s8 %v3148
    %v3150 = vlaneseq
    %v3151 = vshrl.u32 %v3150, 7
    %v3152 = vsub.s32 %v3149, %v3151
    %v3153 = vrot.slane %v423, %v3152
    %v3155 = vunpack.c.l.s4 1987475062
    %v3156 = vunpack.c.0.s8 %v3155
    %v3157 = vlaneseq
    %v3158 = vshrl.u32 %v3157, 7
    %v3159 = vsub.s32 %v3156, %v3158
    %v3160 = vrot.slane %v423, %v3159
    %v3162 = vunpack.c.l.s4 269488144
    %v3163 = vunpack.c.0.s8 %v3162
    %v3164 = vlaneseq
    %v3165 = vshrl.u32 %v3164, 7
    %v3166 = vsub.s32 %v3163, %v3165
    %v3167 = vrot.slane %v426, %v3166
    %v3169 = vunpack.c.l.s4 842150450
    %v3170 = vunpack.c.0.s8 %v3169
    %v3171 = vlaneseq
    %v3172 = vshrl.u32 %v3171, 7
    %v3173 = vsub.s32 %v3170, %v3172
    %v3174 = vrot.slane %v426, %v3173
    %v3176 = vunpack.c.l.s4 1414812756
    %v3177 = vunpack.c.0.s8 %v3176
    %v3178 = vlaneseq
    %v3179 = vshrl.u32 %v3178, 7
    %v3180 = vsub.s32 %v3177, %v3179
    %v3181 = vrot.slane %v426, %v3180
    %v3183 = vunpack.c.l.s4 1987475062
    %v3184 = vunpack.c.0.s8 %v3183
    %v3185 = vlaneseq
    %v3186 = vshrl.u32 %v3185, 7
    %v3187 = vsub.s32 %v3184, %v3186
    %v3188 = vrot.slane %v426, %v3187
    %v3190 = vunpack.c.l.s4 269488144
    %v3191 = vunpack.c.0.s8 %v3190
    %v3192 = vlaneseq
    %v3193 = vshrl.u32 %v3192, 7
    %v3194 = vsub.s32 %v3191, %v3193
    %v3195 = vrot.slane %v429, %v3194
    %v3197 = vunpack.c.l.s4 842150450
    %v3198 = vunpack.c.0.s8 %v3197
    %v3199 = vlaneseq
    %v3200 = vshrl.u32 %v3199, 7
    %v3201 = vsub.s32 %v3198, %v3200
    %v3202 = vrot.slane %v429, %v3201
    %v3204 = vunpack.c.l.s4 1414812756
    %v3205 = vunpack.c.0.s8 %v3204
    %v3206 = vlaneseq
    %v3207 = vshrl.u32 %v3206, 7
    %v3208 = vsub.s32 %v3205, %v3207
    %v3209 = vrot.slane %v429, %v3208
    %v3211 = vunpack.c.l.s4 1987475062
    %v3212 = vunpack.c.0.s8 %v3211
    %v3213 = vlaneseq
    %v3214 = vshrl.u32 %v3213, 7
    %v3215 = vsub.s32 %v3212, %v3214
    %v3216 = vrot.slane %v429, %v3215
    %v3218 = vunpack.c.l.s4 269488144
    %v3219 = vunpack.c.0.s8 %v3218
    %v3220 = vlaneseq
    %v3221 = vshrl.u32 %v3220, 7
    %v3222 = vsub.s32 %v3219, %v3221
    %v3223 = vrot.slane %v432, %v3222
    %v3225 = vunpack.c.l.s4 842150450
    %v3226 = vunpack.c.0.s8 %v3225
    %v3227 = vlaneseq
    %v3228 = vshrl.u32 %v3227, 7
    %v3229 = vsub.s32 %v3226, %v3228
    %v3230 = vrot.slane %v432, %v3229
    %v3232 = vunpack.c.l.s4 1414812756
    %v3233 = vunpack.c.0.s8 %v3232
    %v3234 = vlaneseq
    %v3235 = vshrl.u32 %v3234, 7
    %v3236 = vsub.s32 %v3233, %v3235
    %v3237 = vrot.slane %v432, %v3236
    %v3239 = vunpack.c.l.s4 1987475062
    %v3240 = vunpack.c.0.s8 %v3239
    %v3241 = vlaneseq
    %v3242 = vshrl.u32 %v3241, 7
    %v3243 = vsub.s32 %v3240, %v3242
    %v3244 = vrot.slane %v432, %v3243
    %v3246 = vunpack.c.l.s4 269488144
    %v3247 = vunpack.c.0.s8 %v3246
    %v3248 = vlaneseq
    %v3249 = vshrl.u32 %v3248, 7
    %v3250 = vsub.s32 %v3247, %v3249
    %v3251 = vrot.slane %v435, %v3250
    %v3253 = vunpack.c.l.s4 842150450
    %v3254 = vunpack.c.0.s8 %v3253
    %v3255 = vlaneseq
    %v3256 = vshrl.u32 %v3255, 7
    %v3257 = vsub.s32 %v3254, %v3256
    %v3258 = vrot.slane %v435, %v3257
    %v3260 = vunpack.c.l.s4 1414812756
    %v3261 = vunpack.c.0.s8 %v3260
    %v3262 = vlaneseq
    %v3263 = vshrl.u32 %v3262, 7
    %v3264 = vsub.s32 %v3261, %v3263
    %v3265 = vrot.slane %v435, %v3264
    %v3267 = vunpack.c.l.s4 1987475062
    %v3268 = vunpack.c.0.s8 %v3267
    %v3269 = vlaneseq
    %v3270 = vshrl.u32 %v3269, 7
    %v3271 = vsub.s32 %v3268, %v3270
    %v3272 = vrot.slane %v435, %v3271
    %v3274 = vunpack.c.l.s4 269488144
    %v3275 = vunpack.c.0.s8 %v3274
    %v3276 = vlaneseq
    %v3277 = vshrl.u32 %v3276, 7
    %v3278 = vsub.s32 %v3275, %v3277
    %v3279 = vrot.slane %v438, %v3278
    %v3281 = vunpack.c.l.s4 842150450
    %v3282 = vunpack.c.0.s8 %v3281
    %v3283 = vlaneseq
    %v3284 = vshrl.u32 %v3283, 7
    %v3285 = vsub.s32 %v3282, %v3284
    %v3286 = vrot.slane %v438, %v3285
    %v3288 = vunpack.c.l.s4 1414812756
    %v3289 = vunpack.c.0.s8 %v3288
    %v3290 = vlaneseq
    %v3291 = vshrl.u32 %v3290, 7
    %v3292 = vsub.s32 %v3289, %v3291
    %v3293 = vrot.slane %v438, %v3292
    %v3295 = vunpack.c.l.s4 1987475062
    %v3296 = vunpack.c.0.s8 %v3295
    %v3297 = vlaneseq
    %v3298 = vshrl.u32 %v3297, 7
    %v3299 = vsub.s32 %v3296, %v3298
    %v3300 = vrot.slane %v438, %v3299
    %v3302 = vunpack.c.l.s4 269488144
    %v3303 = vunpack.c.0.s8 %v3302
    %v3304 = vlaneseq
    %v3305 = vshrl.u32 %v3304, 7
    %v3306 = vsub.s32 %v3303, %v3305
    %v3307 = vrot.slane %v441, %v3306
    %v3309 = vunpack.c.l.s4 842150450
    %v3310 = vunpack.c.0.s8 %v3309
    %v3311 = vlaneseq
    %v3312 = vshrl.u32 %v3311, 7
    %v3313 = vsub.s32 %v3310, %v3312
    %v3314 = vrot.slane %v441, %v3313
    %v3316 = vunpack.c.l.s4 1414812756
    %v3317 = vunpack.c.0.s8 %v3316
    %v3318 = vlaneseq
    %v3319 = vshrl.u32 %v3318, 7
    %v3320 = vsub.s32 %v3317, %v3319
    %v3321 = vrot.slane %v441, %v3320
    %v3323 = vunpack.c.l.s4 1987475062
    %v3324 = vunpack.c.0.s8 %v3323
    %v3325 = vlaneseq
    %v3326 = vshrl.u32 %v3325, 7
    %v3327 = vsub.s32 %v3324, %v3326
    %v3328 = vrot.slane %v441, %v3327
    %v3330 = vunpack.c.l.s4 269488144
    %v3331 = vunpack.c.0.s8 %v3330
    %v3332 = vlaneseq
    %v3333 = vshrl.u32 %v3332, 7
    %v3334 = vsub.s32 %v3331, %v3333
    %v3335 = vrot.slane %v444, %v3334
    %v3337 = vunpack.c.l.s4 842150450
    %v3338 = vunpack.c.0.s8 %v3337
    %v3339 = vlaneseq
    %v3340 = vshrl.u32 %v3339, 7
    %v3341 = vsub.s32 %v3338, %v3340
    %v3342 = vrot.slane %v444, %v3341
    %v3344 = vunpack.c.l.s4 1414812756
    %v3345 = vunpack.c.0.s8 %v3344
    %v3346 = vlaneseq
    %v3347 = vshrl.u32 %v3346, 7
    %v3348 = vsub.s32 %v3345, %v3347
    %v3349 = vrot.slane %v444, %v3348
    %v3351 = vunpack.c.l.s4 1987475062
    %v3352 = vunpack.c.0.s8 %v3351
    %v3353 = vlaneseq
    %v3354 = vshrl.u32 %v3353, 7
    %v3355 = vsub.s32 %v3352, %v3354
    %v3356 = vrot.slane %v444, %v3355
    %v3358 = vunpack.c.l.s4 269488144
    %v3359 = vunpack.c.0.s8 %v3358
    %v3360 = vlaneseq
    %v3361 = vshrl.u32 %v3360, 7
    %v3362 = vsub.s32 %v3359, %v3361
    %v3363 = vrot.slane %v447, %v3362
    %v3365 = vunpack.c.l.s4 842150450
    %v3366 = vunpack.c.0.s8 %v3365
    %v3367 = vlaneseq
    %v3368 = vshrl.u32 %v3367, 7
    %v3369 = vsub.s32 %v3366, %v3368
    %v3370 = vrot.slane %v447, %v3369
    %v3372 = vunpack.c.l.s4 1414812756
    %v3373 = vunpack.c.0.s8 %v3372
    %v3374 = vlaneseq
    %v3375 = vshrl.u32 %v3374, 7
    %v3376 = vsub.s32 %v3373, %v3375
    %v3377 = vrot.slane %v447, %v3376
    %v3379 = vunpack.c.l.s4 1987475062
    %v3380 = vunpack.c.0.s8 %v3379
    %v3381 = vlaneseq
    %v3382 = vshrl.u32 %v3381, 7
    %v3383 = vsub.s32 %v3380, %v3382
    %v3384 = vrot.slane %v447, %v3383
    %v3386 = vunpack.c.l.s4 269488144
    %v3387 = vunpack.c.0.s8 %v3386
    %v3388 = vlaneseq
    %v3389 = vshrl.u32 %v3388, 7
    %v3390 = vsub.s32 %v3387, %v3389
    %v3391 = vrot.slane %v450, %v3390
    %v3393 = vunpack.c.l.s4 842150450
    %v3394 = vunpack.c.0.s8 %v3393
    %v3395 = vlaneseq
    %v3396 = vshrl.u32 %v3395, 7
    %v3397 = vsub.s32 %v3394, %v3396
    %v3398 = vrot.slane %v450, %v3397
    %v3400 = vunpack.c.l.s4 1414812756
    %v3401 = vunpack.c.0.s8 %v3400
    %v3402 = vlaneseq
    %v3403 = vshrl.u32 %v3402, 7
    %v3404 = vsub.s32 %v3401, %v3403
    %v3405 = vrot.slane %v450, %v3404
    %v3407 = vunpack.c.l.s4 1987475062
    %v3408 = vunpack.c.0.s8 %v3407
    %v3409 = vlaneseq
    %v3410 = vshrl.u32 %v3409, 7
    %v3411 = vsub.s32 %v3408, %v3410
    %v3412 = vrot.slane %v450, %v3411
    %v3414 = vunpack.c.l.s4 269488144
    %v3415 = vunpack.c.0.s8 %v3414
    %v3416 = vlaneseq
    %v3417 = vshrl.u32 %v3416, 7
    %v3418 = vsub.s32 %v3415, %v3417
    %v3419 = vrot.slane %v453, %v3418
    %v3421 = vunpack.c.l.s4 842150450
    %v3422 = vunpack.c.0.s8 %v3421
    %v3423 = vlaneseq
    %v3424 = vshrl.u32 %v3423, 7
    %v3425 = vsub.s32 %v3422, %v3424
    %v3426 = vrot.slane %v453, %v3425
    %v3428 = vunpack.c.l.s4 1414812756
    %v3429 = vunpack.c.0.s8 %v3428
    %v3430 = vlaneseq
    %v3431 = vshrl.u32 %v3430, 7
    %v3432 = vsub.s32 %v3429, %v3431
    %v3433 = vrot.slane %v453, %v3432
    %v3435 = vunpack.c.l.s4 1987475062
    %v3436 = vunpack.c.0.s8 %v3435
    %v3437 = vlaneseq
    %v3438 = vshrl.u32 %v3437, 7
    %v3439 = vsub.s32 %v3436, %v3438
    %v3440 = vrot.slane %v453, %v3439
    %v3442 = vunpack.c.l.s4 269488144
    %v3443 = vunpack.c.0.s8 %v3442
    %v3444 = vlaneseq
    %v3445 = vshrl.u32 %v3444, 7
    %v3446 = vsub.s32 %v3443, %v3445
    %v3447 = vrot.slane %v456, %v3446
    %v3449 = vunpack.c.l.s4 842150450
    %v3450 = vunpack.c.0.s8 %v3449
    %v3451 = vlaneseq
    %v3452 = vshrl.u32 %v3451, 7
    %v3453 = vsub.s32 %v3450, %v3452
    %v3454 = vrot.slane %v456, %v3453
    %v3456 = vunpack.c.l.s4 1414812756
    %v3457 = vunpack.c.0.s8 %v3456
    %v3458 = vlaneseq
    %v3459 = vshrl.u32 %v3458, 7
    %v3460 = vsub.s32 %v3457, %v3459
    %v3461 = vrot.slane %v456, %v3460
    %v3463 = vunpack.c.l.s4 1987475062
    %v3464 = vunpack.c.0.s8 %v3463
    %v3465 = vlaneseq
    %v3466 = vshrl.u32 %v3465, 7
    %v3467 = vsub.s32 %v3464, %v3466
    %v3468 = vrot.slane %v456, %v3467
    %v3470 = vunpack.c.l.s4 269488144
    %v3471 = vunpack.c.0.s8 %v3470
    %v3472 = vlaneseq
    %v3473 = vshrl.u32 %v3472, 7
    %v3474 = vsub.s32 %v3471, %v3473
    %v3475 = vrot.slane %v459, %v3474
    %v3477 = vunpack.c.l.s4 842150450
    %v3478 = vunpack.c.0.s8 %v3477
    %v3479 = vlaneseq
    %v3480 = vshrl.u32 %v3479, 7
    %v3481 = vsub.s32 %v3478, %v3480
    %v3482 = vrot.slane %v459, %v3481
    %v3484 = vunpack.c.l.s4 1414812756
    %v3485 = vunpack.c.0.s8 %v3484
    %v3486 = vlaneseq
    %v3487 = vshrl.u32 %v3486, 7
    %v3488 = vsub.s32 %v3485, %v3487
    %v3489 = vrot.slane %v459, %v3488
    %v3491 = vunpack.c.l.s4 1987475062
    %v3492 = vunpack.c.0.s8 %v3491
    %v3493 = vlaneseq
    %v3494 = vshrl.u32 %v3493, 7
    %v3495 = vsub.s32 %v3492, %v3494
    %v3496 = vrot.slane %v459, %v3495
    %v3498 = vunpack.c.l.s4 269488144
    %v3499 = vunpack.c.0.s8 %v3498
    %v3500 = vlaneseq
    %v3501 = vshrl.u32 %v3500, 7
    %v3502 = vsub.s32 %v3499, %v3501
    %v3503 = vrot.slane %v462, %v3502
    %v3505 = vunpack.c.l.s4 842150450
    %v3506 = vunpack.c.0.s8 %v3505
    %v3507 = vlaneseq
    %v3508 = vshrl.u32 %v3507, 7
    %v3509 = vsub.s32 %v3506, %v3508
    %v3510 = vrot.slane %v462, %v3509
    %v3512 = vunpack.c.l.s4 1414812756
    %v3513 = vunpack.c.0.s8 %v3512
    %v3514 = vlaneseq
    %v3515 = vshrl.u32 %v3514, 7
    %v3516 = vsub.s32 %v3513, %v3515
    %v3517 = vrot.slane %v462, %v3516
    %v3519 = vunpack.c.l.s4 1987475062
    %v3520 = vunpack.c.0.s8 %v3519
    %v3521 = vlaneseq
    %v3522 = vshrl.u32 %v3521, 7
    %v3523 = vsub.s32 %v3520, %v3522
    %v3524 = vrot.slane %v462, %v3523
    %v3526 = vunpack.c.l.s4 269488144
    %v3527 = vunpack.c.0.s8 %v3526
    %v3528 = vlaneseq
    %v3529 = vshrl.u32 %v3528, 7
    %v3530 = vsub.s32 %v3527, %v3529
    %v3531 = vrot.slane %v465, %v3530
    %v3533 = vunpack.c.l.s4 842150450
    %v3534 = vunpack.c.0.s8 %v3533
    %v3535 = vlaneseq
    %v3536 = vshrl.u32 %v3535, 7
    %v3537 = vsub.s32 %v3534, %v3536
    %v3538 = vrot.slane %v465, %v3537
    %v3540 = vunpack.c.l.s4 1414812756
    %v3541 = vunpack.c.0.s8 %v3540
    %v3542 = vlaneseq
    %v3543 = vshrl.u32 %v3542, 7
    %v3544 = vsub.s32 %v3541, %v3543
    %v3545 = vrot.slane %v465, %v3544
    %v3547 = vunpack.c.l.s4 1987475062
    %v3548 = vunpack.c.0.s8 %v3547
    %v3549 = vlaneseq
    %v3550 = vshrl.u32 %v3549, 7
    %v3551 = vsub.s32 %v3548, %v3550
    %v3552 = vrot.slane %v465, %v3551
    %v3554 = vunpack.c.l.s4 269488144
    %v3555 = vunpack.c.0.s8 %v3554
    %v3556 = vlaneseq
    %v3557 = vshrl.u32 %v3556, 7
    %v3558 = vsub.s32 %v3555, %v3557
    %v3559 = vrot.slane %v468, %v3558
    %v3561 = vunpack.c.l.s4 842150450
    %v3562 = vunpack.c.0.s8 %v3561
    %v3563 = vlaneseq
    %v3564 = vshrl.u32 %v3563, 7
    %v3565 = vsub.s32 %v3562, %v3564
    %v3566 = vrot.slane %v468, %v3565
    %v3568 = vunpack.c.l.s4 1414812756
    %v3569 = vunpack.c.0.s8 %v3568
    %v3570 = vlaneseq
    %v3571 = vshrl.u32 %v3570, 7
    %v3572 = vsub.s32 %v3569, %v3571
    %v3573 = vrot.slane %v468, %v3572
    %v3575 = vunpack.c.l.s4 1987475062
    %v3576 = vunpack.c.0.s8 %v3575
    %v3577 = vlaneseq
    %v3578 = vshrl.u32 %v3577, 7
    %v3579 = vsub.s32 %v3576, %v3578
    %v3580 = vrot.slane %v468, %v3579
    %v3582 = vunpack.c.l.s4 269488144
    %v3583 = vunpack.c.0.s8 %v3582
    %v3584 = vlaneseq
    %v3585 = vshrl.u32 %v3584, 7
    %v3586 = vsub.s32 %v3583, %v3585
    %v3587 = vrot.slane %v471, %v3586
    %v3589 = vunpack.c.l.s4 842150450
    %v3590 = vunpack.c.0.s8 %v3589
    %v3591 = vlaneseq
    %v3592 = vshrl.u32 %v3591, 7
    %v3593 = vsub.s32 %v3590, %v3592
    %v3594 = vrot.slane %v471, %v3593
    %v3596 = vunpack.c.l.s4 1414812756
    %v3597 = vunpack.c.0.s8 %v3596
    %v3598 = vlaneseq
    %v3599 = vshrl.u32 %v3598, 7
    %v3600 = vsub.s32 %v3597, %v3599
    %v3601 = vrot.slane %v471, %v3600
    %v3603 = vunpack.c.l.s4 1987475062
    %v3604 = vunpack.c.0.s8 %v3603
    %v3605 = vlaneseq
    %v3606 = vshrl.u32 %v3605, 7
    %v3607 = vsub.s32 %v3604, %v3606
    %v3608 = vrot.slane %v471, %v3607
    %v3610 = vunpack.c.l.s4 269488144
    %v3611 = vunpack.c.0.s8 %v3610
    %v3612 = vlaneseq
    %v3613 = vshrl.u32 %v3612, 7
    %v3614 = vsub.s32 %v3611, %v3613
    %v3615 = vrot.slane %v474, %v3614
    %v3617 = vunpack.c.l.s4 842150450
    %v3618 = vunpack.c.0.s8 %v3617
    %v3619 = vlaneseq
    %v3620 = vshrl.u32 %v3619, 7
    %v3621 = vsub.s32 %v3618, %v3620
    %v3622 = vrot.slane %v474, %v3621
    %v3624 = vunpack.c.l.s4 1414812756
    %v3625 = vunpack.c.0.s8 %v3624
    %v3626 = vlaneseq
    %v3627 = vshrl.u32 %v3626, 7
    %v3628 = vsub.s32 %v3625, %v3627
    %v3629 = vrot.slane %v474, %v3628
    %v3631 = vunpack.c.l.s4 1987475062
    %v3632 = vunpack.c.0.s8 %v3631
    %v3633 = vlaneseq
    %v3634 = vshrl.u32 %v3633, 7
    %v3635 = vsub.s32 %v3632, %v3634
    %v3636 = vrot.slane %v474, %v3635
    %v3638 = vunpack.c.l.s4 269488144
    %v3639 = vunpack.c.0.s8 %v3638
    %v3640 = vlaneseq
    %v3641 = vshrl.u32 %v3640, 7
    %v3642 = vsub.s32 %v3639, %v3641
    %v3643 = vrot.slane %v477, %v3642
    %v3645 = vunpack.c.l.s4 842150450
    %v3646 = vunpack.c.0.s8 %v3645
    %v3647 = vlaneseq
    %v3648 = vshrl.u32 %v3647, 7
    %v3649 = vsub.s32 %v3646, %v3648
    %v3650 = vrot.slane %v477, %v3649
    %v3652 = vunpack.c.l.s4 1414812756
    %v3653 = vunpack.c.0.s8 %v3652
    %v3654 = vlaneseq
    %v3655 = vshrl.u32 %v3654, 7
    %v3656 = vsub.s32 %v3653, %v3655
    %v3657 = vrot.slane %v477, %v3656
    %v3659 = vunpack.c.l.s4 1987475062
    %v3660 = vunpack.c.0.s8 %v3659
    %v3661 = vlaneseq
    %v3662 = vshrl.u32 %v3661, 7
    %v3663 = vsub.s32 %v3660, %v3662
    %v3664 = vrot.slane %v477, %v3663
    %v3666 = vunpack.c.l.s4 269488144
    %v3667 = vunpack.c.0.s8 %v3666
    %v3668 = vlaneseq
    %v3669 = vshrl.u32 %v3668, 7
    %v3670 = vsub.s32 %v3667, %v3669
    %v3671 = vrot.slane %v480, %v3670
    %v3673 = vunpack.c.l.s4 842150450
    %v3674 = vunpack.c.0.s8 %v3673
    %v3675 = vlaneseq
    %v3676 = vshrl.u32 %v3675, 7
    %v3677 = vsub.s32 %v3674, %v3676
    %v3678 = vrot.slane %v480, %v3677
    %v3680 = vunpack.c.l.s4 1414812756
    %v3681 = vunpack.c.0.s8 %v3680
    %v3682 = vlaneseq
    %v3683 = vshrl.u32 %v3682, 7
    %v3684 = vsub.s32 %v3681, %v3683
    %v3685 = vrot.slane %v480, %v3684
    %v3687 = vunpack.c.l.s4 1987475062
    %v3688 = vunpack.c.0.s8 %v3687
    %v3689 = vlaneseq
    %v3690 = vshrl.u32 %v3689, 7
    %v3691 = vsub.s32 %v3688, %v3690
    %v3692 = vrot.slane %v480, %v3691
    %v3694 = vunpack.c.l.s4 269488144
    %v3695 = vunpack.c.0.s8 %v3694
    %v3696 = vlaneseq
    %v3697 = vshrl.u32 %v3696, 7
    %v3698 = vsub.s32 %v3695, %v3697
    %v3699 = vrot.slane %v483, %v3698
    %v3701 = vunpack.c.l.s4 842150450
    %v3702 = vunpack.c.0.s8 %v3701
    %v3703 = vlaneseq
    %v3704 = vshrl.u32 %v3703, 7
    %v3705 = vsub.s32 %v3702, %v3704
    %v3706 = vrot.slane %v483, %v3705
    %v3708 = vunpack.c.l.s4 1414812756
    %v3709 = vunpack.c.0.s8 %v3708
    %v3710 = vlaneseq
    %v3711 = vshrl.u32 %v3710, 7
    %v3712 = vsub.s32 %v3709, %v3711
    %v3713 = vrot.slane %v483, %v3712
    %v3715 = vunpack.c.l.s4 1987475062
    %v3716 = vunpack.c.0.s8 %v3715
    %v3717 = vlaneseq
    %v3718 = vshrl.u32 %v3717, 7
    %v3719 = vsub.s32 %v3716, %v3718
    %v3720 = vrot.slane %v483, %v3719
    %v3722 = vunpack.c.l.s4 269488144
    %v3723 = vunpack.c.0.s8 %v3722
    %v3724 = vlaneseq
    %v3725 = vshrl.u32 %v3724, 7
    %v3726 = vsub.s32 %v3723, %v3725
    %v3727 = vrot.slane %v486, %v3726
    %v3729 = vunpack.c.l.s4 842150450
    %v3730 = vunpack.c.0.s8 %v3729
    %v3731 = vlaneseq
    %v3732 = vshrl.u32 %v3731, 7
    %v3733 = vsub.s32 %v3730, %v3732
    %v3734 = vrot.slane %v486, %v3733
    %v3736 = vunpack.c.l.s4 1414812756
    %v3737 = vunpack.c.0.s8 %v3736
    %v3738 = vlaneseq
    %v3739 = vshrl.u32 %v3738, 7
    %v3740 = vsub.s32 %v3737, %v3739
    %v3741 = vrot.slane %v486, %v3740
    %v3743 = vunpack.c.l.s4 1987475062
    %v3744 = vunpack.c.0.s8 %v3743
    %v3745 = vlaneseq
    %v3746 = vshrl.u32 %v3745, 7
    %v3747 = vsub.s32 %v3744, %v3746
    %v3748 = vrot.slane %v486, %v3747
    %v3750 = vunpack.c.l.s4 269488144
    %v3751 = vunpack.c.0.s8 %v3750
    %v3752 = vlaneseq
    %v3753 = vshrl.u32 %v3752, 7
    %v3754 = vsub.s32 %v3751, %v3753
    %v3755 = vrot.slane %v489, %v3754
    %v3757 = vunpack.c.l.s4 842150450
    %v3758 = vunpack.c.0.s8 %v3757
    %v3759 = vlaneseq
    %v3760 = vshrl.u32 %v3759, 7
    %v3761 = vsub.s32 %v3758, %v3760
    %v3762 = vrot.slane %v489, %v3761
    %v3764 = vunpack.c.l.s4 1414812756
    %v3765 = vunpack.c.0.s8 %v3764
    %v3766 = vlaneseq
    %v3767 = vshrl.u32 %v3766, 7
    %v3768 = vsub.s32 %v3765, %v3767
    %v3769 = vrot.slane %v489, %v3768
    %v3771 = vunpack.c.l.s4 1987475062
    %v3772 = vunpack.c.0.s8 %v3771
    %v3773 = vlaneseq
    %v3774 = vshrl.u32 %v3773, 7
    %v3775 = vsub.s32 %v3772, %v3774
    %v3776 = vrot.slane %v489, %v3775
    %v3778 = vunpack.c.l.s4 269488144
    %v3779 = vunpack.c.0.s8 %v3778
    %v3780 = vlaneseq
    %v3781 = vshrl.u32 %v3780, 7
    %v3782 = vsub.s32 %v3779, %v3781
    %v3783 = vrot.slane %v492, %v3782
    %v3785 = vunpack.c.l.s4 842150450
    %v3786 = vunpack.c.0.s8 %v3785
    %v3787 = vlaneseq
    %v3788 = vshrl.u32 %v3787, 7
    %v3789 = vsub.s32 %v3786, %v3788
    %v3790 = vrot.slane %v492, %v3789
    %v3792 = vunpack.c.l.s4 1414812756
    %v3793 = vunpack.c.0.s8 %v3792
    %v3794 = vlaneseq
    %v3795 = vshrl.u32 %v3794, 7
    %v3796 = vsub.s32 %v3793, %v3795
    %v3797 = vrot.slane %v492, %v3796
    %v3799 = vunpack.c.l.s4 1987475062
    %v3800 = vunpack.c.0.s8 %v3799
    %v3801 = vlaneseq
    %v3802 = vshrl.u32 %v3801, 7
    %v3803 = vsub.s32 %v3800, %v3802
    %v3804 = vrot.slane %v492, %v3803
    %v3806 = vunpack.c.l.s4 269488144
    %v3807 = vunpack.c.0.s8 %v3806
    %v3808 = vlaneseq
    %v3809 = vshrl.u32 %v3808, 7
    %v3810 = vsub.s32 %v3807, %v3809
    %v3811 = vrot.slane %v495, %v3810
    %v3813 = vunpack.c.l.s4 842150450
    %v3814 = vunpack.c.0.s8 %v3813
    %v3815 = vlaneseq
    %v3816 = vshrl.u32 %v3815, 7
    %v3817 = vsub.s32 %v3814, %v3816
    %v3818 = vrot.slane %v495, %v3817
    %v3820 = vunpack.c.l.s4 1414812756
    %v3821 = vunpack.c.0.s8 %v3820
    %v3822 = vlaneseq
    %v3823 = vshrl.u32 %v3822, 7
    %v3824 = vsub.s32 %v3821, %v3823
    %v3825 = vrot.slane %v495, %v3824
    %v3827 = vunpack.c.l.s4 1987475062
    %v3828 = vunpack.c.0.s8 %v3827
    %v3829 = vlaneseq
    %v3830 = vshrl.u32 %v3829, 7
    %v3831 = vsub.s32 %v3828, %v3830
    %v3832 = vrot.slane %v495, %v3831
    %v3834 = vunpack.c.l.s4 269488144
    %v3835 = vunpack.c.0.s8 %v3834
    %v3836 = vlaneseq
    %v3837 = vshrl.u32 %v3836, 7
    %v3838 = vsub.s32 %v3835, %v3837
    %v3839 = vrot.slane %v498, %v3838
    %v3841 = vunpack.c.l.s4 842150450
    %v3842 = vunpack.c.0.s8 %v3841
    %v3843 = vlaneseq
    %v3844 = vshrl.u32 %v3843, 7
    %v3845 = vsub.s32 %v3842, %v3844
    %v3846 = vrot.slane %v498, %v3845
    %v3848 = vunpack.c.l.s4 1414812756
    %v3849 = vunpack.c.0.s8 %v3848
    %v3850 = vlaneseq
    %v3851 = vshrl.u32 %v3850, 7
    %v3852 = vsub.s32 %v3849, %v3851
    %v3853 = vrot.slane %v498, %v3852
    %v3855 = vunpack.c.l.s4 1987475062
    %v3856 = vunpack.c.0.s8 %v3855
    %v3857 = vlaneseq
    %v3858 = vshrl.u32 %v3857, 7
    %v3859 = vsub.s32 %v3856, %v3858
    %v3860 = vrot.slane %v498, %v3859
    %v3862 = vunpack.c.l.s4 269488144
    %v3863 = vunpack.c.0.s8 %v3862
    %v3864 = vlaneseq
    %v3865 = vshrl.u32 %v3864, 7
    %v3866 = vsub.s32 %v3863, %v3865
    %v3867 = vrot.slane %v501, %v3866
    %v3869 = vunpack.c.l.s4 842150450
    %v3870 = vunpack.c.0.s8 %v3869
    %v3871 = vlaneseq
    %v3872 = vshrl.u32 %v3871, 7
    %v3873 = vsub.s32 %v3870, %v3872
    %v3874 = vrot.slane %v501, %v3873
    %v3876 = vunpack.c.l.s4 1414812756
    %v3877 = vunpack.c.0.s8 %v3876
    %v3878 = vlaneseq
    %v3879 = vshrl.u32 %v3878, 7
    %v3880 = vsub.s32 %v3877, %v3879
    %v3881 = vrot.slane %v501, %v3880
    %v3883 = vunpack.c.l.s4 1987475062
    %v3884 = vunpack.c.0.s8 %v3883
    %v3885 = vlaneseq
    %v3886 = vshrl.u32 %v3885, 7
    %v3887 = vsub.s32 %v3884, %v3886
    %v3888 = vrot.slane %v501, %v3887
    %v3890 = vunpack.c.l.s4 269488144
    %v3891 = vunpack.c.0.s8 %v3890
    %v3892 = vlaneseq
    %v3893 = vshrl.u32 %v3892, 7
    %v3894 = vsub.s32 %v3891, %v3893
    %v3895 = vrot.slane %v504, %v3894
    %v3897 = vunpack.c.l.s4 842150450
    %v3898 = vunpack.c.0.s8 %v3897
    %v3899 = vlaneseq
    %v3900 = vshrl.u32 %v3899, 7
    %v3901 = vsub.s32 %v3898, %v3900
    %v3902 = vrot.slane %v504, %v3901
    %v3904 = vunpack.c.l.s4 1414812756
    %v3905 = vunpack.c.0.s8 %v3904
    %v3906 = vlaneseq
    %v3907 = vshrl.u32 %v3906, 7
    %v3908 = vsub.s32 %v3905, %v3907
    %v3909 = vrot.slane %v504, %v3908
    %v3911 = vunpack.c.l.s4 1987475062
    %v3912 = vunpack.c.0.s8 %v3911
    %v3913 = vlaneseq
    %v3914 = vshrl.u32 %v3913, 7
    %v3915 = vsub.s32 %v3912, %v3914
    %v3916 = vrot.slane %v504, %v3915
    %v3918 = vunpack.c.l.s4 269488144
    %v3919 = vunpack.c.0.s8 %v3918
    %v3920 = vlaneseq
    %v3921 = vshrl.u32 %v3920, 7
    %v3922 = vsub.s32 %v3919, %v3921
    %v3923 = vrot.slane %v507, %v3922
    %v3925 = vunpack.c.l.s4 842150450
    %v3926 = vunpack.c.0.s8 %v3925
    %v3927 = vlaneseq
    %v3928 = vshrl.u32 %v3927, 7
    %v3929 = vsub.s32 %v3926, %v3928
    %v3930 = vrot.slane %v507, %v3929
    %v3932 = vunpack.c.l.s4 1414812756
    %v3933 = vunpack.c.0.s8 %v3932
    %v3934 = vlaneseq
    %v3935 = vshrl.u32 %v3934, 7
    %v3936 = vsub.s32 %v3933, %v3935
    %v3937 = vrot.slane %v507, %v3936
    %v3939 = vunpack.c.l.s4 1987475062
    %v3940 = vunpack.c.0.s8 %v3939
    %v3941 = vlaneseq
    %v3942 = vshrl.u32 %v3941, 7
    %v3943 = vsub.s32 %v3940, %v3942
    %v3944 = vrot.slane %v507, %v3943
    %v3946 = vunpack.c.l.s4 269488144
    %v3947 = vunpack.c.0.s8 %v3946
    %v3948 = vlaneseq
    %v3949 = vshrl.u32 %v3948, 7
    %v3950 = vsub.s32 %v3947, %v3949
    %v3951 = vrot.slane %v510, %v3950
    %v3953 = vunpack.c.l.s4 842150450
    %v3954 = vunpack.c.0.s8 %v3953
    %v3955 = vlaneseq
    %v3956 = vshrl.u32 %v3955, 7
    %v3957 = vsub.s32 %v3954, %v3956
    %v3958 = vrot.slane %v510, %v3957
    %v3960 = vunpack.c.l.s4 1414812756
    %v3961 = vunpack.c.0.s8 %v3960
    %v3962 = vlaneseq
    %v3963 = vshrl.u32 %v3962, 7
    %v3964 = vsub.s32 %v3961, %v3963
    %v3965 = vrot.slane %v510, %v3964
    %v3967 = vunpack.c.l.s4 1987475062
    %v3968 = vunpack.c.0.s8 %v3967
    %v3969 = vlaneseq
    %v3970 = vshrl.u32 %v3969, 7
    %v3971 = vsub.s32 %v3968, %v3970
    %v3972 = vrot.slane %v510, %v3971
    %v3974 = vunpack.c.l.s4 269488144
    %v3975 = vunpack.c.0.s8 %v3974
    %v3976 = vlaneseq
    %v3977 = vshrl.u32 %v3976, 7
    %v3978 = vsub.s32 %v3975, %v3977
    %v3979 = vrot.slane %v513, %v3978
    %v3981 = vunpack.c.l.s4 842150450
    %v3982 = vunpack.c.0.s8 %v3981
    %v3983 = vlaneseq
    %v3984 = vshrl.u32 %v3983, 7
    %v3985 = vsub.s32 %v3982, %v3984
    %v3986 = vrot.slane %v513, %v3985
    %v3988 = vunpack.c.l.s4 1414812756
    %v3989 = vunpack.c.0.s8 %v3988
    %v3990 = vlaneseq
    %v3991 = vshrl.u32 %v3990, 7
    %v3992 = vsub.s32 %v3989, %v3991
    %v3993 = vrot.slane %v513, %v3992
    %v3995 = vunpack.c.l.s4 1987475062
    %v3996 = vunpack.c.0.s8 %v3995
    %v3997 = vlaneseq
    %v3998 = vshrl.u32 %v3997, 7
    %v3999 = vsub.s32 %v3996, %v3998
    %v4000 = vrot.slane %v513, %v3999
    %v4002 = vunpack.c.l.s4 269488144
    %v4003 = vunpack.c.0.s8 %v4002
    %v4004 = vlaneseq
    %v4005 = vshrl.u32 %v4004, 7
    %v4006 = vsub.s32 %v4003, %v4005
    %v4007 = vrot.slane %v516, %v4006
    %v4009 = vunpack.c.l.s4 842150450
    %v4010 = vunpack.c.0.s8 %v4009
    %v4011 = vlaneseq
    %v4012 = vshrl.u32 %v4011, 7
    %v4013 = vsub.s32 %v4010, %v4012
    %v4014 = vrot.slane %v516, %v4013
    %v4016 = vunpack.c.l.s4 1414812756
    %v4017 = vunpack.c.0.s8 %v4016
    %v4018 = vlaneseq
    %v4019 = vshrl.u32 %v4018, 7
    %v4020 = vsub.s32 %v4017, %v4019
    %v4021 = vrot.slane %v516, %v4020
    %v4023 = vunpack.c.l.s4 1987475062
    %v4024 = vunpack.c.0.s8 %v4023
    %v4025 = vlaneseq
    %v4026 = vshrl.u32 %v4025, 7
    %v4027 = vsub.s32 %v4024, %v4026
    %v4028 = vrot.slane %v516, %v4027
    %v4030 = vunpack.c.l.s4 269488144
    %v4031 = vunpack.c.0.s8 %v4030
    %v4032 = vlaneseq
    %v4033 = vshrl.u32 %v4032, 7
    %v4034 = vsub.s32 %v4031, %v4033
    %v4035 = vrot.slane %v519, %v4034
    %v4037 = vunpack.c.l.s4 842150450
    %v4038 = vunpack.c.0.s8 %v4037
    %v4039 = vlaneseq
    %v4040 = vshrl.u32 %v4039, 7
    %v4041 = vsub.s32 %v4038, %v4040
    %v4042 = vrot.slane %v519, %v4041
    %v4044 = vunpack.c.l.s4 1414812756
    %v4045 = vunpack.c.0.s8 %v4044
    %v4046 = vlaneseq
    %v4047 = vshrl.u32 %v4046, 7
    %v4048 = vsub.s32 %v4045, %v4047
    %v4049 = vrot.slane %v519, %v4048
    %v4051 = vunpack.c.l.s4 1987475062
    %v4052 = vunpack.c.0.s8 %v4051
    %v4053 = vlaneseq
    %v4054 = vshrl.u32 %v4053, 7
    %v4055 = vsub.s32 %v4052, %v4054
    %v4056 = vrot.slane %v519, %v4055
    %v4058 = vunpack.c.l.s4 269488144
    %v4059 = vunpack.c.0.s8 %v4058
    %v4060 = vlaneseq
    %v4061 = vshrl.u32 %v4060, 7
    %v4062 = vsub.s32 %v4059, %v4061
    %v4063 = vrot.slane %v522, %v4062
    %v4065 = vunpack.c.l.s4 842150450
    %v4066 = vunpack.c.0.s8 %v4065
    %v4067 = vlaneseq
    %v4068 = vshrl.u32 %v4067, 7
    %v4069 = vsub.s32 %v4066, %v4068
    %v4070 = vrot.slane %v522, %v4069
    %v4072 = vunpack.c.l.s4 1414812756
    %v4073 = vunpack.c.0.s8 %v4072
    %v4074 = vlaneseq
    %v4075 = vshrl.u32 %v4074, 7
    %v4076 = vsub.s32 %v4073, %v4075
    %v4077 = vrot.slane %v522, %v4076
    %v4079 = vunpack.c.l.s4 1987475062
    %v4080 = vunpack.c.0.s8 %v4079
    %v4081 = vlaneseq
    %v4082 = vshrl.u32 %v4081, 7
    %v4083 = vsub.s32 %v4080, %v4082
    %v4084 = vrot.slane %v522, %v4083
    %v4086 = vunpack.c.l.s4 269488144
    %v4087 = vunpack.c.0.s8 %v4086
    %v4088 = vlaneseq
    %v4089 = vshrl.u32 %v4088, 7
    %v4090 = vsub.s32 %v4087, %v4089
    %v4091 = vrot.slane %v525, %v4090
    %v4093 = vunpack.c.l.s4 842150450
    %v4094 = vunpack.c.0.s8 %v4093
    %v4095 = vlaneseq
    %v4096 = vshrl.u32 %v4095, 7
    %v4097 = vsub.s32 %v4094, %v4096
    %v4098 = vrot.slane %v525, %v4097
    %v4100 = vunpack.c.l.s4 1414812756
    %v4101 = vunpack.c.0.s8 %v4100
    %v4102 = vlaneseq
    %v4103 = vshrl.u32 %v4102, 7
    %v4104 = vsub.s32 %v4101, %v4103
    %v4105 = vrot.slane %v525, %v4104
    %v4107 = vunpack.c.l.s4 1987475062
    %v4108 = vunpack.c.0.s8 %v4107
    %v4109 = vlaneseq
    %v4110 = vshrl.u32 %v4109, 7
    %v4111 = vsub.s32 %v4108, %v4110
    %v4112 = vrot.slane %v525, %v4111
    %v4114 = vunpack.c.l.s4 269488144
    %v4115 = vunpack.c.0.s8 %v4114
    %v4116 = vlaneseq
    %v4117 = vshrl.u32 %v4116, 7
    %v4118 = vsub.s32 %v4115, %v4117
    %v4119 = vrot.slane %v528, %v4118
    %v4121 = vunpack.c.l.s4 842150450
    %v4122 = vunpack.c.0.s8 %v4121
    %v4123 = vlaneseq
    %v4124 = vshrl.u32 %v4123, 7
    %v4125 = vsub.s32 %v4122, %v4124
    %v4126 = vrot.slane %v528, %v4125
    %v4128 = vunpack.c.l.s4 1414812756
    %v4129 = vunpack.c.0.s8 %v4128
    %v4130 = vlaneseq
    %v4131 = vshrl.u32 %v4130, 7
    %v4132 = vsub.s32 %v4129, %v4131
    %v4133 = vrot.slane %v528, %v4132
    %v4135 = vunpack.c.l.s4 1987475062
    %v4136 = vunpack.c.0.s8 %v4135
    %v4137 = vlaneseq
    %v4138 = vshrl.u32 %v4137, 7
    %v4139 = vsub.s32 %v4136, %v4138
    %v4140 = vrot.slane %v528, %v4139
    %v4142 = vunpack.c.l.s4 269488144
    %v4143 = vunpack.c.0.s8 %v4142
    %v4144 = vlaneseq
    %v4145 = vshrl.u32 %v4144, 7
    %v4146 = vsub.s32 %v4143, %v4145
    %v4147 = vrot.slane %v531, %v4146
    %v4149 = vunpack.c.l.s4 842150450
    %v4150 = vunpack.c.0.s8 %v4149
    %v4151 = vlaneseq
    %v4152 = vshrl.u32 %v4151, 7
    %v4153 = vsub.s32 %v4150, %v4152
    %v4154 = vrot.slane %v531, %v4153
    %v4156 = vunpack.c.l.s4 1414812756
    %v4157 = vunpack.c.0.s8 %v4156
    %v4158 = vlaneseq
    %v4159 = vshrl.u32 %v4158, 7
    %v4160 = vsub.s32 %v4157, %v4159
    %v4161 = vrot.slane %v531, %v4160
    %v4163 = vunpack.c.l.s4 1987475062
    %v4164 = vunpack.c.0.s8 %v4163
    %v4165 = vlaneseq
    %v4166 = vshrl.u32 %v4165, 7
    %v4167 = vsub.s32 %v4164, %v4166
    %v4168 = vrot.slane %v531, %v4167
    %v4170 = vunpack.c.l.s4 269488144
    %v4171 = vunpack.c.0.s8 %v4170
    %v4172 = vlaneseq
    %v4173 = vshrl.u32 %v4172, 7
    %v4174 = vsub.s32 %v4171, %v4173
    %v4175 = vrot.slane %v534, %v4174
    %v4177 = vunpack.c.l.s4 842150450
    %v4178 = vunpack.c.0.s8 %v4177
    %v4179 = vlaneseq
    %v4180 = vshrl.u32 %v4179, 7
    %v4181 = vsub.s32 %v4178, %v4180
    %v4182 = vrot.slane %v534, %v4181
    %v4184 = vunpack.c.l.s4 1414812756
    %v4185 = vunpack.c.0.s8 %v4184
    %v4186 = vlaneseq
    %v4187 = vshrl.u32 %v4186, 7
    %v4188 = vsub.s32 %v4185, %v4187
    %v4189 = vrot.slane %v534, %v4188
    %v4191 = vunpack.c.l.s4 1987475062
    %v4192 = vunpack.c.0.s8 %v4191
    %v4193 = vlaneseq
    %v4194 = vshrl.u32 %v4193, 7
    %v4195 = vsub.s32 %v4192, %v4194
    %v4196 = vrot.slane %v534, %v4195
    %v4198 = vunpack.c.l.s4 269488144
    %v4199 = vunpack.c.0.s8 %v4198
    %v4200 = vlaneseq
    %v4201 = vshrl.u32 %v4200, 7
    %v4202 = vsub.s32 %v4199, %v4201
    %v4203 = vrot.slane %v537, %v4202
    %v4205 = vunpack.c.l.s4 842150450
    %v4206 = vunpack.c.0.s8 %v4205
    %v4207 = vlaneseq
    %v4208 = vshrl.u32 %v4207, 7
    %v4209 = vsub.s32 %v4206, %v4208
    %v4210 = vrot.slane %v537, %v4209
    %v4212 = vunpack.c.l.s4 1414812756
    %v4213 = vunpack.c.0.s8 %v4212
    %v4214 = vlaneseq
    %v4215 = vshrl.u32 %v4214, 7
    %v4216 = vsub.s32 %v4213, %v4215
    %v4217 = vrot.slane %v537, %v4216
    %v4219 = vunpack.c.l.s4 1987475062
    %v4220 = vunpack.c.0.s8 %v4219
    %v4221 = vlaneseq
    %v4222 = vshrl.u32 %v4221, 7
    %v4223 = vsub.s32 %v4220, %v4222
    %v4224 = vrot.slane %v537, %v4223
    %v4226 = vunpack.c.l.s4 269488144
    %v4227 = vunpack.c.0.s8 %v4226
    %v4228 = vlaneseq
    %v4229 = vshrl.u32 %v4228, 7
    %v4230 = vsub.s32 %v4227, %v4229
    %v4231 = vrot.slane %v540, %v4230
    %v4233 = vunpack.c.l.s4 842150450
    %v4234 = vunpack.c.0.s8 %v4233
    %v4235 = vlaneseq
    %v4236 = vshrl.u32 %v4235, 7
    %v4237 = vsub.s32 %v4234, %v4236
    %v4238 = vrot.slane %v540, %v4237
    %v4240 = vunpack.c.l.s4 1414812756
    %v4241 = vunpack.c.0.s8 %v4240
    %v4242 = vlaneseq
    %v4243 = vshrl.u32 %v4242, 7
    %v4244 = vsub.s32 %v4241, %v4243
    %v4245 = vrot.slane %v540, %v4244
    %v4247 = vunpack.c.l.s4 1987475062
    %v4248 = vunpack.c.0.s8 %v4247
    %v4249 = vlaneseq
    %v4250 = vshrl.u32 %v4249, 7
    %v4251 = vsub.s32 %v4248, %v4250
    %v4252 = vrot.slane %v540, %v4251
    %v4253 = vcombine.low %v675, %v682
    %v4254 = vcombine.low %v689, %v696
    %v4256 = vunpack.c.l.s4 1983009808
    %v4257 = vunpack.c.0.s8 %v4256
    %v4258 = vlaneseq
    %v4259 = vshrl.u32 %v4258, 7
    %v4260 = vsub.s32 %v4257, %v4259
    %v4261 = vrot.slane %v4253, %v4260
    %v4263 = vunpack.c.l.s4 1983009808
    %v4264 = vunpack.c.0.s8 %v4263
    %v4265 = vlaneseq
    %v4266 = vshrl.u32 %v4265, 7
    %v4267 = vsub.s32 %v4264, %v4266
    %v4268 = vrot.slane %v4254, %v4267
    %v4269 = vcombine.low %v4261, %v4268
    %v4270 = vcombine.low %v703, %v710
    %v4271 = vcombine.low %v717, %v724
    %v4273 = vunpack.c.l.s4 1983009808
    %v4274 = vunpack.c.0.s8 %v4273
    %v4275 = vlaneseq
    %v4276 = vshrl.u32 %v4275, 7
    %v4277 = vsub.s32 %v4274, %v4276
    %v4278 = vrot.slane %v4270, %v4277
    %v4280 = vunpack.c.l.s4 1983009808
    %v4281 = vunpack.c.0.s8 %v4280
    %v4282 = vlaneseq
    %v4283 = vshrl.u32 %v4282, 7
    %v4284 = vsub.s32 %v4281, %v4283
    %v4285 = vrot.slane %v4271, %v4284
    %v4286 = vcombine.low %v4278, %v4285
    %v4287 = vcombine.low %v731, %v738
    %v4288 = vcombine.low %v745, %v752
    %v4290 = vunpack.c.l.s4 1983009808
    %v4291 = vunpack.c.0.s8 %v4290
    %v4292 = vlaneseq
    %v4293 = vshrl.u32 %v4292, 7
    %v4294 = vsub.s32 %v4291, %v4293
    %v4295 = vrot.slane %v4287, %v4294
    %v4297 = vunpack.c.l.s4 1983009808
    %v4298 = vunpack.c.0.s8 %v4297
    %v4299 = vlaneseq
    %v4300 = vshrl.u32 %v4299, 7
    %v4301 = vsub.s32 %v4298, %v4300
    %v4302 = vrot.slane %v4288, %v4301
    %v4303 = vcombine.low %v4295, %v4302
    %v4304 = vcombine.low %v759, %v766
    %v4305 = vcombine.low %v773, %v780
    %v4307 = vunpack.c.l.s4 1983009808
    %v4308 = vunpack.c.0.s8 %v4307
    %v4309 = vlaneseq
    %v4310 = vshrl.u32 %v4309, 7
    %v4311 = vsub.s32 %v4308, %v4310
    %v4312 = vrot.slane %v4304, %v4311
    %v4314 = vunpack.c.l.s4 1983009808
    %v4315 = vunpack.c.0.s8 %v4314
    %v4316 = vlaneseq
    %v4317 = vshrl.u32 %v4316, 7
    %v4318 = vsub.s32 %v4315, %v4317
    %v4319 = vrot.slane %v4305, %v4318
    %v4320 = vcombine.low %v4312, %v4319
    %v4321 = vcombine.low %v787, %v794
    %v4322 = vcombine.low %v801, %v808
    %v4324 = vunpack.c.l.s4 1983009808
    %v4325 = vunpack.c.0.s8 %v4324
    %v4326 = vlaneseq
    %v4327 = vshrl.u32 %v4326, 7
    %v4328 = vsub.s32 %v4325, %v4327
    %v4329 = vrot.slane %v4321, %v4328
    %v4331 = vunpack.c.l.s4 1983009808
    %v4332 = vunpack.c.0.s8 %v4331
    %v4333 = vlaneseq
    %v4334 = vshrl.u32 %v4333, 7
    %v4335 = vsub.s32 %v4332, %v4334
    %v4336 = vrot.slane %v4322, %v4335
    %v4337 = vcombine.low %v4329, %v4336
    %v4338 = vcombine.low %v815, %v822
    %v4339 = vcombine.low %v829, %v836
    %v4341 = vunpack.c.l.s4 1983009808
    %v4342 = vunpack.c.0.s8 %v4341
    %v4343 = vlaneseq
    %v4344 = vshrl.u32 %v4343, 7
    %v4345 = vsub.s32 %v4342, %v4344
    %v4346 = vrot.slane %v4338, %v4345
    %v4348 = vunpack.c.l.s4 1983009808
    %v4349 = vunpack.c.0.s8 %v4348
    %v4350 = vlaneseq
    %v4351 = vshrl.u32 %v4350, 7
    %v4352 = vsub.s32 %v4349, %v4351
    %v4353 = vrot.slane %v4339, %v4352
    %v4354 = vcombine.low %v4346, %v4353
    %v4355 = vcombine.low %v843, %v850
    %v4356 = vcombine.low %v857, %v864
    %v4358 = vunpack.c.l.s4 1983009808
    %v4359 = vunpack.c.0.s8 %v4358
    %v4360 = vlaneseq
    %v4361 = vshrl.u32 %v4360, 7
    %v4362 = vsub.s32 %v4359, %v4361
    %v4363 = vrot.slane %v4355, %v4362
    %v4365 = vunpack.c.l.s4 1983009808
    %v4366 = vunpack.c.0.s8 %v4365
    %v4367 = vlaneseq
    %v4368 = vshrl.u32 %v4367, 7
    %v4369 = vsub.s32 %v4366, %v4368
    %v4370 = vrot.slane %v4356, %v4369
    %v4371 = vcombine.low %v4363, %v4370
    %v4372 = vcombine.low %v871, %v878
    %v4373 = vcombine.low %v885, %v892
    %v4375 = vunpack.c.l.s4 1983009808
    %v4376 = vunpack.c.0.s8 %v4375
    %v4377 = vlaneseq
    %v4378 = vshrl.u32 %v4377, 7
    %v4379 = vsub.s32 %v4376, %v4378
    %v4380 = vrot.slane %v4372, %v4379
    %v4382 = vunpack.c.l.s4 1983009808
    %v4383 = vunpack.c.0.s8 %v4382
    %v4384 = vlaneseq
    %v4385 = vshrl.u32 %v4384, 7
    %v4386 = vsub.s32 %v4383, %v4385
    %v4387 = vrot.slane %v4373, %v4386
    %v4388 = vcombine.low %v4380, %v4387
    %v4389 = vcombine.low %v899, %v906
    %v4390 = vcombine.low %v913, %v920
    %v4392 = vunpack.c.l.s4 1983009808
    %v4393 = vunpack.c.0.s8 %v4392
    %v4394 = vlaneseq
    %v4395 = vshrl.u32 %v4394, 7
    %v4396 = vsub.s32 %v4393, %v4395
    %v4397 = vrot.slane %v4389, %v4396
    %v4399 = vunpack.c.l.s4 1983009808
    %v4400 = vunpack.c.0.s8 %v4399
    %v4401 = vlaneseq
    %v4402 = vshrl.u32 %v4401, 7
    %v4403 = vsub.s32 %v4400, %v4402
    %v4404 = vrot.slane %v4390, %v4403
    %v4405 = vcombine.low %v4397, %v4404
    %v4406 = vcombine.low %v927, %v934
    %v4407 = vcombine.low %v941, %v948
    %v4409 = vunpack.c.l.s4 1983009808
    %v4410 = vunpack.c.0.s8 %v4409
    %v4411 = vlaneseq
    %v4412 = vshrl.u32 %v4411, 7
    %v4413 = vsub.s32 %v4410, %v4412
    %v4414 = vrot.slane %v4406, %v4413
    %v4416 = vunpack.c.l.s4 1983009808
    %v4417 = vunpack.c.0.s8 %v4416
    %v4418 = vlaneseq
    %v4419 = vshrl.u32 %v4418, 7
    %v4420 = vsub.s32 %v4417, %v4419
    %v4421 = vrot.slane %v4407, %v4420
    %v4422 = vcombine.low %v4414, %v4421
    %v4423 = vcombine.low %v955, %v962
    %v4424 = vcombine.low %v969, %v976
    %v4426 = vunpack.c.l.s4 1983009808
    %v4427 = vunpack.c.0.s8 %v4426
    %v4428 = vlaneseq
    %v4429 = vshrl.u32 %v4428, 7
    %v4430 = vsub.s32 %v4427, %v4429
    %v4431 = vrot.slane %v4423, %v4430
    %v4433 = vunpack.c.l.s4 1983009808
    %v4434 = vunpack.c.0.s8 %v4433
    %v4435 = vlaneseq
    %v4436 = vshrl.u32 %v4435, 7
    %v4437 = vsub.s32 %v4434, %v4436
    %v4438 = vrot.slane %v4424, %v4437
    %v4439 = vcombine.low %v4431, %v4438
    %v4440 = vcombine.low %v983, %v990
    %v4441 = vcombine.low %v997, %v1004
    %v4443 = vunpack.c.l.s4 1983009808
    %v4444 = vunpack.c.0.s8 %v4443
    %v4445 = vlaneseq
    %v4446 = vshrl.u32 %v4445, 7
    %v4447 = vsub.s32 %v4444, %v4446
    %v4448 = vrot.slane %v4440, %v4447
    %v4450 = vunpack.c.l.s4 1983009808
    %v4451 = vunpack.c.0.s8 %v4450
    %v4452 = vlaneseq
    %v4453 = vshrl.u32 %v4452, 7
    %v4454 = vsub.s32 %v4451, %v4453
    %v4455 = vrot.slane %v4441, %v4454
    %v4456 = vcombine.low %v4448, %v4455
    %v4457 = vcombine.low %v1011, %v1018
    %v4458 = vcombine.low %v1025, %v1032
    %v4460 = vunpack.c.l.s4 1983009808
    %v4461 = vunpack.c.0.s8 %v4460
    %v4462 = vlaneseq
    %v4463 = vshrl.u32 %v4462, 7
    %v4464 = vsub.s32 %v4461, %v4463
    %v4465 = vrot.slane %v4457, %v4464
    %v4467 = vunpack.c.l.s4 1983009808
    %v4468 = vunpack.c.0.s8 %v4467
    %v4469 = vlaneseq
    %v4470 = vshrl.u32 %v4469, 7
    %v4471 = vsub.s32 %v4468, %v4470
    %v4472 = vrot.slane %v4458, %v4471
    %v4473 = vcombine.low %v4465, %v4472
    %v4474 = vcombine.low %v1039, %v1046
    %v4475 = vcombine.low %v1053, %v1060
    %v4477 = vunpack.c.l.s4 1983009808
    %v4478 = vunpack.c.0.s8 %v4477
    %v4479 = vlaneseq
    %v4480 = vshrl.u32 %v4479, 7
    %v4481 = vsub.s32 %v4478, %v4480
    %v4482 = vrot.slane %v4474, %v4481
    %v4484 = vunpack.c.l.s4 1983009808
    %v4485 = vunpack.c.0.s8 %v4484
    %v4486 = vlaneseq
    %v4487 = vshrl.u32 %v4486, 7
    %v4488 = vsub.s32 %v4485, %v4487
    %v4489 = vrot.slane %v4475, %v4488
    %v4490 = vcombine.low %v4482, %v4489
    %v4491 = vcombine.low %v1067, %v1074
    %v4492 = vcombine.low %v1081, %v1088
    %v4494 = vunpack.c.l.s4 1983009808
    %v4495 = vunpack.c.0.s8 %v4494
    %v4496 = vlaneseq
    %v4497 = vshrl.u32 %v4496, 7
    %v4498 = vsub.s32 %v4495, %v4497
    %v4499 = vrot.slane %v4491, %v4498
    %v4501 = vunpack.c.l.s4 1983009808
    %v4502 = vunpack.c.0.s8 %v4501
    %v4503 = vlaneseq
    %v4504 = vshrl.u32 %v4503, 7
    %v4505 = vsub.s32 %v4502, %v4504
    %v4506 = vrot.slane %v4492, %v4505
    %v4507 = vcombine.low %v4499, %v4506
    %v4508 = vcombine.low %v1095, %v1102
    %v4509 = vcombine.low %v1109, %v1116
    %v4511 = vunpack.c.l.s4 1983009808
    %v4512 = vunpack.c.0.s8 %v4511
    %v4513 = vlaneseq
    %v4514 = vshrl.u32 %v4513, 7
    %v4515 = vsub.s32 %v4512, %v4514
    %v4516 = vrot.slane %v4508, %v4515
    %v4518 = vunpack.c.l.s4 1983009808
    %v4519 = vunpack.c.0.s8 %v4518
    %v4520 = vlaneseq
    %v4521 = vshrl.u32 %v4520, 7
    %v4522 = vsub.s32 %v4519, %v4521
    %v4523 = vrot.slane %v4509, %v4522
    %v4524 = vcombine.low %v4516, %v4523
    %v4525 = vcombine.low %v1123, %v1130
    %v4526 = vcombine.low %v1137, %v1144
    %v4528 = vunpack.c.l.s4 1983009808
    %v4529 = vunpack.c.0.s8 %v4528
    %v4530 = vlaneseq
    %v4531 = vshrl.u32 %v4530, 7
    %v4532 = vsub.s32 %v4529, %v4531
    %v4533 = vrot.slane %v4525, %v4532
    %v4535 = vunpack.c.l.s4 1983009808
    %v4536 = vunpack.c.0.s8 %v4535
    %v4537 = vlaneseq
    %v4538 = vshrl.u32 %v4537, 7
    %v4539 = vsub.s32 %v4536, %v4538
    %v4540 = vrot.slane %v4526, %v4539
    %v4541 = vcombine.low %v4533, %v4540
    %v4542 = vcombine.low %v1151, %v1158
    %v4543 = vcombine.low %v1165, %v1172
    %v4545 = vunpack.c.l.s4 1983009808
    %v4546 = vunpack.c.0.s8 %v4545
    %v4547 = vlaneseq
    %v4548 = vshrl.u32 %v4547, 7
    %v4549 = vsub.s32 %v4546, %v4548
    %v4550 = vrot.slane %v4542, %v4549
    %v4552 = vunpack.c.l.s4 1983009808
    %v4553 = vunpack.c.0.s8 %v4552
    %v4554 = vlaneseq
    %v4555 = vshrl.u32 %v4554, 7
    %v4556 = vsub.s32 %v4553, %v4555
    %v4557 = vrot.slane %v4543, %v4556
    %v4558 = vcombine.low %v4550, %v4557
    %v4559 = vcombine.low %v1179, %v1186
    %v4560 = vcombine.low %v1193, %v1200
    %v4562 = vunpack.c.l.s4 1983009808
    %v4563 = vunpack.c.0.s8 %v4562
    %v4564 = vlaneseq
    %v4565 = vshrl.u32 %v4564, 7
    %v4566 = vsub.s32 %v4563, %v4565
    %v4567 = vrot.slane %v4559, %v4566
    %v4569 = vunpack.c.l.s4 1983009808
    %v4570 = vunpack.c.0.s8 %v4569
    %v4571 = vlaneseq
    %v4572 = vshrl.u32 %v4571, 7
    %v4573 = vsub.s32 %v4570, %v4572
    %v4574 = vrot.slane %v4560, %v4573
    %v4575 = vcombine.low %v4567, %v4574
    %v4576 = vcombine.low %v1207, %v1214
    %v4577 = vcombine.low %v1221, %v1228
    %v4579 = vunpack.c.l.s4 1983009808
    %v4580 = vunpack.c.0.s8 %v4579
    %v4581 = vlaneseq
    %v4582 = vshrl.u32 %v4581, 7
    %v4583 = vsub.s32 %v4580, %v4582
    %v4584 = vrot.slane %v4576, %v4583
    %v4586 = vunpack.c.l.s4 1983009808
    %v4587 = vunpack.c.0.s8 %v4586
    %v4588 = vlaneseq
    %v4589 = vshrl.u32 %v4588, 7
    %v4590 = vsub.s32 %v4587, %v4589
    %v4591 = vrot.slane %v4577, %v4590
    %v4592 = vcombine.low %v4584, %v4591
    %v4593 = vcombine.low %v1235, %v1242
    %v4594 = vcombine.low %v1249, %v1256
    %v4596 = vunpack.c.l.s4 1983009808
    %v4597 = vunpack.c.0.s8 %v4596
    %v4598 = vlaneseq
    %v4599 = vshrl.u32 %v4598, 7
    %v4600 = vsub.s32 %v4597, %v4599
    %v4601 = vrot.slane %v4593, %v4600
    %v4603 = vunpack.c.l.s4 1983009808
    %v4604 = vunpack.c.0.s8 %v4603
    %v4605 = vlaneseq
    %v4606 = vshrl.u32 %v4605, 7
    %v4607 = vsub.s32 %v4604, %v4606
    %v4608 = vrot.slane %v4594, %v4607
    %v4609 = vcombine.low %v4601, %v4608
    %v4610 = vcombine.low %v1263, %v1270
    %v4611 = vcombine.low %v1277, %v1284
    %v4613 = vunpack.c.l.s4 1983009808
    %v4614 = vunpack.c.0.s8 %v4613
    %v4615 = vlaneseq
    %v4616 = vshrl.u32 %v4615, 7
    %v4617 = vsub.s32 %v4614, %v4616
    %v4618 = vrot.slane %v4610, %v4617
    %v4620 = vunpack.c.l.s4 1983009808
    %v4621 = vunpack.c.0.s8 %v4620
    %v4622 = vlaneseq
    %v4623 = vshrl.u32 %v4622, 7
    %v4624 = vsub.s32 %v4621, %v4623
    %v4625 = vrot.slane %v4611, %v4624
    %v4626 = vcombine.low %v4618, %v4625
    %v4627 = vcombine.low %v1291, %v1298
    %v4628 = vcombine.low %v1305, %v1312
    %v4630 = vunpack.c.l.s4 1983009808
    %v4631 = vunpack.c.0.s8 %v4630
    %v4632 = vlaneseq
    %v4633 = vshrl.u32 %v4632, 7
    %v4634 = vsub.s32 %v4631, %v4633
    %v4635 = vrot.slane %v4627, %v4634
    %v4637 = vunpack.c.l.s4 1983009808
    %v4638 = vunpack.c.0.s8 %v4637
    %v4639 = vlaneseq
    %v4640 = vshrl.u32 %v4639, 7
    %v4641 = vsub.s32 %v4638, %v4640
    %v4642 = vrot.slane %v4628, %v4641
    %v4643 = vcombine.low %v4635, %v4642
    %v4644 = vcombine.low %v1319, %v1326
    %v4645 = vcombine.low %v1333, %v1340
    %v4647 = vunpack.c.l.s4 1983009808
    %v4648 = vunpack.c.0.s8 %v4647
    %v4649 = vlaneseq
    %v4650 = vshrl.u32 %v4649, 7
    %v4651 = vsub.s32 %v4648, %v4650
    %v4652 = vrot.slane %v4644, %v4651
    %v4654 = vunpack.c.l.s4 1983009808
    %v4655 = vunpack.c.0.s8 %v4654
    %v4656 = vlaneseq
    %v4657 = vshrl.u32 %v4656, 7
    %v4658 = vsub.s32 %v4655, %v4657
    %v4659 = vrot.slane %v4645, %v4658
    %v4660 = vcombine.low %v4652, %v4659
    %v4661 = vcombine.low %v1347, %v1354
    %v4662 = vcombine.low %v1361, %v1368
    %v4664 = vunpack.c.l.s4 1983009808
    %v4665 = vunpack.c.0.s8 %v4664
    %v4666 = vlaneseq
    %v4667 = vshrl.u32 %v4666, 7
    %v4668 = vsub.s32 %v4665, %v4667
    %v4669 = vrot.slane %v4661, %v4668
    %v4671 = vunpack.c.l.s4 1983009808
    %v4672 = vunpack.c.0.s8 %v4671
    %v4673 = vlaneseq
    %v4674 = vshrl.u32 %v4673, 7
    %v4675 = vsub.s32 %v4672, %v4674
    %v4676 = vrot.slane %v4662, %v4675
    %v4677 = vcombine.low %v4669, %v4676
    %v4678 = vcombine.low %v1375, %v1382
    %v4679 = vcombine.low %v1389, %v1396
    %v4681 = vunpack.c.l.s4 1983009808
    %v4682 = vunpack.c.0.s8 %v4681
    %v4683 = vlaneseq
    %v4684 = vshrl.u32 %v4683, 7
    %v4685 = vsub.s32 %v4682, %v4684
    %v4686 = vrot.slane %v4678, %v4685
    %v4688 = vunpack.c.l.s4 1983009808
    %v4689 = vunpack.c.0.s8 %v4688
    %v4690 = vlaneseq
    %v4691 = vshrl.u32 %v4690, 7
    %v4692 = vsub.s32 %v4689, %v4691
    %v4693 = vrot.slane %v4679, %v4692
    %v4694 = vcombine.low %v4686, %v4693
    %v4695 = vcombine.low %v1403, %v1410
    %v4696 = vcombine.low %v1417, %v1424
    %v4698 = vunpack.c.l.s4 1983009808
    %v4699 = vunpack.c.0.s8 %v4698
    %v4700 = vlaneseq
    %v4701 = vshrl.u32 %v4700, 7
    %v4702 = vsub.s32 %v4699, %v4701
    %v4703 = vrot.slane %v4695, %v4702
    %v4705 = vunpack.c.l.s4 1983009808
    %v4706 = vunpack.c.0.s8 %v4705
    %v4707 = vlaneseq
    %v4708 = vshrl.u32 %v4707, 7
    %v4709 = vsub.s32 %v4706, %v4708
    %v4710 = vrot.slane %v4696, %v4709
    %v4711 = vcombine.low %v4703, %v4710
    %v4712 = vcombine.low %v1431, %v1438
    %v4713 = vcombine.low %v1445, %v1452
    %v4715 = vunpack.c.l.s4 1983009808
    %v4716 = vunpack.c.0.s8 %v4715
    %v4717 = vlaneseq
    %v4718 = vshrl.u32 %v4717, 7
    %v4719 = vsub.s32 %v4716, %v4718
    %v4720 = vrot.slane %v4712, %v4719
    %v4722 = vunpack.c.l.s4 1983009808
    %v4723 = vunpack.c.0.s8 %v4722
    %v4724 = vlaneseq
    %v4725 = vshrl.u32 %v4724, 7
    %v4726 = vsub.s32 %v4723, %v4725
    %v4727 = vrot.slane %v4713, %v4726
    %v4728 = vcombine.low %v4720, %v4727
    %v4729 = vcombine.low %v1459, %v1466
    %v4730 = vcombine.low %v1473, %v1480
    %v4732 = vunpack.c.l.s4 1983009808
    %v4733 = vunpack.c.0.s8 %v4732
    %v4734 = vlaneseq
    %v4735 = vshrl.u32 %v4734, 7
    %v4736 = vsub.s32 %v4733, %v4735
    %v4737 = vrot.slane %v4729, %v4736
    %v4739 = vunpack.c.l.s4 1983009808
    %v4740 = vunpack.c.0.s8 %v4739
    %v4741 = vlaneseq
    %v4742 = vshrl.u32 %v4741, 7
    %v4743 = vsub.s32 %v4740, %v4742
    %v4744 = vrot.slane %v4730, %v4743
    %v4745 = vcombine.low %v4737, %v4744
    %v4746 = vcombine.low %v1487, %v1494
    %v4747 = vcombine.low %v1501, %v1508
    %v4749 = vunpack.c.l.s4 1983009808
    %v4750 = vunpack.c.0.s8 %v4749
    %v4751 = vlaneseq
    %v4752 = vshrl.u32 %v4751, 7
    %v4753 = vsub.s32 %v4750, %v4752
    %v4754 = vrot.slane %v4746, %v4753
    %v4756 = vunpack.c.l.s4 1983009808
    %v4757 = vunpack.c.0.s8 %v4756
    %v4758 = vlaneseq
    %v4759 = vshrl.u32 %v4758, 7
    %v4760 = vsub.s32 %v4757, %v4759
    %v4761 = vrot.slane %v4747, %v4760
    %v4762 = vcombine.low %v4754, %v4761
    %v4763 = vcombine.low %v1515, %v1522
    %v4764 = vcombine.low %v1529, %v1536
    %v4766 = vunpack.c.l.s4 1983009808
    %v4767 = vunpack.c.0.s8 %v4766
    %v4768 = vlaneseq
    %v4769 = vshrl.u32 %v4768, 7
    %v4770 = vsub.s32 %v4767, %v4769
    %v4771 = vrot.slane %v4763, %v4770
    %v4773 = vunpack.c.l.s4 1983009808
    %v4774 = vunpack.c.0.s8 %v4773
    %v4775 = vlaneseq
    %v4776 = vshrl.u32 %v4775, 7
    %v4777 = vsub.s32 %v4774, %v4776
    %v4778 = vrot.slane %v4764, %v4777
    %v4779 = vcombine.low %v4771, %v4778
    %v4780 = vcombine.low %v1543, %v1550
    %v4781 = vcombine.low %v1557, %v1564
    %v4783 = vunpack.c.l.s4 1983009808
    %v4784 = vunpack.c.0.s8 %v4783
    %v4785 = vlaneseq
    %v4786 = vshrl.u32 %v4785, 7
    %v4787 = vsub.s32 %v4784, %v4786
    %v4788 = vrot.slane %v4780, %v4787
    %v4790 = vunpack.c.l.s4 1983009808
    %v4791 = vunpack.c.0.s8 %v4790
    %v4792 = vlaneseq
    %v4793 = vshrl.u32 %v4792, 7
    %v4794 = vsub.s32 %v4791, %v4793
    %v4795 = vrot.slane %v4781, %v4794
    %v4796 = vcombine.low %v4788, %v4795
    %v4797 = vcombine.low %v1571, %v1578
    %v4798 = vcombine.low %v1585, %v1592
    %v4800 = vunpack.c.l.s4 1983009808
    %v4801 = vunpack.c.0.s8 %v4800
    %v4802 = vlaneseq
    %v4803 = vshrl.u32 %v4802, 7
    %v4804 = vsub.s32 %v4801, %v4803
    %v4805 = vrot.slane %v4797, %v4804
    %v4807 = vunpack.c.l.s4 1983009808
    %v4808 = vunpack.c.0.s8 %v4807
    %v4809 = vlaneseq
    %v4810 = vshrl.u32 %v4809, 7
    %v4811 = vsub.s32 %v4808, %v4810
    %v4812 = vrot.slane %v4798, %v4811
    %v4813 = vcombine.low %v4805, %v4812
    %v4814 = vcombine.low %v1599, %v1606
    %v4815 = vcombine.low %v1613, %v1620
    %v4817 = vunpack.c.l.s4 1983009808
    %v4818 = vunpack.c.0.s8 %v4817
    %v4819 = vlaneseq
    %v4820 = vshrl.u32 %v4819, 7
    %v4821 = vsub.s32 %v4818, %v4820
    %v4822 = vrot.slane %v4814, %v4821
    %v4824 = vunpack.c.l.s4 1983009808
    %v4825 = vunpack.c.0.s8 %v4824
    %v4826 = vlaneseq
    %v4827 = vshrl.u32 %v4826, 7
    %v4828 = vsub.s32 %v4825, %v4827
    %v4829 = vrot.slane %v4815, %v4828
    %v4830 = vcombine.low %v4822, %v4829
    %v4831 = vcombine.low %v1627, %v1634
    %v4832 = vcombine.low %v1641, %v1648
    %v4834 = vunpack.c.l.s4 1983009808
    %v4835 = vunpack.c.0.s8 %v4834
    %v4836 = vlaneseq
    %v4837 = vshrl.u32 %v4836, 7
    %v4838 = vsub.s32 %v4835, %v4837
    %v4839 = vrot.slane %v4831, %v4838
    %v4841 = vunpack.c.l.s4 1983009808
    %v4842 = vunpack.c.0.s8 %v4841
    %v4843 = vlaneseq
    %v4844 = vshrl.u32 %v4843, 7
    %v4845 = vsub.s32 %v4842, %v4844
    %v4846 = vrot.slane %v4832, %v4845
    %v4847 = vcombine.low %v4839, %v4846
    %v4848 = vcombine.low %v1655, %v1662
    %v4849 = vcombine.low %v1669, %v1676
    %v4851 = vunpack.c.l.s4 1983009808
    %v4852 = vunpack.c.0.s8 %v4851
    %v4853 = vlaneseq
    %v4854 = vshrl.u32 %v4853, 7
    %v4855 = vsub.s32 %v4852, %v4854
    %v4856 = vrot.slane %v4848, %v4855
    %v4858 = vunpack.c.l.s4 1983009808
    %v4859 = vunpack.c.0.s8 %v4858
    %v4860 = vlaneseq
    %v4861 = vshrl.u32 %v4860, 7
    %v4862 = vsub.s32 %v4859, %v4861
    %v4863 = vrot.slane %v4849, %v4862
    %v4864 = vcombine.low %v4856, %v4863
    %v4865 = vcombine.low %v1683, %v1690
    %v4866 = vcombine.low %v1697, %v1704
    %v4868 = vunpack.c.l.s4 1983009808
    %v4869 = vunpack.c.0.s8 %v4868
    %v4870 = vlaneseq
    %v4871 = vshrl.u32 %v4870, 7
    %v4872 = vsub.s32 %v4869, %v4871
    %v4873 = vrot.slane %v4865, %v4872
    %v4875 = vunpack.c.l.s4 1983009808
    %v4876 = vunpack.c.0.s8 %v4875
    %v4877 = vlaneseq
    %v4878 = vshrl.u32 %v4877, 7
    %v4879 = vsub.s32 %v4876, %v4878
    %v4880 = vrot.slane %v4866, %v4879
    %v4881 = vcombine.low %v4873, %v4880
    %v4882 = vcombine.low %v1711, %v1718
    %v4883 = vcombine.low %v1725, %v1732
    %v4885 = vunpack.c.l.s4 1983009808
    %v4886 = vunpack.c.0.s8 %v4885
    %v4887 = vlaneseq
    %v4888 = vshrl.u32 %v4887, 7
    %v4889 = vsub.s32 %v4886, %v4888
    %v4890 = vrot.slane %v4882, %v4889
    %v4892 = vunpack.c.l.s4 1983009808
    %v4893 = vunpack.c.0.s8 %v4892
    %v4894 = vlaneseq
    %v4895 = vshrl.u32 %v4894, 7
    %v4896 = vsub.s32 %v4893, %v4895
    %v4897 = vrot.slane %v4883, %v4896
    %v4898 = vcombine.low %v4890, %v4897
    %v4899 = vcombine.low %v1739, %v1746
    %v4900 = vcombine.low %v1753, %v1760
    %v4902 = vunpack.c.l.s4 1983009808
    %v4903 = vunpack.c.0.s8 %v4902
    %v4904 = vlaneseq
    %v4905 = vshrl.u32 %v4904, 7
    %v4906 = vsub.s32 %v4903, %v4905
    %v4907 = vrot.slane %v4899, %v4906
    %v4909 = vunpack.c.l.s4 1983009808
    %v4910 = vunpack.c.0.s8 %v4909
    %v4911 = vlaneseq
    %v4912 = vshrl.u32 %v4911, 7
    %v4913 = vsub.s32 %v4910, %v4912
    %v4914 = vrot.slane %v4900, %v4913
    %v4915 = vcombine.low %v4907, %v4914
    %v4916 = vcombine.low %v1767, %v1774
    %v4917 = vcombine.low %v1781, %v1788
    %v4919 = vunpack.c.l.s4 1983009808
    %v4920 = vunpack.c.0.s8 %v4919
    %v4921 = vlaneseq
    %v4922 = vshrl.u32 %v4921, 7
    %v4923 = vsub.s32 %v4920, %v4922
    %v4924 = vrot.slane %v4916, %v4923
    %v4926 = vunpack.c.l.s4 1983009808
    %v4927 = vunpack.c.0.s8 %v4926
    %v4928 = vlaneseq
    %v4929 = vshrl.u32 %v4928, 7
    %v4930 = vsub.s32 %v4927, %v4929
    %v4931 = vrot.slane %v4917, %v4930
    %v4932 = vcombine.low %v4924, %v4931
    %v4933 = vcombine.low %v1795, %v1802
    %v4934 = vcombine.low %v1809, %v1816
    %v4936 = vunpack.c.l.s4 1983009808
    %v4937 = vunpack.c.0.s8 %v4936
    %v4938 = vlaneseq
    %v4939 = vshrl.u32 %v4938, 7
    %v4940 = vsub.s32 %v4937, %v4939
    %v4941 = vrot.slane %v4933, %v4940
    %v4943 = vunpack.c.l.s4 1983009808
    %v4944 = vunpack.c.0.s8 %v4943
    %v4945 = vlaneseq
    %v4946 = vshrl.u32 %v4945, 7
    %v4947 = vsub.s32 %v4944, %v4946
    %v4948 = vrot.slane %v4934, %v4947
    %v4949 = vcombine.low %v4941, %v4948
    %v4950 = vcombine.low %v1823, %v1830
    %v4951 = vcombine.low %v1837, %v1844
    %v4953 = vunpack.c.l.s4 1983009808
    %v4954 = vunpack.c.0.s8 %v4953
    %v4955 = vlaneseq
    %v4956 = vshrl.u32 %v4955, 7
    %v4957 = vsub.s32 %v4954, %v4956
    %v4958 = vrot.slane %v4950, %v4957
    %v4960 = vunpack.c.l.s4 1983009808
    %v4961 = vunpack.c.0.s8 %v4960
    %v4962 = vlaneseq
    %v4963 = vshrl.u32 %v4962, 7
    %v4964 = vsub.s32 %v4961, %v4963
    %v4965 = vrot.slane %v4951, %v4964
    %v4966 = vcombine.low %v4958, %v4965
    %v4967 = vcombine.low %v1851, %v1858
    %v4968 = vcombine.low %v1865, %v1872
    %v4970 = vunpack.c.l.s4 1983009808
    %v4971 = vunpack.c.0.s8 %v4970
    %v4972 = vlaneseq
    %v4973 = vshrl.u32 %v4972, 7
    %v4974 = vsub.s32 %v4971, %v4973
    %v4975 = vrot.slane %v4967, %v4974
    %v4977 = vunpack.c.l.s4 1983009808
    %v4978 = vunpack.c.0.s8 %v4977
    %v4979 = vlaneseq
    %v4980 = vshrl.u32 %v4979, 7
    %v4981 = vsub.s32 %v4978, %v4980
    %v4982 = vrot.slane %v4968, %v4981
    %v4983 = vcombine.low %v4975, %v4982
    %v4984 = vcombine.low %v1879, %v1886
    %v4985 = vcombine.low %v1893, %v1900
    %v4987 = vunpack.c.l.s4 1983009808
    %v4988 = vunpack.c.0.s8 %v4987
    %v4989 = vlaneseq
    %v4990 = vshrl.u32 %v4989, 7
    %v4991 = vsub.s32 %v4988, %v4990
    %v4992 = vrot.slane %v4984, %v4991
    %v4994 = vunpack.c.l.s4 1983009808
    %v4995 = vunpack.c.0.s8 %v4994
    %v4996 = vlaneseq
    %v4997 = vshrl.u32 %v4996, 7
    %v4998 = vsub.s32 %v4995, %v4997
    %v4999 = vrot.slane %v4985, %v4998
    %v5000 = vcombine.low %v4992, %v4999
    %v5001 = vcombine.low %v1907, %v1914
    %v5002 = vcombine.low %v1921, %v1928
    %v5004 = vunpack.c.l.s4 1983009808
    %v5005 = vunpack.c.0.s8 %v5004
    %v5006 = vlaneseq
    %v5007 = vshrl.u32 %v5006, 7
    %v5008 = vsub.s32 %v5005, %v5007
    %v5009 = vrot.slane %v5001, %v5008
    %v5011 = vunpack.c.l.s4 1983009808
    %v5012 = vunpack.c.0.s8 %v5011
    %v5013 = vlaneseq
    %v5014 = vshrl.u32 %v5013, 7
    %v5015 = vsub.s32 %v5012, %v5014
    %v5016 = vrot.slane %v5002, %v5015
    %v5017 = vcombine.low %v5009, %v5016
    %v5018 = vcombine.low %v1935, %v1942
    %v5019 = vcombine.low %v1949, %v1956
    %v5021 = vunpack.c.l.s4 1983009808
    %v5022 = vunpack.c.0.s8 %v5021
    %v5023 = vlaneseq
    %v5024 = vshrl.u32 %v5023, 7
    %v5025 = vsub.s32 %v5022, %v5024
    %v5026 = vrot.slane %v5018, %v5025
    %v5028 = vunpack.c.l.s4 1983009808
    %v5029 = vunpack.c.0.s8 %v5028
    %v5030 = vlaneseq
    %v5031 = vshrl.u32 %v5030, 7
    %v5032 = vsub.s32 %v5029, %v5031
    %v5033 = vrot.slane %v5019, %v5032
    %v5034 = vcombine.low %v5026, %v5033
    %v5035 = vcombine.low %v1963, %v1970
    %v5036 = vcombine.low %v1977, %v1984
    %v5038 = vunpack.c.l.s4 1983009808
    %v5039 = vunpack.c.0.s8 %v5038
    %v5040 = vlaneseq
    %v5041 = vshrl.u32 %v5040, 7
    %v5042 = vsub.s32 %v5039, %v5041
    %v5043 = vrot.slane %v5035, %v5042
    %v5045 = vunpack.c.l.s4 1983009808
    %v5046 = vunpack.c.0.s8 %v5045
    %v5047 = vlaneseq
    %v5048 = vshrl.u32 %v5047, 7
    %v5049 = vsub.s32 %v5046, %v5048
    %v5050 = vrot.slane %v5036, %v5049
    %v5051 = vcombine.low %v5043, %v5050
    %v5052 = vcombine.low %v1991, %v1998
    %v5053 = vcombine.low %v2005, %v2012
    %v5055 = vunpack.c.l.s4 1983009808
    %v5056 = vunpack.c.0.s8 %v5055
    %v5057 = vlaneseq
    %v5058 = vshrl.u32 %v5057, 7
    %v5059 = vsub.s32 %v5056, %v5058
    %v5060 = vrot.slane %v5052, %v5059
    %v5062 = vunpack.c.l.s4 1983009808
    %v5063 = vunpack.c.0.s8 %v5062
    %v5064 = vlaneseq
    %v5065 = vshrl.u32 %v5064, 7
    %v5066 = vsub.s32 %v5063, %v5065
    %v5067 = vrot.slane %v5053, %v5066
    %v5068 = vcombine.low %v5060, %v5067
    %v5069 = vcombine.low %v2019, %v2026
    %v5070 = vcombine.low %v2033, %v2040
    %v5072 = vunpack.c.l.s4 1983009808
    %v5073 = vunpack.c.0.s8 %v5072
    %v5074 = vlaneseq
    %v5075 = vshrl.u32 %v5074, 7
    %v5076 = vsub.s32 %v5073, %v5075
    %v5077 = vrot.slane %v5069, %v5076
    %v5079 = vunpack.c.l.s4 1983009808
    %v5080 = vunpack.c.0.s8 %v5079
    %v5081 = vlaneseq
    %v5082 = vshrl.u32 %v5081, 7
    %v5083 = vsub.s32 %v5080, %v5082
    %v5084 = vrot.slane %v5070, %v5083
    %v5085 = vcombine.low %v5077, %v5084
    %v5086 = vcombine.low %v2047, %v2054
    %v5087 = vcombine.low %v2061, %v2068
    %v5089 = vunpack.c.l.s4 1983009808
    %v5090 = vunpack.c.0.s8 %v5089
    %v5091 = vlaneseq
    %v5092 = vshrl.u32 %v5091, 7
    %v5093 = vsub.s32 %v5090, %v5092
    %v5094 = vrot.slane %v5086, %v5093
    %v5096 = vunpack.c.l.s4 1983009808
    %v5097 = vunpack.c.0.s8 %v5096
    %v5098 = vlaneseq
    %v5099 = vshrl.u32 %v5098, 7
    %v5100 = vsub.s32 %v5097, %v5099
    %v5101 = vrot.slane %v5087, %v5100
    %v5102 = vcombine.low %v5094, %v5101
    %v5103 = vcombine.low %v2075, %v2082
    %v5104 = vcombine.low %v2089, %v2096
    %v5106 = vunpack.c.l.s4 1983009808
    %v5107 = vunpack.c.0.s8 %v5106
    %v5108 = vlaneseq
    %v5109 = vshrl.u32 %v5108, 7
    %v5110 = vsub.s32 %v5107, %v5109
    %v5111 = vrot.slane %v5103, %v5110
    %v5113 = vunpack.c.l.s4 1983009808
    %v5114 = vunpack.c.0.s8 %v5113
    %v5115 = vlaneseq
    %v5116 = vshrl.u32 %v5115, 7
    %v5117 = vsub.s32 %v5114, %v5116
    %v5118 = vrot.slane %v5104, %v5117
    %v5119 = vcombine.low %v5111, %v5118
    %v5120 = vcombine.low %v2103, %v2110
    %v5121 = vcombine.low %v2117, %v2124
    %v5123 = vunpack.c.l.s4 1983009808
    %v5124 = vunpack.c.0.s8 %v5123
    %v5125 = vlaneseq
    %v5126 = vshrl.u32 %v5125, 7
    %v5127 = vsub.s32 %v5124, %v5126
    %v5128 = vrot.slane %v5120, %v5127
    %v5130 = vunpack.c.l.s4 1983009808
    %v5131 = vunpack.c.0.s8 %v5130
    %v5132 = vlaneseq
    %v5133 = vshrl.u32 %v5132, 7
    %v5134 = vsub.s32 %v5131, %v5133
    %v5135 = vrot.slane %v5121, %v5134
    %v5136 = vcombine.low %v5128, %v5135
    %v5137 = vcombine.low %v2131, %v2138
    %v5138 = vcombine.low %v2145, %v2152
    %v5140 = vunpack.c.l.s4 1983009808
    %v5141 = vunpack.c.0.s8 %v5140
    %v5142 = vlaneseq
    %v5143 = vshrl.u32 %v5142, 7
    %v5144 = vsub.s32 %v5141, %v5143
    %v5145 = vrot.slane %v5137, %v5144
    %v5147 = vunpack.c.l.s4 1983009808
    %v5148 = vunpack.c.0.s8 %v5147
    %v5149 = vlaneseq
    %v5150 = vshrl.u32 %v5149, 7
    %v5151 = vsub.s32 %v5148, %v5150
    %v5152 = vrot.slane %v5138, %v5151
    %v5153 = vcombine.low %v5145, %v5152
    %v5154 = vcombine.low %v2159, %v2166
    %v5155 = vcombine.low %v2173, %v2180
    %v5157 = vunpack.c.l.s4 1983009808
    %v5158 = vunpack.c.0.s8 %v5157
    %v5159 = vlaneseq
    %v5160 = vshrl.u32 %v5159, 7
    %v5161 = vsub.s32 %v5158, %v5160
    %v5162 = vrot.slane %v5154, %v5161
    %v5164 = vunpack.c.l.s4 1983009808
    %v5165 = vunpack.c.0.s8 %v5164
    %v5166 = vlaneseq
    %v5167 = vshrl.u32 %v5166, 7
    %v5168 = vsub.s32 %v5165, %v5167
    %v5169 = vrot.slane %v5155, %v5168
    %v5170 = vcombine.low %v5162, %v5169
    %v5171 = vcombine.low %v2187, %v2194
    %v5172 = vcombine.low %v2201, %v2208
    %v5174 = vunpack.c.l.s4 1983009808
    %v5175 = vunpack.c.0.s8 %v5174
    %v5176 = vlaneseq
    %v5177 = vshrl.u32 %v5176, 7
    %v5178 = vsub.s32 %v5175, %v5177
    %v5179 = vrot.slane %v5171, %v5178
    %v5181 = vunpack.c.l.s4 1983009808
    %v5182 = vunpack.c.0.s8 %v5181
    %v5183 = vlaneseq
    %v5184 = vshrl.u32 %v5183, 7
    %v5185 = vsub.s32 %v5182, %v5184
    %v5186 = vrot.slane %v5172, %v5185
    %v5187 = vcombine.low %v5179, %v5186
    %v5188 = vcombine.low %v2215, %v2222
    %v5189 = vcombine.low %v2229, %v2236
    %v5191 = vunpack.c.l.s4 1983009808
    %v5192 = vunpack.c.0.s8 %v5191
    %v5193 = vlaneseq
    %v5194 = vshrl.u32 %v5193, 7
    %v5195 = vsub.s32 %v5192, %v5194
    %v5196 = vrot.slane %v5188, %v5195
    %v5198 = vunpack.c.l.s4 1983009808
    %v5199 = vunpack.c.0.s8 %v5198
    %v5200 = vlaneseq
    %v5201 = vshrl.u32 %v5200, 7
    %v5202 = vsub.s32 %v5199, %v5201
    %v5203 = vrot.slane %v5189, %v5202
    %v5204 = vcombine.low %v5196, %v5203
    %v5205 = vcombine.low %v2243, %v2250
    %v5206 = vcombine.low %v2257, %v2264
    %v5208 = vunpack.c.l.s4 1983009808
    %v5209 = vunpack.c.0.s8 %v5208
    %v5210 = vlaneseq
    %v5211 = vshrl.u32 %v5210, 7
    %v5212 = vsub.s32 %v5209, %v5211
    %v5213 = vrot.slane %v5205, %v5212
    %v5215 = vunpack.c.l.s4 1983009808
    %v5216 = vunpack.c.0.s8 %v5215
    %v5217 = vlaneseq
    %v5218 = vshrl.u32 %v5217, 7
    %v5219 = vsub.s32 %v5216, %v5218
    %v5220 = vrot.slane %v5206, %v5219
    %v5221 = vcombine.low %v5213, %v5220
    %v5222 = vcombine.low %v2271, %v2278
    %v5223 = vcombine.low %v2285, %v2292
    %v5225 = vunpack.c.l.s4 1983009808
    %v5226 = vunpack.c.0.s8 %v5225
    %v5227 = vlaneseq
    %v5228 = vshrl.u32 %v5227, 7
    %v5229 = vsub.s32 %v5226, %v5228
    %v5230 = vrot.slane %v5222, %v5229
    %v5232 = vunpack.c.l.s4 1983009808
    %v5233 = vunpack.c.0.s8 %v5232
    %v5234 = vlaneseq
    %v5235 = vshrl.u32 %v5234, 7
    %v5236 = vsub.s32 %v5233, %v5235
    %v5237 = vrot.slane %v5223, %v5236
    %v5238 = vcombine.low %v5230, %v5237
    %v5239 = vcombine.low %v2299, %v2306
    %v5240 = vcombine.low %v2313, %v2320
    %v5242 = vunpack.c.l.s4 1983009808
    %v5243 = vunpack.c.0.s8 %v5242
    %v5244 = vlaneseq
    %v5245 = vshrl.u32 %v5244, 7
    %v5246 = vsub.s32 %v5243, %v5245
    %v5247 = vrot.slane %v5239, %v5246
    %v5249 = vunpack.c.l.s4 1983009808
    %v5250 = vunpack.c.0.s8 %v5249
    %v5251 = vlaneseq
    %v5252 = vshrl.u32 %v5251, 7
    %v5253 = vsub.s32 %v5250, %v5252
    %v5254 = vrot.slane %v5240, %v5253
    %v5255 = vcombine.low %v5247, %v5254
    %v5256 = vcombine.low %v2327, %v2334
    %v5257 = vcombine.low %v2341, %v2348
    %v5259 = vunpack.c.l.s4 1983009808
    %v5260 = vunpack.c.0.s8 %v5259
    %v5261 = vlaneseq
    %v5262 = vshrl.u32 %v5261, 7
    %v5263 = vsub.s32 %v5260, %v5262
    %v5264 = vrot.slane %v5256, %v5263
    %v5266 = vunpack.c.l.s4 1983009808
    %v5267 = vunpack.c.0.s8 %v5266
    %v5268 = vlaneseq
    %v5269 = vshrl.u32 %v5268, 7
    %v5270 = vsub.s32 %v5267, %v5269
    %v5271 = vrot.slane %v5257, %v5270
    %v5272 = vcombine.low %v5264, %v5271
    %v5273 = vcombine.low %v2355, %v2362
    %v5274 = vcombine.low %v2369, %v2376
    %v5276 = vunpack.c.l.s4 1983009808
    %v5277 = vunpack.c.0.s8 %v5276
    %v5278 = vlaneseq
    %v5279 = vshrl.u32 %v5278, 7
    %v5280 = vsub.s32 %v5277, %v5279
    %v5281 = vrot.slane %v5273, %v5280
    %v5283 = vunpack.c.l.s4 1983009808
    %v5284 = vunpack.c.0.s8 %v5283
    %v5285 = vlaneseq
    %v5286 = vshrl.u32 %v5285, 7
    %v5287 = vsub.s32 %v5284, %v5286
    %v5288 = vrot.slane %v5274, %v5287
    %v5289 = vcombine.low %v5281, %v5288
    %v5290 = vcombine.low %v2383, %v2390
    %v5291 = vcombine.low %v2397, %v2404
    %v5293 = vunpack.c.l.s4 1983009808
    %v5294 = vunpack.c.0.s8 %v5293
    %v5295 = vlaneseq
    %v5296 = vshrl.u32 %v5295, 7
    %v5297 = vsub.s32 %v5294, %v5296
    %v5298 = vrot.slane %v5290, %v5297
    %v5300 = vunpack.c.l.s4 1983009808
    %v5301 = vunpack.c.0.s8 %v5300
    %v5302 = vlaneseq
    %v5303 = vshrl.u32 %v5302, 7
    %v5304 = vsub.s32 %v5301, %v5303
    %v5305 = vrot.slane %v5291, %v5304
    %v5306 = vcombine.low %v5298, %v5305
    %v5307 = vcombine.low %v2411, %v2418
    %v5308 = vcombine.low %v2425, %v2432
    %v5310 = vunpack.c.l.s4 1983009808
    %v5311 = vunpack.c.0.s8 %v5310
    %v5312 = vlaneseq
    %v5313 = vshrl.u32 %v5312, 7
    %v5314 = vsub.s32 %v5311, %v5313
    %v5315 = vrot.slane %v5307, %v5314
    %v5317 = vunpack.c.l.s4 1983009808
    %v5318 = vunpack.c.0.s8 %v5317
    %v5319 = vlaneseq
    %v5320 = vshrl.u32 %v5319, 7
    %v5321 = vsub.s32 %v5318, %v5320
    %v5322 = vrot.slane %v5308, %v5321
    %v5323 = vcombine.low %v5315, %v5322
    %v5324 = vcombine.low %v2439, %v2446
    %v5325 = vcombine.low %v2453, %v2460
    %v5327 = vunpack.c.l.s4 1983009808
    %v5328 = vunpack.c.0.s8 %v5327
    %v5329 = vlaneseq
    %v5330 = vshrl.u32 %v5329, 7
    %v5331 = vsub.s32 %v5328, %v5330
    %v5332 = vrot.slane %v5324, %v5331
    %v5334 = vunpack.c.l.s4 1983009808
    %v5335 = vunpack.c.0.s8 %v5334
    %v5336 = vlaneseq
    %v5337 = vshrl.u32 %v5336, 7
    %v5338 = vsub.s32 %v5335, %v5337
    %v5339 = vrot.slane %v5325, %v5338
    %v5340 = vcombine.low %v5332, %v5339
    %v5341 = vcombine.low %v2467, %v2474
    %v5342 = vcombine.low %v2481, %v2488
    %v5344 = vunpack.c.l.s4 1983009808
    %v5345 = vunpack.c.0.s8 %v5344
    %v5346 = vlaneseq
    %v5347 = vshrl.u32 %v5346, 7
    %v5348 = vsub.s32 %v5345, %v5347
    %v5349 = vrot.slane %v5341, %v5348
    %v5351 = vunpack.c.l.s4 1983009808
    %v5352 = vunpack.c.0.s8 %v5351
    %v5353 = vlaneseq
    %v5354 = vshrl.u32 %v5353, 7
    %v5355 = vsub.s32 %v5352, %v5354
    %v5356 = vrot.slane %v5342, %v5355
    %v5357 = vcombine.low %v5349, %v5356
    %v5358 = vcombine.low %v2495, %v2502
    %v5359 = vcombine.low %v2509, %v2516
    %v5361 = vunpack.c.l.s4 1983009808
    %v5362 = vunpack.c.0.s8 %v5361
    %v5363 = vlaneseq
    %v5364 = vshrl.u32 %v5363, 7
    %v5365 = vsub.s32 %v5362, %v5364
    %v5366 = vrot.slane %v5358, %v5365
    %v5368 = vunpack.c.l.s4 1983009808
    %v5369 = vunpack.c.0.s8 %v5368
    %v5370 = vlaneseq
    %v5371 = vshrl.u32 %v5370, 7
    %v5372 = vsub.s32 %v5369, %v5371
    %v5373 = vrot.slane %v5359, %v5372
    %v5374 = vcombine.low %v5366, %v5373
    %v5375 = vcombine.low %v2523, %v2530
    %v5376 = vcombine.low %v2537, %v2544
    %v5378 = vunpack.c.l.s4 1983009808
    %v5379 = vunpack.c.0.s8 %v5378
    %v5380 = vlaneseq
    %v5381 = vshrl.u32 %v5380, 7
    %v5382 = vsub.s32 %v5379, %v5381
    %v5383 = vrot.slane %v5375, %v5382
    %v5385 = vunpack.c.l.s4 1983009808
    %v5386 = vunpack.c.0.s8 %v5385
    %v5387 = vlaneseq
    %v5388 = vshrl.u32 %v5387, 7
    %v5389 = vsub.s32 %v5386, %v5388
    %v5390 = vrot.slane %v5376, %v5389
    %v5391 = vcombine.low %v5383, %v5390
    %v5392 = vcombine.low %v2551, %v2558
    %v5393 = vcombine.low %v2565, %v2572
    %v5395 = vunpack.c.l.s4 1983009808
    %v5396 = vunpack.c.0.s8 %v5395
    %v5397 = vlaneseq
    %v5398 = vshrl.u32 %v5397, 7
    %v5399 = vsub.s32 %v5396, %v5398
    %v5400 = vrot.slane %v5392, %v5399
    %v5402 = vunpack.c.l.s4 1983009808
    %v5403 = vunpack.c.0.s8 %v5402
    %v5404 = vlaneseq
    %v5405 = vshrl.u32 %v5404, 7
    %v5406 = vsub.s32 %v5403, %v5405
    %v5407 = vrot.slane %v5393, %v5406
    %v5408 = vcombine.low %v5400, %v5407
    %v5409 = vcombine.low %v2579, %v2586
    %v5410 = vcombine.low %v2593, %v2600
    %v5412 = vunpack.c.l.s4 1983009808
    %v5413 = vunpack.c.0.s8 %v5412
    %v5414 = vlaneseq
    %v5415 = vshrl.u32 %v5414, 7
    %v5416 = vsub.s32 %v5413, %v5415
    %v5417 = vrot.slane %v5409, %v5416
    %v5419 = vunpack.c.l.s4 1983009808
    %v5420 = vunpack.c.0.s8 %v5419
    %v5421 = vlaneseq
    %v5422 = vshrl.u32 %v5421, 7
    %v5423 = vsub.s32 %v5420, %v5422
    %v5424 = vrot.slane %v5410, %v5423
    %v5425 = vcombine.low %v5417, %v5424
    %v5426 = vcombine.low %v2607, %v2614
    %v5427 = vcombine.low %v2621, %v2628
    %v5429 = vunpack.c.l.s4 1983009808
    %v5430 = vunpack.c.0.s8 %v5429
    %v5431 = vlaneseq
    %v5432 = vshrl.u32 %v5431, 7
    %v5433 = vsub.s32 %v5430, %v5432
    %v5434 = vrot.slane %v5426, %v5433
    %v5436 = vunpack.c.l.s4 1983009808
    %v5437 = vunpack.c.0.s8 %v5436
    %v5438 = vlaneseq
    %v5439 = vshrl.u32 %v5438, 7
    %v5440 = vsub.s32 %v5437, %v5439
    %v5441 = vrot.slane %v5427, %v5440
    %v5442 = vcombine.low %v5434, %v5441
    %v5443 = vcombine.low %v2635, %v2642
    %v5444 = vcombine.low %v2649, %v2656
    %v5446 = vunpack.c.l.s4 1983009808
    %v5447 = vunpack.c.0.s8 %v5446
    %v5448 = vlaneseq
    %v5449 = vshrl.u32 %v5448, 7
    %v5450 = vsub.s32 %v5447, %v5449
    %v5451 = vrot.slane %v5443, %v5450
    %v5453 = vunpack.c.l.s4 1983009808
    %v5454 = vunpack.c.0.s8 %v5453
    %v5455 = vlaneseq
    %v5456 = vshrl.u32 %v5455, 7
    %v5457 = vsub.s32 %v5454, %v5456
    %v5458 = vrot.slane %v5444, %v5457
    %v5459 = vcombine.low %v5451, %v5458
    %v5460 = vcombine.low %v2663, %v2670
    %v5461 = vcombine.low %v2677, %v2684
    %v5463 = vunpack.c.l.s4 1983009808
    %v5464 = vunpack.c.0.s8 %v5463
    %v5465 = vlaneseq
    %v5466 = vshrl.u32 %v5465, 7
    %v5467 = vsub.s32 %v5464, %v5466
    %v5468 = vrot.slane %v5460, %v5467
    %v5470 = vunpack.c.l.s4 1983009808
    %v5471 = vunpack.c.0.s8 %v5470
    %v5472 = vlaneseq
    %v5473 = vshrl.u32 %v5472, 7
    %v5474 = vsub.s32 %v5471, %v5473
    %v5475 = vrot.slane %v5461, %v5474
    %v5476 = vcombine.low %v5468, %v5475
    %v5477 = vcombine.low %v2691, %v2698
    %v5478 = vcombine.low %v2705, %v2712
    %v5480 = vunpack.c.l.s4 1983009808
    %v5481 = vunpack.c.0.s8 %v5480
    %v5482 = vlaneseq
    %v5483 = vshrl.u32 %v5482, 7
    %v5484 = vsub.s32 %v5481, %v5483
    %v5485 = vrot.slane %v5477, %v5484
    %v5487 = vunpack.c.l.s4 1983009808
    %v5488 = vunpack.c.0.s8 %v5487
    %v5489 = vlaneseq
    %v5490 = vshrl.u32 %v5489, 7
    %v5491 = vsub.s32 %v5488, %v5490
    %v5492 = vrot.slane %v5478, %v5491
    %v5493 = vcombine.low %v5485, %v5492
    %v5494 = vcombine.low %v2719, %v2726
    %v5495 = vcombine.low %v2733, %v2740
    %v5497 = vunpack.c.l.s4 1983009808
    %v5498 = vunpack.c.0.s8 %v5497
    %v5499 = vlaneseq
    %v5500 = vshrl.u32 %v5499, 7
    %v5501 = vsub.s32 %v5498, %v5500
    %v5502 = vrot.slane %v5494, %v5501
    %v5504 = vunpack.c.l.s4 1983009808
    %v5505 = vunpack.c.0.s8 %v5504
    %v5506 = vlaneseq
    %v5507 = vshrl.u32 %v5506, 7
    %v5508 = vsub.s32 %v5505, %v5507
    %v5509 = vrot.slane %v5495, %v5508
    %v5510 = vcombine.low %v5502, %v5509
    %v5511 = vcombine.low %v2747, %v2754
    %v5512 = vcombine.low %v2761, %v2768
    %v5514 = vunpack.c.l.s4 1983009808
    %v5515 = vunpack.c.0.s8 %v5514
    %v5516 = vlaneseq
    %v5517 = vshrl.u32 %v5516, 7
    %v5518 = vsub.s32 %v5515, %v5517
    %v5519 = vrot.slane %v5511, %v5518
    %v5521 = vunpack.c.l.s4 1983009808
    %v5522 = vunpack.c.0.s8 %v5521
    %v5523 = vlaneseq
    %v5524 = vshrl.u32 %v5523, 7
    %v5525 = vsub.s32 %v5522, %v5524
    %v5526 = vrot.slane %v5512, %v5525
    %v5527 = vcombine.low %v5519, %v5526
    %v5528 = vcombine.low %v2775, %v2782
    %v5529 = vcombine.low %v2789, %v2796
    %v5531 = vunpack.c.l.s4 1983009808
    %v5532 = vunpack.c.0.s8 %v5531
    %v5533 = vlaneseq
    %v5534 = vshrl.u32 %v5533, 7
    %v5535 = vsub.s32 %v5532, %v5534
    %v5536 = vrot.slane %v5528, %v5535
    %v5538 = vunpack.c.l.s4 1983009808
    %v5539 = vunpack.c.0.s8 %v5538
    %v5540 = vlaneseq
    %v5541 = vshrl.u32 %v5540, 7
    %v5542 = vsub.s32 %v5539, %v5541
    %v5543 = vrot.slane %v5529, %v5542
    %v5544 = vcombine.low %v5536, %v5543
    %v5545 = vcombine.low %v2803, %v2810
    %v5546 = vcombine.low %v2817, %v2824
    %v5548 = vunpack.c.l.s4 1983009808
    %v5549 = vunpack.c.0.s8 %v5548
    %v5550 = vlaneseq
    %v5551 = vshrl.u32 %v5550, 7
    %v5552 = vsub.s32 %v5549, %v5551
    %v5553 = vrot.slane %v5545, %v5552
    %v5555 = vunpack.c.l.s4 1983009808
    %v5556 = vunpack.c.0.s8 %v5555
    %v5557 = vlaneseq
    %v5558 = vshrl.u32 %v5557, 7
    %v5559 = vsub.s32 %v5556, %v5558
    %v5560 = vrot.slane %v5546, %v5559
    %v5561 = vcombine.low %v5553, %v5560
    %v5562 = vcombine.low %v2831, %v2838
    %v5563 = vcombine.low %v2845, %v2852
    %v5565 = vunpack.c.l.s4 1983009808
    %v5566 = vunpack.c.0.s8 %v5565
    %v5567 = vlaneseq
    %v5568 = vshrl.u32 %v5567, 7
    %v5569 = vsub.s32 %v5566, %v5568
    %v5570 = vrot.slane %v5562, %v5569
    %v5572 = vunpack.c.l.s4 1983009808
    %v5573 = vunpack.c.0.s8 %v5572
    %v5574 = vlaneseq
    %v5575 = vshrl.u32 %v5574, 7
    %v5576 = vsub.s32 %v5573, %v5575
    %v5577 = vrot.slane %v5563, %v5576
    %v5578 = vcombine.low %v5570, %v5577
    %v5579 = vcombine.low %v2859, %v2866
    %v5580 = vcombine.low %v2873, %v2880
    %v5582 = vunpack.c.l.s4 1983009808
    %v5583 = vunpack.c.0.s8 %v5582
    %v5584 = vlaneseq
    %v5585 = vshrl.u32 %v5584, 7
    %v5586 = vsub.s32 %v5583, %v5585
    %v5587 = vrot.slane %v5579, %v5586
    %v5589 = vunpack.c.l.s4 1983009808
    %v5590 = vunpack.c.0.s8 %v5589
    %v5591 = vlaneseq
    %v5592 = vshrl.u32 %v5591, 7
    %v5593 = vsub.s32 %v5590, %v5592
    %v5594 = vrot.slane %v5580, %v5593
    %v5595 = vcombine.low %v5587, %v5594
    %v5596 = vcombine.low %v2887, %v2894
    %v5597 = vcombine.low %v2901, %v2908
    %v5599 = vunpack.c.l.s4 1983009808
    %v5600 = vunpack.c.0.s8 %v5599
    %v5601 = vlaneseq
    %v5602 = vshrl.u32 %v5601, 7
    %v5603 = vsub.s32 %v5600, %v5602
    %v5604 = vrot.slane %v5596, %v5603
    %v5606 = vunpack.c.l.s4 1983009808
    %v5607 = vunpack.c.0.s8 %v5606
    %v5608 = vlaneseq
    %v5609 = vshrl.u32 %v5608, 7
    %v5610 = vsub.s32 %v5607, %v5609
    %v5611 = vrot.slane %v5597, %v5610
    %v5612 = vcombine.low %v5604, %v5611
    %v5613 = vcombine.low %v2915, %v2922
    %v5614 = vcombine.low %v2929, %v2936
    %v5616 = vunpack.c.l.s4 1983009808
    %v5617 = vunpack.c.0.s8 %v5616
    %v5618 = vlaneseq
    %v5619 = vshrl.u32 %v5618, 7
    %v5620 = vsub.s32 %v5617, %v5619
    %v5621 = vrot.slane %v5613, %v5620
    %v5623 = vunpack.c.l.s4 1983009808
    %v5624 = vunpack.c.0.s8 %v5623
    %v5625 = vlaneseq
    %v5626 = vshrl.u32 %v5625, 7
    %v5627 = vsub.s32 %v5624, %v5626
    %v5628 = vrot.slane %v5614, %v5627
    %v5629 = vcombine.low %v5621, %v5628
    %v5630 = vcombine.low %v2943, %v2950
    %v5631 = vcombine.low %v2957, %v2964
    %v5633 = vunpack.c.l.s4 1983009808
    %v5634 = vunpack.c.0.s8 %v5633
    %v5635 = vlaneseq
    %v5636 = vshrl.u32 %v5635, 7
    %v5637 = vsub.s32 %v5634, %v5636
    %v5638 = vrot.slane %v5630, %v5637
    %v5640 = vunpack.c.l.s4 1983009808
    %v5641 = vunpack.c.0.s8 %v5640
    %v5642 = vlaneseq
    %v5643 = vshrl.u32 %v5642, 7
    %v5644 = vsub.s32 %v5641, %v5643
    %v5645 = vrot.slane %v5631, %v5644
    %v5646 = vcombine.low %v5638, %v5645
    %v5647 = vcombine.low %v2971, %v2978
    %v5648 = vcombine.low %v2985, %v2992
    %v5650 = vunpack.c.l.s4 1983009808
    %v5651 = vunpack.c.0.s8 %v5650
    %v5652 = vlaneseq
    %v5653 = vshrl.u32 %v5652, 7
    %v5654 = vsub.s32 %v5651, %v5653
    %v5655 = vrot.slane %v5647, %v5654
    %v5657 = vunpack.c.l.s4 1983009808
    %v5658 = vunpack.c.0.s8 %v5657
    %v5659 = vlaneseq
    %v5660 = vshrl.u32 %v5659, 7
    %v5661 = vsub.s32 %v5658, %v5660
    %v5662 = vrot.slane %v5648, %v5661
    %v5663 = vcombine.low %v5655, %v5662
    %v5664 = vcombine.low %v2999, %v3006
    %v5665 = vcombine.low %v3013, %v3020
    %v5667 = vunpack.c.l.s4 1983009808
    %v5668 = vunpack.c.0.s8 %v5667
    %v5669 = vlaneseq
    %v5670 = vshrl.u32 %v5669, 7
    %v5671 = vsub.s32 %v5668, %v5670
    %v5672 = vrot.slane %v5664, %v5671
    %v5674 = vunpack.c.l.s4 1983009808
    %v5675 = vunpack.c.0.s8 %v5674
    %v5676 = vlaneseq
    %v5677 = vshrl.u32 %v5676, 7
    %v5678 = vsub.s32 %v5675, %v5677
    %v5679 = vrot.slane %v5665, %v5678
    %v5680 = vcombine.low %v5672, %v5679
    %v5681 = vcombine.low %v3027, %v3034
    %v5682 = vcombine.low %v3041, %v3048
    %v5684 = vunpack.c.l.s4 1983009808
    %v5685 = vunpack.c.0.s8 %v5684
    %v5686 = vlaneseq
    %v5687 = vshrl.u32 %v5686, 7
    %v5688 = vsub.s32 %v5685, %v5687
    %v5689 = vrot.slane %v5681, %v5688
    %v5691 = vunpack.c.l.s4 1983009808
    %v5692 = vunpack.c.0.s8 %v5691
    %v5693 = vlaneseq
    %v5694 = vshrl.u32 %v5693, 7
    %v5695 = vsub.s32 %v5692, %v5694
    %v5696 = vrot.slane %v5682, %v5695
    %v5697 = vcombine.low %v5689, %v5696
    %v5698 = vcombine.low %v3055, %v3062
    %v5699 = vcombine.low %v3069, %v3076
    %v5701 = vunpack.c.l.s4 1983009808
    %v5702 = vunpack.c.0.s8 %v5701
    %v5703 = vlaneseq
    %v5704 = vshrl.u32 %v5703, 7
    %v5705 = vsub.s32 %v5702, %v5704
    %v5706 = vrot.slane %v5698, %v5705
    %v5708 = vunpack.c.l.s4 1983009808
    %v5709 = vunpack.c.0.s8 %v5708
    %v5710 = vlaneseq
    %v5711 = vshrl.u32 %v5710, 7
    %v5712 = vsub.s32 %v5709, %v5711
    %v5713 = vrot.slane %v5699, %v5712
    %v5714 = vcombine.low %v5706, %v5713
    %v5715 = vcombine.low %v3083, %v3090
    %v5716 = vcombine.low %v3097, %v3104
    %v5718 = vunpack.c.l.s4 1983009808
    %v5719 = vunpack.c.0.s8 %v5718
    %v5720 = vlaneseq
    %v5721 = vshrl.u32 %v5720, 7
    %v5722 = vsub.s32 %v5719, %v5721
    %v5723 = vrot.slane %v5715, %v5722
    %v5725 = vunpack.c.l.s4 1983009808
    %v5726 = vunpack.c.0.s8 %v5725
    %v5727 = vlaneseq
    %v5728 = vshrl.u32 %v5727, 7
    %v5729 = vsub.s32 %v5726, %v5728
    %v5730 = vrot.slane %v5716, %v5729
    %v5731 = vcombine.low %v5723, %v5730
    %v5732 = vcombine.low %v3111, %v3118
    %v5733 = vcombine.low %v3125, %v3132
    %v5735 = vunpack.c.l.s4 1983009808
    %v5736 = vunpack.c.0.s8 %v5735
    %v5737 = vlaneseq
    %v5738 = vshrl.u32 %v5737, 7
    %v5739 = vsub.s32 %v5736, %v5738
    %v5740 = vrot.slane %v5732, %v5739
    %v5742 = vunpack.c.l.s4 1983009808
    %v5743 = vunpack.c.0.s8 %v5742
    %v5744 = vlaneseq
    %v5745 = vshrl.u32 %v5744, 7
    %v5746 = vsub.s32 %v5743, %v5745
    %v5747 = vrot.slane %v5733, %v5746
    %v5748 = vcombine.low %v5740, %v5747
    %v5749 = vcombine.low %v3139, %v3146
    %v5750 = vcombine.low %v3153, %v3160
    %v5752 = vunpack.c.l.s4 1983009808
    %v5753 = vunpack.c.0.s8 %v5752
    %v5754 = vlaneseq
    %v5755 = vshrl.u32 %v5754, 7
    %v5756 = vsub.s32 %v5753, %v5755
    %v5757 = vrot.slane %v5749, %v5756
    %v5759 = vunpack.c.l.s4 1983009808
    %v5760 = vunpack.c.0.s8 %v5759
    %v5761 = vlaneseq
    %v5762 = vshrl.u32 %v5761, 7
    %v5763 = vsub.s32 %v5760, %v5762
    %v5764 = vrot.slane %v5750, %v5763
    %v5765 = vcombine.low %v5757, %v5764
    %v5766 = vcombine.low %v3167, %v3174
    %v5767 = vcombine.low %v3181, %v3188
    %v5769 = vunpack.c.l.s4 1983009808
    %v5770 = vunpack.c.0.s8 %v5769
    %v5771 = vlaneseq
    %v5772 = vshrl.u32 %v5771, 7
    %v5773 = vsub.s32 %v5770, %v5772
    %v5774 = vrot.slane %v5766, %v5773
    %v5776 = vunpack.c.l.s4 1983009808
    %v5777 = vunpack.c.0.s8 %v5776
    %v5778 = vlaneseq
    %v5779 = vshrl.u32 %v5778, 7
    %v5780 = vsub.s32 %v5777, %v5779
    %v5781 = vrot.slane %v5767, %v5780
    %v5782 = vcombine.low %v5774, %v5781
    %v5783 = vcombine.low %v3195, %v3202
    %v5784 = vcombine.low %v3209, %v3216
    %v5786 = vunpack.c.l.s4 1983009808
    %v5787 = vunpack.c.0.s8 %v5786
    %v5788 = vlaneseq
    %v5789 = vshrl.u32 %v5788, 7
    %v5790 = vsub.s32 %v5787, %v5789
    %v5791 = vrot.slane %v5783, %v5790
    %v5793 = vunpack.c.l.s4 1983009808
    %v5794 = vunpack.c.0.s8 %v5793
    %v5795 = vlaneseq
    %v5796 = vshrl.u32 %v5795, 7
    %v5797 = vsub.s32 %v5794, %v5796
    %v5798 = vrot.slane %v5784, %v5797
    %v5799 = vcombine.low %v5791, %v5798
    %v5800 = vcombine.low %v3223, %v3230
    %v5801 = vcombine.low %v3237, %v3244
    %v5803 = vunpack.c.l.s4 1983009808
    %v5804 = vunpack.c.0.s8 %v5803
    %v5805 = vlaneseq
    %v5806 = vshrl.u32 %v5805, 7
    %v5807 = vsub.s32 %v5804, %v5806
    %v5808 = vrot.slane %v5800, %v5807
    %v5810 = vunpack.c.l.s4 1983009808
    %v5811 = vunpack.c.0.s8 %v5810
    %v5812 = vlaneseq
    %v5813 = vshrl.u32 %v5812, 7
    %v5814 = vsub.s32 %v5811, %v5813
    %v5815 = vrot.slane %v5801, %v5814
    %v5816 = vcombine.low %v5808, %v5815
    %v5817 = vcombine.low %v3251, %v3258
    %v5818 = vcombine.low %v3265, %v3272
    %v5820 = vunpack.c.l.s4 1983009808
    %v5821 = vunpack.c.0.s8 %v5820
    %v5822 = vlaneseq
    %v5823 = vshrl.u32 %v5822, 7
    %v5824 = vsub.s32 %v5821, %v5823
    %v5825 = vrot.slane %v5817, %v5824
    %v5827 = vunpack.c.l.s4 1983009808
    %v5828 = vunpack.c.0.s8 %v5827
    %v5829 = vlaneseq
    %v5830 = vshrl.u32 %v5829, 7
    %v5831 = vsub.s32 %v5828, %v5830
    %v5832 = vrot.slane %v5818, %v5831
    %v5833 = vcombine.low %v5825, %v5832
    %v5834 = vcombine.low %v3279, %v3286
    %v5835 = vcombine.low %v3293, %v3300
    %v5837 = vunpack.c.l.s4 1983009808
    %v5838 = vunpack.c.0.s8 %v5837
    %v5839 = vlaneseq
    %v5840 = vshrl.u32 %v5839, 7
    %v5841 = vsub.s32 %v5838, %v5840
    %v5842 = vrot.slane %v5834, %v5841
    %v5844 = vunpack.c.l.s4 1983009808
    %v5845 = vunpack.c.0.s8 %v5844
    %v5846 = vlaneseq
    %v5847 = vshrl.u32 %v5846, 7
    %v5848 = vsub.s32 %v5845, %v5847
    %v5849 = vrot.slane %v5835, %v5848
    %v5850 = vcombine.low %v5842, %v5849
    %v5851 = vcombine.low %v3307, %v3314
    %v5852 = vcombine.low %v3321, %v3328
    %v5854 = vunpack.c.l.s4 1983009808
    %v5855 = vunpack.c.0.s8 %v5854
    %v5856 = vlaneseq
    %v5857 = vshrl.u32 %v5856, 7
    %v5858 = vsub.s32 %v5855, %v5857
    %v5859 = vrot.slane %v5851, %v5858
    %v5861 = vunpack.c.l.s4 1983009808
    %v5862 = vunpack.c.0.s8 %v5861
    %v5863 = vlaneseq
    %v5864 = vshrl.u32 %v5863, 7
    %v5865 = vsub.s32 %v5862, %v5864
    %v5866 = vrot.slane %v5852, %v5865
    %v5867 = vcombine.low %v5859, %v5866
    %v5868 = vcombine.low %v3335, %v3342
    %v5869 = vcombine.low %v3349, %v3356
    %v5871 = vunpack.c.l.s4 1983009808
    %v5872 = vunpack.c.0.s8 %v5871
    %v5873 = vlaneseq
    %v5874 = vshrl.u32 %v5873, 7
    %v5875 = vsub.s32 %v5872, %v5874
    %v5876 = vrot.slane %v5868, %v5875
    %v5878 = vunpack.c.l.s4 1983009808
    %v5879 = vunpack.c.0.s8 %v5878
    %v5880 = vlaneseq
    %v5881 = vshrl.u32 %v5880, 7
    %v5882 = vsub.s32 %v5879, %v5881
    %v5883 = vrot.slane %v5869, %v5882
    %v5884 = vcombine.low %v5876, %v5883
    %v5885 = vcombine.low %v3363, %v3370
    %v5886 = vcombine.low %v3377, %v3384
    %v5888 = vunpack.c.l.s4 1983009808
    %v5889 = vunpack.c.0.s8 %v5888
    %v5890 = vlaneseq
    %v5891 = vshrl.u32 %v5890, 7
    %v5892 = vsub.s32 %v5889, %v5891
    %v5893 = vrot.slane %v5885, %v5892
    %v5895 = vunpack.c.l.s4 1983009808
    %v5896 = vunpack.c.0.s8 %v5895
    %v5897 = vlaneseq
    %v5898 = vshrl.u32 %v5897, 7
    %v5899 = vsub.s32 %v5896, %v5898
    %v5900 = vrot.slane %v5886, %v5899
    %v5901 = vcombine.low %v5893, %v5900
    %v5902 = vcombine.low %v3391, %v3398
    %v5903 = vcombine.low %v3405, %v3412
    %v5905 = vunpack.c.l.s4 1983009808
    %v5906 = vunpack.c.0.s8 %v5905
    %v5907 = vlaneseq
    %v5908 = vshrl.u32 %v5907, 7
    %v5909 = vsub.s32 %v5906, %v5908
    %v5910 = vrot.slane %v5902, %v5909
    %v5912 = vunpack.c.l.s4 1983009808
    %v5913 = vunpack.c.0.s8 %v5912
    %v5914 = vlaneseq
    %v5915 = vshrl.u32 %v5914, 7
    %v5916 = vsub.s32 %v5913, %v5915
    %v5917 = vrot.slane %v5903, %v5916
    %v5918 = vcombine.low %v5910, %v5917
    %v5919 = vcombine.low %v3419, %v3426
    %v5920 = vcombine.low %v3433, %v3440
    %v5922 = vunpack.c.l.s4 1983009808
    %v5923 = vunpack.c.0.s8 %v5922
    %v5924 = vlaneseq
    %v5925 = vshrl.u32 %v5924, 7
    %v5926 = vsub.s32 %v5923, %v5925
    %v5927 = vrot.slane %v5919, %v5926
    %v5929 = vunpack.c.l.s4 1983009808
    %v5930 = vunpack.c.0.s8 %v5929
    %v5931 = vlaneseq
    %v5932 = vshrl.u32 %v5931, 7
    %v5933 = vsub.s32 %v5930, %v5932
    %v5934 = vrot.slane %v5920, %v5933
    %v5935 = vcombine.low %v5927, %v5934
    %v5936 = vcombine.low %v3447, %v3454
    %v5937 = vcombine.low %v3461, %v3468
    %v5939 = vunpack.c.l.s4 1983009808
    %v5940 = vunpack.c.0.s8 %v5939
    %v5941 = vlaneseq
    %v5942 = vshrl.u32 %v5941, 7
    %v5943 = vsub.s32 %v5940, %v5942
    %v5944 = vrot.slane %v5936, %v5943
    %v5946 = vunpack.c.l.s4 1983009808
    %v5947 = vunpack.c.0.s8 %v5946
    %v5948 = vlaneseq
    %v5949 = vshrl.u32 %v5948, 7
    %v5950 = vsub.s32 %v5947, %v5949
    %v5951 = vrot.slane %v5937, %v5950
    %v5952 = vcombine.low %v5944, %v5951
    %v5953 = vcombine.low %v3475, %v3482
    %v5954 = vcombine.low %v3489, %v3496
    %v5956 = vunpack.c.l.s4 1983009808
    %v5957 = vunpack.c.0.s8 %v5956
    %v5958 = vlaneseq
    %v5959 = vshrl.u32 %v5958, 7
    %v5960 = vsub.s32 %v5957, %v5959
    %v5961 = vrot.slane %v5953, %v5960
    %v5963 = vunpack.c.l.s4 1983009808
    %v5964 = vunpack.c.0.s8 %v5963
    %v5965 = vlaneseq
    %v5966 = vshrl.u32 %v5965, 7
    %v5967 = vsub.s32 %v5964, %v5966
    %v5968 = vrot.slane %v5954, %v5967
    %v5969 = vcombine.low %v5961, %v5968
    %v5970 = vcombine.low %v3503, %v3510
    %v5971 = vcombine.low %v3517, %v3524
    %v5973 = vunpack.c.l.s4 1983009808
    %v5974 = vunpack.c.0.s8 %v5973
    %v5975 = vlaneseq
    %v5976 = vshrl.u32 %v5975, 7
    %v5977 = vsub.s32 %v5974, %v5976
    %v5978 = vrot.slane %v5970, %v5977
    %v5980 = vunpack.c.l.s4 1983009808
    %v5981 = vunpack.c.0.s8 %v5980
    %v5982 = vlaneseq
    %v5983 = vshrl.u32 %v5982, 7
    %v5984 = vsub.s32 %v5981, %v5983
    %v5985 = vrot.slane %v5971, %v5984
    %v5986 = vcombine.low %v5978, %v5985
    %v5987 = vcombine.low %v3531, %v3538
    %v5988 = vcombine.low %v3545, %v3552
    %v5990 = vunpack.c.l.s4 1983009808
    %v5991 = vunpack.c.0.s8 %v5990
    %v5992 = vlaneseq
    %v5993 = vshrl.u32 %v5992, 7
    %v5994 = vsub.s32 %v5991, %v5993
    %v5995 = vrot.slane %v5987, %v5994
    %v5997 = vunpack.c.l.s4 1983009808
    %v5998 = vunpack.c.0.s8 %v5997
    %v5999 = vlaneseq
    %v6000 = vshrl.u32 %v5999, 7
    %v6001 = vsub.s32 %v5998, %v6000
    %v6002 = vrot.slane %v5988, %v6001
    %v6003 = vcombine.low %v5995, %v6002
    %v6004 = vcombine.low %v3559, %v3566
    %v6005 = vcombine.low %v3573, %v3580
    %v6007 = vunpack.c.l.s4 1983009808
    %v6008 = vunpack.c.0.s8 %v6007
    %v6009 = vlaneseq
    %v6010 = vshrl.u32 %v6009, 7
    %v6011 = vsub.s32 %v6008, %v6010
    %v6012 = vrot.slane %v6004, %v6011
    %v6014 = vunpack.c.l.s4 1983009808
    %v6015 = vunpack.c.0.s8 %v6014
    %v6016 = vlaneseq
    %v6017 = vshrl.u32 %v6016, 7
    %v6018 = vsub.s32 %v6015, %v6017
    %v6019 = vrot.slane %v6005, %v6018
    %v6020 = vcombine.low %v6012, %v6019
    %v6021 = vcombine.low %v3587, %v3594
    %v6022 = vcombine.low %v3601, %v3608
    %v6024 = vunpack.c.l.s4 1983009808
    %v6025 = vunpack.c.0.s8 %v6024
    %v6026 = vlaneseq
    %v6027 = vshrl.u32 %v6026, 7
    %v6028 = vsub.s32 %v6025, %v6027
    %v6029 = vrot.slane %v6021, %v6028
    %v6031 = vunpack.c.l.s4 1983009808
    %v6032 = vunpack.c.0.s8 %v6031
    %v6033 = vlaneseq
    %v6034 = vshrl.u32 %v6033, 7
    %v6035 = vsub.s32 %v6032, %v6034
    %v6036 = vrot.slane %v6022, %v6035
    %v6037 = vcombine.low %v6029, %v6036
    %v6038 = vcombine.low %v3615, %v3622
    %v6039 = vcombine.low %v3629, %v3636
    %v6041 = vunpack.c.l.s4 1983009808
    %v6042 = vunpack.c.0.s8 %v6041
    %v6043 = vlaneseq
    %v6044 = vshrl.u32 %v6043, 7
    %v6045 = vsub.s32 %v6042, %v6044
    %v6046 = vrot.slane %v6038, %v6045
    %v6048 = vunpack.c.l.s4 1983009808
    %v6049 = vunpack.c.0.s8 %v6048
    %v6050 = vlaneseq
    %v6051 = vshrl.u32 %v6050, 7
    %v6052 = vsub.s32 %v6049, %v6051
    %v6053 = vrot.slane %v6039, %v6052
    %v6054 = vcombine.low %v6046, %v6053
    %v6055 = vcombine.low %v3643, %v3650
    %v6056 = vcombine.low %v3657, %v3664
    %v6058 = vunpack.c.l.s4 1983009808
    %v6059 = vunpack.c.0.s8 %v6058
    %v6060 = vlaneseq
    %v6061 = vshrl.u32 %v6060, 7
    %v6062 = vsub.s32 %v6059, %v6061
    %v6063 = vrot.slane %v6055, %v6062
    %v6065 = vunpack.c.l.s4 1983009808
    %v6066 = vunpack.c.0.s8 %v6065
    %v6067 = vlaneseq
    %v6068 = vshrl.u32 %v6067, 7
    %v6069 = vsub.s32 %v6066, %v6068
    %v6070 = vrot.slane %v6056, %v6069
    %v6071 = vcombine.low %v6063, %v6070
    %v6072 = vcombine.low %v3671, %v3678
    %v6073 = vcombine.low %v3685, %v3692
    %v6075 = vunpack.c.l.s4 1983009808
    %v6076 = vunpack.c.0.s8 %v6075
    %v6077 = vlaneseq
    %v6078 = vshrl.u32 %v6077, 7
    %v6079 = vsub.s32 %v6076, %v6078
    %v6080 = vrot.slane %v6072, %v6079
    %v6082 = vunpack.c.l.s4 1983009808
    %v6083 = vunpack.c.0.s8 %v6082
    %v6084 = vlaneseq
    %v6085 = vshrl.u32 %v6084, 7
    %v6086 = vsub.s32 %v6083, %v6085
    %v6087 = vrot.slane %v6073, %v6086
    %v6088 = vcombine.low %v6080, %v6087
    %v6089 = vcombine.low %v3699, %v3706
    %v6090 = vcombine.low %v3713, %v3720
    %v6092 = vunpack.c.l.s4 1983009808
    %v6093 = vunpack.c.0.s8 %v6092
    %v6094 = vlaneseq
    %v6095 = vshrl.u32 %v6094, 7
    %v6096 = vsub.s32 %v6093, %v6095
    %v6097 = vrot.slane %v6089, %v6096
    %v6099 = vunpack.c.l.s4 1983009808
    %v6100 = vunpack.c.0.s8 %v6099
    %v6101 = vlaneseq
    %v6102 = vshrl.u32 %v6101, 7
    %v6103 = vsub.s32 %v6100, %v6102
    %v6104 = vrot.slane %v6090, %v6103
    %v6105 = vcombine.low %v6097, %v6104
    %v6106 = vcombine.low %v3727, %v3734
    %v6107 = vcombine.low %v3741, %v3748
    %v6109 = vunpack.c.l.s4 1983009808
    %v6110 = vunpack.c.0.s8 %v6109
    %v6111 = vlaneseq
    %v6112 = vshrl.u32 %v6111, 7
    %v6113 = vsub.s32 %v6110, %v6112
    %v6114 = vrot.slane %v6106, %v6113
    %v6116 = vunpack.c.l.s4 1983009808
    %v6117 = vunpack.c.0.s8 %v6116
    %v6118 = vlaneseq
    %v6119 = vshrl.u32 %v6118, 7
    %v6120 = vsub.s32 %v6117, %v6119
    %v6121 = vrot.slane %v6107, %v6120
    %v6122 = vcombine.low %v6114, %v6121
    %v6123 = vcombine.low %v3755, %v3762
    %v6124 = vcombine.low %v3769, %v3776
    %v6126 = vunpack.c.l.s4 1983009808
    %v6127 = vunpack.c.0.s8 %v6126
    %v6128 = vlaneseq
    %v6129 = vshrl.u32 %v6128, 7
    %v6130 = vsub.s32 %v6127, %v6129
    %v6131 = vrot.slane %v6123, %v6130
    %v6133 = vunpack.c.l.s4 1983009808
    %v6134 = vunpack.c.0.s8 %v6133
    %v6135 = vlaneseq
    %v6136 = vshrl.u32 %v6135, 7
    %v6137 = vsub.s32 %v6134, %v6136
    %v6138 = vrot.slane %v6124, %v6137
    %v6139 = vcombine.low %v6131, %v6138
    %v6140 = vcombine.low %v3783, %v3790
    %v6141 = vcombine.low %v3797, %v3804
    %v6143 = vunpack.c.l.s4 1983009808
    %v6144 = vunpack.c.0.s8 %v6143
    %v6145 = vlaneseq
    %v6146 = vshrl.u32 %v6145, 7
    %v6147 = vsub.s32 %v6144, %v6146
    %v6148 = vrot.slane %v6140, %v6147
    %v6150 = vunpack.c.l.s4 1983009808
    %v6151 = vunpack.c.0.s8 %v6150
    %v6152 = vlaneseq
    %v6153 = vshrl.u32 %v6152, 7
    %v6154 = vsub.s32 %v6151, %v6153
    %v6155 = vrot.slane %v6141, %v6154
    %v6156 = vcombine.low %v6148, %v6155
    %v6157 = vcombine.low %v3811, %v3818
    %v6158 = vcombine.low %v3825, %v3832
    %v6160 = vunpack.c.l.s4 1983009808
    %v6161 = vunpack.c.0.s8 %v6160
    %v6162 = vlaneseq
    %v6163 = vshrl.u32 %v6162, 7
    %v6164 = vsub.s32 %v6161, %v6163
    %v6165 = vrot.slane %v6157, %v6164
    %v6167 = vunpack.c.l.s4 1983009808
    %v6168 = vunpack.c.0.s8 %v6167
    %v6169 = vlaneseq
    %v6170 = vshrl.u32 %v6169, 7
    %v6171 = vsub.s32 %v6168, %v6170
    %v6172 = vrot.slane %v6158, %v6171
    %v6173 = vcombine.low %v6165, %v6172
    %v6174 = vcombine.low %v3839, %v3846
    %v6175 = vcombine.low %v3853, %v3860
    %v6177 = vunpack.c.l.s4 1983009808
    %v6178 = vunpack.c.0.s8 %v6177
    %v6179 = vlaneseq
    %v6180 = vshrl.u32 %v6179, 7
    %v6181 = vsub.s32 %v6178, %v6180
    %v6182 = vrot.slane %v6174, %v6181
    %v6184 = vunpack.c.l.s4 1983009808
    %v6185 = vunpack.c.0.s8 %v6184
    %v6186 = vlaneseq
    %v6187 = vshrl.u32 %v6186, 7
    %v6188 = vsub.s32 %v6185, %v6187
    %v6189 = vrot.slane %v6175, %v6188
    %v6190 = vcombine.low %v6182, %v6189
    %v6191 = vcombine.low %v3867, %v3874
    %v6192 = vcombine.low %v3881, %v3888
    %v6194 = vunpack.c.l.s4 1983009808
    %v6195 = vunpack.c.0.s8 %v6194
    %v6196 = vlaneseq
    %v6197 = vshrl.u32 %v6196, 7
    %v6198 = vsub.s32 %v6195, %v6197
    %v6199 = vrot.slane %v6191, %v6198
    %v6201 = vunpack.c.l.s4 1983009808
    %v6202 = vunpack.c.0.s8 %v6201
    %v6203 = vlaneseq
    %v6204 = vshrl.u32 %v6203, 7
    %v6205 = vsub.s32 %v6202, %v6204
    %v6206 = vrot.slane %v6192, %v6205
    %v6207 = vcombine.low %v6199, %v6206
    %v6208 = vcombine.low %v3895, %v3902
    %v6209 = vcombine.low %v3909, %v3916
    %v6211 = vunpack.c.l.s4 1983009808
    %v6212 = vunpack.c.0.s8 %v6211
    %v6213 = vlaneseq
    %v6214 = vshrl.u32 %v6213, 7
    %v6215 = vsub.s32 %v6212, %v6214
    %v6216 = vrot.slane %v6208, %v6215
    %v6218 = vunpack.c.l.s4 1983009808
    %v6219 = vunpack.c.0.s8 %v6218
    %v6220 = vlaneseq
    %v6221 = vshrl.u32 %v6220, 7
    %v6222 = vsub.s32 %v6219, %v6221
    %v6223 = vrot.slane %v6209, %v6222
    %v6224 = vcombine.low %v6216, %v6223
    %v6225 = vcombine.low %v3923, %v3930
    %v6226 = vcombine.low %v3937, %v3944
    %v6228 = vunpack.c.l.s4 1983009808
    %v6229 = vunpack.c.0.s8 %v6228
    %v6230 = vlaneseq
    %v6231 = vshrl.u32 %v6230, 7
    %v6232 = vsub.s32 %v6229, %v6231
    %v6233 = vrot.slane %v6225, %v6232
    %v6235 = vunpack.c.l.s4 1983009808
    %v6236 = vunpack.c.0.s8 %v6235
    %v6237 = vlaneseq
    %v6238 = vshrl.u32 %v6237, 7
    %v6239 = vsub.s32 %v6236, %v6238
    %v6240 = vrot.slane %v6226, %v6239
    %v6241 = vcombine.low %v6233, %v6240
    %v6242 = vcombine.low %v3951, %v3958
    %v6243 = vcombine.low %v3965, %v3972
    %v6245 = vunpack.c.l.s4 1983009808
    %v6246 = vunpack.c.0.s8 %v6245
    %v6247 = vlaneseq
    %v6248 = vshrl.u32 %v6247, 7
    %v6249 = vsub.s32 %v6246, %v6248
    %v6250 = vrot.slane %v6242, %v6249
    %v6252 = vunpack.c.l.s4 1983009808
    %v6253 = vunpack.c.0.s8 %v6252
    %v6254 = vlaneseq
    %v6255 = vshrl.u32 %v6254, 7
    %v6256 = vsub.s32 %v6253, %v6255
    %v6257 = vrot.slane %v6243, %v6256
    %v6258 = vcombine.low %v6250, %v6257
    %v6259 = vcombine.low %v3979, %v3986
    %v6260 = vcombine.low %v3993, %v4000
    %v6262 = vunpack.c.l.s4 1983009808
    %v6263 = vunpack.c.0.s8 %v6262
    %v6264 = vlaneseq
    %v6265 = vshrl.u32 %v6264, 7
    %v6266 = vsub.s32 %v6263, %v6265
    %v6267 = vrot.slane %v6259, %v6266
    %v6269 = vunpack.c.l.s4 1983009808
    %v6270 = vunpack.c.0.s8 %v6269
    %v6271 = vlaneseq
    %v6272 = vshrl.u32 %v6271, 7
    %v6273 = vsub.s32 %v6270, %v6272
    %v6274 = vrot.slane %v6260, %v6273
    %v6275 = vcombine.low %v6267, %v6274
    %v6276 = vcombine.low %v4007, %v4014
    %v6277 = vcombine.low %v4021, %v4028
    %v6279 = vunpack.c.l.s4 1983009808
    %v6280 = vunpack.c.0.s8 %v6279
    %v6281 = vlaneseq
    %v6282 = vshrl.u32 %v6281, 7
    %v6283 = vsub.s32 %v6280, %v6282
    %v6284 = vrot.slane %v6276, %v6283
    %v6286 = vunpack.c.l.s4 1983009808
    %v6287 = vunpack.c.0.s8 %v6286
    %v6288 = vlaneseq
    %v6289 = vshrl.u32 %v6288, 7
    %v6290 = vsub.s32 %v6287, %v6289
    %v6291 = vrot.slane %v6277, %v6290
    %v6292 = vcombine.low %v6284, %v6291
    %v6293 = vcombine.low %v4035, %v4042
    %v6294 = vcombine.low %v4049, %v4056
    %v6296 = vunpack.c.l.s4 1983009808
    %v6297 = vunpack.c.0.s8 %v6296
    %v6298 = vlaneseq
    %v6299 = vshrl.u32 %v6298, 7
    %v6300 = vsub.s32 %v6297, %v6299
    %v6301 = vrot.slane %v6293, %v6300
    %v6303 = vunpack.c.l.s4 1983009808
    %v6304 = vunpack.c.0.s8 %v6303
    %v6305 = vlaneseq
    %v6306 = vshrl.u32 %v6305, 7
    %v6307 = vsub.s32 %v6304, %v6306
    %v6308 = vrot.slane %v6294, %v6307
    %v6309 = vcombine.low %v6301, %v6308
    %v6310 = vcombine.low %v4063, %v4070
    %v6311 = vcombine.low %v4077, %v4084
    %v6313 = vunpack.c.l.s4 1983009808
    %v6314 = vunpack.c.0.s8 %v6313
    %v6315 = vlaneseq
    %v6316 = vshrl.u32 %v6315, 7
    %v6317 = vsub.s32 %v6314, %v6316
    %v6318 = vrot.slane %v6310, %v6317
    %v6320 = vunpack.c.l.s4 1983009808
    %v6321 = vunpack.c.0.s8 %v6320
    %v6322 = vlaneseq
    %v6323 = vshrl.u32 %v6322, 7
    %v6324 = vsub.s32 %v6321, %v6323
    %v6325 = vrot.slane %v6311, %v6324
    %v6326 = vcombine.low %v6318, %v6325
    %v6327 = vcombine.low %v4091, %v4098
    %v6328 = vcombine.low %v4105, %v4112
    %v6330 = vunpack.c.l.s4 1983009808
    %v6331 = vunpack.c.0.s8 %v6330
    %v6332 = vlaneseq
    %v6333 = vshrl.u32 %v6332, 7
    %v6334 = vsub.s32 %v6331, %v6333
    %v6335 = vrot.slane %v6327, %v6334
    %v6337 = vunpack.c.l.s4 1983009808
    %v6338 = vunpack.c.0.s8 %v6337
    %v6339 = vlaneseq
    %v6340 = vshrl.u32 %v6339, 7
    %v6341 = vsub.s32 %v6338, %v6340
    %v6342 = vrot.slane %v6328, %v6341
    %v6343 = vcombine.low %v6335, %v6342
    %v6344 = vcombine.low %v4119, %v4126
    %v6345 = vcombine.low %v4133, %v4140
    %v6347 = vunpack.c.l.s4 1983009808
    %v6348 = vunpack.c.0.s8 %v6347
    %v6349 = vlaneseq
    %v6350 = vshrl.u32 %v6349, 7
    %v6351 = vsub.s32 %v6348, %v6350
    %v6352 = vrot.slane %v6344, %v6351
    %v6354 = vunpack.c.l.s4 1983009808
    %v6355 = vunpack.c.0.s8 %v6354
    %v6356 = vlaneseq
    %v6357 = vshrl.u32 %v6356, 7
    %v6358 = vsub.s32 %v6355, %v6357
    %v6359 = vrot.slane %v6345, %v6358
    %v6360 = vcombine.low %v6352, %v6359
    %v6361 = vcombine.low %v4147, %v4154
    %v6362 = vcombine.low %v4161, %v4168
    %v6364 = vunpack.c.l.s4 1983009808
    %v6365 = vunpack.c.0.s8 %v6364
    %v6366 = vlaneseq
    %v6367 = vshrl.u32 %v6366, 7
    %v6368 = vsub.s32 %v6365, %v6367
    %v6369 = vrot.slane %v6361, %v6368
    %v6371 = vunpack.c.l.s4 1983009808
    %v6372 = vunpack.c.0.s8 %v6371
    %v6373 = vlaneseq
    %v6374 = vshrl.u32 %v6373, 7
    %v6375 = vsub.s32 %v6372, %v6374
    %v6376 = vrot.slane %v6362, %v6375
    %v6377 = vcombine.low %v6369, %v6376
    %v6378 = vcombine.low %v4175, %v4182
    %v6379 = vcombine.low %v4189, %v4196
    %v6381 = vunpack.c.l.s4 1983009808
    %v6382 = vunpack.c.0.s8 %v6381
    %v6383 = vlaneseq
    %v6384 = vshrl.u32 %v6383, 7
    %v6385 = vsub.s32 %v6382, %v6384
    %v6386 = vrot.slane %v6378, %v6385
    %v6388 = vunpack.c.l.s4 1983009808
    %v6389 = vunpack.c.0.s8 %v6388
    %v6390 = vlaneseq
    %v6391 = vshrl.u32 %v6390, 7
    %v6392 = vsub.s32 %v6389, %v6391
    %v6393 = vrot.slane %v6379, %v6392
    %v6394 = vcombine.low %v6386, %v6393
    %v6395 = vcombine.low %v4203, %v4210
    %v6396 = vcombine.low %v4217, %v4224
    %v6398 = vunpack.c.l.s4 1983009808
    %v6399 = vunpack.c.0.s8 %v6398
    %v6400 = vlaneseq
    %v6401 = vshrl.u32 %v6400, 7
    %v6402 = vsub.s32 %v6399, %v6401
    %v6403 = vrot.slane %v6395, %v6402
    %v6405 = vunpack.c.l.s4 1983009808
    %v6406 = vunpack.c.0.s8 %v6405
    %v6407 = vlaneseq
    %v6408 = vshrl.u32 %v6407, 7
    %v6409 = vsub.s32 %v6406, %v6408
    %v6410 = vrot.slane %v6396, %v6409
    %v6411 = vcombine.low %v6403, %v6410
    %v6412 = vcombine.low %v4231, %v4238
    %v6413 = vcombine.low %v4245, %v4252
    %v6415 = vunpack.c.l.s4 1983009808
    %v6416 = vunpack.c.0.s8 %v6415
    %v6417 = vlaneseq
    %v6418 = vshrl.u32 %v6417, 7
    %v6419 = vsub.s32 %v6416, %v6418
    %v6420 = vrot.slane %v6412, %v6419
    %v6422 = vunpack.c.l.s4 1983009808
    %v6423 = vunpack.c.0.s8 %v6422
    %v6424 = vlaneseq
    %v6425 = vshrl.u32 %v6424, 7
    %v6426 = vsub.s32 %v6423, %v6425
    %v6427 = vrot.slane %v6413, %v6426
    %v6428 = vcombine.low %v6420, %v6427
    %6429 = vset.pattern.permute.xlu0 0
    %6430 = vperm.xlu0 %6429, %v4269
    %v6431 = vpop.permute.xlu0 %6430
    %6432 = vset.pattern.permute.xlu0 0
    %6433 = vperm.xlu0 %6432, %v4286
    %v6434 = vpop.permute.xlu0 %6433
    %6435 = vset.pattern.permute.xlu0 0
    %6436 = vperm.xlu0 %6435, %v4303
    %v6437 = vpop.permute.xlu0 %6436
    %6438 = vset.pattern.permute.xlu0 0
    %6439 = vperm.xlu0 %6438, %v4320
    %v6440 = vpop.permute.xlu0 %6439
    %6441 = vset.pattern.permute.xlu0 0
    %6442 = vperm.xlu0 %6441, %v4337
    %v6443 = vpop.permute.xlu0 %6442
    %6444 = vset.pattern.permute.xlu0 0
    %6445 = vperm.xlu0 %6444, %v4354
    %v6446 = vpop.permute.xlu0 %6445
    %6447 = vset.pattern.permute.xlu0 0
    %6448 = vperm.xlu0 %6447, %v4371
    %v6449 = vpop.permute.xlu0 %6448
    %6450 = vset.pattern.permute.xlu0 0
    %6451 = vperm.xlu0 %6450, %v4388
    %v6452 = vpop.permute.xlu0 %6451
    %6453 = vset.pattern.permute.xlu0 0
    %6454 = vperm.xlu0 %6453, %v4405
    %v6455 = vpop.permute.xlu0 %6454
    %6456 = vset.pattern.permute.xlu0 0
    %6457 = vperm.xlu0 %6456, %v4422
    %v6458 = vpop.permute.xlu0 %6457
    %6459 = vset.pattern.permute.xlu0 0
    %6460 = vperm.xlu0 %6459, %v4439
    %v6461 = vpop.permute.xlu0 %6460
    %6462 = vset.pattern.permute.xlu0 0
    %6463 = vperm.xlu0 %6462, %v4456
    %v6464 = vpop.permute.xlu0 %6463
    %6465 = vset.pattern.permute.xlu0 0
    %6466 = vperm.xlu0 %6465, %v4473
    %v6467 = vpop.permute.xlu0 %6466
    %6468 = vset.pattern.permute.xlu0 0
    %6469 = vperm.xlu0 %6468, %v4490
    %v6470 = vpop.permute.xlu0 %6469
    %6471 = vset.pattern.permute.xlu0 0
    %6472 = vperm.xlu0 %6471, %v4507
    %v6473 = vpop.permute.xlu0 %6472
    %6474 = vset.pattern.permute.xlu0 0
    %6475 = vperm.xlu0 %6474, %v4524
    %v6476 = vpop.permute.xlu0 %6475
    %6477 = vset.pattern.permute.xlu0 0
    %6478 = vperm.xlu0 %6477, %v4541
    %v6479 = vpop.permute.xlu0 %6478
    %6480 = vset.pattern.permute.xlu0 0
    %6481 = vperm.xlu0 %6480, %v4558
    %v6482 = vpop.permute.xlu0 %6481
    %6483 = vset.pattern.permute.xlu0 0
    %6484 = vperm.xlu0 %6483, %v4575
    %v6485 = vpop.permute.xlu0 %6484
    %6486 = vset.pattern.permute.xlu0 0
    %6487 = vperm.xlu0 %6486, %v4592
    %v6488 = vpop.permute.xlu0 %6487
    %6489 = vset.pattern.permute.xlu0 0
    %6490 = vperm.xlu0 %6489, %v4609
    %v6491 = vpop.permute.xlu0 %6490
    %6492 = vset.pattern.permute.xlu0 0
    %6493 = vperm.xlu0 %6492, %v4626
    %v6494 = vpop.permute.xlu0 %6493
    %6495 = vset.pattern.permute.xlu0 0
    %6496 = vperm.xlu0 %6495, %v4643
    %v6497 = vpop.permute.xlu0 %6496
    %6498 = vset.pattern.permute.xlu0 0
    %6499 = vperm.xlu0 %6498, %v4660
    %v6500 = vpop.permute.xlu0 %6499
    %6501 = vset.pattern.permute.xlu0 0
    %6502 = vperm.xlu0 %6501, %v4677
    %v6503 = vpop.permute.xlu0 %6502
    %6504 = vset.pattern.permute.xlu0 0
    %6505 = vperm.xlu0 %6504, %v4694
    %v6506 = vpop.permute.xlu0 %6505
    %6507 = vset.pattern.permute.xlu0 0
    %6508 = vperm.xlu0 %6507, %v4711
    %v6509 = vpop.permute.xlu0 %6508
    %6510 = vset.pattern.permute.xlu0 0
    %6511 = vperm.xlu0 %6510, %v4728
    %v6512 = vpop.permute.xlu0 %6511
    %6513 = vset.pattern.permute.xlu0 0
    %6514 = vperm.xlu0 %6513, %v4745
    %v6515 = vpop.permute.xlu0 %6514
    %6516 = vset.pattern.permute.xlu0 0
    %6517 = vperm.xlu0 %6516, %v4762
    %v6518 = vpop.permute.xlu0 %6517
    %6519 = vset.pattern.permute.xlu0 0
    %6520 = vperm.xlu0 %6519, %v4779
    %v6521 = vpop.permute.xlu0 %6520
    %6522 = vset.pattern.permute.xlu0 0
    %6523 = vperm.xlu0 %6522, %v4796
    %v6524 = vpop.permute.xlu0 %6523
    %6525 = vset.pattern.permute.xlu0 0
    %6526 = vperm.xlu0 %6525, %v4813
    %v6527 = vpop.permute.xlu0 %6526
    %6528 = vset.pattern.permute.xlu0 0
    %6529 = vperm.xlu0 %6528, %v4830
    %v6530 = vpop.permute.xlu0 %6529
    %6531 = vset.pattern.permute.xlu0 0
    %6532 = vperm.xlu0 %6531, %v4847
    %v6533 = vpop.permute.xlu0 %6532
    %6534 = vset.pattern.permute.xlu0 0
    %6535 = vperm.xlu0 %6534, %v4864
    %v6536 = vpop.permute.xlu0 %6535
    %6537 = vset.pattern.permute.xlu0 0
    %6538 = vperm.xlu0 %6537, %v4881
    %v6539 = vpop.permute.xlu0 %6538
    %6540 = vset.pattern.permute.xlu0 0
    %6541 = vperm.xlu0 %6540, %v4898
    %v6542 = vpop.permute.xlu0 %6541
    %6543 = vset.pattern.permute.xlu0 0
    %6544 = vperm.xlu0 %6543, %v4915
    %v6545 = vpop.permute.xlu0 %6544
    %6546 = vset.pattern.permute.xlu0 0
    %6547 = vperm.xlu0 %6546, %v4932
    %v6548 = vpop.permute.xlu0 %6547
    %6549 = vset.pattern.permute.xlu0 0
    %6550 = vperm.xlu0 %6549, %v4949
    %v6551 = vpop.permute.xlu0 %6550
    %6552 = vset.pattern.permute.xlu0 0
    %6553 = vperm.xlu0 %6552, %v4966
    %v6554 = vpop.permute.xlu0 %6553
    %6555 = vset.pattern.permute.xlu0 0
    %6556 = vperm.xlu0 %6555, %v4983
    %v6557 = vpop.permute.xlu0 %6556
    %6558 = vset.pattern.permute.xlu0 0
    %6559 = vperm.xlu0 %6558, %v5000
    %v6560 = vpop.permute.xlu0 %6559
    %6561 = vset.pattern.permute.xlu0 0
    %6562 = vperm.xlu0 %6561, %v5017
    %v6563 = vpop.permute.xlu0 %6562
    %6564 = vset.pattern.permute.xlu0 0
    %6565 = vperm.xlu0 %6564, %v5034
    %v6566 = vpop.permute.xlu0 %6565
    %6567 = vset.pattern.permute.xlu0 0
    %6568 = vperm.xlu0 %6567, %v5051
    %v6569 = vpop.permute.xlu0 %6568
    %6570 = vset.pattern.permute.xlu0 0
    %6571 = vperm.xlu0 %6570, %v5068
    %v6572 = vpop.permute.xlu0 %6571
    %6573 = vset.pattern.permute.xlu0 0
    %6574 = vperm.xlu0 %6573, %v5085
    %v6575 = vpop.permute.xlu0 %6574
    %6576 = vset.pattern.permute.xlu0 0
    %6577 = vperm.xlu0 %6576, %v5102
    %v6578 = vpop.permute.xlu0 %6577
    %6579 = vset.pattern.permute.xlu0 0
    %6580 = vperm.xlu0 %6579, %v5119
    %v6581 = vpop.permute.xlu0 %6580
    %6582 = vset.pattern.permute.xlu0 0
    %6583 = vperm.xlu0 %6582, %v5136
    %v6584 = vpop.permute.xlu0 %6583
    %6585 = vset.pattern.permute.xlu0 0
    %6586 = vperm.xlu0 %6585, %v5153
    %v6587 = vpop.permute.xlu0 %6586
    %6588 = vset.pattern.permute.xlu0 0
    %6589 = vperm.xlu0 %6588, %v5170
    %v6590 = vpop.permute.xlu0 %6589
    %6591 = vset.pattern.permute.xlu0 0
    %6592 = vperm.xlu0 %6591, %v5187
    %v6593 = vpop.permute.xlu0 %6592
    %6594 = vset.pattern.permute.xlu0 0
    %6595 = vperm.xlu0 %6594, %v5204
    %v6596 = vpop.permute.xlu0 %6595
    %6597 = vset.pattern.permute.xlu0 0
    %6598 = vperm.xlu0 %6597, %v5221
    %v6599 = vpop.permute.xlu0 %6598
    %6600 = vset.pattern.permute.xlu0 0
    %6601 = vperm.xlu0 %6600, %v5238
    %v6602 = vpop.permute.xlu0 %6601
    %6603 = vset.pattern.permute.xlu0 0
    %6604 = vperm.xlu0 %6603, %v5255
    %v6605 = vpop.permute.xlu0 %6604
    %6606 = vset.pattern.permute.xlu0 0
    %6607 = vperm.xlu0 %6606, %v5272
    %v6608 = vpop.permute.xlu0 %6607
    %6609 = vset.pattern.permute.xlu0 0
    %6610 = vperm.xlu0 %6609, %v5289
    %v6611 = vpop.permute.xlu0 %6610
    %6612 = vset.pattern.permute.xlu0 0
    %6613 = vperm.xlu0 %6612, %v5306
    %v6614 = vpop.permute.xlu0 %6613
    %6615 = vset.pattern.permute.xlu0 0
    %6616 = vperm.xlu0 %6615, %v5323
    %v6617 = vpop.permute.xlu0 %6616
    %6618 = vset.pattern.permute.xlu0 0
    %6619 = vperm.xlu0 %6618, %v5340
    %v6620 = vpop.permute.xlu0 %6619
    %6621 = vset.pattern.permute.xlu0 0
    %6622 = vperm.xlu0 %6621, %v5357
    %v6623 = vpop.permute.xlu0 %6622
    %6624 = vset.pattern.permute.xlu0 0
    %6625 = vperm.xlu0 %6624, %v5374
    %v6626 = vpop.permute.xlu0 %6625
    %6627 = vset.pattern.permute.xlu0 0
    %6628 = vperm.xlu0 %6627, %v5391
    %v6629 = vpop.permute.xlu0 %6628
    %6630 = vset.pattern.permute.xlu0 0
    %6631 = vperm.xlu0 %6630, %v5408
    %v6632 = vpop.permute.xlu0 %6631
    %6633 = vset.pattern.permute.xlu0 0
    %6634 = vperm.xlu0 %6633, %v5425
    %v6635 = vpop.permute.xlu0 %6634
    %6636 = vset.pattern.permute.xlu0 0
    %6637 = vperm.xlu0 %6636, %v5442
    %v6638 = vpop.permute.xlu0 %6637
    %6639 = vset.pattern.permute.xlu0 0
    %6640 = vperm.xlu0 %6639, %v5459
    %v6641 = vpop.permute.xlu0 %6640
    %6642 = vset.pattern.permute.xlu0 0
    %6643 = vperm.xlu0 %6642, %v5476
    %v6644 = vpop.permute.xlu0 %6643
    %6645 = vset.pattern.permute.xlu0 0
    %6646 = vperm.xlu0 %6645, %v5493
    %v6647 = vpop.permute.xlu0 %6646
    %6648 = vset.pattern.permute.xlu0 0
    %6649 = vperm.xlu0 %6648, %v5510
    %v6650 = vpop.permute.xlu0 %6649
    %6651 = vset.pattern.permute.xlu0 0
    %6652 = vperm.xlu0 %6651, %v5527
    %v6653 = vpop.permute.xlu0 %6652
    %6654 = vset.pattern.permute.xlu0 0
    %6655 = vperm.xlu0 %6654, %v5544
    %v6656 = vpop.permute.xlu0 %6655
    %6657 = vset.pattern.permute.xlu0 0
    %6658 = vperm.xlu0 %6657, %v5561
    %v6659 = vpop.permute.xlu0 %6658
    %6660 = vset.pattern.permute.xlu0 0
    %6661 = vperm.xlu0 %6660, %v5578
    %v6662 = vpop.permute.xlu0 %6661
    %6663 = vset.pattern.permute.xlu0 0
    %6664 = vperm.xlu0 %6663, %v5595
    %v6665 = vpop.permute.xlu0 %6664
    %6666 = vset.pattern.permute.xlu0 0
    %6667 = vperm.xlu0 %6666, %v5612
    %v6668 = vpop.permute.xlu0 %6667
    %6669 = vset.pattern.permute.xlu0 0
    %6670 = vperm.xlu0 %6669, %v5629
    %v6671 = vpop.permute.xlu0 %6670
    %6672 = vset.pattern.permute.xlu0 0
    %6673 = vperm.xlu0 %6672, %v5646
    %v6674 = vpop.permute.xlu0 %6673
    %6675 = vset.pattern.permute.xlu0 0
    %6676 = vperm.xlu0 %6675, %v5663
    %v6677 = vpop.permute.xlu0 %6676
    %6678 = vset.pattern.permute.xlu0 0
    %6679 = vperm.xlu0 %6678, %v5680
    %v6680 = vpop.permute.xlu0 %6679
    %6681 = vset.pattern.permute.xlu0 0
    %6682 = vperm.xlu0 %6681, %v5697
    %v6683 = vpop.permute.xlu0 %6682
    %6684 = vset.pattern.permute.xlu0 0
    %6685 = vperm.xlu0 %6684, %v5714
    %v6686 = vpop.permute.xlu0 %6685
    %6687 = vset.pattern.permute.xlu0 0
    %6688 = vperm.xlu0 %6687, %v5731
    %v6689 = vpop.permute.xlu0 %6688
    %6690 = vset.pattern.permute.xlu0 0
    %6691 = vperm.xlu0 %6690, %v5748
    %v6692 = vpop.permute.xlu0 %6691
    %6693 = vset.pattern.permute.xlu0 0
    %6694 = vperm.xlu0 %6693, %v5765
    %v6695 = vpop.permute.xlu0 %6694
    %6696 = vset.pattern.permute.xlu0 0
    %6697 = vperm.xlu0 %6696, %v5782
    %v6698 = vpop.permute.xlu0 %6697
    %6699 = vset.pattern.permute.xlu0 0
    %6700 = vperm.xlu0 %6699, %v5799
    %v6701 = vpop.permute.xlu0 %6700
    %6702 = vset.pattern.permute.xlu0 0
    %6703 = vperm.xlu0 %6702, %v5816
    %v6704 = vpop.permute.xlu0 %6703
    %6705 = vset.pattern.permute.xlu0 0
    %6706 = vperm.xlu0 %6705, %v5833
    %v6707 = vpop.permute.xlu0 %6706
    %6708 = vset.pattern.permute.xlu0 0
    %6709 = vperm.xlu0 %6708, %v5850
    %v6710 = vpop.permute.xlu0 %6709
    %6711 = vset.pattern.permute.xlu0 0
    %6712 = vperm.xlu0 %6711, %v5867
    %v6713 = vpop.permute.xlu0 %6712
    %6714 = vset.pattern.permute.xlu0 0
    %6715 = vperm.xlu0 %6714, %v5884
    %v6716 = vpop.permute.xlu0 %6715
    %6717 = vset.pattern.permute.xlu0 0
    %6718 = vperm.xlu0 %6717, %v5901
    %v6719 = vpop.permute.xlu0 %6718
    %6720 = vset.pattern.permute.xlu0 0
    %6721 = vperm.xlu0 %6720, %v5918
    %v6722 = vpop.permute.xlu0 %6721
    %6723 = vset.pattern.permute.xlu0 0
    %6724 = vperm.xlu0 %6723, %v5935
    %v6725 = vpop.permute.xlu0 %6724
    %6726 = vset.pattern.permute.xlu0 0
    %6727 = vperm.xlu0 %6726, %v5952
    %v6728 = vpop.permute.xlu0 %6727
    %6729 = vset.pattern.permute.xlu0 0
    %6730 = vperm.xlu0 %6729, %v5969
    %v6731 = vpop.permute.xlu0 %6730
    %6732 = vset.pattern.permute.xlu0 0
    %6733 = vperm.xlu0 %6732, %v5986
    %v6734 = vpop.permute.xlu0 %6733
    %6735 = vset.pattern.permute.xlu0 0
    %6736 = vperm.xlu0 %6735, %v6003
    %v6737 = vpop.permute.xlu0 %6736
    %6738 = vset.pattern.permute.xlu0 0
    %6739 = vperm.xlu0 %6738, %v6020
    %v6740 = vpop.permute.xlu0 %6739
    %6741 = vset.pattern.permute.xlu0 0
    %6742 = vperm.xlu0 %6741, %v6037
    %v6743 = vpop.permute.xlu0 %6742
    %6744 = vset.pattern.permute.xlu0 0
    %6745 = vperm.xlu0 %6744, %v6054
    %v6746 = vpop.permute.xlu0 %6745
    %6747 = vset.pattern.permute.xlu0 0
    %6748 = vperm.xlu0 %6747, %v6071
    %v6749 = vpop.permute.xlu0 %6748
    %6750 = vset.pattern.permute.xlu0 0
    %6751 = vperm.xlu0 %6750, %v6088
    %v6752 = vpop.permute.xlu0 %6751
    %6753 = vset.pattern.permute.xlu0 0
    %6754 = vperm.xlu0 %6753, %v6105
    %v6755 = vpop.permute.xlu0 %6754
    %6756 = vset.pattern.permute.xlu0 0
    %6757 = vperm.xlu0 %6756, %v6122
    %v6758 = vpop.permute.xlu0 %6757
    %6759 = vset.pattern.permute.xlu0 0
    %6760 = vperm.xlu0 %6759, %v6139
    %v6761 = vpop.permute.xlu0 %6760
    %6762 = vset.pattern.permute.xlu0 0
    %6763 = vperm.xlu0 %6762, %v6156
    %v6764 = vpop.permute.xlu0 %6763
    %6765 = vset.pattern.permute.xlu0 0
    %6766 = vperm.xlu0 %6765, %v6173
    %v6767 = vpop.permute.xlu0 %6766
    %6768 = vset.pattern.permute.xlu0 0
    %6769 = vperm.xlu0 %6768, %v6190
    %v6770 = vpop.permute.xlu0 %6769
    %6771 = vset.pattern.permute.xlu0 0
    %6772 = vperm.xlu0 %6771, %v6207
    %v6773 = vpop.permute.xlu0 %6772
    %6774 = vset.pattern.permute.xlu0 0
    %6775 = vperm.xlu0 %6774, %v6224
    %v6776 = vpop.permute.xlu0 %6775
    %6777 = vset.pattern.permute.xlu0 0
    %6778 = vperm.xlu0 %6777, %v6241
    %v6779 = vpop.permute.xlu0 %6778
    %6780 = vset.pattern.permute.xlu0 0
    %6781 = vperm.xlu0 %6780, %v6258
    %v6782 = vpop.permute.xlu0 %6781
    %6783 = vset.pattern.permute.xlu0 0
    %6784 = vperm.xlu0 %6783, %v6275
    %v6785 = vpop.permute.xlu0 %6784
    %6786 = vset.pattern.permute.xlu0 0
    %6787 = vperm.xlu0 %6786, %v6292
    %v6788 = vpop.permute.xlu0 %6787
    %6789 = vset.pattern.permute.xlu0 0
    %6790 = vperm.xlu0 %6789, %v6309
    %v6791 = vpop.permute.xlu0 %6790
    %6792 = vset.pattern.permute.xlu0 0
    %6793 = vperm.xlu0 %6792, %v6326
    %v6794 = vpop.permute.xlu0 %6793
    %6795 = vset.pattern.permute.xlu0 0
    %6796 = vperm.xlu0 %6795, %v6343
    %v6797 = vpop.permute.xlu0 %6796
    %6798 = vset.pattern.permute.xlu0 0
    %6799 = vperm.xlu0 %6798, %v6360
    %v6800 = vpop.permute.xlu0 %6799
    %6801 = vset.pattern.permute.xlu0 0
    %6802 = vperm.xlu0 %6801, %v6377
    %v6803 = vpop.permute.xlu0 %6802
    %6804 = vset.pattern.permute.xlu0 0
    %6805 = vperm.xlu0 %6804, %v6394
    %v6806 = vpop.permute.xlu0 %6805
    %6807 = vset.pattern.permute.xlu0 0
    %6808 = vperm.xlu0 %6807, %v6411
    %v6809 = vpop.permute.xlu0 %6808
    %6810 = vset.pattern.permute.xlu0 0
    %6811 = vperm.xlu0 %6810, %v6428
    %v6812 = vpop.permute.xlu0 %6811
    %v6813 = vlaneseq
    %v6814 = vand.u32 %v6813, 127
    %v6815 = vlaneseq
    %v6816 = vshrl.u32 %v6815, 7
    %v6817 = vsub.s32 %v6814, %v6816
    %v6818 = vrot.slane %v6431, %v6817
    %v6819 = vadd.s32 %v6814, 4294967288
    %v6820 = vlaneseq
    %v6821 = vshrl.u32 %v6820, 7
    %v6822 = vsub.s32 %v6819, %v6821
    %v6823 = vrot.slane %v6434, %v6822
    %vm6824 = vcmask 130112
    %v6825 = vsel %vm6824, %v6823, %v6818
    %v6826 = vadd.s32 %v6814, 4294967280
    %v6827 = vlaneseq
    %v6828 = vshrl.u32 %v6827, 7
    %v6829 = vsub.s32 %v6826, %v6828
    %v6830 = vrot.slane %v6437, %v6829
    %vm6831 = vcmask 195712
    %v6832 = vsel %vm6831, %v6830, %v6825
    %v6833 = vadd.s32 %v6814, 4294967272
    %v6834 = vlaneseq
    %v6835 = vshrl.u32 %v6834, 7
    %v6836 = vsub.s32 %v6833, %v6835
    %v6837 = vrot.slane %v6440, %v6836
    %vm6838 = vcmask 261312
    %v6839 = vsel %vm6838, %v6837, %v6832
    %v6840 = vadd.s32 %v6814, 4294967264
    %v6841 = vlaneseq
    %v6842 = vshrl.u32 %v6841, 7
    %v6843 = vsub.s32 %v6840, %v6842
    %v6844 = vrot.slane %v6443, %v6843
    %vm6845 = vcmask 326912
    %v6846 = vsel %vm6845, %v6844, %v6839
    %v6847 = vadd.s32 %v6814, 4294967256
    %v6848 = vlaneseq
    %v6849 = vshrl.u32 %v6848, 7
    %v6850 = vsub.s32 %v6847, %v6849
    %v6851 = vrot.slane %v6446, %v6850
    %vm6852 = vcmask 392512
    %v6853 = vsel %vm6852, %v6851, %v6846
    %v6854 = vadd.s32 %v6814, 4294967248
    %v6855 = vlaneseq
    %v6856 = vshrl.u32 %v6855, 7
    %v6857 = vsub.s32 %v6854, %v6856
    %v6858 = vrot.slane %v6449, %v6857
    %vm6859 = vcmask 458112
    %v6860 = vsel %vm6859, %v6858, %v6853
    %v6861 = vadd.s32 %v6814, 4294967240
    %v6862 = vlaneseq
    %v6863 = vshrl.u32 %v6862, 7
    %v6864 = vsub.s32 %v6861, %v6863
    %v6865 = vrot.slane %v6452, %v6864
    %vm6866 = vcmask 523712
    %v6867 = vsel %vm6866, %v6865, %v6860
    %v6868 = vadd.s32 %v6814, 4294967232
    %v6869 = vlaneseq
    %v6870 = vshrl.u32 %v6869, 7
    %v6871 = vsub.s32 %v6868, %v6870
    %v6872 = vrot.slane %v6455, %v6871
    %vm6873 = vcmask 589312
    %v6874 = vsel %vm6873, %v6872, %v6867
    %v6875 = vadd.s32 %v6814, 4294967224
    %v6876 = vlaneseq
    %v6877 = vshrl.u32 %v6876, 7
    %v6878 = vsub.s32 %v6875, %v6877
    %v6879 = vrot.slane %v6458, %v6878
    %vm6880 = vcmask 654912
    %v6881 = vsel %vm6880, %v6879, %v6874
    %v6882 = vadd.s32 %v6814, 4294967216
    %v6883 = vlaneseq
    %v6884 = vshrl.u32 %v6883, 7
    %v6885 = vsub.s32 %v6882, %v6884
    %v6886 = vrot.slane %v6461, %v6885
    %vm6887 = vcmask 720512
    %v6888 = vsel %vm6887, %v6886, %v6881
    %v6889 = vadd.s32 %v6814, 4294967208
    %v6890 = vlaneseq
    %v6891 = vshrl.u32 %v6890, 7
    %v6892 = vsub.s32 %v6889, %v6891
    %v6893 = vrot.slane %v6464, %v6892
    %vm6894 = vcmask 786112
    %v6895 = vsel %vm6894, %v6893, %v6888
    %v6896 = vadd.s32 %v6814, 4294967200
    %v6897 = vlaneseq
    %v6898 = vshrl.u32 %v6897, 7
    %v6899 = vsub.s32 %v6896, %v6898
    %v6900 = vrot.slane %v6467, %v6899
    %vm6901 = vcmask 851712
    %v6902 = vsel %vm6901, %v6900, %v6895
    %v6903 = vadd.s32 %v6814, 4294967192
    %v6904 = vlaneseq
    %v6905 = vshrl.u32 %v6904, 7
    %v6906 = vsub.s32 %v6903, %v6905
    %v6907 = vrot.slane %v6470, %v6906
    %vm6908 = vcmask 917312
    %v6909 = vsel %vm6908, %v6907, %v6902
    %v6910 = vadd.s32 %v6814, 4294967184
    %v6911 = vlaneseq
    %v6912 = vshrl.u32 %v6911, 7
    %v6913 = vsub.s32 %v6910, %v6912
    %v6914 = vrot.slane %v6473, %v6913
    %vm6915 = vcmask 982912
    %v6916 = vsel %vm6915, %v6914, %v6909
    %v6917 = vadd.s32 %v6814, 4294967176
    %v6918 = vlaneseq
    %v6919 = vshrl.u32 %v6918, 7
    %v6920 = vsub.s32 %v6917, %v6919
    %v6921 = vrot.slane %v6476, %v6920
    %vm6922 = vcmask 1048512
    %v6923 = vsel %vm6922, %v6921, %v6916
    %v6924 = vlaneseq
    %v6925 = vshrl.u32 %v6924, 7
    %v6926 = vsub.s32 %v6814, %v6925
    %v6927 = vrot.slane %v6479, %v6926
    %v6928 = vlaneseq
    %v6929 = vshrl.u32 %v6928, 7
    %v6930 = vsub.s32 %v6819, %v6929
    %v6931 = vrot.slane %v6482, %v6930
    %v6932 = vsel %vm6824, %v6931, %v6927
    %v6933 = vlaneseq
    %v6934 = vshrl.u32 %v6933, 7
    %v6935 = vsub.s32 %v6826, %v6934
    %v6936 = vrot.slane %v6485, %v6935
    %v6937 = vsel %vm6831, %v6936, %v6932
    %v6938 = vlaneseq
    %v6939 = vshrl.u32 %v6938, 7
    %v6940 = vsub.s32 %v6833, %v6939
    %v6941 = vrot.slane %v6488, %v6940
    %v6942 = vsel %vm6838, %v6941, %v6937
    %v6943 = vlaneseq
    %v6944 = vshrl.u32 %v6943, 7
    %v6945 = vsub.s32 %v6840, %v6944
    %v6946 = vrot.slane %v6491, %v6945
    %v6947 = vsel %vm6845, %v6946, %v6942
    %v6948 = vlaneseq
    %v6949 = vshrl.u32 %v6948, 7
    %v6950 = vsub.s32 %v6847, %v6949
    %v6951 = vrot.slane %v6494, %v6950
    %v6952 = vsel %vm6852, %v6951, %v6947
    %v6953 = vlaneseq
    %v6954 = vshrl.u32 %v6953, 7
    %v6955 = vsub.s32 %v6854, %v6954
    %v6956 = vrot.slane %v6497, %v6955
    %v6957 = vsel %vm6859, %v6956, %v6952
    %v6958 = vlaneseq
    %v6959 = vshrl.u32 %v6958, 7
    %v6960 = vsub.s32 %v6861, %v6959
    %v6961 = vrot.slane %v6500, %v6960
    %v6962 = vsel %vm6866, %v6961, %v6957
    %v6963 = vlaneseq
    %v6964 = vshrl.u32 %v6963, 7
    %v6965 = vsub.s32 %v6868, %v6964
    %v6966 = vrot.slane %v6503, %v6965
    %v6967 = vsel %vm6873, %v6966, %v6962
    %v6968 = vlaneseq
    %v6969 = vshrl.u32 %v6968, 7
    %v6970 = vsub.s32 %v6875, %v6969
    %v6971 = vrot.slane %v6506, %v6970
    %v6972 = vsel %vm6880, %v6971, %v6967
    %v6973 = vlaneseq
    %v6974 = vshrl.u32 %v6973, 7
    %v6975 = vsub.s32 %v6882, %v6974
    %v6976 = vrot.slane %v6509, %v6975
    %v6977 = vsel %vm6887, %v6976, %v6972
    %v6978 = vlaneseq
    %v6979 = vshrl.u32 %v6978, 7
    %v6980 = vsub.s32 %v6889, %v6979
    %v6981 = vrot.slane %v6512, %v6980
    %v6982 = vsel %vm6894, %v6981, %v6977
    %v6983 = vlaneseq
    %v6984 = vshrl.u32 %v6983, 7
    %v6985 = vsub.s32 %v6896, %v6984
    %v6986 = vrot.slane %v6515, %v6985
    %v6987 = vsel %vm6901, %v6986, %v6982
    %v6988 = vlaneseq
    %v6989 = vshrl.u32 %v6988, 7
    %v6990 = vsub.s32 %v6903, %v6989
    %v6991 = vrot.slane %v6518, %v6990
    %v6992 = vsel %vm6908, %v6991, %v6987
    %v6993 = vlaneseq
    %v6994 = vshrl.u32 %v6993, 7
    %v6995 = vsub.s32 %v6910, %v6994
    %v6996 = vrot.slane %v6521, %v6995
    %v6997 = vsel %vm6915, %v6996, %v6992
    %v6998 = vlaneseq
    %v6999 = vshrl.u32 %v6998, 7
    %v7000 = vsub.s32 %v6917, %v6999
    %v7001 = vrot.slane %v6524, %v7000
    %v7002 = vsel %vm6922, %v7001, %v6997
    %v7003 = vlaneseq
    %v7004 = vshrl.u32 %v7003, 7
    %v7005 = vsub.s32 %v6814, %v7004
    %v7006 = vrot.slane %v6527, %v7005
    %v7007 = vlaneseq
    %v7008 = vshrl.u32 %v7007, 7
    %v7009 = vsub.s32 %v6819, %v7008
    %v7010 = vrot.slane %v6530, %v7009
    %v7011 = vsel %vm6824, %v7010, %v7006
    %v7012 = vlaneseq
    %v7013 = vshrl.u32 %v7012, 7
    %v7014 = vsub.s32 %v6826, %v7013
    %v7015 = vrot.slane %v6533, %v7014
    %v7016 = vsel %vm6831, %v7015, %v7011
    %v7017 = vlaneseq
    %v7018 = vshrl.u32 %v7017, 7
    %v7019 = vsub.s32 %v6833, %v7018
    %v7020 = vrot.slane %v6536, %v7019
    %v7021 = vsel %vm6838, %v7020, %v7016
    %v7022 = vlaneseq
    %v7023 = vshrl.u32 %v7022, 7
    %v7024 = vsub.s32 %v6840, %v7023
    %v7025 = vrot.slane %v6539, %v7024
    %v7026 = vsel %vm6845, %v7025, %v7021
    %v7027 = vlaneseq
    %v7028 = vshrl.u32 %v7027, 7
    %v7029 = vsub.s32 %v6847, %v7028
    %v7030 = vrot.slane %v6542, %v7029
    %v7031 = vsel %vm6852, %v7030, %v7026
    %v7032 = vlaneseq
    %v7033 = vshrl.u32 %v7032, 7
    %v7034 = vsub.s32 %v6854, %v7033
    %v7035 = vrot.slane %v6545, %v7034
    %v7036 = vsel %vm6859, %v7035, %v7031
    %v7037 = vlaneseq
    %v7038 = vshrl.u32 %v7037, 7
    %v7039 = vsub.s32 %v6861, %v7038
    %v7040 = vrot.slane %v6548, %v7039
    %v7041 = vsel %vm6866, %v7040, %v7036
    %v7042 = vlaneseq
    %v7043 = vshrl.u32 %v7042, 7
    %v7044 = vsub.s32 %v6868, %v7043
    %v7045 = vrot.slane %v6551, %v7044
    %v7046 = vsel %vm6873, %v7045, %v7041
    %v7047 = vlaneseq
    %v7048 = vshrl.u32 %v7047, 7
    %v7049 = vsub.s32 %v6875, %v7048
    %v7050 = vrot.slane %v6554, %v7049
    %v7051 = vsel %vm6880, %v7050, %v7046
    %v7052 = vlaneseq
    %v7053 = vshrl.u32 %v7052, 7
    %v7054 = vsub.s32 %v6882, %v7053
    %v7055 = vrot.slane %v6557, %v7054
    %v7056 = vsel %vm6887, %v7055, %v7051
    %v7057 = vlaneseq
    %v7058 = vshrl.u32 %v7057, 7
    %v7059 = vsub.s32 %v6889, %v7058
    %v7060 = vrot.slane %v6560, %v7059
    %v7061 = vsel %vm6894, %v7060, %v7056
    %v7062 = vlaneseq
    %v7063 = vshrl.u32 %v7062, 7
    %v7064 = vsub.s32 %v6896, %v7063
    %v7065 = vrot.slane %v6563, %v7064
    %v7066 = vsel %vm6901, %v7065, %v7061
    %v7067 = vlaneseq
    %v7068 = vshrl.u32 %v7067, 7
    %v7069 = vsub.s32 %v6903, %v7068
    %v7070 = vrot.slane %v6566, %v7069
    %v7071 = vsel %vm6908, %v7070, %v7066
    %v7072 = vlaneseq
    %v7073 = vshrl.u32 %v7072, 7
    %v7074 = vsub.s32 %v6910, %v7073
    %v7075 = vrot.slane %v6569, %v7074
    %v7076 = vsel %vm6915, %v7075, %v7071
    %v7077 = vlaneseq
    %v7078 = vshrl.u32 %v7077, 7
    %v7079 = vsub.s32 %v6917, %v7078
    %v7080 = vrot.slane %v6572, %v7079
    %v7081 = vsel %vm6922, %v7080, %v7076
    %v7082 = vlaneseq
    %v7083 = vshrl.u32 %v7082, 7
    %v7084 = vsub.s32 %v6814, %v7083
    %v7085 = vrot.slane %v6575, %v7084
    %v7086 = vlaneseq
    %v7087 = vshrl.u32 %v7086, 7
    %v7088 = vsub.s32 %v6819, %v7087
    %v7089 = vrot.slane %v6578, %v7088
    %v7090 = vsel %vm6824, %v7089, %v7085
    %v7091 = vlaneseq
    %v7092 = vshrl.u32 %v7091, 7
    %v7093 = vsub.s32 %v6826, %v7092
    %v7094 = vrot.slane %v6581, %v7093
    %v7095 = vsel %vm6831, %v7094, %v7090
    %v7096 = vlaneseq
    %v7097 = vshrl.u32 %v7096, 7
    %v7098 = vsub.s32 %v6833, %v7097
    %v7099 = vrot.slane %v6584, %v7098
    %v7100 = vsel %vm6838, %v7099, %v7095
    %v7101 = vlaneseq
    %v7102 = vshrl.u32 %v7101, 7
    %v7103 = vsub.s32 %v6840, %v7102
    %v7104 = vrot.slane %v6587, %v7103
    %v7105 = vsel %vm6845, %v7104, %v7100
    %v7106 = vlaneseq
    %v7107 = vshrl.u32 %v7106, 7
    %v7108 = vsub.s32 %v6847, %v7107
    %v7109 = vrot.slane %v6590, %v7108
    %v7110 = vsel %vm6852, %v7109, %v7105
    %v7111 = vlaneseq
    %v7112 = vshrl.u32 %v7111, 7
    %v7113 = vsub.s32 %v6854, %v7112
    %v7114 = vrot.slane %v6593, %v7113
    %v7115 = vsel %vm6859, %v7114, %v7110
    %v7116 = vlaneseq
    %v7117 = vshrl.u32 %v7116, 7
    %v7118 = vsub.s32 %v6861, %v7117
    %v7119 = vrot.slane %v6596, %v7118
    %v7120 = vsel %vm6866, %v7119, %v7115
    %v7121 = vlaneseq
    %v7122 = vshrl.u32 %v7121, 7
    %v7123 = vsub.s32 %v6868, %v7122
    %v7124 = vrot.slane %v6599, %v7123
    %v7125 = vsel %vm6873, %v7124, %v7120
    %v7126 = vlaneseq
    %v7127 = vshrl.u32 %v7126, 7
    %v7128 = vsub.s32 %v6875, %v7127
    %v7129 = vrot.slane %v6602, %v7128
    %v7130 = vsel %vm6880, %v7129, %v7125
    %v7131 = vlaneseq
    %v7132 = vshrl.u32 %v7131, 7
    %v7133 = vsub.s32 %v6882, %v7132
    %v7134 = vrot.slane %v6605, %v7133
    %v7135 = vsel %vm6887, %v7134, %v7130
    %v7136 = vlaneseq
    %v7137 = vshrl.u32 %v7136, 7
    %v7138 = vsub.s32 %v6889, %v7137
    %v7139 = vrot.slane %v6608, %v7138
    %v7140 = vsel %vm6894, %v7139, %v7135
    %v7141 = vlaneseq
    %v7142 = vshrl.u32 %v7141, 7
    %v7143 = vsub.s32 %v6896, %v7142
    %v7144 = vrot.slane %v6611, %v7143
    %v7145 = vsel %vm6901, %v7144, %v7140
    %v7146 = vlaneseq
    %v7147 = vshrl.u32 %v7146, 7
    %v7148 = vsub.s32 %v6903, %v7147
    %v7149 = vrot.slane %v6614, %v7148
    %v7150 = vsel %vm6908, %v7149, %v7145
    %v7151 = vlaneseq
    %v7152 = vshrl.u32 %v7151, 7
    %v7153 = vsub.s32 %v6910, %v7152
    %v7154 = vrot.slane %v6617, %v7153
    %v7155 = vsel %vm6915, %v7154, %v7150
    %v7156 = vlaneseq
    %v7157 = vshrl.u32 %v7156, 7
    %v7158 = vsub.s32 %v6917, %v7157
    %v7159 = vrot.slane %v6620, %v7158
    %v7160 = vsel %vm6922, %v7159, %v7155
    %v7161 = vlaneseq
    %v7162 = vshrl.u32 %v7161, 7
    %v7163 = vsub.s32 %v6814, %v7162
    %v7164 = vrot.slane %v6623, %v7163
    %v7165 = vlaneseq
    %v7166 = vshrl.u32 %v7165, 7
    %v7167 = vsub.s32 %v6819, %v7166
    %v7168 = vrot.slane %v6626, %v7167
    %v7169 = vsel %vm6824, %v7168, %v7164
    %v7170 = vlaneseq
    %v7171 = vshrl.u32 %v7170, 7
    %v7172 = vsub.s32 %v6826, %v7171
    %v7173 = vrot.slane %v6629, %v7172
    %v7174 = vsel %vm6831, %v7173, %v7169
    %v7175 = vlaneseq
    %v7176 = vshrl.u32 %v7175, 7
    %v7177 = vsub.s32 %v6833, %v7176
    %v7178 = vrot.slane %v6632, %v7177
    %v7179 = vsel %vm6838, %v7178, %v7174
    %v7180 = vlaneseq
    %v7181 = vshrl.u32 %v7180, 7
    %v7182 = vsub.s32 %v6840, %v7181
    %v7183 = vrot.slane %v6635, %v7182
    %v7184 = vsel %vm6845, %v7183, %v7179
    %v7185 = vlaneseq
    %v7186 = vshrl.u32 %v7185, 7
    %v7187 = vsub.s32 %v6847, %v7186
    %v7188 = vrot.slane %v6638, %v7187
    %v7189 = vsel %vm6852, %v7188, %v7184
    %v7190 = vlaneseq
    %v7191 = vshrl.u32 %v7190, 7
    %v7192 = vsub.s32 %v6854, %v7191
    %v7193 = vrot.slane %v6641, %v7192
    %v7194 = vsel %vm6859, %v7193, %v7189
    %v7195 = vlaneseq
    %v7196 = vshrl.u32 %v7195, 7
    %v7197 = vsub.s32 %v6861, %v7196
    %v7198 = vrot.slane %v6644, %v7197
    %v7199 = vsel %vm6866, %v7198, %v7194
    %v7200 = vlaneseq
    %v7201 = vshrl.u32 %v7200, 7
    %v7202 = vsub.s32 %v6868, %v7201
    %v7203 = vrot.slane %v6647, %v7202
    %v7204 = vsel %vm6873, %v7203, %v7199
    %v7205 = vlaneseq
    %v7206 = vshrl.u32 %v7205, 7
    %v7207 = vsub.s32 %v6875, %v7206
    %v7208 = vrot.slane %v6650, %v7207
    %v7209 = vsel %vm6880, %v7208, %v7204
    %v7210 = vlaneseq
    %v7211 = vshrl.u32 %v7210, 7
    %v7212 = vsub.s32 %v6882, %v7211
    %v7213 = vrot.slane %v6653, %v7212
    %v7214 = vsel %vm6887, %v7213, %v7209
    %v7215 = vlaneseq
    %v7216 = vshrl.u32 %v7215, 7
    %v7217 = vsub.s32 %v6889, %v7216
    %v7218 = vrot.slane %v6656, %v7217
    %v7219 = vsel %vm6894, %v7218, %v7214
    %v7220 = vlaneseq
    %v7221 = vshrl.u32 %v7220, 7
    %v7222 = vsub.s32 %v6896, %v7221
    %v7223 = vrot.slane %v6659, %v7222
    %v7224 = vsel %vm6901, %v7223, %v7219
    %v7225 = vlaneseq
    %v7226 = vshrl.u32 %v7225, 7
    %v7227 = vsub.s32 %v6903, %v7226
    %v7228 = vrot.slane %v6662, %v7227
    %v7229 = vsel %vm6908, %v7228, %v7224
    %v7230 = vlaneseq
    %v7231 = vshrl.u32 %v7230, 7
    %v7232 = vsub.s32 %v6910, %v7231
    %v7233 = vrot.slane %v6665, %v7232
    %v7234 = vsel %vm6915, %v7233, %v7229
    %v7235 = vlaneseq
    %v7236 = vshrl.u32 %v7235, 7
    %v7237 = vsub.s32 %v6917, %v7236
    %v7238 = vrot.slane %v6668, %v7237
    %v7239 = vsel %vm6922, %v7238, %v7234
    %v7240 = vlaneseq
    %v7241 = vshrl.u32 %v7240, 7
    %v7242 = vsub.s32 %v6814, %v7241
    %v7243 = vrot.slane %v6671, %v7242
    %v7244 = vlaneseq
    %v7245 = vshrl.u32 %v7244, 7
    %v7246 = vsub.s32 %v6819, %v7245
    %v7247 = vrot.slane %v6674, %v7246
    %v7248 = vsel %vm6824, %v7247, %v7243
    %v7249 = vlaneseq
    %v7250 = vshrl.u32 %v7249, 7
    %v7251 = vsub.s32 %v6826, %v7250
    %v7252 = vrot.slane %v6677, %v7251
    %v7253 = vsel %vm6831, %v7252, %v7248
    %v7254 = vlaneseq
    %v7255 = vshrl.u32 %v7254, 7
    %v7256 = vsub.s32 %v6833, %v7255
    %v7257 = vrot.slane %v6680, %v7256
    %v7258 = vsel %vm6838, %v7257, %v7253
    %v7259 = vlaneseq
    %v7260 = vshrl.u32 %v7259, 7
    %v7261 = vsub.s32 %v6840, %v7260
    %v7262 = vrot.slane %v6683, %v7261
    %v7263 = vsel %vm6845, %v7262, %v7258
    %v7264 = vlaneseq
    %v7265 = vshrl.u32 %v7264, 7
    %v7266 = vsub.s32 %v6847, %v7265
    %v7267 = vrot.slane %v6686, %v7266
    %v7268 = vsel %vm6852, %v7267, %v7263
    %v7269 = vlaneseq
    %v7270 = vshrl.u32 %v7269, 7
    %v7271 = vsub.s32 %v6854, %v7270
    %v7272 = vrot.slane %v6689, %v7271
    %v7273 = vsel %vm6859, %v7272, %v7268
    %v7274 = vlaneseq
    %v7275 = vshrl.u32 %v7274, 7
    %v7276 = vsub.s32 %v6861, %v7275
    %v7277 = vrot.slane %v6692, %v7276
    %v7278 = vsel %vm6866, %v7277, %v7273
    %v7279 = vlaneseq
    %v7280 = vshrl.u32 %v7279, 7
    %v7281 = vsub.s32 %v6868, %v7280
    %v7282 = vrot.slane %v6695, %v7281
    %v7283 = vsel %vm6873, %v7282, %v7278
    %v7284 = vlaneseq
    %v7285 = vshrl.u32 %v7284, 7
    %v7286 = vsub.s32 %v6875, %v7285
    %v7287 = vrot.slane %v6698, %v7286
    %v7288 = vsel %vm6880, %v7287, %v7283
    %v7289 = vlaneseq
    %v7290 = vshrl.u32 %v7289, 7
    %v7291 = vsub.s32 %v6882, %v7290
    %v7292 = vrot.slane %v6701, %v7291
    %v7293 = vsel %vm6887, %v7292, %v7288
    %v7294 = vlaneseq
    %v7295 = vshrl.u32 %v7294, 7
    %v7296 = vsub.s32 %v6889, %v7295
    %v7297 = vrot.slane %v6704, %v7296
    %v7298 = vsel %vm6894, %v7297, %v7293
    %v7299 = vlaneseq
    %v7300 = vshrl.u32 %v7299, 7
    %v7301 = vsub.s32 %v6896, %v7300
    %v7302 = vrot.slane %v6707, %v7301
    %v7303 = vsel %vm6901, %v7302, %v7298
    %v7304 = vlaneseq
    %v7305 = vshrl.u32 %v7304, 7
    %v7306 = vsub.s32 %v6903, %v7305
    %v7307 = vrot.slane %v6710, %v7306
    %v7308 = vsel %vm6908, %v7307, %v7303
    %v7309 = vlaneseq
    %v7310 = vshrl.u32 %v7309, 7
    %v7311 = vsub.s32 %v6910, %v7310
    %v7312 = vrot.slane %v6713, %v7311
    %v7313 = vsel %vm6915, %v7312, %v7308
    %v7314 = vlaneseq
    %v7315 = vshrl.u32 %v7314, 7
    %v7316 = vsub.s32 %v6917, %v7315
    %v7317 = vrot.slane %v6716, %v7316
    %v7318 = vsel %vm6922, %v7317, %v7313
    %v7319 = vlaneseq
    %v7320 = vshrl.u32 %v7319, 7
    %v7321 = vsub.s32 %v6814, %v7320
    %v7322 = vrot.slane %v6719, %v7321
    %v7323 = vlaneseq
    %v7324 = vshrl.u32 %v7323, 7
    %v7325 = vsub.s32 %v6819, %v7324
    %v7326 = vrot.slane %v6722, %v7325
    %v7327 = vsel %vm6824, %v7326, %v7322
    %v7328 = vlaneseq
    %v7329 = vshrl.u32 %v7328, 7
    %v7330 = vsub.s32 %v6826, %v7329
    %v7331 = vrot.slane %v6725, %v7330
    %v7332 = vsel %vm6831, %v7331, %v7327
    %v7333 = vlaneseq
    %v7334 = vshrl.u32 %v7333, 7
    %v7335 = vsub.s32 %v6833, %v7334
    %v7336 = vrot.slane %v6728, %v7335
    %v7337 = vsel %vm6838, %v7336, %v7332
    %v7338 = vlaneseq
    %v7339 = vshrl.u32 %v7338, 7
    %v7340 = vsub.s32 %v6840, %v7339
    %v7341 = vrot.slane %v6731, %v7340
    %v7342 = vsel %vm6845, %v7341, %v7337
    %v7343 = vlaneseq
    %v7344 = vshrl.u32 %v7343, 7
    %v7345 = vsub.s32 %v6847, %v7344
    %v7346 = vrot.slane %v6734, %v7345
    %v7347 = vsel %vm6852, %v7346, %v7342
    %v7348 = vlaneseq
    %v7349 = vshrl.u32 %v7348, 7
    %v7350 = vsub.s32 %v6854, %v7349
    %v7351 = vrot.slane %v6737, %v7350
    %v7352 = vsel %vm6859, %v7351, %v7347
    %v7353 = vlaneseq
    %v7354 = vshrl.u32 %v7353, 7
    %v7355 = vsub.s32 %v6861, %v7354
    %v7356 = vrot.slane %v6740, %v7355
    %v7357 = vsel %vm6866, %v7356, %v7352
    %v7358 = vlaneseq
    %v7359 = vshrl.u32 %v7358, 7
    %v7360 = vsub.s32 %v6868, %v7359
    %v7361 = vrot.slane %v6743, %v7360
    %v7362 = vsel %vm6873, %v7361, %v7357
    %v7363 = vlaneseq
    %v7364 = vshrl.u32 %v7363, 7
    %v7365 = vsub.s32 %v6875, %v7364
    %v7366 = vrot.slane %v6746, %v7365
    %v7367 = vsel %vm6880, %v7366, %v7362
    %v7368 = vlaneseq
    %v7369 = vshrl.u32 %v7368, 7
    %v7370 = vsub.s32 %v6882, %v7369
    %v7371 = vrot.slane %v6749, %v7370
    %v7372 = vsel %vm6887, %v7371, %v7367
    %v7373 = vlaneseq
    %v7374 = vshrl.u32 %v7373, 7
    %v7375 = vsub.s32 %v6889, %v7374
    %v7376 = vrot.slane %v6752, %v7375
    %v7377 = vsel %vm6894, %v7376, %v7372
    %v7378 = vlaneseq
    %v7379 = vshrl.u32 %v7378, 7
    %v7380 = vsub.s32 %v6896, %v7379
    %v7381 = vrot.slane %v6755, %v7380
    %v7382 = vsel %vm6901, %v7381, %v7377
    %v7383 = vlaneseq
    %v7384 = vshrl.u32 %v7383, 7
    %v7385 = vsub.s32 %v6903, %v7384
    %v7386 = vrot.slane %v6758, %v7385
    %v7387 = vsel %vm6908, %v7386, %v7382
    %v7388 = vlaneseq
    %v7389 = vshrl.u32 %v7388, 7
    %v7390 = vsub.s32 %v6910, %v7389
    %v7391 = vrot.slane %v6761, %v7390
    %v7392 = vsel %vm6915, %v7391, %v7387
    %v7393 = vlaneseq
    %v7394 = vshrl.u32 %v7393, 7
    %v7395 = vsub.s32 %v6917, %v7394
    %v7396 = vrot.slane %v6764, %v7395
    %v7397 = vsel %vm6922, %v7396, %v7392
    %v7398 = vlaneseq
    %v7399 = vshrl.u32 %v7398, 7
    %v7400 = vsub.s32 %v6814, %v7399
    %v7401 = vrot.slane %v6767, %v7400
    %v7402 = vlaneseq
    %v7403 = vshrl.u32 %v7402, 7
    %v7404 = vsub.s32 %v6819, %v7403
    %v7405 = vrot.slane %v6770, %v7404
    %v7406 = vsel %vm6824, %v7405, %v7401
    %v7407 = vlaneseq
    %v7408 = vshrl.u32 %v7407, 7
    %v7409 = vsub.s32 %v6826, %v7408
    %v7410 = vrot.slane %v6773, %v7409
    %v7411 = vsel %vm6831, %v7410, %v7406
    %v7412 = vlaneseq
    %v7413 = vshrl.u32 %v7412, 7
    %v7414 = vsub.s32 %v6833, %v7413
    %v7415 = vrot.slane %v6776, %v7414
    %v7416 = vsel %vm6838, %v7415, %v7411
    %v7417 = vlaneseq
    %v7418 = vshrl.u32 %v7417, 7
    %v7419 = vsub.s32 %v6840, %v7418
    %v7420 = vrot.slane %v6779, %v7419
    %v7421 = vsel %vm6845, %v7420, %v7416
    %v7422 = vlaneseq
    %v7423 = vshrl.u32 %v7422, 7
    %v7424 = vsub.s32 %v6847, %v7423
    %v7425 = vrot.slane %v6782, %v7424
    %v7426 = vsel %vm6852, %v7425, %v7421
    %v7427 = vlaneseq
    %v7428 = vshrl.u32 %v7427, 7
    %v7429 = vsub.s32 %v6854, %v7428
    %v7430 = vrot.slane %v6785, %v7429
    %v7431 = vsel %vm6859, %v7430, %v7426
    %v7432 = vlaneseq
    %v7433 = vshrl.u32 %v7432, 7
    %v7434 = vsub.s32 %v6861, %v7433
    %v7435 = vrot.slane %v6788, %v7434
    %v7436 = vsel %vm6866, %v7435, %v7431
    %v7437 = vlaneseq
    %v7438 = vshrl.u32 %v7437, 7
    %v7439 = vsub.s32 %v6868, %v7438
    %v7440 = vrot.slane %v6791, %v7439
    %v7441 = vsel %vm6873, %v7440, %v7436
    %v7442 = vlaneseq
    %v7443 = vshrl.u32 %v7442, 7
    %v7444 = vsub.s32 %v6875, %v7443
    %v7445 = vrot.slane %v6794, %v7444
    %v7446 = vsel %vm6880, %v7445, %v7441
    %v7447 = vlaneseq
    %v7448 = vshrl.u32 %v7447, 7
    %v7449 = vsub.s32 %v6882, %v7448
    %v7450 = vrot.slane %v6797, %v7449
    %v7451 = vsel %vm6887, %v7450, %v7446
    %v7452 = vlaneseq
    %v7453 = vshrl.u32 %v7452, 7
    %v7454 = vsub.s32 %v6889, %v7453
    %v7455 = vrot.slane %v6800, %v7454
    %v7456 = vsel %vm6894, %v7455, %v7451
    %v7457 = vlaneseq
    %v7458 = vshrl.u32 %v7457, 7
    %v7459 = vsub.s32 %v6896, %v7458
    %v7460 = vrot.slane %v6803, %v7459
    %v7461 = vsel %vm6901, %v7460, %v7456
    %v7462 = vlaneseq
    %v7463 = vshrl.u32 %v7462, 7
    %v7464 = vsub.s32 %v6903, %v7463
    %v7465 = vrot.slane %v6806, %v7464
    %v7466 = vsel %vm6908, %v7465, %v7461
    %v7467 = vlaneseq
    %v7468 = vshrl.u32 %v7467, 7
    %v7469 = vsub.s32 %v6910, %v7468
    %v7470 = vrot.slane %v6809, %v7469
    %v7471 = vsel %vm6915, %v7470, %v7466
    %v7472 = vlaneseq
    %v7473 = vshrl.u32 %v7472, 7
    %v7474 = vsub.s32 %v6917, %v7473
    %v7475 = vrot.slane %v6812, %v7474
    %v7476 = vsel %vm6922, %v7475, %v7471
    %vm7477 = vcmask 1041409
    %v7478 = vsel %vm7477, %v7239, %v6923
    %v7479 = vsel %vm7477, %v7318, %v7002
    %v7480 = vsel %vm7477, %v7397, %v7081
    %v7481 = vsel %vm7477, %v7476, %v7160
    %v7482 = vcombine.low %v7478, %v7479
    %v7483 = vcombine.low %v7480, %v7481
    %v7485 = vunpack.c.l.s4 1983009808
    %v7486 = vunpack.c.0.s8 %v7485
    %v7487 = vlaneseq
    %v7488 = vshrl.u32 %v7487, 7
    %v7489 = vsub.s32 %v7486, %v7488
    %v7490 = vrot.slane %v7482, %v7489
    %v7492 = vunpack.c.l.s4 1983009808
    %v7493 = vunpack.c.0.s8 %v7492
    %v7494 = vlaneseq
    %v7495 = vshrl.u32 %v7494, 7
    %v7496 = vsub.s32 %v7493, %v7495
    %v7497 = vrot.slane %v7483, %v7496
    %v7498 = vcombine.low %v7490, %v7497
    %v7500 = vadd.f32 %v155, %v7498
    %7501 = vst [vmem:[#allocation2] sm:$0xff] %v7500
    // Predicated region
    $region26: #{tpu_custom_call.1} parent=1 // pred_check
      %p7502 = pneg %p22
    $region27: #{tpu_custom_call.1} parent=1 // pred_check_branch
      %7504 = sbr.rel (%p7502) target = $region29
    $region28: #{tpu_custom_call.1} parent=1 // pred_region
      %v7505 = vld [vmem:[#allocation2] sm:$0xff]
      %v7506 = vmul.f32 %v7505, 0.0625
      %v7508 = vcombine.high %v7506, %v7506
      %v7510 = vunpack.c.l.s4 1983009808
      %v7511 = vunpack.c.0.s8 %v7510
      %v7512 = vlaneseq
      %v7513 = vshrl.u32 %v7512, 7
      %v7514 = vsub.s32 %v7511, %v7513
      %v7515 = vrot.slane %v7506, %v7514
      %v7517 = vunpack.c.l.s4 1983009808
      %v7518 = vunpack.c.0.s8 %v7517
      %v7519 = vlaneseq
      %v7520 = vshrl.u32 %v7519, 7
      %v7521 = vsub.s32 %v7518, %v7520
      %v7522 = vrot.slane %v7508, %v7521
      %v7523 = vcombine.high %v7515, %v7515
      %v7524 = vcombine.high %v7522, %v7522
      %v7529 = vpack.c.bf16 %v7515, %v7515
      %v7530 = vpack.c.bf16 %v7523, %v7523
      %v7531 = vpack.c.bf16 %v7522, %v7522
      %v7532 = vpack.c.bf16 %v7524, %v7524
      %v7533 = vld [vmem:[%s1] sm:$0xff]
      %v7534 = vld [vmem:[%s1 + $0x8] sm:$0xff]
      %v7535 = vld [vmem:[%s1 + $0x10] sm:$0xff]
      %v7536 = vld [vmem:[%s1 + $0x18] sm:$0xff]
      %v7537 = vld [vmem:[%s1 + $0x20] sm:$0xff]
      %v7538 = vld [vmem:[%s1 + $0x28] sm:$0xff]
      %v7539 = vld [vmem:[%s1 + $0x30] sm:$0xff]
      %v7540 = vld [vmem:[%s1 + $0x38] sm:$0xff]
      %v7541 = vld [vmem:[%s1 + $0x40] sm:$0xff]
      %v7542 = vld [vmem:[%s1 + $0x48] sm:$0xff]
      %v7543 = vld [vmem:[%s1 + $0x50] sm:$0xff]
      %v7544 = vld [vmem:[%s1 + $0x58] sm:$0xff]
      %v7545 = vld [vmem:[%s1 + $0x60] sm:$0xff]
      %v7546 = vld [vmem:[%s1 + $0x68] sm:$0xff]
      %v7547 = vld [vmem:[%s1 + $0x70] sm:$0xff]
      %v7548 = vld [vmem:[%s1 + $0x78] sm:$0xff]
      %v7549 = vld [vmem:[%s1 + $0x80] sm:$0xff]
      %v7550 = vld [vmem:[%s1 + $0x88] sm:$0xff]
      %v7551 = vld [vmem:[%s1 + $0x90] sm:$0xff]
      %v7552 = vld [vmem:[%s1 + $0x98] sm:$0xff]
      %v7553 = vld [vmem:[%s1 + $0xa0] sm:$0xff]
      %v7554 = vld [vmem:[%s1 + $0xa8] sm:$0xff]
      %v7555 = vld [vmem:[%s1 + $0xb0] sm:$0xff]
      %v7556 = vld [vmem:[%s1 + $0xb8] sm:$0xff]
      %v7557 = vld [vmem:[%s1 + $0xc0] sm:$0xff]
      %v7558 = vld [vmem:[%s1 + $0xc8] sm:$0xff]
      %v7559 = vld [vmem:[%s1 + $0xd0] sm:$0xff]
      %v7560 = vld [vmem:[%s1 + $0xd8] sm:$0xff]
      %v7561 = vld [vmem:[%s1 + $0xe0] sm:$0xff]
      %v7562 = vld [vmem:[%s1 + $0xe8] sm:$0xff]
      %v7563 = vld [vmem:[%s1 + $0xf0] sm:$0xff]
      %v7564 = vld [vmem:[%s1 + $0xf8] sm:$0xff]
      %v7565 = vld [vmem:[%s1 + $0x100] sm:$0xff]
      %v7566 = vld [vmem:[%s1 + $0x108] sm:$0xff]
      %v7567 = vld [vmem:[%s1 + $0x110] sm:$0xff]
      %v7568 = vld [vmem:[%s1 + $0x118] sm:$0xff]
      %v7569 = vld [vmem:[%s1 + $0x120] sm:$0xff]
      %v7570 = vld [vmem:[%s1 + $0x128] sm:$0xff]
      %v7571 = vld [vmem:[%s1 + $0x130] sm:$0xff]
      %v7572 = vld [vmem:[%s1 + $0x138] sm:$0xff]
      %v7573 = vld [vmem:[%s1 + $0x140] sm:$0xff]
      %v7574 = vld [vmem:[%s1 + $0x148] sm:$0xff]
      %v7575 = vld [vmem:[%s1 + $0x150] sm:$0xff]
      %v7576 = vld [vmem:[%s1 + $0x158] sm:$0xff]
      %v7577 = vld [vmem:[%s1 + $0x160] sm:$0xff]
      %v7578 = vld [vmem:[%s1 + $0x168] sm:$0xff]
      %v7579 = vld [vmem:[%s1 + $0x170] sm:$0xff]
      %v7580 = vld [vmem:[%s1 + $0x178] sm:$0xff]
      %v7581 = vld [vmem:[%s1 + $0x180] sm:$0xff]
      %v7582 = vld [vmem:[%s1 + $0x188] sm:$0xff]
      %v7583 = vld [vmem:[%s1 + $0x190] sm:$0xff]
      %v7584 = vld [vmem:[%s1 + $0x198] sm:$0xff]
      %v7585 = vld [vmem:[%s1 + $0x1a0] sm:$0xff]
      %v7586 = vld [vmem:[%s1 + $0x1a8] sm:$0xff]
      %v7587 = vld [vmem:[%s1 + $0x1b0] sm:$0xff]
      %v7588 = vld [vmem:[%s1 + $0x1b8] sm:$0xff]
      %v7589 = vld [vmem:[%s1 + $0x1c0] sm:$0xff]
      %v7590 = vld [vmem:[%s1 + $0x1c8] sm:$0xff]
      %v7591 = vld [vmem:[%s1 + $0x1d0] sm:$0xff]
      %v7592 = vld [vmem:[%s1 + $0x1d8] sm:$0xff]
      %v7593 = vld [vmem:[%s1 + $0x1e0] sm:$0xff]
      %v7594 = vld [vmem:[%s1 + $0x1e8] sm:$0xff]
      %v7595 = vld [vmem:[%s1 + $0x1f0] sm:$0xff]
      %v7596 = vld [vmem:[%s1 + $0x1f8] sm:$0xff]
      %v7597 = vld [vmem:[%s2] sm:$0x3]
      %v7599 = vlaneseq
      %v7600 = vshrl.u32 %v7599, 7
      %v7601 = vsub.s32 0, %v7600
      %v7602 = vrot.slane %v7597, %v7601
      %v7603 = vlaneseq
      %v7604 = vshrl.u32 %v7603, 7
      %v7605 = vsub.s32 1, %v7604
      %v7606 = vrot.slane %v7597, %v7605
      %v7673 = vunpack.c.l.b16 %v7533
      %v7674 = vunpack.c.h.b16 %v7533
      %v7675 = vunpack.c.l.b16 %v7534
      %v7676 = vunpack.c.h.b16 %v7534
      %v7677 = vunpack.c.l.b16 %v7535
      %v7678 = vunpack.c.h.b16 %v7535
      %v7679 = vunpack.c.l.b16 %v7536
      %v7680 = vunpack.c.h.b16 %v7536
      %v7681 = vunpack.c.l.b16 %v7537
      %v7682 = vunpack.c.h.b16 %v7537
      %v7683 = vunpack.c.l.b16 %v7538
      %v7684 = vunpack.c.h.b16 %v7538
      %v7685 = vunpack.c.l.b16 %v7539
      %v7686 = vunpack.c.h.b16 %v7539
      %v7687 = vunpack.c.l.b16 %v7540
      %v7688 = vunpack.c.h.b16 %v7540
      %v7689 = vunpack.c.l.b16 %v7541
      %v7690 = vunpack.c.h.b16 %v7541
      %v7691 = vunpack.c.l.b16 %v7542
      %v7692 = vunpack.c.h.b16 %v7542
      %v7693 = vunpack.c.l.b16 %v7543
      %v7694 = vunpack.c.h.b16 %v7543
      %v7695 = vunpack.c.l.b16 %v7544
      %v7696 = vunpack.c.h.b16 %v7544
      %v7697 = vunpack.c.l.b16 %v7545
      %v7698 = vunpack.c.h.b16 %v7545
      %v7699 = vunpack.c.l.b16 %v7546
      %v7700 = vunpack.c.h.b16 %v7546
      %v7701 = vunpack.c.l.b16 %v7547
      %v7702 = vunpack.c.h.b16 %v7547
      %v7703 = vunpack.c.l.b16 %v7548
      %v7704 = vunpack.c.h.b16 %v7548
      %v7705 = vunpack.c.l.b16 %v7549
      %v7706 = vunpack.c.h.b16 %v7549
      %v7707 = vunpack.c.l.b16 %v7550
      %v7708 = vunpack.c.h.b16 %v7550
      %v7709 = vunpack.c.l.b16 %v7551
      %v7710 = vunpack.c.h.b16 %v7551
      %v7711 = vunpack.c.l.b16 %v7552
      %v7712 = vunpack.c.h.b16 %v7552
      %v7713 = vunpack.c.l.b16 %v7553
      %v7714 = vunpack.c.h.b16 %v7553
      %v7715 = vunpack.c.l.b16 %v7554
      %v7716 = vunpack.c.h.b16 %v7554
      %v7717 = vunpack.c.l.b16 %v7555
      %v7718 = vunpack.c.h.b16 %v7555
      %v7719 = vunpack.c.l.b16 %v7556
      %v7720 = vunpack.c.h.b16 %v7556
      %v7721 = vunpack.c.l.b16 %v7557
      %v7722 = vunpack.c.h.b16 %v7557
      %v7723 = vunpack.c.l.b16 %v7558
      %v7724 = vunpack.c.h.b16 %v7558
      %v7725 = vunpack.c.l.b16 %v7559
      %v7726 = vunpack.c.h.b16 %v7559
      %v7727 = vunpack.c.l.b16 %v7560
      %v7728 = vunpack.c.h.b16 %v7560
      %v7729 = vunpack.c.l.b16 %v7561
      %v7730 = vunpack.c.h.b16 %v7561
      %v7731 = vunpack.c.l.b16 %v7562
      %v7732 = vunpack.c.h.b16 %v7562
      %v7733 = vunpack.c.l.b16 %v7563
      %v7734 = vunpack.c.h.b16 %v7563
      %v7735 = vunpack.c.l.b16 %v7564
      %v7736 = vunpack.c.h.b16 %v7564
      %v7737 = vunpack.c.l.b16 %v7565
      %v7738 = vunpack.c.h.b16 %v7565
      %v7739 = vunpack.c.l.b16 %v7566
      %v7740 = vunpack.c.h.b16 %v7566
      %v7741 = vunpack.c.l.b16 %v7567
      %v7742 = vunpack.c.h.b16 %v7567
      %v7743 = vunpack.c.l.b16 %v7568
      %v7744 = vunpack.c.h.b16 %v7568
      %v7745 = vunpack.c.l.b16 %v7569
      %v7746 = vunpack.c.h.b16 %v7569
      %v7747 = vunpack.c.l.b16 %v7570
      %v7748 = vunpack.c.h.b16 %v7570
      %v7749 = vunpack.c.l.b16 %v7571
      %v7750 = vunpack.c.h.b16 %v7571
      %v7751 = vunpack.c.l.b16 %v7572
      %v7752 = vunpack.c.h.b16 %v7572
      %v7753 = vunpack.c.l.b16 %v7573
      %v7754 = vunpack.c.h.b16 %v7573
      %v7755 = vunpack.c.l.b16 %v7574
      %v7756 = vunpack.c.h.b16 %v7574
      %v7757 = vunpack.c.l.b16 %v7575
      %v7758 = vunpack.c.h.b16 %v7575
      %v7759 = vunpack.c.l.b16 %v7576
      %v7760 = vunpack.c.h.b16 %v7576
      %v7761 = vunpack.c.l.b16 %v7577
      %v7762 = vunpack.c.h.b16 %v7577
      %v7763 = vunpack.c.l.b16 %v7578
      %v7764 = vunpack.c.h.b16 %v7578
      %v7765 = vunpack.c.l.b16 %v7579
      %v7766 = vunpack.c.h.b16 %v7579
      %v7767 = vunpack.c.l.b16 %v7580
      %v7768 = vunpack.c.h.b16 %v7580
      %v7769 = vunpack.c.l.b16 %v7581
      %v7770 = vunpack.c.h.b16 %v7581
      %v7771 = vunpack.c.l.b16 %v7582
      %v7772 = vunpack.c.h.b16 %v7582
      %v7773 = vunpack.c.l.b16 %v7583
      %v7774 = vunpack.c.h.b16 %v7583
      %v7775 = vunpack.c.l.b16 %v7584
      %v7776 = vunpack.c.h.b16 %v7584
      %v7777 = vunpack.c.l.b16 %v7585
      %v7778 = vunpack.c.h.b16 %v7585
      %v7779 = vunpack.c.l.b16 %v7586
      %v7780 = vunpack.c.h.b16 %v7586
      %v7781 = vunpack.c.l.b16 %v7587
      %v7782 = vunpack.c.h.b16 %v7587
      %v7783 = vunpack.c.l.b16 %v7588
      %v7784 = vunpack.c.h.b16 %v7588
      %v7785 = vunpack.c.l.b16 %v7589
      %v7786 = vunpack.c.h.b16 %v7589
      %v7787 = vunpack.c.l.b16 %v7590
      %v7788 = vunpack.c.h.b16 %v7590
      %v7789 = vunpack.c.l.b16 %v7591
      %v7790 = vunpack.c.h.b16 %v7591
      %v7791 = vunpack.c.l.b16 %v7592
      %v7792 = vunpack.c.h.b16 %v7592
      %v7793 = vunpack.c.l.b16 %v7593
      %v7794 = vunpack.c.h.b16 %v7593
      %v7795 = vunpack.c.l.b16 %v7594
      %v7796 = vunpack.c.h.b16 %v7594
      %v7797 = vunpack.c.l.b16 %v7595
      %v7798 = vunpack.c.h.b16 %v7595
      %v7799 = vunpack.c.l.b16 %v7596
      %v7800 = vunpack.c.h.b16 %v7596
      %v7801 = vpack.c.b16 %v7675, %v7673
      %v7802 = vpack.c.b16 %v7676, %v7674
      %v7803 = vpack.c.b16 %v7679, %v7677
      %v7804 = vpack.c.b16 %v7680, %v7678
      %v7805 = vpack.c.b16 %v7683, %v7681
      %v7806 = vpack.c.b16 %v7684, %v7682
      %v7807 = vpack.c.b16 %v7687, %v7685
      %v7808 = vpack.c.b16 %v7688, %v7686
      %v7809 = vpack.c.b16 %v7691, %v7689
      %v7810 = vpack.c.b16 %v7692, %v7690
      %v7811 = vpack.c.b16 %v7695, %v7693
      %v7812 = vpack.c.b16 %v7696, %v7694
      %v7813 = vpack.c.b16 %v7699, %v7697
      %v7814 = vpack.c.b16 %v7700, %v7698
      %v7815 = vpack.c.b16 %v7703, %v7701
      %v7816 = vpack.c.b16 %v7704, %v7702
      %v7817 = vpack.c.b16 %v7707, %v7705
      %v7818 = vpack.c.b16 %v7708, %v7706
      %v7819 = vpack.c.b16 %v7711, %v7709
      %v7820 = vpack.c.b16 %v7712, %v7710
      %v7821 = vpack.c.b16 %v7715, %v7713
      %v7822 = vpack.c.b16 %v7716, %v7714
      %v7823 = vpack.c.b16 %v7719, %v7717
      %v7824 = vpack.c.b16 %v7720, %v7718
      %v7825 = vpack.c.b16 %v7723, %v7721
      %v7826 = vpack.c.b16 %v7724, %v7722
      %v7827 = vpack.c.b16 %v7727, %v7725
      %v7828 = vpack.c.b16 %v7728, %v7726
      %v7829 = vpack.c.b16 %v7731, %v7729
      %v7830 = vpack.c.b16 %v7732, %v7730
      %v7831 = vpack.c.b16 %v7735, %v7733
      %v7832 = vpack.c.b16 %v7736, %v7734
      %v7833 = vpack.c.b16 %v7739, %v7737
      %v7834 = vpack.c.b16 %v7740, %v7738
      %v7835 = vpack.c.b16 %v7743, %v7741
      %v7836 = vpack.c.b16 %v7744, %v7742
      %v7837 = vpack.c.b16 %v7747, %v7745
      %v7838 = vpack.c.b16 %v7748, %v7746
      %v7839 = vpack.c.b16 %v7751, %v7749
      %v7840 = vpack.c.b16 %v7752, %v7750
      %v7841 = vpack.c.b16 %v7755, %v7753
      %v7842 = vpack.c.b16 %v7756, %v7754
      %v7843 = vpack.c.b16 %v7759, %v7757
      %v7844 = vpack.c.b16 %v7760, %v7758
      %v7845 = vpack.c.b16 %v7763, %v7761
      %v7846 = vpack.c.b16 %v7764, %v7762
      %v7847 = vpack.c.b16 %v7767, %v7765
      %v7848 = vpack.c.b16 %v7768, %v7766
      %v7849 = vpack.c.b16 %v7771, %v7769
      %v7850 = vpack.c.b16 %v7772, %v7770
      %v7851 = vpack.c.b16 %v7775, %v7773
      %v7852 = vpack.c.b16 %v7776, %v7774
      %v7853 = vpack.c.b16 %v7779, %v7777
      %v7854 = vpack.c.b16 %v7780, %v7778
      %v7855 = vpack.c.b16 %v7783, %v7781
      %v7856 = vpack.c.b16 %v7784, %v7782
      %v7857 = vpack.c.b16 %v7787, %v7785
      %v7858 = vpack.c.b16 %v7788, %v7786
      %v7859 = vpack.c.b16 %v7791, %v7789
      %v7860 = vpack.c.b16 %v7792, %v7790
      %v7861 = vpack.c.b16 %v7795, %v7793
      %v7862 = vpack.c.b16 %v7796, %v7794
      %v7863 = vpack.c.b16 %v7799, %v7797
      %v7864 = vpack.c.b16 %v7800, %v7798
      %7929 = vmatprep.subr.bf16.mxu0 %v7802
      %7930 = vmatpush1.bf16.msra.mxu0 %v7801
      %7931 = vmatprep.subr.bf16.mxu0 %v7804
      %7932 = vmatpush1.bf16.msra.mxu0 %v7803
      %7933 = vmatprep.subr.bf16.mxu0 %v7806
      %7934 = vmatpush1.bf16.msra.mxu0 %v7805
      %7935 = vmatprep.subr.bf16.mxu0 %v7808
      %7936 = vmatpush1.bf16.msra.mxu0 %v7807
      %7937 = vmatprep.subr.bf16.mxu0 %v7810
      %7938 = vmatpush1.bf16.msra.mxu0 %v7809
      %7939 = vmatprep.subr.bf16.mxu0 %v7812
      %7940 = vmatpush1.bf16.msra.mxu0 %v7811
      %7941 = vmatprep.subr.bf16.mxu0 %v7814
      %7942 = vmatpush1.bf16.msra.mxu0 %v7813
      %7943 = vmatprep.subr.bf16.mxu0 %v7816
      %7944 = vmatpush1.bf16.msra.mxu0 %v7815
      %7945 = vmatprep.subr.bf16.mxu0 %v7818
      %7946 = vmatpush1.bf16.msra.mxu0 %v7817
      %7947 = vmatprep.subr.bf16.mxu0 %v7820
      %7948 = vmatpush1.bf16.msra.mxu0 %v7819
      %7949 = vmatprep.subr.bf16.mxu0 %v7822
      %7950 = vmatpush1.bf16.msra.mxu0 %v7821
      %7951 = vmatprep.subr.bf16.mxu0 %v7824
      %7952 = vmatpush1.bf16.msra.mxu0 %v7823
      %7953 = vmatprep.subr.bf16.mxu0 %v7826
      %7954 = vmatpush1.bf16.msra.mxu0 %v7825
      %7955 = vmatprep.subr.bf16.mxu0 %v7828
      %7956 = vmatpush1.bf16.msra.mxu0 %v7827
      %7957 = vmatprep.subr.bf16.mxu0 %v7830
      %7958 = vmatpush1.bf16.msra.mxu0 %v7829
      %7959 = vmatprep.subr.bf16.mxu0 %v7832
      %7960 = vmatpush1.bf16.msra.mxu0 %v7831
      %7961 = vmatprep.mubr.bf16.mxu0 %v7530
      %7962 = vmatmul.mubr.bf16.gmra.mrb[0].mxu0 %v7529
      %v7963 = vpop.f32.mrb[0].mxu0
      %v7964 = vadd.f32 %v7602, %v7963
      %v7965 = vpop.f32.mrb[0].mxu0
      %v7966 = vadd.f32 %v7606, %v7965
      %v7967 = vpop.f32.mrb[0].mxu0
      %v7968 = vpop.f32.mrb[0].mxu0
      %7969 = vdwg.mxu0
      %7970 = vmatprep.subr.bf16.mxu0 %v7834
      %7971 = vmatpush1.bf16.msra.mxu0 %v7833
      %7972 = vmatprep.subr.bf16.mxu0 %v7836
      %7973 = vmatpush1.bf16.msra.mxu0 %v7835
      %7974 = vmatprep.subr.bf16.mxu0 %v7838
      %7975 = vmatpush1.bf16.msra.mxu0 %v7837
      %7976 = vmatprep.subr.bf16.mxu0 %v7840
      %7977 = vmatpush1.bf16.msra.mxu0 %v7839
      %7978 = vmatprep.subr.bf16.mxu0 %v7842
      %7979 = vmatpush1.bf16.msra.mxu0 %v7841
      %7980 = vmatprep.subr.bf16.mxu0 %v7844
      %7981 = vmatpush1.bf16.msra.mxu0 %v7843
      %7982 = vmatprep.subr.bf16.mxu0 %v7846
      %7983 = vmatpush1.bf16.msra.mxu0 %v7845
      %7984 = vmatprep.subr.bf16.mxu0 %v7848
      %7985 = vmatpush1.bf16.msra.mxu0 %v7847
      %7986 = vmatprep.subr.bf16.mxu0 %v7850
      %7987 = vmatpush1.bf16.msra.mxu0 %v7849
      %7988 = vmatprep.subr.bf16.mxu0 %v7852
      %7989 = vmatpush1.bf16.msra.mxu0 %v7851
      %7990 = vmatprep.subr.bf16.mxu0 %v7854
      %7991 = vmatpush1.bf16.msra.mxu0 %v7853
      %7992 = vmatprep.subr.bf16.mxu0 %v7856
      %7993 = vmatpush1.bf16.msra.mxu0 %v7855
      %7994 = vmatprep.subr.bf16.mxu0 %v7858
      %7995 = vmatpush1.bf16.msra.mxu0 %v7857
      %7996 = vmatprep.subr.bf16.mxu0 %v7860
      %7997 = vmatpush1.bf16.msra.mxu0 %v7859
      %7998 = vmatprep.subr.bf16.mxu0 %v7862
      %7999 = vmatpush1.bf16.msra.mxu0 %v7861
      %8000 = vmatprep.subr.bf16.mxu0 %v7864
      %8001 = vmatpush1.bf16.msra.mxu0 %v7863
      %8002 = vmatprep.mubr.bf16.mxu0 %v7532
      %8003 = vmatmul.mubr.bf16.gmra.mrb[0].mxu0 %v7531
      %v8004 = vpop.f32.mrb[0].mxu0
      %v8005 = vadd.f32 %v7964, %v8004
      %v8006 = vpop.f32.mrb[0].mxu0
      %v8007 = vadd.f32 %v7966, %v8006
      %v8008 = vpop.f32.mrb[0].mxu0
      %v8009 = vpop.f32.mrb[0].mxu0
      %8010 = vdwg.mxu0
      %v8011 = vmax.f32 %v8005, 0.0
      %v8012 = vmax.f32 %v8007, 0.0
      %v8013 = vpack.c.bf16 %v8011, %v8011
      %v8014 = vpack.c.bf16 %v8012, %v8012
      %v8015 = vld [vmem:[%s3] sm:$0xf]
      %v8016 = vld [vmem:[%s3 + $0x4] sm:$0xf]
      %v8017 = vld [vmem:[%s3 + $0x8] sm:$0xf]
      %v8018 = vld [vmem:[%s3 + $0xc] sm:$0xf]
      %v8019 = vld [vmem:[%s3 + $0x10] sm:$0xf]
      %v8020 = vld [vmem:[%s3 + $0x14] sm:$0xf]
      %v8021 = vld [vmem:[%s3 + $0x18] sm:$0xf]
      %v8022 = vld [vmem:[%s3 + $0x1c] sm:$0xf]
      %v8023 = vld [vmem:[%s3 + $0x20] sm:$0xf]
      %v8024 = vld [vmem:[%s3 + $0x24] sm:$0xf]
      %v8025 = vld [vmem:[%s3 + $0x28] sm:$0xf]
      %v8026 = vld [vmem:[%s3 + $0x2c] sm:$0xf]
      %v8027 = vld [vmem:[%s3 + $0x30] sm:$0xf]
      %v8028 = vld [vmem:[%s3 + $0x34] sm:$0xf]
      %v8029 = vld [vmem:[%s3 + $0x38] sm:$0xf]
      %v8030 = vld [vmem:[%s3 + $0x3c] sm:$0xf]
      %v8031 = vld [vmem:[%s3 + $0x40] sm:$0xf]
      %v8032 = vld [vmem:[%s3 + $0x44] sm:$0xf]
      %v8033 = vld [vmem:[%s3 + $0x48] sm:$0xf]
      %v8034 = vld [vmem:[%s3 + $0x4c] sm:$0xf]
      %v8035 = vld [vmem:[%s3 + $0x50] sm:$0xf]
      %v8036 = vld [vmem:[%s3 + $0x54] sm:$0xf]
      %v8037 = vld [vmem:[%s3 + $0x58] sm:$0xf]
      %v8038 = vld [vmem:[%s3 + $0x5c] sm:$0xf]
      %v8039 = vld [vmem:[%s3 + $0x60] sm:$0xf]
      %v8040 = vld [vmem:[%s3 + $0x64] sm:$0xf]
      %v8041 = vld [vmem:[%s3 + $0x68] sm:$0xf]
      %v8042 = vld [vmem:[%s3 + $0x6c] sm:$0xf]
      %v8043 = vld [vmem:[%s3 + $0x70] sm:$0xf]
      %v8044 = vld [vmem:[%s3 + $0x74] sm:$0xf]
      %v8045 = vld [vmem:[%s3 + $0x78] sm:$0xf]
      %v8046 = vld [vmem:[%s3 + $0x7c] sm:$0xf]
      %v8047 = vld [vmem:[%s4] sm:$0x1]
      %v8049 = vlaneseq
      %v8050 = vshrl.u32 %v8049, 7
      %v8051 = vsub.s32 0, %v8050
      %v8052 = vrot.slane %v8047, %v8051
      %v8086 = vunpack.c.l.b16 %v8015
      %v8087 = vunpack.c.l.b16 %v8016
      %v8088 = vunpack.c.l.b16 %v8017
      %v8089 = vunpack.c.l.b16 %v8018
      %v8090 = vunpack.c.l.b16 %v8019
      %v8091 = vunpack.c.l.b16 %v8020
      %v8092 = vunpack.c.l.b16 %v8021
      %v8093 = vunpack.c.l.b16 %v8022
      %v8094 = vunpack.c.l.b16 %v8023
      %v8095 = vunpack.c.l.b16 %v8024
      %v8096 = vunpack.c.l.b16 %v8025
      %v8097 = vunpack.c.l.b16 %v8026
      %v8098 = vunpack.c.l.b16 %v8027
      %v8099 = vunpack.c.l.b16 %v8028
      %v8100 = vunpack.c.l.b16 %v8029
      %v8101 = vunpack.c.l.b16 %v8030
      %v8102 = vunpack.c.l.b16 %v8031
      %v8103 = vunpack.c.l.b16 %v8032
      %v8104 = vunpack.c.l.b16 %v8033
      %v8105 = vunpack.c.l.b16 %v8034
      %v8106 = vunpack.c.l.b16 %v8035
      %v8107 = vunpack.c.l.b16 %v8036
      %v8108 = vunpack.c.l.b16 %v8037
      %v8109 = vunpack.c.l.b16 %v8038
      %v8110 = vunpack.c.l.b16 %v8039
      %v8111 = vunpack.c.l.b16 %v8040
      %v8112 = vunpack.c.l.b16 %v8041
      %v8113 = vunpack.c.l.b16 %v8042
      %v8114 = vunpack.c.l.b16 %v8043
      %v8115 = vunpack.c.l.b16 %v8044
      %v8116 = vunpack.c.l.b16 %v8045
      %v8117 = vunpack.c.l.b16 %v8046
      %v8118 = vpack.c.b16 %v8087, %v8086
      %v8119 = vpack.c.b16 %v8089, %v8088
      %v8120 = vpack.c.b16 %v8091, %v8090
      %v8121 = vpack.c.b16 %v8093, %v8092
      %v8122 = vpack.c.b16 %v8095, %v8094
      %v8123 = vpack.c.b16 %v8097, %v8096
      %v8124 = vpack.c.b16 %v8099, %v8098
      %v8125 = vpack.c.b16 %v8101, %v8100
      %v8126 = vpack.c.b16 %v8103, %v8102
      %v8127 = vpack.c.b16 %v8105, %v8104
      %v8128 = vpack.c.b16 %v8107, %v8106
      %v8129 = vpack.c.b16 %v8109, %v8108
      %v8130 = vpack.c.b16 %v8111, %v8110
      %v8131 = vpack.c.b16 %v8113, %v8112
      %v8132 = vpack.c.b16 %v8115, %v8114
      %v8133 = vpack.c.b16 %v8117, %v8116
      %8150 = vmatprep.subr.bf16.mxu0 0
      %8151 = vmatpush1.bf16.msra.mxu0 %v8118
      %8152 = vmatprep.subr.bf16.mxu0 0
      %8153 = vmatpush1.bf16.msra.mxu0 %v8119
      %8154 = vmatprep.subr.bf16.mxu0 0
      %8155 = vmatpush1.bf16.msra.mxu0 %v8120
      %8156 = vmatprep.subr.bf16.mxu0 0
      %8157 = vmatpush1.bf16.msra.mxu0 %v8121
      %8158 = vmatprep.subr.bf16.mxu0 0
      %8159 = vmatpush1.bf16.msra.mxu0 %v8122
      %8160 = vmatprep.subr.bf16.mxu0 0
      %8161 = vmatpush1.bf16.msra.mxu0 %v8123
      %8162 = vmatprep.subr.bf16.mxu0 0
      %8163 = vmatpush1.bf16.msra.mxu0 %v8124
      %8164 = vmatprep.subr.bf16.mxu0 0
      %8165 = vmatpush1.bf16.msra.mxu0 %v8125
      %8166 = vmatprep.subr.bf16.mxu0 0
      %8167 = vmatpush1.bf16.msra.mxu0 %v8126
      %8168 = vmatprep.subr.bf16.mxu0 0
      %8169 = vmatpush1.bf16.msra.mxu0 %v8127
      %8170 = vmatprep.subr.bf16.mxu0 0
      %8171 = vmatpush1.bf16.msra.mxu0 %v8128
      %8172 = vmatprep.subr.bf16.mxu0 0
      %8173 = vmatpush1.bf16.msra.mxu0 %v8129
      %8174 = vmatprep.subr.bf16.mxu0 0
      %8175 = vmatpush1.bf16.msra.mxu0 %v8130
      %8176 = vmatprep.subr.bf16.mxu0 0
      %8177 = vmatpush1.bf16.msra.mxu0 %v8131
      %8178 = vmatprep.subr.bf16.mxu0 0
      %8179 = vmatpush1.bf16.msra.mxu0 %v8132
      %8180 = vmatprep.subr.bf16.mxu0 0
      %8181 = vmatpush1.bf16.msra.mxu0 %v8133
      %8182 = vmatprep.mubr.bf16.mxu0 %v8014
      %8183 = vmatmul.mubr.bf16.gmra.mrb[0].mxu0 %v8013
      %v8184 = vpop.f32.mrb[0].mxu0
      %v8185 = vadd.f32 %v8052, %v8184
      %v8186 = vpop.f32.mrb[0].mxu0
      %v8187 = vpop.f32.mrb[0].mxu0
      %v8188 = vpop.f32.mrb[0].mxu0
      %8189 = vdwg.mxu0
      %8190 = vst [vmem:[#allocation3] sm:$0x3] %v8185
    $region29: #{tpu_custom_call.1} parent=1 // pred_fallthru
      _
    // Predicated region
    $region30: #{tpu_custom_call.1} parent=1 // pred_check
      _
    $region31: #{tpu_custom_call.1} parent=1 // pred_check_branch
      %8192 = sbr.rel (0) target = $region33
    $region32: #{tpu_custom_call.1} parent=1 // pred_region
      %s8194 = ssub.s32 32, 32
      %8195 = vsyncadd [#allocation4], %s8194
      %s8197 = sshll.u32 [#allocation3], 4
      %s8198 = int_to_ptr.vmem [resolvable:$true] %s8197
      %8200 = dma.vmem_to_hbm [thread:$0]  %s8198, 32, %s5, [#allocation4]
    $region33: #{tpu_custom_call.1} parent=1 // pred_fallthru
      _
    // Predicated region
    $region34: #{tpu_custom_call.1} parent=1 // pred_check
      _
    $region35: #{tpu_custom_call.1} parent=1 // pred_check_branch
      %8202 = sbr.rel (0) target = $region37
    $region36: #{tpu_custom_call.1} parent=1 // pred_region
      %8203 = dma.done [#allocation4], 32
    $region37: #{tpu_custom_call.1} parent=1 // pred_fallthru
      _
    %8204 = vsyncpa [#allocation4], 1

</llo_original>
